<compile_context>
chip_gen: v7x
topology: tpu7x:2x2x1
jax: 0.10.0
libtpu: 0.0.40
codegen_flags: <defaults>
</compile_context>

<pallas_src>
import math
from functools import partial

import jax
import jax.numpy as jnp
from jax.experimental import pallas as pl
from jax.experimental.pallas import tpu as pltpu

LANE = 128                      # channel padding target (lane width)
THW_MAX = 512                   # row-tile size for pointwise convs
VMEM_LIMIT = 32 * 1024 * 1024   # explicit scoped-VMEM budget (safe on v5e/v6e/v7x)


def _round_up(v, m):
    return ((v + m - 1) // m) * m


# ----------------------------------------------------------------------------
# Pallas kernels
# ----------------------------------------------------------------------------

def _pw_kernel(*refs, swish, has_gate, has_residual):
    """1x1 conv (matmul) + folded BN [+ swish] [+ SE gate on input] [+ residual]."""
    x_ref, w_ref, s_ref, b_ref = refs[:4]
    pos = 4
    gate_ref = None
    res_ref = None
    if has_gate:
        gate_ref = refs[pos]; pos += 1
    if has_residual:
        res_ref = refs[pos]; pos += 1
    o_ref = refs[pos]

    x = x_ref[0]                                           # (THW, Cin_p)
    if has_gate:
        # SE gate: per-(batch, channel) scale folded into the projection input.
        x = x.astype(jnp.float32) * gate_ref[0]            # (THW, Cin_p) f32
    y = jnp.dot(x.astype(w_ref.dtype), w_ref[...],
                preferred_element_type=jnp.float32)        # (THW, Cout_p) f32
    y = y * s_ref[...] + b_ref[...]                        # folded BatchNorm (eval)
    if swish:
        y = y * jax.nn.sigmoid(y)
    if has_residual:
        y = y + res_ref[0].astype(jnp.float32)             # id-skip residual add
    o_ref[0] = y.astype(o_ref.dtype)


def pointwise_conv_bn(x3, w, scale, bias, *, swish=False, gate=None, residual=None):
    """x3: (N, HW, Cin_p) bf16 -> (N, HW, Cout_p) bf16, tiled over (N, row tiles)."""
    N, HW, Cin_p = x3.shape
    Cout_p = w.shape[1]
    assert Cin_p == w.shape[0]

    thw = min(THW_MAX, _round_up(HW, 8))
    HWp = _round_up(HW, thw)
    if HWp != HW:
        x3 = jnp.pad(x3, ((0, 0), (0, HWp - HW), (0, 0)))
        if residual is not None:
            residual = jnp.pad(residual, ((0, 0), (0, HWp - HW), (0, 0)))

    inputs = [x3, w, scale, bias]
    in_specs = [
        pl.BlockSpec((1, thw, Cin_p), lambda n, t: (n, t, 0)),
        pl.BlockSpec((Cin_p, Cout_p), lambda n, t: (0, 0)),   # weights stay resident
        pl.BlockSpec((1, Cout_p), lambda n, t: (0, 0)),
        pl.BlockSpec((1, Cout_p), lambda n, t: (0, 0)),
    ]
    if gate is not None:
        inputs.append(gate)                                   # (N, 1, Cin_p) f32
        in_specs.append(pl.BlockSpec((1, 1, Cin_p), lambda n, t: (n, 0, 0)))
    if residual is not None:
        inputs.append(residual)                               # (N, HWp, Cout_p) bf16
        in_specs.append(pl.BlockSpec((1, thw, Cout_p), lambda n, t: (n, t, 0)))

    kernel = partial(_pw_kernel, swish=swish,
                     has_gate=gate is not None, has_residual=residual is not None)
    out = pl.pallas_call(
        kernel,
        out_shape=jax.ShapeDtypeStruct((N, HWp, Cout_p), jnp.bfloat16),
        grid=(N, HWp // thw),
        in_specs=in_specs,
        out_specs=pl.BlockSpec((1, thw, Cout_p), lambda n, t: (n, t, 0)),
        compiler_params=pltpu.CompilerParams(
            dimension_semantics=("parallel", "parallel"),
            vmem_limit_bytes=VMEM_LIMIT),
    )(*inputs)
    return out[:, :HW] if HWp != HW else out


def _dw_kernel(p_ref, w_ref, s_ref, b_ref, o_ref, pool_ref,
               *, k, stride, ho, wo, hph, inv_hw):
    """Depthwise kxk conv (stride via phase-decomposed input) + BN + swish.
    Also emits the SE global-average pool of the activated output."""
    cp = o_ref.shape[-1]
    acc = jnp.zeros((ho, wo, cp), jnp.float32)
    for kh in range(k):
        for kw in range(k):
            ph = (kh % stride) * stride + (kw % stride)        # phase block index
            r0 = ph * hph + kh // stride
            c0 = kw // stride
            tap = p_ref[0, r0:r0 + ho, c0:c0 + wo, :].astype(jnp.float32)
            t = kh * k + kw
            acc = acc + tap * w_ref[t:t + 1, :]                # (1, cp) broadcast
    y = acc * s_ref[...] + b_ref[...]                          # folded BatchNorm
    y = y * jax.nn.sigmoid(y)                                  # Swish
    o_ref[0] = y.astype(o_ref.dtype)
    pool_ref[...] = jnp.sum(y, axis=(0, 1), keepdims=True) * inv_hw  # fused SE pool


def depthwise_conv_bn_swish(phases, w, scale, bias, *, k, stride, ho, wo, hph):
    """phases: (N, s*s*Hph, Wph, Cp) bf16 (phase-decomposed SAME-padded input)."""
    N, SH, Wph, Cp = phases.shape
    kernel = partial(_dw_kernel, k=k, stride=stride, ho=ho, wo=wo, hph=hph,
                     inv_hw=1.0 / float(ho * wo))
    y, pooled = pl.pallas_call(
        kernel,
        out_shape=(jax.ShapeDtypeStruct((N, ho, wo, Cp), jnp.bfloat16),
                   jax.ShapeDtypeStruct((N, 1, Cp), jnp.float32)),
        grid=(N,),
        in_specs=[
            pl.BlockSpec((1, SH, Wph, Cp), lambda n: (n, 0, 0, 0)),
            pl.BlockSpec((k * k, Cp), lambda n: (0, 0)),
            pl.BlockSpec((1, Cp), lambda n: (0, 0)),
            pl.BlockSpec((1, Cp), lambda n: (0, 0)),
        ],
        out_specs=(pl.BlockSpec((1, ho, wo, Cp), lambda n: (n, 0, 0, 0)),
                   pl.BlockSpec((1, 1, Cp), lambda n: (n, 0, 0))),
        compiler_params=pltpu.CompilerParams(
            dimension_semantics=("parallel",),
            vmem_limit_bytes=VMEM_LIMIT),
    )(phases, w, scale, bias)
    return y, pooled


def _se_mlp_kernel(p_ref, w1_ref, b1_ref, w2_ref, b2_ref, g_ref):
    p = p_ref[...]                                             # (N, Cp) f32
    h = jnp.dot(p, w1_ref[...], preferred_element_type=jnp.float32) + b1_ref[...]
    h = h * jax.nn.sigmoid(h)                                  # swish
    z = jnp.dot(h, w2_ref[...], preferred_element_type=jnp.float32) + b2_ref[...]
    g_ref[...] = jax.nn.sigmoid(z)                             # SE gate


def se_mlp(pooled, w1, b1, w2, b2):
    N, Cp = pooled.shape
    Cse_p = w1.shape[1]
    return pl.pallas_call(
        _se_mlp_kernel,
        out_shape=jax.ShapeDtypeStruct((N, Cp), jnp.float32),
        grid=(1,),
        in_specs=[pl.BlockSpec((N, Cp), lambda i: (0, 0)),
                  pl.BlockSpec((Cp, Cse_p), lambda i: (0, 0)),
                  pl.BlockSpec((1, Cse_p), lambda i: (0, 0)),
                  pl.BlockSpec((Cse_p, Cp), lambda i: (0, 0)),
                  pl.BlockSpec((1, Cp), lambda i: (0, 0))],
        out_specs=pl.BlockSpec((N, Cp), lambda i: (0, 0)),
    )(pooled, w1, b1, w2, b2)


def _pool_fc_kernel(x_ref, w_ref, b_ref, o_ref, *, inv_hw):
    pooled = jnp.sum(x_ref[...].astype(jnp.float32), axis=1) * inv_hw   # (N, Cp)
    o_ref[...] = jnp.dot(pooled, w_ref[...],
                         preferred_element_type=jnp.float32) + b_ref[...]


def avgpool_fc(x, w, b):
    # x: (N, HW, Cp) bf16 ; dropout in eval mode is identity
    N, HW, Cp = x.shape
    HWp = _round_up(HW, 8)
    if HWp != HW:
        x = jnp.pad(x, ((0, 0), (0, HWp - HW), (0, 0)))
    ncls_p = w.shape[1]
    kernel = partial(_pool_fc_kernel, inv_hw=1.0 / float(HW))
    return pl.pallas_call(
        kernel,
        out_shape=jax.ShapeDtypeStruct((N, ncls_p), jnp.float32),
        grid=(1,),
        in_specs=[pl.BlockSpec((N, HWp, Cp), lambda i: (0, 0, 0)),
                  pl.BlockSpec((Cp, ncls_p), lambda i: (0, 0)),
                  pl.BlockSpec((1, ncls_p), lambda i: (0, 0))],
        out_specs=pl.BlockSpec((N, ncls_p), lambda i: (0, 0)),
    )(x, w, b)


# ----------------------------------------------------------------------------
# Glue: TF-"SAME" padding, phase decomposition, stem im2col, config / params
# ----------------------------------------------------------------------------

def _same_pad_amounts(size, k, s):
    out = math.ceil(size / s)
    pad = max((out - 1) * s + k - size, 0)
    return pad // 2, pad - pad // 2, out


def _pad_same_nhwc(x, k, s):
    # Matches Conv2dStaticSamePadding: asymmetric pad (left/top = pad//2).
    _, H, W, _ = x.shape
    pt, pb, Ho = _same_pad_amounts(H, k, s)
    plft, prgt, Wo = _same_pad_amounts(W, k, s)
    xp = jnp.pad(x, ((0, 0), (pt, pb), (plft, prgt), (0, 0)))
    return xp, Ho, Wo


def _make_phases(x, k, stride):
    """SAME-pad then decompose into stride*stride spatial phases so the depthwise
    kernel only needs static contiguous slices.  Total HBM bytes == 1x padded input."""
    xp, Ho, Wo = _pad_same_nhwc(x, k, stride)
    N, Hp, Wp, Cp = xp.shape
    Hp2, Wp2 = _round_up(Hp, stride), _round_up(Wp, stride)
    if (Hp2, Wp2) != (Hp, Wp):
        xp = jnp.pad(xp, ((0, 0), (0, Hp2 - Hp), (0, Wp2 - Wp), (0, 0)))
    Hph, Wph = Hp2 // stride, Wp2 // stride
    phs = [xp[:, a::stride, b::stride, :] for a in range(stride) for b in range(stride)]
    phases = jnp.concatenate(phs, axis=1)          # (N, s*s*Hph, Wph, Cp)
    return phases, Ho, Wo, Hph


def _extract_patches(xp, k, s, Ho, Wo):
    # stem im2col (3-channel input only -> cheap); tap order (kh, kw)
    taps = []
    for kh in range(k):
        for kw in range(k):
            taps.append(xp[:, kh:kh + s * (Ho - 1) + 1:s, kw:kw + s * (Wo - 1) + 1:s, :])
    return jnp.stack(taps, axis=3)                  # (N, Ho, Wo, k*k, Cin)


def round_filters(filters, width_coef, divisor=8, min_depth=None):
    if width_coef is None:
        return filters
    filters *= width_coef
    min_depth = min_depth or divisor
    new_filters = max(min_depth, int(filters + divisor / 2) // divisor * divisor)
    if new_filters < 0.9 * filters:
        new_filters += divisor
    return int(new_filters)


def round_repeats(repeats, depth_coef):
    if depth_coef is None:
        return repeats
    return int(math.ceil(depth_coef * repeats))


def _bn_fold(key, c, cp, eps):
    kg, kb, km, kv = jax.random.split(key, 4)
    gamma = 1.0 + 0.1 * jax.random.normal(kg, (c,), jnp.float32)
    beta = 0.1 * jax.random.normal(kb, (c,), jnp.float32)
    mean = 0.1 * jax.random.normal(km, (c,), jnp.float32)
    var = 0.5 + jax.random.uniform(kv, (c,), jnp.float32)
    scale = gamma / jnp.sqrt(var + eps)
    bias = beta - mean * scale
    scale = jnp.pad(scale, (0, cp - c), constant_values=1.0).reshape(1, cp)
    bias = jnp.pad(bias, (0, cp - c)).reshape(1, cp)
    return scale, bias


def build_efficientnet_params(key, blocks_args, gp):
    eps = gp["bn_eps"]
    wc, dc = gp["width_coefficient"], gp["depth_coefficient"]
    div, md = gp["depth_divisor"], gp["min_depth"]
    keys = iter(jax.random.split(key, 512))

    def conv_bn(cin, cout):
        cin_p, cout_p = _round_up(cin, LANE), _round_up(cout, LANE)
        w = 0.1 * jax.random.normal(next(keys), (cin, cout), jnp.float32)
        w = jnp.pad(w, ((0, cin_p - cin), (0, cout_p - cout))).astype(jnp.bfloat16)
        scale, bias = _bn_fold(next(keys), cout, cout_p, eps)
        return dict(w=w, scale=scale, bias=bias, out_c=cout)

    params = {}
    stem_out = round_filters(32, wc, div, md)
    params["stem"] = conv_bn(3 * 3 * 3, stem_out)   # im2col weight (k*k*Cin, Cout)

    blocks = []
    for ba in blocks_args:
        inf = round_filters(ba["input_filters"], wc, div, md)
        outf = round_filters(ba["output_filters"], wc, div, md)
        nrep = round_repeats(ba["num_repeat"], dc)
        for r in range(nrep):
            cfg = dict(
                input_filters=inf if r == 0 else outf,
                output_filters=outf,
                kernel_size=ba["kernel_size"],
                stride=ba["stride"] if r == 0 else 1,
                expand_ratio=ba["expand_ratio"],
                se_ratio=ba["se_ratio"],
                id_skip=ba["id_skip"],
            )
            cfg["has_se"] = cfg["se_ratio"] is not None and 0 < cfg["se_ratio"] <= 1
            oup = cfg["input_filters"] * cfg["expand_ratio"]
            oup_p = _round_up(oup, LANE)
            bp = dict(cfg=cfg)
            if cfg["expand_ratio"] != 1:
                bp["expand"] = conv_bn(cfg["input_filters"], oup)
            k = cfg["kernel_size"]
            wdw = 0.1 * jax.random.normal(next(keys), (k * k, oup), jnp.float32)
            wdw = jnp.pad(wdw, ((0, 0), (0, oup_p - oup)))
            sdw, bdw = _bn_fold(next(keys), oup, oup_p, eps)
            bp["dw"] = dict(w=wdw, scale=sdw, bias=bdw)
            if cfg["has_se"]:
                cse = max(1, int(cfg["input_filters"] * cfg["se_ratio"]))
                cse_p = _round_up(cse, LANE)
                w1 = 0.1 * jax.random.normal(next(keys), (oup, cse), jnp.float32)
                b1 = 0.1 * jax.random.normal(next(keys), (cse,), jnp.float32)
                w2 = 0.1 * jax.random.normal(next(keys), (cse, oup), jnp.float32)
                b2 = 0.1 * jax.random.normal(next(keys), (oup,), jnp.float32)
                bp["se"] = dict(
                    w1=jnp.pad(w1, ((0, oup_p - oup), (0, cse_p - cse))),
                    b1=jnp.pad(b1, (0, cse_p - cse)).reshape(1, cse_p),
                    w2=jnp.pad(w2, ((0, cse_p - cse), (0, oup_p - oup))),
                    b2=jnp.pad(b2, (0, oup_p - oup)).reshape(1, oup_p),
                )
            bp["project"] = conv_bn(oup, cfg["output_filters"])
            blocks.append(bp)
    params["blocks"] = blocks

    head_in = blocks[-1]["cfg"]["output_filters"]
    head_out = round_filters(1280, wc, div, md)
    params["head"] = conv_bn(head_in, head_out)
    ncls = gp["num_classes"]
    ncls_p = _round_up(ncls, LANE)
    head_out_p = _round_up(head_out, LANE)
    wfc = 0.05 * jax.random.normal(next(keys), (head_out, ncls), jnp.float32)
    bfc = 0.05 * jax.random.normal(next(keys), (ncls,), jnp.float32)
    params["fc"] = dict(
        w=jnp.pad(wfc, ((0, head_out_p - head_out), (0, ncls_p - ncls))),
        b=jnp.pad(bfc, (0, ncls_p - ncls)).reshape(1, ncls_p),
    )
    return params


# ----------------------------------------------------------------------------
# Forward pass (MBConv blocks + stem/head), mirroring the PyTorch module
# ----------------------------------------------------------------------------

def mbconv_forward(bp, x):
    cfg = bp["cfg"]
    N, H, W, Cin_p = x.shape
    inputs = x
    # expand (1x1 conv + BN + swish)
    if cfg["expand_ratio"] != 1:
        y = pointwise_conv_bn(x.reshape(N, H * W, Cin_p), bp["expand"]["w"],
                              bp["expand"]["scale"], bp["expand"]["bias"], swish=True)
        x = y.reshape(N, H, W, y.shape[-1])
    Cexp_p = x.shape[-1]
    # depthwise conv (SAME pad via phase decomposition) + BN + swish (+ fused SE pool)
    k, stride = cfg["kernel_size"], cfg["stride"]
    phases, Ho, Wo, Hph = _make_phases(x, k, stride)
    y4, pooled = depthwise_conv_bn_swish(phases, bp["dw"]["w"], bp["dw"]["scale"],
                                         bp["dw"]["bias"], k=k, stride=stride,
                                         ho=Ho, wo=Wo, hph=Hph)
    # squeeze & excite: tiny MLP on the fused pooled mean -> per-(n,c) gate
    gate = None
    if cfg["has_se"]:
        g = se_mlp(pooled.reshape(N, Cexp_p), bp["se"]["w1"], bp["se"]["b1"],
                   bp["se"]["w2"], bp["se"]["b2"])
        gate = g.reshape(N, 1, Cexp_p)
    # project (1x1 conv + BN, no activation) with fused SE gate and id-skip residual
    use_skip = (cfg["id_skip"] and cfg["stride"] == 1
                and cfg["input_filters"] == cfg["output_filters"])
    residual = inputs.reshape(N, Ho * Wo, Cin_p) if use_skip else None
    # eval mode: drop_connect is identity
    y = pointwise_conv_bn(y4.reshape(N, Ho * Wo, Cexp_p), bp["project"]["w"],
                          bp["project"]["scale"], bp["project"]["bias"],
                          swish=False, gate=gate, residual=residual)
    return y.reshape(N, Ho, Wo, bp["project"]["w"].shape[1])


def efficientnet_forward(params, gp, x_nchw):
    x = jnp.transpose(x_nchw, (0, 2, 3, 1)).astype(jnp.float32)  # NCHW -> NHWC
    N = x.shape[0]
    # stem: 3x3 stride-2 SAME conv (im2col on 3-ch input + Pallas matmul) + BN + swish
    xp, Ho, Wo = _pad_same_nhwc(x, 3, 2)
    pat = _extract_patches(xp, 3, 2, Ho, Wo).reshape(N, Ho * Wo, 9 * x.shape[-1])
    cin_p = params["stem"]["w"].shape[0]
    pat = jnp.pad(pat, ((0, 0), (0, 0), (0, cin_p - pat.shape[-1]))).astype(jnp.bfloat16)
    y = pointwise_conv_bn(pat, params["stem"]["w"], params["stem"]["scale"],
                          params["stem"]["bias"], swish=True)
    x = y.reshape(N, Ho, Wo, y.shape[-1])
    # MBConv blocks
    for bp in params["blocks"]:
        x = mbconv_forward(bp, x)
    # head: 1x1 conv + BN + swish
    N, H, W, Cp = x.shape
    y = pointwise_conv_bn(x.reshape(N, H * W, Cp), params["head"]["w"],
                          params["head"]["scale"], params["head"]["bias"], swish=True)
    # avg pool + (dropout = identity at eval) + fc
    if gp["include_top"]:
        logits = avgpool_fc(y, params["fc"]["w"], params["fc"]["b"])
        return logits[:, :gp["num_classes"]]
    pooled = jnp.mean(y.astype(jnp.float32), axis=1)
    return pooled[:, :params["head"]["out_c"]]


# ----------------------------------------------------------------------------
# Main
# ----------------------------------------------------------------------------

if __name__ == "__main__":
    # Small synthetic EfficientNet config (width 0.25 -> 8-channel blocks).
    global_params = dict(
        width_coefficient=0.25, depth_coefficient=1.0,
        depth_divisor=8, min_depth=None,
        bn_momentum=0.99, bn_eps=1e-3,
        image_size=16, dropout_rate=0.2, drop_connect_rate=0.2,
        num_classes=10, include_top=True,
    )
    blocks_args = [
        dict(num_repeat=1, kernel_size=3, stride=1, expand_ratio=1,
             input_filters=32, output_filters=16, se_ratio=0.25, id_skip=True),
        dict(num_repeat=2, kernel_size=3, stride=2, expand_ratio=6,
             input_filters=16, output_filters=24, se_ratio=0.25, id_skip=True),
    ]

    key = jax.random.PRNGKey(0)
    kp, kx = jax.random.split(key)
    params = build_efficientnet_params(kp, blocks_args, global_params)

    x = jax.random.normal(kx, (2, 3, 16, 16), jnp.float32)  # NCHW input
    fwd = jax.jit(lambda xx: efficientnet_forward(params, global_params, xx))
    logits = fwd(x)
    logits = jax.block_until_ready(logits)
    assert logits.shape == (2, global_params["num_classes"])
    assert bool(jnp.all(jnp.isfinite(logits)))
    print("KERNEL_OK")
</pallas_src>

<mosaic_0001>
module attributes {stable_mosaic.version = 11 : i64} {
  func.func @_pw_kernel(%arg0: i32, %arg1: i32, %arg2: memref<1x64x128xbf16, #tpu.memory_space<vmem>>, %arg3: memref<128x128xbf16, #tpu.memory_space<vmem>>, %arg4: memref<1x128xf32, #tpu.memory_space<vmem>>, %arg5: memref<1x128xf32, #tpu.memory_space<vmem>>, %arg6: memref<1x64x128xbf16, #tpu.memory_space<vmem>>) attributes {dimension_semantics = [#tpu.dimension_semantics<parallel>, #tpu.dimension_semantics<parallel>], iteration_bounds = array<i64: 2, 1>, scalar_prefetch = 0 : i64, scratch_operands = 0 : i64, tpu.core_type = #tpu.core_type<tc>, window_params = [{transform_indices = @transform_0, window_bounds = array<i64: 1, 64, 128>}, {pipeline_mode = #tpu.pipeline_mode<synchronous>, transform_indices = @transform_1, window_bounds = array<i64: 128, 128>}, {pipeline_mode = #tpu.pipeline_mode<synchronous>, transform_indices = @transform_2, window_bounds = array<i64: 1, 128>}, {pipeline_mode = #tpu.pipeline_mode<synchronous>, transform_indices = @transform_3, window_bounds = array<i64: 1, 128>}, {transform_indices = @transform_4, window_bounds = array<i64: 1, 64, 128>}]} {
    %c0 = arith.constant 0 : index
    %c0_0 = arith.constant 0 : index
    %c0_1 = arith.constant 0 : index
    %0 = vector.load %arg2[%c0, %c0_0, %c0_1] : memref<1x64x128xbf16, #tpu.memory_space<vmem>>, vector<1x64x128xbf16>
    %1 = vector.shape_cast %0 : vector<1x64x128xbf16> to vector<64x128xbf16>
    %c0_2 = arith.constant 0 : index
    %c0_3 = arith.constant 0 : index
    %2 = vector.load %arg3[%c0_2, %c0_3] : memref<128x128xbf16, #tpu.memory_space<vmem>>, vector<128x128xbf16>
    %cst = arith.constant dense<0.000000e+00> : vector<64x128xf32>
    %3 = tpu.matmul %1, %2, %cst {dimension_numbers = #tpu.dot_dimension_numbers<[1], [0], [0], [1], [0, 0, 1, 1], [], []>} : vector<64x128xbf16>, vector<128x128xbf16>, vector<64x128xf32> -> vector<64x128xf32>
    %c0_4 = arith.constant 0 : index
    %c0_5 = arith.constant 0 : index
    %4 = vector.load %arg4[%c0_4, %c0_5] : memref<1x128xf32, #tpu.memory_space<vmem>>, vector<1x128xf32>
    %5 = vector.broadcast %4 : vector<1x128xf32> to vector<64x128xf32>
    %6 = arith.mulf %3, %5 : vector<64x128xf32>
    %c0_6 = arith.constant 0 : index
    %c0_7 = arith.constant 0 : index
    %7 = vector.load %arg5[%c0_6, %c0_7] : memref<1x128xf32, #tpu.memory_space<vmem>>, vector<1x128xf32>
    %8 = vector.broadcast %7 : vector<1x128xf32> to vector<64x128xf32>
    %9 = arith.addf %6, %8 : vector<64x128xf32>
    %10 = arith.negf %9 : vector<64x128xf32>
    %11 = math.exp %10 : vector<64x128xf32>
    %cst_8 = arith.constant 1.000000e+00 : f32
    %12 = vector.broadcast %cst_8 : f32 to vector<64x128xf32>
    %13 = arith.addf %12, %11 : vector<64x128xf32>
    %14 = arith.divf %12, %13 : vector<64x128xf32>
    %15 = arith.mulf %9, %14 : vector<64x128xf32>
    %16 = arith.truncf %15 : vector<64x128xf32> to vector<64x128xbf16>
    %c0_9 = arith.constant 0 : index
    %c0_10 = arith.constant 0 : index
    %c0_11 = arith.constant 0 : index
    %17 = vector.load %arg6[%c0_9, %c0_10, %c0_11] : memref<1x64x128xbf16, #tpu.memory_space<vmem>>, vector<1x64x128xbf16>
    %18 = vector.shape_cast %17 : vector<1x64x128xbf16> to vector<64x128xbf16>
    %19 = vector.shape_cast %16 : vector<64x128xbf16> to vector<1x64x128xbf16>
    tpu.vector_store %arg6[%c0_9, %c0_10, %c0_11], %19 {strides = array<i32>} : memref<1x64x128xbf16, #tpu.memory_space<vmem>>, vector<1x64x128xbf16>,
    return
  }
  func.func @transform_0(%arg0: i32, %arg1: i32) -> (i32, i32, i32) {
    %c0_i32 = arith.constant 0 : i32
    %c0_i32_0 = arith.constant 0 : i32
    return %arg0, %arg1, %c0_i32 : i32, i32, i32
  }
  func.func @transform_1(%arg0: i32, %arg1: i32) -> (i32, i32) {
    %c0_i32 = arith.constant 0 : i32
    %c0_i32_0 = arith.constant 0 : i32
    %c0_i32_1 = arith.constant 0 : i32
    return %c0_i32, %c0_i32_0 : i32, i32
  }
  func.func @transform_2(%arg0: i32, %arg1: i32) -> (i32, i32) {
    %c0_i32 = arith.constant 0 : i32
    %c0_i32_0 = arith.constant 0 : i32
    %c0_i32_1 = arith.constant 0 : i32
    return %c0_i32, %c0_i32_0 : i32, i32
  }
  func.func @transform_3(%arg0: i32, %arg1: i32) -> (i32, i32) {
    %c0_i32 = arith.constant 0 : i32
    %c0_i32_0 = arith.constant 0 : i32
    %c0_i32_1 = arith.constant 0 : i32
    return %c0_i32, %c0_i32_0 : i32, i32
  }
  func.func @transform_4(%arg0: i32, %arg1: i32) -> (i32, i32, i32) {
    %c0_i32 = arith.constant 0 : i32
    %c0_i32_0 = arith.constant 0 : i32
    return %arg0, %arg1, %c0_i32 : i32, i32, i32
  }
}

module attributes {stable_mosaic.version = 11 : i64} {
  func.func @_dw_kernel(%arg0: i32, %arg1: memref<1x10x10x128xbf16, #tpu.memory_space<vmem>>, %arg2: memref<9x128xf32, #tpu.memory_space<vmem>>, %arg3: memref<1x128xf32, #tpu.memory_space<vmem>>, %arg4: memref<1x128xf32, #tpu.memory_space<vmem>>, %arg5: memref<1x8x8x128xbf16, #tpu.memory_space<vmem>>, %arg6: memref<1x1x128xf32, #tpu.memory_space<vmem>>) attributes {dimension_semantics = [#tpu.dimension_semantics<parallel>], iteration_bounds = array<i64: 2>, scalar_prefetch = 0 : i64, scratch_operands = 0 : i64, tpu.core_type = #tpu.core_type<tc>, window_params = [{transform_indices = @transform_0, window_bounds = array<i64: 1, 10, 10, 128>}, {pipeline_mode = #tpu.pipeline_mode<synchronous>, transform_indices = @transform_1, window_bounds = array<i64: 9, 128>}, {pipeline_mode = #tpu.pipeline_mode<synchronous>, transform_indices = @transform_2, window_bounds = array<i64: 1, 128>}, {pipeline_mode = #tpu.pipeline_mode<synchronous>, transform_indices = @transform_3, window_bounds = array<i64: 1, 128>}, {transform_indices = @transform_4, window_bounds = array<i64: 1, 8, 8, 128>}, {transform_indices = @transform_5, window_bounds = array<i64: 1, 1, 128>}]} {
    %cst = arith.constant 0.000000e+00 : f32
    %0 = vector.broadcast %cst : f32 to vector<8x8x128xf32>
    %c0 = arith.constant 0 : index
    %c0_0 = arith.constant 0 : index
    %c0_1 = arith.constant 0 : index
    %c0_2 = arith.constant 0 : index
    %1 = vector.load %arg1[%c0, %c0_0, %c0_1, %c0_2] : memref<1x10x10x128xbf16, #tpu.memory_space<vmem>>, vector<1x8x8x128xbf16>
    %2 = vector.shape_cast %1 : vector<1x8x8x128xbf16> to vector<8x8x128xbf16>
    %3 = arith.extf %2 : vector<8x8x128xbf16> to vector<8x8x128xf32>
    %c0_3 = arith.constant 0 : index
    %c0_4 = arith.constant 0 : index
    %4 = vector.load %arg2[%c0_3, %c0_4] : memref<9x128xf32, #tpu.memory_space<vmem>>, vector<1x128xf32>
    %5 = vector.shape_cast %4 : vector<1x128xf32> to vector<1x1x128xf32>
    %6 = vector.broadcast %5 : vector<1x1x128xf32> to vector<8x8x128xf32>
    %7 = arith.mulf %3, %6 : vector<8x8x128xf32>
    %8 = arith.addf %0, %7 : vector<8x8x128xf32>
    %c0_5 = arith.constant 0 : index
    %c0_6 = arith.constant 0 : index
    %c1 = arith.constant 1 : index
    %c0_7 = arith.constant 0 : index
    %9 = vector.load %arg1[%c0_5, %c0_6, %c1, %c0_7] : memref<1x10x10x128xbf16, #tpu.memory_space<vmem>>, vector<1x8x8x128xbf16>
    %10 = vector.shape_cast %9 : vector<1x8x8x128xbf16> to vector<8x8x128xbf16>
    %11 = arith.extf %10 : vector<8x8x128xbf16> to vector<8x8x128xf32>
    %c1_8 = arith.constant 1 : index
    %c0_9 = arith.constant 0 : index
    %12 = vector.load %arg2[%c1_8, %c0_9] : memref<9x128xf32, #tpu.memory_space<vmem>>, vector<1x128xf32>
    %13 = vector.shape_cast %12 : vector<1x128xf32> to vector<1x1x128xf32>
    %14 = vector.broadcast %13 : vector<1x1x128xf32> to vector<8x8x128xf32>
    %15 = arith.mulf %11, %14 : vector<8x8x128xf32>
    %16 = arith.addf %8, %15 : vector<8x8x128xf32>
    %c0_10 = arith.constant 0 : index
    %c0_11 = arith.constant 0 : index
    %c2 = arith.constant 2 : index
    %c0_12 = arith.constant 0 : index
    %17 = vector.load %arg1[%c0_10, %c0_11, %c2, %c0_12] : memref<1x10x10x128xbf16, #tpu.memory_space<vmem>>, vector<1x8x8x128xbf16>
    %18 = vector.shape_cast %17 : vector<1x8x8x128xbf16> to vector<8x8x128xbf16>
    %19 = arith.extf %18 : vector<8x8x128xbf16> to vector<8x8x128xf32>
    %c2_13 = arith.constant 2 : index
    %c0_14 = arith.constant 0 : index
    %20 = vector.load %arg2[%c2_13, %c0_14] : memref<9x128xf32, #tpu.memory_space<vmem>>, vector<1x128xf32>
    %21 = vector.shape_cast %20 : vector<1x128xf32> to vector<1x1x128xf32>
    %22 = vector.broadcast %21 : vector<1x1x128xf32> to vector<8x8x128xf32>
    %23 = arith.mulf %19, %22 : vector<8x8x128xf32>
    %24 = arith.addf %16, %23 : vector<8x8x128xf32>
    %c0_15 = arith.constant 0 : index
    %c1_16 = arith.constant 1 : index
    %c0_17 = arith.constant 0 : index
    %c0_18 = arith.constant 0 : index
    %25 = vector.load %arg1[%c0_15, %c1_16, %c0_17, %c0_18] : memref<1x10x10x128xbf16, #tpu.memory_space<vmem>>, vector<1x8x8x128xbf16>
    %26 = vector.shape_cast %25 : vector<1x8x8x128xbf16> to vector<8x8x128xbf16>
    %27 = arith.extf %26 : vector<8x8x128xbf16> to vector<8x8x128xf32>
    %c3 = arith.constant 3 : index
    %c0_19 = arith.constant 0 : index
    %28 = vector.load %arg2[%c3, %c0_19] : memref<9x128xf32, #tpu.memory_space<vmem>>, vector<1x128xf32>
    %29 = vector.shape_cast %28 : vector<1x128xf32> to vector<1x1x128xf32>
    %30 = vector.broadcast %29 : vector<1x1x128xf32> to vector<8x8x128xf32>
    %31 = arith.mulf %27, %30 : vector<8x8x128xf32>
    %32 = arith.addf %24, %31 : vector<8x8x128xf32>
    %c0_20 = arith.constant 0 : index
    %c1_21 = arith.constant 1 : index
    %c1_22 = arith.constant 1 : index
    %c0_23 = arith.constant 0 : index
    %33 = vector.load %arg1[%c0_20, %c1_21, %c1_22, %c0_23] : memref<1x10x10x128xbf16, #tpu.memory_space<vmem>>, vector<1x8x8x128xbf16>
    %34 = vector.shape_cast %33 : vector<1x8x8x128xbf16> to vector<8x8x128xbf16>
    %35 = arith.extf %34 : vector<8x8x128xbf16> to vector<8x8x128xf32>
    %c4 = arith.constant 4 : index
    %c0_24 = arith.constant 0 : index
    %36 = vector.load %arg2[%c4, %c0_24] : memref<9x128xf32, #tpu.memory_space<vmem>>, vector<1x128xf32>
    %37 = vector.shape_cast %36 : vector<1x128xf32> to vector<1x1x128xf32>
    %38 = vector.broadcast %37 : vector<1x1x128xf32> to vector<8x8x128xf32>
    %39 = arith.mulf %35, %38 : vector<8x8x128xf32>
    %40 = arith.addf %32, %39 : vector<8x8x128xf32>
    %c0_25 = arith.constant 0 : index
    %c1_26 = arith.constant 1 : index
    %c2_27 = arith.constant 2 : index
    %c0_28 = arith.constant 0 : index
    %41 = vector.load %arg1[%c0_25, %c1_26, %c2_27, %c0_28] : memref<1x10x10x128xbf16, #tpu.memory_space<vmem>>, vector<1x8x8x128xbf16>
    %42 = vector.shape_cast %41 : vector<1x8x8x128xbf16> to vector<8x8x128xbf16>
    %43 = arith.extf %42 : vector<8x8x128xbf16> to vector<8x8x128xf32>
    %c5 = arith.constant 5 : index
    %c0_29 = arith.constant 0 : index
    %44 = vector.load %arg2[%c5, %c0_29] : memref<9x128xf32, #tpu.memory_space<vmem>>, vector<1x128xf32>
    %45 = vector.shape_cast %44 : vector<1x128xf32> to vector<1x1x128xf32>
    %46 = vector.broadcast %45 : vector<1x1x128xf32> to vector<8x8x128xf32>
    %47 = arith.mulf %43, %46 : vector<8x8x128xf32>
    %48 = arith.addf %40, %47 : vector<8x8x128xf32>
    %c0_30 = arith.constant 0 : index
    %c2_31 = arith.constant 2 : index
    %c0_32 = arith.constant 0 : index
    %c0_33 = arith.constant 0 : index
    %49 = vector.load %arg1[%c0_30, %c2_31, %c0_32, %c0_33] : memref<1x10x10x128xbf16, #tpu.memory_space<vmem>>, vector<1x8x8x128xbf16>
    %50 = vector.shape_cast %49 : vector<1x8x8x128xbf16> to vector<8x8x128xbf16>
    %51 = arith.extf %50 : vector<8x8x128xbf16> to vector<8x8x128xf32>
    %c6 = arith.constant 6 : index
    %c0_34 = arith.constant 0 : index
    %52 = vector.load %arg2[%c6, %c0_34] : memref<9x128xf32, #tpu.memory_space<vmem>>, vector<1x128xf32>
    %53 = vector.shape_cast %52 : vector<1x128xf32> to vector<1x1x128xf32>
    %54 = vector.broadcast %53 : vector<1x1x128xf32> to vector<8x8x128xf32>
    %55 = arith.mulf %51, %54 : vector<8x8x128xf32>
    %56 = arith.addf %48, %55 : vector<8x8x128xf32>
    %c0_35 = arith.constant 0 : index
    %c2_36 = arith.constant 2 : index
    %c1_37 = arith.constant 1 : index
    %c0_38 = arith.constant 0 : index
    %57 = vector.load %arg1[%c0_35, %c2_36, %c1_37, %c0_38] : memref<1x10x10x128xbf16, #tpu.memory_space<vmem>>, vector<1x8x8x128xbf16>
    %58 = vector.shape_cast %57 : vector<1x8x8x128xbf16> to vector<8x8x128xbf16>
    %59 = arith.extf %58 : vector<8x8x128xbf16> to vector<8x8x128xf32>
    %c7 = arith.constant 7 : index
    %c0_39 = arith.constant 0 : index
    %60 = vector.load %arg2[%c7, %c0_39] : memref<9x128xf32, #tpu.memory_space<vmem>>, vector<1x128xf32>
    %61 = vector.shape_cast %60 : vector<1x128xf32> to vector<1x1x128xf32>
    %62 = vector.broadcast %61 : vector<1x1x128xf32> to vector<8x8x128xf32>
    %63 = arith.mulf %59, %62 : vector<8x8x128xf32>
    %64 = arith.addf %56, %63 : vector<8x8x128xf32>
    %c0_40 = arith.constant 0 : index
    %c2_41 = arith.constant 2 : index
    %c2_42 = arith.constant 2 : index
    %c0_43 = arith.constant 0 : index
    %65 = vector.load %arg1[%c0_40, %c2_41, %c2_42, %c0_43] : memref<1x10x10x128xbf16, #tpu.memory_space<vmem>>, vector<1x8x8x128xbf16>
    %66 = vector.shape_cast %65 : vector<1x8x8x128xbf16> to vector<8x8x128xbf16>
    %67 = arith.extf %66 : vector<8x8x128xbf16> to vector<8x8x128xf32>
    %c8 = arith.constant 8 : index
    %c0_44 = arith.constant 0 : index
    %68 = vector.load %arg2[%c8, %c0_44] : memref<9x128xf32, #tpu.memory_space<vmem>>, vector<1x128xf32>
    %69 = vector.shape_cast %68 : vector<1x128xf32> to vector<1x1x128xf32>
    %70 = vector.broadcast %69 : vector<1x1x128xf32> to vector<8x8x128xf32>
    %71 = arith.mulf %67, %70 : vector<8x8x128xf32>
    %72 = arith.addf %64, %71 : vector<8x8x128xf32>
    %c0_45 = arith.constant 0 : index
    %c0_46 = arith.constant 0 : index
    %73 = vector.load %arg3[%c0_45, %c0_46] : memref<1x128xf32, #tpu.memory_space<vmem>>, vector<1x128xf32>
    %74 = vector.shape_cast %73 : vector<1x128xf32> to vector<1x1x128xf32>
    %75 = vector.broadcast %74 : vector<1x1x128xf32> to vector<8x8x128xf32>
    %76 = arith.mulf %72, %75 : vector<8x8x128xf32>
    %c0_47 = arith.constant 0 : index
    %c0_48 = arith.constant 0 : index
    %77 = vector.load %arg4[%c0_47, %c0_48] : memref<1x128xf32, #tpu.memory_space<vmem>>, vector<1x128xf32>
    %78 = vector.shape_cast %77 : vector<1x128xf32> to vector<1x1x128xf32>
    %79 = vector.broadcast %78 : vector<1x1x128xf32> to vector<8x8x128xf32>
    %80 = arith.addf %76, %79 : vector<8x8x128xf32>
    %81 = arith.negf %80 : vector<8x8x128xf32>
    %82 = math.exp %81 : vector<8x8x128xf32>
    %cst_49 = arith.constant 1.000000e+00 : f32
    %83 = vector.broadcast %cst_49 : f32 to vector<8x8x128xf32>
    %84 = arith.addf %83, %82 : vector<8x8x128xf32>
    %85 = arith.divf %83, %84 : vector<8x8x128xf32>
    %86 = arith.mulf %80, %85 : vector<8x8x128xf32>
    %87 = arith.truncf %86 : vector<8x8x128xf32> to vector<8x8x128xbf16>
    %c0_50 = arith.constant 0 : index
    %c0_51 = arith.constant 0 : index
    %c0_52 = arith.constant 0 : index
    %c0_53 = arith.constant 0 : index
    %88 = vector.load %arg5[%c0_50, %c0_51, %c0_52, %c0_53] : memref<1x8x8x128xbf16, #tpu.memory_space<vmem>>, vector<1x8x8x128xbf16>
    %89 = vector.shape_cast %88 : vector<1x8x8x128xbf16> to vector<8x8x128xbf16>
    %90 = vector.shape_cast %87 : vector<8x8x128xbf16> to vector<1x8x8x128xbf16>
    tpu.vector_store %arg5[%c0_50, %c0_51, %c0_52, %c0_53], %90 {strides = array<i32>} : memref<1x8x8x128xbf16, #tpu.memory_space<vmem>>, vector<1x8x8x128xbf16>,
    %cst_54 = arith.constant dense<0.000000e+00> : vector<128xf32>
    %91 = vector.multi_reduction <add>, %86, %cst_54 [0, 1] : vector<8x8x128xf32> to vector<128xf32>
    %92 = vector.shape_cast %91 : vector<128xf32> to vector<1x1x128xf32>
    %cst_55 = arith.constant 1.562500e-02 : f32
    %93 = vector.broadcast %cst_55 : f32 to vector<1x1x128xf32>
    %94 = arith.mulf %92, %93 : vector<1x1x128xf32>
    %c0_56 = arith.constant 0 : index
    %c0_57 = arith.constant 0 : index
    %c0_58 = arith.constant 0 : index
    %95 = vector.load %arg6[%c0_56, %c0_57, %c0_58] : memref<1x1x128xf32, #tpu.memory_space<vmem>>, vector<1x1x128xf32>
    tpu.vector_store %arg6[%c0_56, %c0_57, %c0_58], %94 {strides = array<i32>} : memref<1x1x128xf32, #tpu.memory_space<vmem>>, vector<1x1x128xf32>,
    return
  }
  func.func @transform_0(%arg0: i32) -> (i32, i32, i32, i32) {
    %c0_i32 = arith.constant 0 : i32
    %c0_i32_0 = arith.constant 0 : i32
    %c0_i32_1 = arith.constant 0 : i32
    %c0_i32_2 = arith.constant 0 : i32
    return %arg0, %c0_i32, %c0_i32_0, %c0_i32_1 : i32, i32, i32, i32
  }
  func.func @transform_1(%arg0: i32) -> (i32, i32) {
    %c0_i32 = arith.constant 0 : i32
    %c0_i32_0 = arith.constant 0 : i32
    %c0_i32_1 = arith.constant 0 : i32
    return %c0_i32, %c0_i32_0 : i32, i32
  }
  func.func @transform_2(%arg0: i32) -> (i32, i32) {
    %c0_i32 = arith.constant 0 : i32
    %c0_i32_0 = arith.constant 0 : i32
    %c0_i32_1 = arith.constant 0 : i32
    return %c0_i32, %c0_i32_0 : i32, i32
  }
  func.func @transform_3(%arg0: i32) -> (i32, i32) {
    %c0_i32 = arith.constant 0 : i32
    %c0_i32_0 = arith.constant 0 : i32
    %c0_i32_1 = arith.constant 0 : i32
    return %c0_i32, %c0_i32_0 : i32, i32
  }
  func.func @transform_4(%arg0: i32) -> (i32, i32, i32, i32) {
    %c0_i32 = arith.constant 0 : i32
    %c0_i32_0 = arith.constant 0 : i32
    %c0_i32_1 = arith.constant 0 : i32
    %c0_i32_2 = arith.constant 0 : i32
    return %arg0, %c0_i32, %c0_i32_0, %c0_i32_1 : i32, i32, i32, i32
  }
  func.func @transform_5(%arg0: i32) -> (i32, i32, i32) {
    %c0_i32 = arith.constant 0 : i32
    %c0_i32_0 = arith.constant 0 : i32
    %c0_i32_1 = arith.constant 0 : i32
    return %arg0, %c0_i32, %c0_i32_0 : i32, i32, i32
  }
}

module attributes {stable_mosaic.version = 11 : i64} {
  func.func @_se_mlp_kernel(%arg0: i32, %arg1: memref<2x128xf32, #tpu.memory_space<vmem>>, %arg2: memref<128x128xf32, #tpu.memory_space<vmem>>, %arg3: memref<1x128xf32, #tpu.memory_space<vmem>>, %arg4: memref<128x128xf32, #tpu.memory_space<vmem>>, %arg5: memref<1x128xf32, #tpu.memory_space<vmem>>, %arg6: memref<2x128xf32, #tpu.memory_space<vmem>>) attributes {dimension_semantics = [#tpu.dimension_semantics<arbitrary>], iteration_bounds = array<i64: 1>, scalar_prefetch = 0 : i64, scratch_operands = 0 : i64, tpu.core_type = #tpu.core_type<tc>, window_params = [{pipeline_mode = #tpu.pipeline_mode<synchronous>, transform_indices = @transform_0, window_bounds = array<i64: 2, 128>}, {pipeline_mode = #tpu.pipeline_mode<synchronous>, transform_indices = @transform_1, window_bounds = array<i64: 128, 128>}, {pipeline_mode = #tpu.pipeline_mode<synchronous>, transform_indices = @transform_2, window_bounds = array<i64: 1, 128>}, {pipeline_mode = #tpu.pipeline_mode<synchronous>, transform_indices = @transform_3, window_bounds = array<i64: 128, 128>}, {pipeline_mode = #tpu.pipeline_mode<synchronous>, transform_indices = @transform_4, window_bounds = array<i64: 1, 128>}, {pipeline_mode = #tpu.pipeline_mode<synchronous>, transform_indices = @transform_5, window_bounds = array<i64: 2, 128>}]} {
    %c0 = arith.constant 0 : index
    %c0_0 = arith.constant 0 : index
    %0 = vector.load %arg1[%c0, %c0_0] : memref<2x128xf32, #tpu.memory_space<vmem>>, vector<2x128xf32>
    %c0_1 = arith.constant 0 : index
    %c0_2 = arith.constant 0 : index
    %1 = vector.load %arg2[%c0_1, %c0_2] : memref<128x128xf32, #tpu.memory_space<vmem>>, vector<128x128xf32>
    %cst = arith.constant dense<0.000000e+00> : vector<2x128xf32>
    %2 = tpu.matmul %0, %1, %cst {dimension_numbers = #tpu.dot_dimension_numbers<[1], [0], [0], [1], [0, 0, 1, 1], [], []>} : vector<2x128xf32>, vector<128x128xf32>, vector<2x128xf32> -> vector<2x128xf32>
    %c0_3 = arith.constant 0 : index
    %c0_4 = arith.constant 0 : index
    %3 = vector.load %arg3[%c0_3, %c0_4] : memref<1x128xf32, #tpu.memory_space<vmem>>, vector<1x128xf32>
    %4 = vector.broadcast %3 : vector<1x128xf32> to vector<2x128xf32>
    %5 = arith.addf %2, %4 : vector<2x128xf32>
    %6 = arith.negf %5 : vector<2x128xf32>
    %7 = math.exp %6 : vector<2x128xf32>
    %cst_5 = arith.constant 1.000000e+00 : f32
    %8 = vector.broadcast %cst_5 : f32 to vector<2x128xf32>
    %9 = arith.addf %8, %7 : vector<2x128xf32>
    %10 = arith.divf %8, %9 : vector<2x128xf32>
    %11 = arith.mulf %5, %10 : vector<2x128xf32>
    %c0_6 = arith.constant 0 : index
    %c0_7 = arith.constant 0 : index
    %12 = vector.load %arg4[%c0_6, %c0_7] : memref<128x128xf32, #tpu.memory_space<vmem>>, vector<128x128xf32>
    %cst_8 = arith.constant dense<0.000000e+00> : vector<2x128xf32>
    %13 = tpu.matmul %11, %12, %cst_8 {dimension_numbers = #tpu.dot_dimension_numbers<[1], [0], [0], [1], [0, 0, 1, 1], [], []>} : vector<2x128xf32>, vector<128x128xf32>, vector<2x128xf32> -> vector<2x128xf32>
    %c0_9 = arith.constant 0 : index
    %c0_10 = arith.constant 0 : index
    %14 = vector.load %arg5[%c0_9, %c0_10] : memref<1x128xf32, #tpu.memory_space<vmem>>, vector<1x128xf32>
    %15 = vector.broadcast %14 : vector<1x128xf32> to vector<2x128xf32>
    %16 = arith.addf %13, %15 : vector<2x128xf32>
    %17 = arith.negf %16 : vector<2x128xf32>
    %18 = math.exp %17 : vector<2x128xf32>
    %cst_11 = arith.constant 1.000000e+00 : f32
    %19 = vector.broadcast %cst_11 : f32 to vector<2x128xf32>
    %20 = arith.addf %19, %18 : vector<2x128xf32>
    %21 = arith.divf %19, %20 : vector<2x128xf32>
    %c0_12 = arith.constant 0 : index
    %c0_13 = arith.constant 0 : index
    %22 = vector.load %arg6[%c0_12, %c0_13] : memref<2x128xf32, #tpu.memory_space<vmem>>, vector<2x128xf32>
    tpu.vector_store %arg6[%c0_12, %c0_13], %21 {strides = array<i32>} : memref<2x128xf32, #tpu.memory_space<vmem>>, vector<2x128xf32>,
    return
  }
  func.func @transform_0(%arg0: i32) -> (i32, i32) {
    %c0_i32 = arith.constant 0 : i32
    %c0_i32_0 = arith.constant 0 : i32
    %c0_i32_1 = arith.constant 0 : i32
    return %c0_i32, %c0_i32_0 : i32, i32
  }
  func.func @transform_1(%arg0: i32) -> (i32, i32) {
    %c0_i32 = arith.constant 0 : i32
    %c0_i32_0 = arith.constant 0 : i32
    %c0_i32_1 = arith.constant 0 : i32
    return %c0_i32, %c0_i32_0 : i32, i32
  }
  func.func @transform_2(%arg0: i32) -> (i32, i32) {
    %c0_i32 = arith.constant 0 : i32
    %c0_i32_0 = arith.constant 0 : i32
    %c0_i32_1 = arith.constant 0 : i32
    return %c0_i32, %c0_i32_0 : i32, i32
  }
  func.func @transform_3(%arg0: i32) -> (i32, i32) {
    %c0_i32 = arith.constant 0 : i32
    %c0_i32_0 = arith.constant 0 : i32
    %c0_i32_1 = arith.constant 0 : i32
    return %c0_i32, %c0_i32_0 : i32, i32
  }
  func.func @transform_4(%arg0: i32) -> (i32, i32) {
    %c0_i32 = arith.constant 0 : i32
    %c0_i32_0 = arith.constant 0 : i32
    %c0_i32_1 = arith.constant 0 : i32
    return %c0_i32, %c0_i32_0 : i32, i32
  }
  func.func @transform_5(%arg0: i32) -> (i32, i32) {
    %c0_i32 = arith.constant 0 : i32
    %c0_i32_0 = arith.constant 0 : i32
    %c0_i32_1 = arith.constant 0 : i32
    return %c0_i32, %c0_i32_0 : i32, i32
  }
}

module attributes {stable_mosaic.version = 11 : i64} {
  func.func @_pw_kernel(%arg0: i32, %arg1: i32, %arg2: memref<1x64x128xbf16, #tpu.memory_space<vmem>>, %arg3: memref<128x128xbf16, #tpu.memory_space<vmem>>, %arg4: memref<1x128xf32, #tpu.memory_space<vmem>>, %arg5: memref<1x128xf32, #tpu.memory_space<vmem>>, %arg6: memref<1x1x128xf32, #tpu.memory_space<vmem>>, %arg7: memref<1x64x128xbf16, #tpu.memory_space<vmem>>, %arg8: memref<1x64x128xbf16, #tpu.memory_space<vmem>>) attributes {dimension_semantics = [#tpu.dimension_semantics<parallel>, #tpu.dimension_semantics<parallel>], iteration_bounds = array<i64: 2, 1>, scalar_prefetch = 0 : i64, scratch_operands = 0 : i64, tpu.core_type = #tpu.core_type<tc>, window_params = [{transform_indices = @transform_0, window_bounds = array<i64: 1, 64, 128>}, {pipeline_mode = #tpu.pipeline_mode<synchronous>, transform_indices = @transform_1, window_bounds = array<i64: 128, 128>}, {pipeline_mode = #tpu.pipeline_mode<synchronous>, transform_indices = @transform_2, window_bounds = array<i64: 1, 128>}, {pipeline_mode = #tpu.pipeline_mode<synchronous>, transform_indices = @transform_3, window_bounds = array<i64: 1, 128>}, {transform_indices = @transform_4, window_bounds = array<i64: 1, 1, 128>}, {transform_indices = @transform_5, window_bounds = array<i64: 1, 64, 128>}, {transform_indices = @transform_6, window_bounds = array<i64: 1, 64, 128>}]} {
    %c0 = arith.constant 0 : index
    %c0_0 = arith.constant 0 : index
    %c0_1 = arith.constant 0 : index
    %0 = vector.load %arg2[%c0, %c0_0, %c0_1] : memref<1x64x128xbf16, #tpu.memory_space<vmem>>, vector<1x64x128xbf16>
    %1 = vector.shape_cast %0 : vector<1x64x128xbf16> to vector<64x128xbf16>
    %2 = arith.extf %1 : vector<64x128xbf16> to vector<64x128xf32>
    %c0_2 = arith.constant 0 : index
    %c0_3 = arith.constant 0 : index
    %c0_4 = arith.constant 0 : index
    %3 = vector.load %arg6[%c0_2, %c0_3, %c0_4] : memref<1x1x128xf32, #tpu.memory_space<vmem>>, vector<1x1x128xf32>
    %4 = vector.shape_cast %3 : vector<1x1x128xf32> to vector<1x128xf32>
    %5 = vector.broadcast %4 : vector<1x128xf32> to vector<64x128xf32>
    %6 = arith.mulf %2, %5 : vector<64x128xf32>
    %7 = arith.truncf %6 : vector<64x128xf32> to vector<64x128xbf16>
    %c0_5 = arith.constant 0 : index
    %c0_6 = arith.constant 0 : index
    %8 = vector.load %arg3[%c0_5, %c0_6] : memref<128x128xbf16, #tpu.memory_space<vmem>>, vector<128x128xbf16>
    %cst = arith.constant dense<0.000000e+00> : vector<64x128xf32>
    %9 = tpu.matmul %7, %8, %cst {dimension_numbers = #tpu.dot_dimension_numbers<[1], [0], [0], [1], [0, 0, 1, 1], [], []>} : vector<64x128xbf16>, vector<128x128xbf16>, vector<64x128xf32> -> vector<64x128xf32>
    %c0_7 = arith.constant 0 : index
    %c0_8 = arith.constant 0 : index
    %10 = vector.load %arg4[%c0_7, %c0_8] : memref<1x128xf32, #tpu.memory_space<vmem>>, vector<1x128xf32>
    %11 = vector.broadcast %10 : vector<1x128xf32> to vector<64x128xf32>
    %12 = arith.mulf %9, %11 : vector<64x128xf32>
    %c0_9 = arith.constant 0 : index
    %c0_10 = arith.constant 0 : index
    %13 = vector.load %arg5[%c0_9, %c0_10] : memref<1x128xf32, #tpu.memory_space<vmem>>, vector<1x128xf32>
    %14 = vector.broadcast %13 : vector<1x128xf32> to vector<64x128xf32>
    %15 = arith.addf %12, %14 : vector<64x128xf32>
    %c0_11 = arith.constant 0 : index
    %c0_12 = arith.constant 0 : index
    %c0_13 = arith.constant 0 : index
    %16 = vector.load %arg7[%c0_11, %c0_12, %c0_13] : memref<1x64x128xbf16, #tpu.memory_space<vmem>>, vector<1x64x128xbf16>
    %17 = vector.shape_cast %16 : vector<1x64x128xbf16> to vector<64x128xbf16>
    %18 = arith.extf %17 : vector<64x128xbf16> to vector<64x128xf32>
    %19 = arith.addf %15, %18 : vector<64x128xf32>
    %20 = arith.truncf %19 : vector<64x128xf32> to vector<64x128xbf16>
    %c0_14 = arith.constant 0 : index
    %c0_15 = arith.constant 0 : index
    %c0_16 = arith.constant 0 : index
    %21 = vector.load %arg8[%c0_14, %c0_15, %c0_16] : memref<1x64x128xbf16, #tpu.memory_space<vmem>>, vector<1x64x128xbf16>
    %22 = vector.shape_cast %21 : vector<1x64x128xbf16> to vector<64x128xbf16>
    %23 = vector.shape_cast %20 : vector<64x128xbf16> to vector<1x64x128xbf16>
    tpu.vector_store %arg8[%c0_14, %c0_15, %c0_16], %23 {strides = array<i32>} : memref<1x64x128xbf16, #tpu.memory_space<vmem>>, vector<1x64x128xbf16>,
    return
  }
  func.func @transform_0(%arg0: i32, %arg1: i32) -> (i32, i32, i32) {
    %c0_i32 = arith.constant 0 : i32
    %c0_i32_0 = arith.constant 0 : i32
    return %arg0, %arg1, %c0_i32 : i32, i32, i32
  }
  func.func @transform_1(%arg0: i32, %arg1: i32) -> (i32, i32) {
    %c0_i32 = arith.constant 0 : i32
    %c0_i32_0 = arith.constant 0 : i32
    %c0_i32_1 = arith.constant 0 : i32
    return %c0_i32, %c0_i32_0 : i32, i32
  }
  func.func @transform_2(%arg0: i32, %arg1: i32) -> (i32, i32) {
    %c0_i32 = arith.constant 0 : i32
    %c0_i32_0 = arith.constant 0 : i32
    %c0_i32_1 = arith.constant 0 : i32
    return %c0_i32, %c0_i32_0 : i32, i32
  }
  func.func @transform_3(%arg0: i32, %arg1: i32) -> (i32, i32) {
    %c0_i32 = arith.constant 0 : i32
    %c0_i32_0 = arith.constant 0 : i32
    %c0_i32_1 = arith.constant 0 : i32
    return %c0_i32, %c0_i32_0 : i32, i32
  }
  func.func @transform_4(%arg0: i32, %arg1: i32) -> (i32, i32, i32) {
    %c0_i32 = arith.constant 0 : i32
    %c0_i32_0 = arith.constant 0 : i32
    %c0_i32_1 = arith.constant 0 : i32
    return %arg0, %c0_i32, %c0_i32_0 : i32, i32, i32
  }
  func.func @transform_5(%arg0: i32, %arg1: i32) -> (i32, i32, i32) {
    %c0_i32 = arith.constant 0 : i32
    %c0_i32_0 = arith.constant 0 : i32
    return %arg0, %arg1, %c0_i32 : i32, i32, i32
  }
  func.func @transform_6(%arg0: i32, %arg1: i32) -> (i32, i32, i32) {
    %c0_i32 = arith.constant 0 : i32
    %c0_i32_0 = arith.constant 0 : i32
    return %arg0, %arg1, %c0_i32 : i32, i32, i32
  }
}

module attributes {stable_mosaic.version = 11 : i64} {
  func.func @_dw_kernel(%arg0: i32, %arg1: memref<1x20x5x128xbf16, #tpu.memory_space<vmem>>, %arg2: memref<9x128xf32, #tpu.memory_space<vmem>>, %arg3: memref<1x128xf32, #tpu.memory_space<vmem>>, %arg4: memref<1x128xf32, #tpu.memory_space<vmem>>, %arg5: memref<1x4x4x128xbf16, #tpu.memory_space<vmem>>, %arg6: memref<1x1x128xf32, #tpu.memory_space<vmem>>) attributes {dimension_semantics = [#tpu.dimension_semantics<parallel>], iteration_bounds = array<i64: 2>, scalar_prefetch = 0 : i64, scratch_operands = 0 : i64, tpu.core_type = #tpu.core_type<tc>, window_params = [{transform_indices = @transform_0, window_bounds = array<i64: 1, 20, 5, 128>}, {pipeline_mode = #tpu.pipeline_mode<synchronous>, transform_indices = @transform_1, window_bounds = array<i64: 9, 128>}, {pipeline_mode = #tpu.pipeline_mode<synchronous>, transform_indices = @transform_2, window_bounds = array<i64: 1, 128>}, {pipeline_mode = #tpu.pipeline_mode<synchronous>, transform_indices = @transform_3, window_bounds = array<i64: 1, 128>}, {transform_indices = @transform_4, window_bounds = array<i64: 1, 4, 4, 128>}, {transform_indices = @transform_5, window_bounds = array<i64: 1, 1, 128>}]} {
    %cst = arith.constant 0.000000e+00 : f32
    %0 = vector.broadcast %cst : f32 to vector<4x4x128xf32>
    %c0 = arith.constant 0 : index
    %c0_0 = arith.constant 0 : index
    %c0_1 = arith.constant 0 : index
    %c0_2 = arith.constant 0 : index
    %1 = vector.load %arg1[%c0, %c0_0, %c0_1, %c0_2] : memref<1x20x5x128xbf16, #tpu.memory_space<vmem>>, vector<1x4x4x128xbf16>
    %2 = vector.shape_cast %1 : vector<1x4x4x128xbf16> to vector<4x4x128xbf16>
    %3 = arith.extf %2 : vector<4x4x128xbf16> to vector<4x4x128xf32>
    %c0_3 = arith.constant 0 : index
    %c0_4 = arith.constant 0 : index
    %4 = vector.load %arg2[%c0_3, %c0_4] : memref<9x128xf32, #tpu.memory_space<vmem>>, vector<1x128xf32>
    %5 = vector.shape_cast %4 : vector<1x128xf32> to vector<1x1x128xf32>
    %6 = vector.broadcast %5 : vector<1x1x128xf32> to vector<4x4x128xf32>
    %7 = arith.mulf %3, %6 : vector<4x4x128xf32>
    %8 = arith.addf %0, %7 : vector<4x4x128xf32>
    %c0_5 = arith.constant 0 : index
    %c5 = arith.constant 5 : index
    %c0_6 = arith.constant 0 : index
    %c0_7 = arith.constant 0 : index
    %9 = vector.load %arg1[%c0_5, %c5, %c0_6, %c0_7] : memref<1x20x5x128xbf16, #tpu.memory_space<vmem>>, vector<1x4x4x128xbf16>
    %10 = vector.shape_cast %9 : vector<1x4x4x128xbf16> to vector<4x4x128xbf16>
    %11 = arith.extf %10 : vector<4x4x128xbf16> to vector<4x4x128xf32>
    %c1 = arith.constant 1 : index
    %c0_8 = arith.constant 0 : index
    %12 = vector.load %arg2[%c1, %c0_8] : memref<9x128xf32, #tpu.memory_space<vmem>>, vector<1x128xf32>
    %13 = vector.shape_cast %12 : vector<1x128xf32> to vector<1x1x128xf32>
    %14 = vector.broadcast %13 : vector<1x1x128xf32> to vector<4x4x128xf32>
    %15 = arith.mulf %11, %14 : vector<4x4x128xf32>
    %16 = arith.addf %8, %15 : vector<4x4x128xf32>
    %c0_9 = arith.constant 0 : index
    %c0_10 = arith.constant 0 : index
    %c1_11 = arith.constant 1 : index
    %c0_12 = arith.constant 0 : index
    %17 = vector.load %arg1[%c0_9, %c0_10, %c1_11, %c0_12] : memref<1x20x5x128xbf16, #tpu.memory_space<vmem>>, vector<1x4x4x128xbf16>
    %18 = vector.shape_cast %17 : vector<1x4x4x128xbf16> to vector<4x4x128xbf16>
    %19 = arith.extf %18 : vector<4x4x128xbf16> to vector<4x4x128xf32>
    %c2 = arith.constant 2 : index
    %c0_13 = arith.constant 0 : index
    %20 = vector.load %arg2[%c2, %c0_13] : memref<9x128xf32, #tpu.memory_space<vmem>>, vector<1x128xf32>
    %21 = vector.shape_cast %20 : vector<1x128xf32> to vector<1x1x128xf32>
    %22 = vector.broadcast %21 : vector<1x1x128xf32> to vector<4x4x128xf32>
    %23 = arith.mulf %19, %22 : vector<4x4x128xf32>
    %24 = arith.addf %16, %23 : vector<4x4x128xf32>
    %c0_14 = arith.constant 0 : index
    %c10 = arith.constant 10 : index
    %c0_15 = arith.constant 0 : index
    %c0_16 = arith.constant 0 : index
    %25 = vector.load %arg1[%c0_14, %c10, %c0_15, %c0_16] : memref<1x20x5x128xbf16, #tpu.memory_space<vmem>>, vector<1x4x4x128xbf16>
    %26 = vector.shape_cast %25 : vector<1x4x4x128xbf16> to vector<4x4x128xbf16>
    %27 = arith.extf %26 : vector<4x4x128xbf16> to vector<4x4x128xf32>
    %c3 = arith.constant 3 : index
    %c0_17 = arith.constant 0 : index
    %28 = vector.load %arg2[%c3, %c0_17] : memref<9x128xf32, #tpu.memory_space<vmem>>, vector<1x128xf32>
    %29 = vector.shape_cast %28 : vector<1x128xf32> to vector<1x1x128xf32>
    %30 = vector.broadcast %29 : vector<1x1x128xf32> to vector<4x4x128xf32>
    %31 = arith.mulf %27, %30 : vector<4x4x128xf32>
    %32 = arith.addf %24, %31 : vector<4x4x128xf32>
    %c0_18 = arith.constant 0 : index
    %c15 = arith.constant 15 : index
    %c0_19 = arith.constant 0 : index
    %c0_20 = arith.constant 0 : index
    %33 = vector.load %arg1[%c0_18, %c15, %c0_19, %c0_20] : memref<1x20x5x128xbf16, #tpu.memory_space<vmem>>, vector<1x4x4x128xbf16>
    %34 = vector.shape_cast %33 : vector<1x4x4x128xbf16> to vector<4x4x128xbf16>
    %35 = arith.extf %34 : vector<4x4x128xbf16> to vector<4x4x128xf32>
    %c4 = arith.constant 4 : index
    %c0_21 = arith.constant 0 : index
    %36 = vector.load %arg2[%c4, %c0_21] : memref<9x128xf32, #tpu.memory_space<vmem>>, vector<1x128xf32>
    %37 = vector.shape_cast %36 : vector<1x128xf32> to vector<1x1x128xf32>
    %38 = vector.broadcast %37 : vector<1x1x128xf32> to vector<4x4x128xf32>
    %39 = arith.mulf %35, %38 : vector<4x4x128xf32>
    %40 = arith.addf %32, %39 : vector<4x4x128xf32>
    %c0_22 = arith.constant 0 : index
    %c10_23 = arith.constant 10 : index
    %c1_24 = arith.constant 1 : index
    %c0_25 = arith.constant 0 : index
    %41 = vector.load %arg1[%c0_22, %c10_23, %c1_24, %c0_25] : memref<1x20x5x128xbf16, #tpu.memory_space<vmem>>, vector<1x4x4x128xbf16>
    %42 = vector.shape_cast %41 : vector<1x4x4x128xbf16> to vector<4x4x128xbf16>
    %43 = arith.extf %42 : vector<4x4x128xbf16> to vector<4x4x128xf32>
    %c5_26 = arith.constant 5 : index
    %c0_27 = arith.constant 0 : index
    %44 = vector.load %arg2[%c5_26, %c0_27] : memref<9x128xf32, #tpu.memory_space<vmem>>, vector<1x128xf32>
    %45 = vector.shape_cast %44 : vector<1x128xf32> to vector<1x1x128xf32>
    %46 = vector.broadcast %45 : vector<1x1x128xf32> to vector<4x4x128xf32>
    %47 = arith.mulf %43, %46 : vector<4x4x128xf32>
    %48 = arith.addf %40, %47 : vector<4x4x128xf32>
    %c0_28 = arith.constant 0 : index
    %c1_29 = arith.constant 1 : index
    %c0_30 = arith.constant 0 : index
    %c0_31 = arith.constant 0 : index
    %49 = vector.load %arg1[%c0_28, %c1_29, %c0_30, %c0_31] : memref<1x20x5x128xbf16, #tpu.memory_space<vmem>>, vector<1x4x4x128xbf16>
    %50 = vector.shape_cast %49 : vector<1x4x4x128xbf16> to vector<4x4x128xbf16>
    %51 = arith.extf %50 : vector<4x4x128xbf16> to vector<4x4x128xf32>
    %c6 = arith.constant 6 : index
    %c0_32 = arith.constant 0 : index
    %52 = vector.load %arg2[%c6, %c0_32] : memref<9x128xf32, #tpu.memory_space<vmem>>, vector<1x128xf32>
    %53 = vector.shape_cast %52 : vector<1x128xf32> to vector<1x1x128xf32>
    %54 = vector.broadcast %53 : vector<1x1x128xf32> to vector<4x4x128xf32>
    %55 = arith.mulf %51, %54 : vector<4x4x128xf32>
    %56 = arith.addf %48, %55 : vector<4x4x128xf32>
    %c0_33 = arith.constant 0 : index
    %c6_34 = arith.constant 6 : index
    %c0_35 = arith.constant 0 : index
    %c0_36 = arith.constant 0 : index
    %57 = vector.load %arg1[%c0_33, %c6_34, %c0_35, %c0_36] : memref<1x20x5x128xbf16, #tpu.memory_space<vmem>>, vector<1x4x4x128xbf16>
    %58 = vector.shape_cast %57 : vector<1x4x4x128xbf16> to vector<4x4x128xbf16>
    %59 = arith.extf %58 : vector<4x4x128xbf16> to vector<4x4x128xf32>
    %c7 = arith.constant 7 : index
    %c0_37 = arith.constant 0 : index
    %60 = vector.load %arg2[%c7, %c0_37] : memref<9x128xf32, #tpu.memory_space<vmem>>, vector<1x128xf32>
    %61 = vector.shape_cast %60 : vector<1x128xf32> to vector<1x1x128xf32>
    %62 = vector.broadcast %61 : vector<1x1x128xf32> to vector<4x4x128xf32>
    %63 = arith.mulf %59, %62 : vector<4x4x128xf32>
    %64 = arith.addf %56, %63 : vector<4x4x128xf32>
    %c0_38 = arith.constant 0 : index
    %c1_39 = arith.constant 1 : index
    %c1_40 = arith.constant 1 : index
    %c0_41 = arith.constant 0 : index
    %65 = vector.load %arg1[%c0_38, %c1_39, %c1_40, %c0_41] : memref<1x20x5x128xbf16, #tpu.memory_space<vmem>>, vector<1x4x4x128xbf16>
    %66 = vector.shape_cast %65 : vector<1x4x4x128xbf16> to vector<4x4x128xbf16>
    %67 = arith.extf %66 : vector<4x4x128xbf16> to vector<4x4x128xf32>
    %c8 = arith.constant 8 : index
    %c0_42 = arith.constant 0 : index
    %68 = vector.load %arg2[%c8, %c0_42] : memref<9x128xf32, #tpu.memory_space<vmem>>, vector<1x128xf32>
    %69 = vector.shape_cast %68 : vector<1x128xf32> to vector<1x1x128xf32>
    %70 = vector.broadcast %69 : vector<1x1x128xf32> to vector<4x4x128xf32>
    %71 = arith.mulf %67, %70 : vector<4x4x128xf32>
    %72 = arith.addf %64, %71 : vector<4x4x128xf32>
    %c0_43 = arith.constant 0 : index
    %c0_44 = arith.constant 0 : index
    %73 = vector.load %arg3[%c0_43, %c0_44] : memref<1x128xf32, #tpu.memory_space<vmem>>, vector<1x128xf32>
    %74 = vector.shape_cast %73 : vector<1x128xf32> to vector<1x1x128xf32>
    %75 = vector.broadcast %74 : vector<1x1x128xf32> to vector<4x4x128xf32>
    %76 = arith.mulf %72, %75 : vector<4x4x128xf32>
    %c0_45 = arith.constant 0 : index
    %c0_46 = arith.constant 0 : index
    %77 = vector.load %arg4[%c0_45, %c0_46] : memref<1x128xf32, #tpu.memory_space<vmem>>, vector<1x128xf32>
    %78 = vector.shape_cast %77 : vector<1x128xf32> to vector<1x1x128xf32>
    %79 = vector.broadcast %78 : vector<1x1x128xf32> to vector<4x4x128xf32>
    %80 = arith.addf %76, %79 : vector<4x4x128xf32>
    %81 = arith.negf %80 : vector<4x4x128xf32>
    %82 = math.exp %81 : vector<4x4x128xf32>
    %cst_47 = arith.constant 1.000000e+00 : f32
    %83 = vector.broadcast %cst_47 : f32 to vector<4x4x128xf32>
    %84 = arith.addf %83, %82 : vector<4x4x128xf32>
    %85 = arith.divf %83, %84 : vector<4x4x128xf32>
    %86 = arith.mulf %80, %85 : vector<4x4x128xf32>
    %87 = arith.truncf %86 : vector<4x4x128xf32> to vector<4x4x128xbf16>
    %c0_48 = arith.constant 0 : index
    %c0_49 = arith.constant 0 : index
    %c0_50 = arith.constant 0 : index
    %c0_51 = arith.constant 0 : index
    %88 = vector.load %arg5[%c0_48, %c0_49, %c0_50, %c0_51] : memref<1x4x4x128xbf16, #tpu.memory_space<vmem>>, vector<1x4x4x128xbf16>
    %89 = vector.shape_cast %88 : vector<1x4x4x128xbf16> to vector<4x4x128xbf16>
    %90 = vector.shape_cast %87 : vector<4x4x128xbf16> to vector<1x4x4x128xbf16>
    tpu.vector_store %arg5[%c0_48, %c0_49, %c0_50, %c0_51], %90 {strides = array<i32>} : memref<1x4x4x128xbf16, #tpu.memory_space<vmem>>, vector<1x4x4x128xbf16>,
    %cst_52 = arith.constant dense<0.000000e+00> : vector<128xf32>
    %91 = vector.multi_reduction <add>, %86, %cst_52 [0, 1] : vector<4x4x128xf32> to vector<128xf32>
    %92 = vector.shape_cast %91 : vector<128xf32> to vector<1x1x128xf32>
    %cst_53 = arith.constant 6.250000e-02 : f32
    %93 = vector.broadcast %cst_53 : f32 to vector<1x1x128xf32>
    %94 = arith.mulf %92, %93 : vector<1x1x128xf32>
    %c0_54 = arith.constant 0 : index
    %c0_55 = arith.constant 0 : index
    %c0_56 = arith.constant 0 : index
    %95 = vector.load %arg6[%c0_54, %c0_55, %c0_56] : memref<1x1x128xf32, #tpu.memory_space<vmem>>, vector<1x1x128xf32>
    tpu.vector_store %arg6[%c0_54, %c0_55, %c0_56], %94 {strides = array<i32>} : memref<1x1x128xf32, #tpu.memory_space<vmem>>, vector<1x1x128xf32>,
    return
  }
  func.func @transform_0(%arg0: i32) -> (i32, i32, i32, i32) {
    %c0_i32 = arith.constant 0 : i32
    %c0_i32_0 = arith.constant 0 : i32
    %c0_i32_1 = arith.constant 0 : i32
    %c0_i32_2 = arith.constant 0 : i32
    return %arg0, %c0_i32, %c0_i32_0, %c0_i32_1 : i32, i32, i32, i32
  }
  func.func @transform_1(%arg0: i32) -> (i32, i32) {
    %c0_i32 = arith.constant 0 : i32
    %c0_i32_0 = arith.constant 0 : i32
    %c0_i32_1 = arith.constant 0 : i32
    return %c0_i32, %c0_i32_0 : i32, i32
  }
  func.func @transform_2(%arg0: i32) -> (i32, i32) {
    %c0_i32 = arith.constant 0 : i32
    %c0_i32_0 = arith.constant 0 : i32
    %c0_i32_1 = arith.constant 0 : i32
    return %c0_i32, %c0_i32_0 : i32, i32
  }
  func.func @transform_3(%arg0: i32) -> (i32, i32) {
    %c0_i32 = arith.constant 0 : i32
    %c0_i32_0 = arith.constant 0 : i32
    %c0_i32_1 = arith.constant 0 : i32
    return %c0_i32, %c0_i32_0 : i32, i32
  }
  func.func @transform_4(%arg0: i32) -> (i32, i32, i32, i32) {
    %c0_i32 = arith.constant 0 : i32
    %c0_i32_0 = arith.constant 0 : i32
    %c0_i32_1 = arith.constant 0 : i32
    %c0_i32_2 = arith.constant 0 : i32
    return %arg0, %c0_i32, %c0_i32_0, %c0_i32_1 : i32, i32, i32, i32
  }
  func.func @transform_5(%arg0: i32) -> (i32, i32, i32) {
    %c0_i32 = arith.constant 0 : i32
    %c0_i32_0 = arith.constant 0 : i32
    %c0_i32_1 = arith.constant 0 : i32
    return %arg0, %c0_i32, %c0_i32_0 : i32, i32, i32
  }
}

module attributes {stable_mosaic.version = 11 : i64} {
  func.func @_pw_kernel(%arg0: i32, %arg1: i32, %arg2: memref<1x16x128xbf16, #tpu.memory_space<vmem>>, %arg3: memref<128x128xbf16, #tpu.memory_space<vmem>>, %arg4: memref<1x128xf32, #tpu.memory_space<vmem>>, %arg5: memref<1x128xf32, #tpu.memory_space<vmem>>, %arg6: memref<1x1x128xf32, #tpu.memory_space<vmem>>, %arg7: memref<1x16x128xbf16, #tpu.memory_space<vmem>>) attributes {dimension_semantics = [#tpu.dimension_semantics<parallel>, #tpu.dimension_semantics<parallel>], iteration_bounds = array<i64: 2, 1>, scalar_prefetch = 0 : i64, scratch_operands = 0 : i64, tpu.core_type = #tpu.core_type<tc>, window_params = [{transform_indices = @transform_0, window_bounds = array<i64: 1, 16, 128>}, {pipeline_mode = #tpu.pipeline_mode<synchronous>, transform_indices = @transform_1, window_bounds = array<i64: 128, 128>}, {pipeline_mode = #tpu.pipeline_mode<synchronous>, transform_indices = @transform_2, window_bounds = array<i64: 1, 128>}, {pipeline_mode = #tpu.pipeline_mode<synchronous>, transform_indices = @transform_3, window_bounds = array<i64: 1, 128>}, {transform_indices = @transform_4, window_bounds = array<i64: 1, 1, 128>}, {transform_indices = @transform_5, window_bounds = array<i64: 1, 16, 128>}]} {
    %c0 = arith.constant 0 : index
    %c0_0 = arith.constant 0 : index
    %c0_1 = arith.constant 0 : index
    %0 = vector.load %arg2[%c0, %c0_0, %c0_1] : memref<1x16x128xbf16, #tpu.memory_space<vmem>>, vector<1x16x128xbf16>
    %1 = vector.shape_cast %0 : vector<1x16x128xbf16> to vector<16x128xbf16>
    %2 = arith.extf %1 : vector<16x128xbf16> to vector<16x128xf32>
    %c0_2 = arith.constant 0 : index
    %c0_3 = arith.constant 0 : index
    %c0_4 = arith.constant 0 : index
    %3 = vector.load %arg6[%c0_2, %c0_3, %c0_4] : memref<1x1x128xf32, #tpu.memory_space<vmem>>, vector<1x1x128xf32>
    %4 = vector.shape_cast %3 : vector<1x1x128xf32> to vector<1x128xf32>
    %5 = vector.broadcast %4 : vector<1x128xf32> to vector<16x128xf32>
    %6 = arith.mulf %2, %5 : vector<16x128xf32>
    %7 = arith.truncf %6 : vector<16x128xf32> to vector<16x128xbf16>
    %c0_5 = arith.constant 0 : index
    %c0_6 = arith.constant 0 : index
    %8 = vector.load %arg3[%c0_5, %c0_6] : memref<128x128xbf16, #tpu.memory_space<vmem>>, vector<128x128xbf16>
    %cst = arith.constant dense<0.000000e+00> : vector<16x128xf32>
    %9 = tpu.matmul %7, %8, %cst {dimension_numbers = #tpu.dot_dimension_numbers<[1], [0], [0], [1], [0, 0, 1, 1], [], []>} : vector<16x128xbf16>, vector<128x128xbf16>, vector<16x128xf32> -> vector<16x128xf32>
    %c0_7 = arith.constant 0 : index
    %c0_8 = arith.constant 0 : index
    %10 = vector.load %arg4[%c0_7, %c0_8] : memref<1x128xf32, #tpu.memory_space<vmem>>, vector<1x128xf32>
    %11 = vector.broadcast %10 : vector<1x128xf32> to vector<16x128xf32>
    %12 = arith.mulf %9, %11 : vector<16x128xf32>
    %c0_9 = arith.constant 0 : index
    %c0_10 = arith.constant 0 : index
    %13 = vector.load %arg5[%c0_9, %c0_10] : memref<1x128xf32, #tpu.memory_space<vmem>>, vector<1x128xf32>
    %14 = vector.broadcast %13 : vector<1x128xf32> to vector<16x128xf32>
    %15 = arith.addf %12, %14 : vector<16x128xf32>
    %16 = arith.truncf %15 : vector<16x128xf32> to vector<16x128xbf16>
    %c0_11 = arith.constant 0 : index
    %c0_12 = arith.constant 0 : index
    %c0_13 = arith.constant 0 : index
    %17 = vector.load %arg7[%c0_11, %c0_12, %c0_13] : memref<1x16x128xbf16, #tpu.memory_space<vmem>>, vector<1x16x128xbf16>
    %18 = vector.shape_cast %17 : vector<1x16x128xbf16> to vector<16x128xbf16>
    %19 = vector.shape_cast %16 : vector<16x128xbf16> to vector<1x16x128xbf16>
    tpu.vector_store %arg7[%c0_11, %c0_12, %c0_13], %19 {strides = array<i32>} : memref<1x16x128xbf16, #tpu.memory_space<vmem>>, vector<1x16x128xbf16>,
    return
  }
  func.func @transform_0(%arg0: i32, %arg1: i32) -> (i32, i32, i32) {
    %c0_i32 = arith.constant 0 : i32
    %c0_i32_0 = arith.constant 0 : i32
    return %arg0, %arg1, %c0_i32 : i32, i32, i32
  }
  func.func @transform_1(%arg0: i32, %arg1: i32) -> (i32, i32) {
    %c0_i32 = arith.constant 0 : i32
    %c0_i32_0 = arith.constant 0 : i32
    %c0_i32_1 = arith.constant 0 : i32
    return %c0_i32, %c0_i32_0 : i32, i32
  }
  func.func @transform_2(%arg0: i32, %arg1: i32) -> (i32, i32) {
    %c0_i32 = arith.constant 0 : i32
    %c0_i32_0 = arith.constant 0 : i32
    %c0_i32_1 = arith.constant 0 : i32
    return %c0_i32, %c0_i32_0 : i32, i32
  }
  func.func @transform_3(%arg0: i32, %arg1: i32) -> (i32, i32) {
    %c0_i32 = arith.constant 0 : i32
    %c0_i32_0 = arith.constant 0 : i32
    %c0_i32_1 = arith.constant 0 : i32
    return %c0_i32, %c0_i32_0 : i32, i32
  }
  func.func @transform_4(%arg0: i32, %arg1: i32) -> (i32, i32, i32) {
    %c0_i32 = arith.constant 0 : i32
    %c0_i32_0 = arith.constant 0 : i32
    %c0_i32_1 = arith.constant 0 : i32
    return %arg0, %c0_i32, %c0_i32_0 : i32, i32, i32
  }
  func.func @transform_5(%arg0: i32, %arg1: i32) -> (i32, i32, i32) {
    %c0_i32 = arith.constant 0 : i32
    %c0_i32_0 = arith.constant 0 : i32
    return %arg0, %arg1, %c0_i32 : i32, i32, i32
  }
}

module attributes {stable_mosaic.version = 11 : i64} {
  func.func @_dw_kernel(%arg0: i32, %arg1: memref<1x6x6x128xbf16, #tpu.memory_space<vmem>>, %arg2: memref<9x128xf32, #tpu.memory_space<vmem>>, %arg3: memref<1x128xf32, #tpu.memory_space<vmem>>, %arg4: memref<1x128xf32, #tpu.memory_space<vmem>>, %arg5: memref<1x4x4x128xbf16, #tpu.memory_space<vmem>>, %arg6: memref<1x1x128xf32, #tpu.memory_space<vmem>>) attributes {dimension_semantics = [#tpu.dimension_semantics<parallel>], iteration_bounds = array<i64: 2>, scalar_prefetch = 0 : i64, scratch_operands = 0 : i64, tpu.core_type = #tpu.core_type<tc>, window_params = [{transform_indices = @transform_0, window_bounds = array<i64: 1, 6, 6, 128>}, {pipeline_mode = #tpu.pipeline_mode<synchronous>, transform_indices = @transform_1, window_bounds = array<i64: 9, 128>}, {pipeline_mode = #tpu.pipeline_mode<synchronous>, transform_indices = @transform_2, window_bounds = array<i64: 1, 128>}, {pipeline_mode = #tpu.pipeline_mode<synchronous>, transform_indices = @transform_3, window_bounds = array<i64: 1, 128>}, {transform_indices = @transform_4, window_bounds = array<i64: 1, 4, 4, 128>}, {transform_indices = @transform_5, window_bounds = array<i64: 1, 1, 128>}]} {
    %cst = arith.constant 0.000000e+00 : f32
    %0 = vector.broadcast %cst : f32 to vector<4x4x128xf32>
    %c0 = arith.constant 0 : index
    %c0_0 = arith.constant 0 : index
    %c0_1 = arith.constant 0 : index
    %c0_2 = arith.constant 0 : index
    %1 = vector.load %arg1[%c0, %c0_0, %c0_1, %c0_2] : memref<1x6x6x128xbf16, #tpu.memory_space<vmem>>, vector<1x4x4x128xbf16>
    %2 = vector.shape_cast %1 : vector<1x4x4x128xbf16> to vector<4x4x128xbf16>
    %3 = arith.extf %2 : vector<4x4x128xbf16> to vector<4x4x128xf32>
    %c0_3 = arith.constant 0 : index
    %c0_4 = arith.constant 0 : index
    %4 = vector.load %arg2[%c0_3, %c0_4] : memref<9x128xf32, #tpu.memory_space<vmem>>, vector<1x128xf32>
    %5 = vector.shape_cast %4 : vector<1x128xf32> to vector<1x1x128xf32>
    %6 = vector.broadcast %5 : vector<1x1x128xf32> to vector<4x4x128xf32>
    %7 = arith.mulf %3, %6 : vector<4x4x128xf32>
    %8 = arith.addf %0, %7 : vector<4x4x128xf32>
    %c0_5 = arith.constant 0 : index
    %c0_6 = arith.constant 0 : index
    %c1 = arith.constant 1 : index
    %c0_7 = arith.constant 0 : index
    %9 = vector.load %arg1[%c0_5, %c0_6, %c1, %c0_7] : memref<1x6x6x128xbf16, #tpu.memory_space<vmem>>, vector<1x4x4x128xbf16>
    %10 = vector.shape_cast %9 : vector<1x4x4x128xbf16> to vector<4x4x128xbf16>
    %11 = arith.extf %10 : vector<4x4x128xbf16> to vector<4x4x128xf32>
    %c1_8 = arith.constant 1 : index
    %c0_9 = arith.constant 0 : index
    %12 = vector.load %arg2[%c1_8, %c0_9] : memref<9x128xf32, #tpu.memory_space<vmem>>, vector<1x128xf32>
    %13 = vector.shape_cast %12 : vector<1x128xf32> to vector<1x1x128xf32>
    %14 = vector.broadcast %13 : vector<1x1x128xf32> to vector<4x4x128xf32>
    %15 = arith.mulf %11, %14 : vector<4x4x128xf32>
    %16 = arith.addf %8, %15 : vector<4x4x128xf32>
    %c0_10 = arith.constant 0 : index
    %c0_11 = arith.constant 0 : index
    %c2 = arith.constant 2 : index
    %c0_12 = arith.constant 0 : index
    %17 = vector.load %arg1[%c0_10, %c0_11, %c2, %c0_12] : memref<1x6x6x128xbf16, #tpu.memory_space<vmem>>, vector<1x4x4x128xbf16>
    %18 = vector.shape_cast %17 : vector<1x4x4x128xbf16> to vector<4x4x128xbf16>
    %19 = arith.extf %18 : vector<4x4x128xbf16> to vector<4x4x128xf32>
    %c2_13 = arith.constant 2 : index
    %c0_14 = arith.constant 0 : index
    %20 = vector.load %arg2[%c2_13, %c0_14] : memref<9x128xf32, #tpu.memory_space<vmem>>, vector<1x128xf32>
    %21 = vector.shape_cast %20 : vector<1x128xf32> to vector<1x1x128xf32>
    %22 = vector.broadcast %21 : vector<1x1x128xf32> to vector<4x4x128xf32>
    %23 = arith.mulf %19, %22 : vector<4x4x128xf32>
    %24 = arith.addf %16, %23 : vector<4x4x128xf32>
    %c0_15 = arith.constant 0 : index
    %c1_16 = arith.constant 1 : index
    %c0_17 = arith.constant 0 : index
    %c0_18 = arith.constant 0 : index
    %25 = vector.load %arg1[%c0_15, %c1_16, %c0_17, %c0_18] : memref<1x6x6x128xbf16, #tpu.memory_space<vmem>>, vector<1x4x4x128xbf16>
    %26 = vector.shape_cast %25 : vector<1x4x4x128xbf16> to vector<4x4x128xbf16>
    %27 = arith.extf %26 : vector<4x4x128xbf16> to vector<4x4x128xf32>
    %c3 = arith.constant 3 : index
    %c0_19 = arith.constant 0 : index
    %28 = vector.load %arg2[%c3, %c0_19] : memref<9x128xf32, #tpu.memory_space<vmem>>, vector<1x128xf32>
    %29 = vector.shape_cast %28 : vector<1x128xf32> to vector<1x1x128xf32>
    %30 = vector.broadcast %29 : vector<1x1x128xf32> to vector<4x4x128xf32>
    %31 = arith.mulf %27, %30 : vector<4x4x128xf32>
    %32 = arith.addf %24, %31 : vector<4x4x128xf32>
    %c0_20 = arith.constant 0 : index
    %c1_21 = arith.constant 1 : index
    %c1_22 = arith.constant 1 : index
    %c0_23 = arith.constant 0 : index
    %33 = vector.load %arg1[%c0_20, %c1_21, %c1_22, %c0_23] : memref<1x6x6x128xbf16, #tpu.memory_space<vmem>>, vector<1x4x4x128xbf16>
    %34 = vector.shape_cast %33 : vector<1x4x4x128xbf16> to vector<4x4x128xbf16>
    %35 = arith.extf %34 : vector<4x4x128xbf16> to vector<4x4x128xf32>
    %c4 = arith.constant 4 : index
    %c0_24 = arith.constant 0 : index
    %36 = vector.load %arg2[%c4, %c0_24] : memref<9x128xf32, #tpu.memory_space<vmem>>, vector<1x128xf32>
    %37 = vector.shape_cast %36 : vector<1x128xf32> to vector<1x1x128xf32>
    %38 = vector.broadcast %37 : vector<1x1x128xf32> to vector<4x4x128xf32>
    %39 = arith.mulf %35, %38 : vector<4x4x128xf32>
    %40 = arith.addf %32, %39 : vector<4x4x128xf32>
    %c0_25 = arith.constant 0 : index
    %c1_26 = arith.constant 1 : index
    %c2_27 = arith.constant 2 : index
    %c0_28 = arith.constant 0 : index
    %41 = vector.load %arg1[%c0_25, %c1_26, %c2_27, %c0_28] : memref<1x6x6x128xbf16, #tpu.memory_space<vmem>>, vector<1x4x4x128xbf16>
    %42 = vector.shape_cast %41 : vector<1x4x4x128xbf16> to vector<4x4x128xbf16>
    %43 = arith.extf %42 : vector<4x4x128xbf16> to vector<4x4x128xf32>
    %c5 = arith.constant 5 : index
    %c0_29 = arith.constant 0 : index
    %44 = vector.load %arg2[%c5, %c0_29] : memref<9x128xf32, #tpu.memory_space<vmem>>, vector<1x128xf32>
    %45 = vector.shape_cast %44 : vector<1x128xf32> to vector<1x1x128xf32>
    %46 = vector.broadcast %45 : vector<1x1x128xf32> to vector<4x4x128xf32>
    %47 = arith.mulf %43, %46 : vector<4x4x128xf32>
    %48 = arith.addf %40, %47 : vector<4x4x128xf32>
    %c0_30 = arith.constant 0 : index
    %c2_31 = arith.constant 2 : index
    %c0_32 = arith.constant 0 : index
    %c0_33 = arith.constant 0 : index
    %49 = vector.load %arg1[%c0_30, %c2_31, %c0_32, %c0_33] : memref<1x6x6x128xbf16, #tpu.memory_space<vmem>>, vector<1x4x4x128xbf16>
    %50 = vector.shape_cast %49 : vector<1x4x4x128xbf16> to vector<4x4x128xbf16>
    %51 = arith.extf %50 : vector<4x4x128xbf16> to vector<4x4x128xf32>
    %c6 = arith.constant 6 : index
    %c0_34 = arith.constant 0 : index
    %52 = vector.load %arg2[%c6, %c0_34] : memref<9x128xf32, #tpu.memory_space<vmem>>, vector<1x128xf32>
    %53 = vector.shape_cast %52 : vector<1x128xf32> to vector<1x1x128xf32>
    %54 = vector.broadcast %53 : vector<1x1x128xf32> to vector<4x4x128xf32>
    %55 = arith.mulf %51, %54 : vector<4x4x128xf32>
    %56 = arith.addf %48, %55 : vector<4x4x128xf32>
    %c0_35 = arith.constant 0 : index
    %c2_36 = arith.constant 2 : index
    %c1_37 = arith.constant 1 : index
    %c0_38 = arith.constant 0 : index
    %57 = vector.load %arg1[%c0_35, %c2_36, %c1_37, %c0_38] : memref<1x6x6x128xbf16, #tpu.memory_space<vmem>>, vector<1x4x4x128xbf16>
    %58 = vector.shape_cast %57 : vector<1x4x4x128xbf16> to vector<4x4x128xbf16>
    %59 = arith.extf %58 : vector<4x4x128xbf16> to vector<4x4x128xf32>
    %c7 = arith.constant 7 : index
    %c0_39 = arith.constant 0 : index
    %60 = vector.load %arg2[%c7, %c0_39] : memref<9x128xf32, #tpu.memory_space<vmem>>, vector<1x128xf32>
    %61 = vector.shape_cast %60 : vector<1x128xf32> to vector<1x1x128xf32>
    %62 = vector.broadcast %61 : vector<1x1x128xf32> to vector<4x4x128xf32>
    %63 = arith.mulf %59, %62 : vector<4x4x128xf32>
    %64 = arith.addf %56, %63 : vector<4x4x128xf32>
    %c0_40 = arith.constant 0 : index
    %c2_41 = arith.constant 2 : index
    %c2_42 = arith.constant 2 : index
    %c0_43 = arith.constant 0 : index
    %65 = vector.load %arg1[%c0_40, %c2_41, %c2_42, %c0_43] : memref<1x6x6x128xbf16, #tpu.memory_space<vmem>>, vector<1x4x4x128xbf16>
    %66 = vector.shape_cast %65 : vector<1x4x4x128xbf16> to vector<4x4x128xbf16>
    %67 = arith.extf %66 : vector<4x4x128xbf16> to vector<4x4x128xf32>
    %c8 = arith.constant 8 : index
    %c0_44 = arith.constant 0 : index
    %68 = vector.load %arg2[%c8, %c0_44] : memref<9x128xf32, #tpu.memory_space<vmem>>, vector<1x128xf32>
    %69 = vector.shape_cast %68 : vector<1x128xf32> to vector<1x1x128xf32>
    %70 = vector.broadcast %69 : vector<1x1x128xf32> to vector<4x4x128xf32>
    %71 = arith.mulf %67, %70 : vector<4x4x128xf32>
    %72 = arith.addf %64, %71 : vector<4x4x128xf32>
    %c0_45 = arith.constant 0 : index
    %c0_46 = arith.constant 0 : index
    %73 = vector.load %arg3[%c0_45, %c0_46] : memref<1x128xf32, #tpu.memory_space<vmem>>, vector<1x128xf32>
    %74 = vector.shape_cast %73 : vector<1x128xf32> to vector<1x1x128xf32>
    %75 = vector.broadcast %74 : vector<1x1x128xf32> to vector<4x4x128xf32>
    %76 = arith.mulf %72, %75 : vector<4x4x128xf32>
    %c0_47 = arith.constant 0 : index
    %c0_48 = arith.constant 0 : index
    %77 = vector.load %arg4[%c0_47, %c0_48] : memref<1x128xf32, #tpu.memory_space<vmem>>, vector<1x128xf32>
    %78 = vector.shape_cast %77 : vector<1x128xf32> to vector<1x1x128xf32>
    %79 = vector.broadcast %78 : vector<1x1x128xf32> to vector<4x4x128xf32>
    %80 = arith.addf %76, %79 : vector<4x4x128xf32>
    %81 = arith.negf %80 : vector<4x4x128xf32>
    %82 = math.exp %81 : vector<4x4x128xf32>
    %cst_49 = arith.constant 1.000000e+00 : f32
    %83 = vector.broadcast %cst_49 : f32 to vector<4x4x128xf32>
    %84 = arith.addf %83, %82 : vector<4x4x128xf32>
    %85 = arith.divf %83, %84 : vector<4x4x128xf32>
    %86 = arith.mulf %80, %85 : vector<4x4x128xf32>
    %87 = arith.truncf %86 : vector<4x4x128xf32> to vector<4x4x128xbf16>
    %c0_50 = arith.constant 0 : index
    %c0_51 = arith.constant 0 : index
    %c0_52 = arith.constant 0 : index
    %c0_53 = arith.constant 0 : index
    %88 = vector.load %arg5[%c0_50, %c0_51, %c0_52, %c0_53] : memref<1x4x4x128xbf16, #tpu.memory_space<vmem>>, vector<1x4x4x128xbf16>
    %89 = vector.shape_cast %88 : vector<1x4x4x128xbf16> to vector<4x4x128xbf16>
    %90 = vector.shape_cast %87 : vector<4x4x128xbf16> to vector<1x4x4x128xbf16>
    tpu.vector_store %arg5[%c0_50, %c0_51, %c0_52, %c0_53], %90 {strides = array<i32>} : memref<1x4x4x128xbf16, #tpu.memory_space<vmem>>, vector<1x4x4x128xbf16>,
    %cst_54 = arith.constant dense<0.000000e+00> : vector<128xf32>
    %91 = vector.multi_reduction <add>, %86, %cst_54 [0, 1] : vector<4x4x128xf32> to vector<128xf32>
    %92 = vector.shape_cast %91 : vector<128xf32> to vector<1x1x128xf32>
    %cst_55 = arith.constant 6.250000e-02 : f32
    %93 = vector.broadcast %cst_55 : f32 to vector<1x1x128xf32>
    %94 = arith.mulf %92, %93 : vector<1x1x128xf32>
    %c0_56 = arith.constant 0 : index
    %c0_57 = arith.constant 0 : index
    %c0_58 = arith.constant 0 : index
    %95 = vector.load %arg6[%c0_56, %c0_57, %c0_58] : memref<1x1x128xf32, #tpu.memory_space<vmem>>, vector<1x1x128xf32>
    tpu.vector_store %arg6[%c0_56, %c0_57, %c0_58], %94 {strides = array<i32>} : memref<1x1x128xf32, #tpu.memory_space<vmem>>, vector<1x1x128xf32>,
    return
  }
  func.func @transform_0(%arg0: i32) -> (i32, i32, i32, i32) {
    %c0_i32 = arith.constant 0 : i32
    %c0_i32_0 = arith.constant 0 : i32
    %c0_i32_1 = arith.constant 0 : i32
    %c0_i32_2 = arith.constant 0 : i32
    return %arg0, %c0_i32, %c0_i32_0, %c0_i32_1 : i32, i32, i32, i32
  }
  func.func @transform_1(%arg0: i32) -> (i32, i32) {
    %c0_i32 = arith.constant 0 : i32
    %c0_i32_0 = arith.constant 0 : i32
    %c0_i32_1 = arith.constant 0 : i32
    return %c0_i32, %c0_i32_0 : i32, i32
  }
  func.func @transform_2(%arg0: i32) -> (i32, i32) {
    %c0_i32 = arith.constant 0 : i32
    %c0_i32_0 = arith.constant 0 : i32
    %c0_i32_1 = arith.constant 0 : i32
    return %c0_i32, %c0_i32_0 : i32, i32
  }
  func.func @transform_3(%arg0: i32) -> (i32, i32) {
    %c0_i32 = arith.constant 0 : i32
    %c0_i32_0 = arith.constant 0 : i32
    %c0_i32_1 = arith.constant 0 : i32
    return %c0_i32, %c0_i32_0 : i32, i32
  }
  func.func @transform_4(%arg0: i32) -> (i32, i32, i32, i32) {
    %c0_i32 = arith.constant 0 : i32
    %c0_i32_0 = arith.constant 0 : i32
    %c0_i32_1 = arith.constant 0 : i32
    %c0_i32_2 = arith.constant 0 : i32
    return %arg0, %c0_i32, %c0_i32_0, %c0_i32_1 : i32, i32, i32, i32
  }
  func.func @transform_5(%arg0: i32) -> (i32, i32, i32) {
    %c0_i32 = arith.constant 0 : i32
    %c0_i32_0 = arith.constant 0 : i32
    %c0_i32_1 = arith.constant 0 : i32
    return %arg0, %c0_i32, %c0_i32_0 : i32, i32, i32
  }
}

module attributes {stable_mosaic.version = 11 : i64} {
  func.func @_pw_kernel(%arg0: i32, %arg1: i32, %arg2: memref<1x16x128xbf16, #tpu.memory_space<vmem>>, %arg3: memref<128x128xbf16, #tpu.memory_space<vmem>>, %arg4: memref<1x128xf32, #tpu.memory_space<vmem>>, %arg5: memref<1x128xf32, #tpu.memory_space<vmem>>, %arg6: memref<1x16x128xbf16, #tpu.memory_space<vmem>>) attributes {dimension_semantics = [#tpu.dimension_semantics<parallel>, #tpu.dimension_semantics<parallel>], iteration_bounds = array<i64: 2, 1>, scalar_prefetch = 0 : i64, scratch_operands = 0 : i64, tpu.core_type = #tpu.core_type<tc>, window_params = [{transform_indices = @transform_0, window_bounds = array<i64: 1, 16, 128>}, {pipeline_mode = #tpu.pipeline_mode<synchronous>, transform_indices = @transform_1, window_bounds = array<i64: 128, 128>}, {pipeline_mode = #tpu.pipeline_mode<synchronous>, transform_indices = @transform_2, window_bounds = array<i64: 1, 128>}, {pipeline_mode = #tpu.pipeline_mode<synchronous>, transform_indices = @transform_3, window_bounds = array<i64: 1, 128>}, {transform_indices = @transform_4, window_bounds = array<i64: 1, 16, 128>}]} {
    %c0 = arith.constant 0 : index
    %c0_0 = arith.constant 0 : index
    %c0_1 = arith.constant 0 : index
    %0 = vector.load %arg2[%c0, %c0_0, %c0_1] : memref<1x16x128xbf16, #tpu.memory_space<vmem>>, vector<1x16x128xbf16>
    %1 = vector.shape_cast %0 : vector<1x16x128xbf16> to vector<16x128xbf16>
    %c0_2 = arith.constant 0 : index
    %c0_3 = arith.constant 0 : index
    %2 = vector.load %arg3[%c0_2, %c0_3] : memref<128x128xbf16, #tpu.memory_space<vmem>>, vector<128x128xbf16>
    %cst = arith.constant dense<0.000000e+00> : vector<16x128xf32>
    %3 = tpu.matmul %1, %2, %cst {dimension_numbers = #tpu.dot_dimension_numbers<[1], [0], [0], [1], [0, 0, 1, 1], [], []>} : vector<16x128xbf16>, vector<128x128xbf16>, vector<16x128xf32> -> vector<16x128xf32>
    %c0_4 = arith.constant 0 : index
    %c0_5 = arith.constant 0 : index
    %4 = vector.load %arg4[%c0_4, %c0_5] : memref<1x128xf32, #tpu.memory_space<vmem>>, vector<1x128xf32>
    %5 = vector.broadcast %4 : vector<1x128xf32> to vector<16x128xf32>
    %6 = arith.mulf %3, %5 : vector<16x128xf32>
    %c0_6 = arith.constant 0 : index
    %c0_7 = arith.constant 0 : index
    %7 = vector.load %arg5[%c0_6, %c0_7] : memref<1x128xf32, #tpu.memory_space<vmem>>, vector<1x128xf32>
    %8 = vector.broadcast %7 : vector<1x128xf32> to vector<16x128xf32>
    %9 = arith.addf %6, %8 : vector<16x128xf32>
    %10 = arith.negf %9 : vector<16x128xf32>
    %11 = math.exp %10 : vector<16x128xf32>
    %cst_8 = arith.constant 1.000000e+00 : f32
    %12 = vector.broadcast %cst_8 : f32 to vector<16x128xf32>
    %13 = arith.addf %12, %11 : vector<16x128xf32>
    %14 = arith.divf %12, %13 : vector<16x128xf32>
    %15 = arith.mulf %9, %14 : vector<16x128xf32>
    %16 = arith.truncf %15 : vector<16x128xf32> to vector<16x128xbf16>
    %c0_9 = arith.constant 0 : index
    %c0_10 = arith.constant 0 : index
    %c0_11 = arith.constant 0 : index
    %17 = vector.load %arg6[%c0_9, %c0_10, %c0_11] : memref<1x16x128xbf16, #tpu.memory_space<vmem>>, vector<1x16x128xbf16>
    %18 = vector.shape_cast %17 : vector<1x16x128xbf16> to vector<16x128xbf16>
    %19 = vector.shape_cast %16 : vector<16x128xbf16> to vector<1x16x128xbf16>
    tpu.vector_store %arg6[%c0_9, %c0_10, %c0_11], %19 {strides = array<i32>} : memref<1x16x128xbf16, #tpu.memory_space<vmem>>, vector<1x16x128xbf16>,
    return
  }
  func.func @transform_0(%arg0: i32, %arg1: i32) -> (i32, i32, i32) {
    %c0_i32 = arith.constant 0 : i32
    %c0_i32_0 = arith.constant 0 : i32
    return %arg0, %arg1, %c0_i32 : i32, i32, i32
  }
  func.func @transform_1(%arg0: i32, %arg1: i32) -> (i32, i32) {
    %c0_i32 = arith.constant 0 : i32
    %c0_i32_0 = arith.constant 0 : i32
    %c0_i32_1 = arith.constant 0 : i32
    return %c0_i32, %c0_i32_0 : i32, i32
  }
  func.func @transform_2(%arg0: i32, %arg1: i32) -> (i32, i32) {
    %c0_i32 = arith.constant 0 : i32
    %c0_i32_0 = arith.constant 0 : i32
    %c0_i32_1 = arith.constant 0 : i32
    return %c0_i32, %c0_i32_0 : i32, i32
  }
  func.func @transform_3(%arg0: i32, %arg1: i32) -> (i32, i32) {
    %c0_i32 = arith.constant 0 : i32
    %c0_i32_0 = arith.constant 0 : i32
    %c0_i32_1 = arith.constant 0 : i32
    return %c0_i32, %c0_i32_0 : i32, i32
  }
  func.func @transform_4(%arg0: i32, %arg1: i32) -> (i32, i32, i32) {
    %c0_i32 = arith.constant 0 : i32
    %c0_i32_0 = arith.constant 0 : i32
    return %arg0, %arg1, %c0_i32 : i32, i32, i32
  }
}

module attributes {stable_mosaic.version = 11 : i64} {
  func.func @_pw_kernel(%arg0: i32, %arg1: i32, %arg2: memref<1x16x128xbf16, #tpu.memory_space<vmem>>, %arg3: memref<128x128xbf16, #tpu.memory_space<vmem>>, %arg4: memref<1x128xf32, #tpu.memory_space<vmem>>, %arg5: memref<1x128xf32, #tpu.memory_space<vmem>>, %arg6: memref<1x1x128xf32, #tpu.memory_space<vmem>>, %arg7: memref<1x16x128xbf16, #tpu.memory_space<vmem>>, %arg8: memref<1x16x128xbf16, #tpu.memory_space<vmem>>) attributes {dimension_semantics = [#tpu.dimension_semantics<parallel>, #tpu.dimension_semantics<parallel>], iteration_bounds = array<i64: 2, 1>, scalar_prefetch = 0 : i64, scratch_operands = 0 : i64, tpu.core_type = #tpu.core_type<tc>, window_params = [{transform_indices = @transform_0, window_bounds = array<i64: 1, 16, 128>}, {pipeline_mode = #tpu.pipeline_mode<synchronous>, transform_indices = @transform_1, window_bounds = array<i64: 128, 128>}, {pipeline_mode = #tpu.pipeline_mode<synchronous>, transform_indices = @transform_2, window_bounds = array<i64: 1, 128>}, {pipeline_mode = #tpu.pipeline_mode<synchronous>, transform_indices = @transform_3, window_bounds = array<i64: 1, 128>}, {transform_indices = @transform_4, window_bounds = array<i64: 1, 1, 128>}, {transform_indices = @transform_5, window_bounds = array<i64: 1, 16, 128>}, {transform_indices = @transform_6, window_bounds = array<i64: 1, 16, 128>}]} {
    %c0 = arith.constant 0 : index
    %c0_0 = arith.constant 0 : index
    %c0_1 = arith.constant 0 : index
    %0 = vector.load %arg2[%c0, %c0_0, %c0_1] : memref<1x16x128xbf16, #tpu.memory_space<vmem>>, vector<1x16x128xbf16>
    %1 = vector.shape_cast %0 : vector<1x16x128xbf16> to vector<16x128xbf16>
    %2 = arith.extf %1 : vector<16x128xbf16> to vector<16x128xf32>
    %c0_2 = arith.constant 0 : index
    %c0_3 = arith.constant 0 : index
    %c0_4 = arith.constant 0 : index
    %3 = vector.load %arg6[%c0_2, %c0_3, %c0_4] : memref<1x1x128xf32, #tpu.memory_space<vmem>>, vector<1x1x128xf32>
    %4 = vector.shape_cast %3 : vector<1x1x128xf32> to vector<1x128xf32>
    %5 = vector.broadcast %4 : vector<1x128xf32> to vector<16x128xf32>
    %6 = arith.mulf %2, %5 : vector<16x128xf32>
    %7 = arith.truncf %6 : vector<16x128xf32> to vector<16x128xbf16>
    %c0_5 = arith.constant 0 : index
    %c0_6 = arith.constant 0 : index
    %8 = vector.load %arg3[%c0_5, %c0_6] : memref<128x128xbf16, #tpu.memory_space<vmem>>, vector<128x128xbf16>
    %cst = arith.constant dense<0.000000e+00> : vector<16x128xf32>
    %9 = tpu.matmul %7, %8, %cst {dimension_numbers = #tpu.dot_dimension_numbers<[1], [0], [0], [1], [0, 0, 1, 1], [], []>} : vector<16x128xbf16>, vector<128x128xbf16>, vector<16x128xf32> -> vector<16x128xf32>
    %c0_7 = arith.constant 0 : index
    %c0_8 = arith.constant 0 : index
    %10 = vector.load %arg4[%c0_7, %c0_8] : memref<1x128xf32, #tpu.memory_space<vmem>>, vector<1x128xf32>
    %11 = vector.broadcast %10 : vector<1x128xf32> to vector<16x128xf32>
    %12 = arith.mulf %9, %11 : vector<16x128xf32>
    %c0_9 = arith.constant 0 : index
    %c0_10 = arith.constant 0 : index
    %13 = vector.load %arg5[%c0_9, %c0_10] : memref<1x128xf32, #tpu.memory_space<vmem>>, vector<1x128xf32>
    %14 = vector.broadcast %13 : vector<1x128xf32> to vector<16x128xf32>
    %15 = arith.addf %12, %14 : vector<16x128xf32>
    %c0_11 = arith.constant 0 : index
    %c0_12 = arith.constant 0 : index
    %c0_13 = arith.constant 0 : index
    %16 = vector.load %arg7[%c0_11, %c0_12, %c0_13] : memref<1x16x128xbf16, #tpu.memory_space<vmem>>, vector<1x16x128xbf16>
    %17 = vector.shape_cast %16 : vector<1x16x128xbf16> to vector<16x128xbf16>
    %18 = arith.extf %17 : vector<16x128xbf16> to vector<16x128xf32>
    %19 = arith.addf %15, %18 : vector<16x128xf32>
    %20 = arith.truncf %19 : vector<16x128xf32> to vector<16x128xbf16>
    %c0_14 = arith.constant 0 : index
    %c0_15 = arith.constant 0 : index
    %c0_16 = arith.constant 0 : index
    %21 = vector.load %arg8[%c0_14, %c0_15, %c0_16] : memref<1x16x128xbf16, #tpu.memory_space<vmem>>, vector<1x16x128xbf16>
    %22 = vector.shape_cast %21 : vector<1x16x128xbf16> to vector<16x128xbf16>
    %23 = vector.shape_cast %20 : vector<16x128xbf16> to vector<1x16x128xbf16>
    tpu.vector_store %arg8[%c0_14, %c0_15, %c0_16], %23 {strides = array<i32>} : memref<1x16x128xbf16, #tpu.memory_space<vmem>>, vector<1x16x128xbf16>,
    return
  }
  func.func @transform_0(%arg0: i32, %arg1: i32) -> (i32, i32, i32) {
    %c0_i32 = arith.constant 0 : i32
    %c0_i32_0 = arith.constant 0 : i32
    return %arg0, %arg1, %c0_i32 : i32, i32, i32
  }
  func.func @transform_1(%arg0: i32, %arg1: i32) -> (i32, i32) {
    %c0_i32 = arith.constant 0 : i32
    %c0_i32_0 = arith.constant 0 : i32
    %c0_i32_1 = arith.constant 0 : i32
    return %c0_i32, %c0_i32_0 : i32, i32
  }
  func.func @transform_2(%arg0: i32, %arg1: i32) -> (i32, i32) {
    %c0_i32 = arith.constant 0 : i32
    %c0_i32_0 = arith.constant 0 : i32
    %c0_i32_1 = arith.constant 0 : i32
    return %c0_i32, %c0_i32_0 : i32, i32
  }
  func.func @transform_3(%arg0: i32, %arg1: i32) -> (i32, i32) {
    %c0_i32 = arith.constant 0 : i32
    %c0_i32_0 = arith.constant 0 : i32
    %c0_i32_1 = arith.constant 0 : i32
    return %c0_i32, %c0_i32_0 : i32, i32
  }
  func.func @transform_4(%arg0: i32, %arg1: i32) -> (i32, i32, i32) {
    %c0_i32 = arith.constant 0 : i32
    %c0_i32_0 = arith.constant 0 : i32
    %c0_i32_1 = arith.constant 0 : i32
    return %arg0, %c0_i32, %c0_i32_0 : i32, i32, i32
  }
  func.func @transform_5(%arg0: i32, %arg1: i32) -> (i32, i32, i32) {
    %c0_i32 = arith.constant 0 : i32
    %c0_i32_0 = arith.constant 0 : i32
    return %arg0, %arg1, %c0_i32 : i32, i32, i32
  }
  func.func @transform_6(%arg0: i32, %arg1: i32) -> (i32, i32, i32) {
    %c0_i32 = arith.constant 0 : i32
    %c0_i32_0 = arith.constant 0 : i32
    return %arg0, %arg1, %c0_i32 : i32, i32, i32
  }
}

module attributes {stable_mosaic.version = 11 : i64} {
  func.func @_pw_kernel(%arg0: i32, %arg1: i32, %arg2: memref<1x16x128xbf16, #tpu.memory_space<vmem>>, %arg3: memref<128x384xbf16, #tpu.memory_space<vmem>>, %arg4: memref<1x384xf32, #tpu.memory_space<vmem>>, %arg5: memref<1x384xf32, #tpu.memory_space<vmem>>, %arg6: memref<1x16x384xbf16, #tpu.memory_space<vmem>>) attributes {dimension_semantics = [#tpu.dimension_semantics<parallel>, #tpu.dimension_semantics<parallel>], iteration_bounds = array<i64: 2, 1>, scalar_prefetch = 0 : i64, scratch_operands = 0 : i64, tpu.core_type = #tpu.core_type<tc>, window_params = [{transform_indices = @transform_0, window_bounds = array<i64: 1, 16, 128>}, {pipeline_mode = #tpu.pipeline_mode<synchronous>, transform_indices = @transform_1, window_bounds = array<i64: 128, 384>}, {pipeline_mode = #tpu.pipeline_mode<synchronous>, transform_indices = @transform_2, window_bounds = array<i64: 1, 384>}, {pipeline_mode = #tpu.pipeline_mode<synchronous>, transform_indices = @transform_3, window_bounds = array<i64: 1, 384>}, {transform_indices = @transform_4, window_bounds = array<i64: 1, 16, 384>}]} {
    %c0 = arith.constant 0 : index
    %c0_0 = arith.constant 0 : index
    %c0_1 = arith.constant 0 : index
    %0 = vector.load %arg2[%c0, %c0_0, %c0_1] : memref<1x16x128xbf16, #tpu.memory_space<vmem>>, vector<1x16x128xbf16>
    %1 = vector.shape_cast %0 : vector<1x16x128xbf16> to vector<16x128xbf16>
    %c0_2 = arith.constant 0 : index
    %c0_3 = arith.constant 0 : index
    %2 = vector.load %arg3[%c0_2, %c0_3] : memref<128x384xbf16, #tpu.memory_space<vmem>>, vector<128x384xbf16>
    %cst = arith.constant dense<0.000000e+00> : vector<16x384xf32>
    %3 = tpu.matmul %1, %2, %cst {dimension_numbers = #tpu.dot_dimension_numbers<[1], [0], [0], [1], [0, 0, 1, 1], [], []>} : vector<16x128xbf16>, vector<128x384xbf16>, vector<16x384xf32> -> vector<16x384xf32>
    %c0_4 = arith.constant 0 : index
    %c0_5 = arith.constant 0 : index
    %4 = vector.load %arg4[%c0_4, %c0_5] : memref<1x384xf32, #tpu.memory_space<vmem>>, vector<1x384xf32>
    %5 = vector.broadcast %4 : vector<1x384xf32> to vector<16x384xf32>
    %6 = arith.mulf %3, %5 : vector<16x384xf32>
    %c0_6 = arith.constant 0 : index
    %c0_7 = arith.constant 0 : index
    %7 = vector.load %arg5[%c0_6, %c0_7] : memref<1x384xf32, #tpu.memory_space<vmem>>, vector<1x384xf32>
    %8 = vector.broadcast %7 : vector<1x384xf32> to vector<16x384xf32>
    %9 = arith.addf %6, %8 : vector<16x384xf32>
    %10 = arith.negf %9 : vector<16x384xf32>
    %11 = math.exp %10 : vector<16x384xf32>
    %cst_8 = arith.constant 1.000000e+00 : f32
    %12 = vector.broadcast %cst_8 : f32 to vector<16x384xf32>
    %13 = arith.addf %12, %11 : vector<16x384xf32>
    %14 = arith.divf %12, %13 : vector<16x384xf32>
    %15 = arith.mulf %9, %14 : vector<16x384xf32>
    %16 = arith.truncf %15 : vector<16x384xf32> to vector<16x384xbf16>
    %c0_9 = arith.constant 0 : index
    %c0_10 = arith.constant 0 : index
    %c0_11 = arith.constant 0 : index
    %17 = vector.load %arg6[%c0_9, %c0_10, %c0_11] : memref<1x16x384xbf16, #tpu.memory_space<vmem>>, vector<1x16x384xbf16>
    %18 = vector.shape_cast %17 : vector<1x16x384xbf16> to vector<16x384xbf16>
    %19 = vector.shape_cast %16 : vector<16x384xbf16> to vector<1x16x384xbf16>
    tpu.vector_store %arg6[%c0_9, %c0_10, %c0_11], %19 {strides = array<i32>} : memref<1x16x384xbf16, #tpu.memory_space<vmem>>, vector<1x16x384xbf16>,
    return
  }
  func.func @transform_0(%arg0: i32, %arg1: i32) -> (i32, i32, i32) {
    %c0_i32 = arith.constant 0 : i32
    %c0_i32_0 = arith.constant 0 : i32
    return %arg0, %arg1, %c0_i32 : i32, i32, i32
  }
  func.func @transform_1(%arg0: i32, %arg1: i32) -> (i32, i32) {
    %c0_i32 = arith.constant 0 : i32
    %c0_i32_0 = arith.constant 0 : i32
    %c0_i32_1 = arith.constant 0 : i32
    return %c0_i32, %c0_i32_0 : i32, i32
  }
  func.func @transform_2(%arg0: i32, %arg1: i32) -> (i32, i32) {
    %c0_i32 = arith.constant 0 : i32
    %c0_i32_0 = arith.constant 0 : i32
    %c0_i32_1 = arith.constant 0 : i32
    return %c0_i32, %c0_i32_0 : i32, i32
  }
  func.func @transform_3(%arg0: i32, %arg1: i32) -> (i32, i32) {
    %c0_i32 = arith.constant 0 : i32
    %c0_i32_0 = arith.constant 0 : i32
    %c0_i32_1 = arith.constant 0 : i32
    return %c0_i32, %c0_i32_0 : i32, i32
  }
  func.func @transform_4(%arg0: i32, %arg1: i32) -> (i32, i32, i32) {
    %c0_i32 = arith.constant 0 : i32
    %c0_i32_0 = arith.constant 0 : i32
    return %arg0, %arg1, %c0_i32 : i32, i32, i32
  }
}

module attributes {stable_mosaic.version = 11 : i64} {
  func.func @_pool_fc_kernel(%arg0: i32, %arg1: memref<2x16x384xbf16, #tpu.memory_space<vmem>>, %arg2: memref<384x128xf32, #tpu.memory_space<vmem>>, %arg3: memref<1x128xf32, #tpu.memory_space<vmem>>, %arg4: memref<2x128xf32, #tpu.memory_space<vmem>>) attributes {dimension_semantics = [#tpu.dimension_semantics<arbitrary>], iteration_bounds = array<i64: 1>, scalar_prefetch = 0 : i64, scratch_operands = 0 : i64, tpu.core_type = #tpu.core_type<tc>, window_params = [{pipeline_mode = #tpu.pipeline_mode<synchronous>, transform_indices = @transform_0, window_bounds = array<i64: 2, 16, 384>}, {pipeline_mode = #tpu.pipeline_mode<synchronous>, transform_indices = @transform_1, window_bounds = array<i64: 384, 128>}, {pipeline_mode = #tpu.pipeline_mode<synchronous>, transform_indices = @transform_2, window_bounds = array<i64: 1, 128>}, {pipeline_mode = #tpu.pipeline_mode<synchronous>, transform_indices = @transform_3, window_bounds = array<i64: 2, 128>}]} {
    %c0 = arith.constant 0 : index
    %c0_0 = arith.constant 0 : index
    %c0_1 = arith.constant 0 : index
    %0 = vector.load %arg1[%c0, %c0_0, %c0_1] : memref<2x16x384xbf16, #tpu.memory_space<vmem>>, vector<2x16x384xbf16>
    %1 = arith.extf %0 : vector<2x16x384xbf16> to vector<2x16x384xf32>
    %cst = arith.constant dense<0.000000e+00> : vector<2x384xf32>
    %2 = vector.multi_reduction <add>, %1, %cst [1] : vector<2x16x384xf32> to vector<2x384xf32>
    %cst_2 = arith.constant 6.250000e-02 : f32
    %3 = vector.broadcast %cst_2 : f32 to vector<2x384xf32>
    %4 = arith.mulf %2, %3 : vector<2x384xf32>
    %c0_3 = arith.constant 0 : index
    %c0_4 = arith.constant 0 : index
    %5 = vector.load %arg2[%c0_3, %c0_4] : memref<384x128xf32, #tpu.memory_space<vmem>>, vector<384x128xf32>
    %cst_5 = arith.constant dense<0.000000e+00> : vector<2x128xf32>
    %6 = tpu.matmul %4, %5, %cst_5 {dimension_numbers = #tpu.dot_dimension_numbers<[1], [0], [0], [1], [0, 0, 1, 1], [], []>} : vector<2x384xf32>, vector<384x128xf32>, vector<2x128xf32> -> vector<2x128xf32>
    %c0_6 = arith.constant 0 : index
    %c0_7 = arith.constant 0 : index
    %7 = vector.load %arg3[%c0_6, %c0_7] : memref<1x128xf32, #tpu.memory_space<vmem>>, vector<1x128xf32>
    %8 = vector.broadcast %7 : vector<1x128xf32> to vector<2x128xf32>
    %9 = arith.addf %6, %8 : vector<2x128xf32>
    %c0_8 = arith.constant 0 : index
    %c0_9 = arith.constant 0 : index
    %10 = vector.load %arg4[%c0_8, %c0_9] : memref<2x128xf32, #tpu.memory_space<vmem>>, vector<2x128xf32>
    tpu.vector_store %arg4[%c0_8, %c0_9], %9 {strides = array<i32>} : memref<2x128xf32, #tpu.memory_space<vmem>>, vector<2x128xf32>,
    return
  }
  func.func @transform_0(%arg0: i32) -> (i32, i32, i32) {
    %c0_i32 = arith.constant 0 : i32
    %c0_i32_0 = arith.constant 0 : i32
    %c0_i32_1 = arith.constant 0 : i32
    %c0_i32_2 = arith.constant 0 : i32
    return %c0_i32, %c0_i32_0, %c0_i32_1 : i32, i32, i32
  }
  func.func @transform_1(%arg0: i32) -> (i32, i32) {
    %c0_i32 = arith.constant 0 : i32
    %c0_i32_0 = arith.constant 0 : i32
    %c0_i32_1 = arith.constant 0 : i32
    return %c0_i32, %c0_i32_0 : i32, i32
  }
  func.func @transform_2(%arg0: i32) -> (i32, i32) {
    %c0_i32 = arith.constant 0 : i32
    %c0_i32_0 = arith.constant 0 : i32
    %c0_i32_1 = arith.constant 0 : i32
    return %c0_i32, %c0_i32_0 : i32, i32
  }
  func.func @transform_3(%arg0: i32) -> (i32, i32) {
    %c0_i32 = arith.constant 0 : i32
    %c0_i32_0 = arith.constant 0 : i32
    %c0_i32_1 = arith.constant 0 : i32
    return %c0_i32, %c0_i32_0 : i32, i32
  }
}

</mosaic_0001>

<llo_original>
// kernel: _lambda_.16
$region0: #{_lambda_.16}
  #allocation0 [shape = 'u32[]', space=smem, size = 0x4, offset = 0x4, fixed_abs, tag = 'smem constant byte address 0x4 - core index']
  #allocation1 [shape = 'u32[144,128]{1,0:T(1,128)}', space=vmem, size = 0x12000, scoped, tag = 'internal scratch']
  %s0 = inlined_call_operand.vmem [shape: f32[2,128], index: 0, kind: input, shape index: {}]
  %s1 = inlined_call_operand.vmem [shape: f32[128,128], index: 1, kind: input, shape index: {}]
  %s2 = inlined_call_operand.vmem [shape: f32[1,128], index: 2, kind: input, shape index: {}]
  %s3 = inlined_call_operand.vmem [shape: f32[128,128], index: 3, kind: input, shape index: {}]
  %s4 = inlined_call_operand.vmem [shape: f32[1,128], index: 4, kind: input, shape index: {}]
  %s5 = inlined_call_operand.vmem [shape: f32[2,128], index: 5, kind: output, shape index: {}]
  %s6 = sld [smem:[#allocation0]]
  $region30: #{_lambda_.16} parent=0
    _
  %s8 = ssub.s32 1, %s6
  %s9 = scalar_select 0, %s8, %s6
  // Predicated region
  $region2: #{_lambda_.16} parent=0 // pred_check
    _
  $region3: #{_lambda_.16} parent=0 // pred_check_branch
    %11 = sbr.rel (0) target = $region5
  $region4: #{_lambda_.16} parent=0 // pred_region
    _
  $region5: #{_lambda_.16} parent=0 // pred_fallthru
    _
  // Predicated region
  $region6: #{_lambda_.16} parent=0 // pred_check
    _
  $region7: #{_lambda_.16} parent=0 // pred_check_branch
    %13 = sbr.rel (0) target = $region9
  $region8: #{_lambda_.16} parent=0 // pred_region
    _
  $region9: #{_lambda_.16} parent=0 // pred_fallthru
    _
  // Predicated region
  $region10: #{_lambda_.16} parent=0 // pred_check
    _
  $region11: #{_lambda_.16} parent=0 // pred_check_branch
    %15 = sbr.rel (0) target = $region13
  $region12: #{_lambda_.16} parent=0 // pred_region
    _
  $region13: #{_lambda_.16} parent=0 // pred_fallthru
    _
  // Predicated region
  $region14: #{_lambda_.16} parent=0 // pred_check
    _
  $region15: #{_lambda_.16} parent=0 // pred_check_branch
    %17 = sbr.rel (0) target = $region17
  $region16: #{_lambda_.16} parent=0 // pred_region
    _
  $region17: #{_lambda_.16} parent=0 // pred_fallthru
    _
  // Predicated region
  $region18: #{_lambda_.16} parent=0 // pred_check
    _
  $region19: #{_lambda_.16} parent=0 // pred_check_branch
    %19 = sbr.rel (0) target = $region21
  $region20: #{_lambda_.16} parent=0 // pred_region
    _
  $region21: #{_lambda_.16} parent=0 // pred_fallthru
    _
  %v20 = vld [vmem:[%s0] sm:$0x3]
  %v21 = vld [vmem:[%s1] sm:$0xff]
  %v22 = vld [vmem:[%s1 + $0x8] sm:$0xff]
  %v23 = vld [vmem:[%s1 + $0x10] sm:$0xff]
  %v24 = vld [vmem:[%s1 + $0x18] sm:$0xff]
  %v25 = vld [vmem:[%s1 + $0x20] sm:$0xff]
  %v26 = vld [vmem:[%s1 + $0x28] sm:$0xff]
  %v27 = vld [vmem:[%s1 + $0x30] sm:$0xff]
  %v28 = vld [vmem:[%s1 + $0x38] sm:$0xff]
  %v29 = vld [vmem:[%s1 + $0x40] sm:$0xff]
  %v30 = vld [vmem:[%s1 + $0x48] sm:$0xff]
  %v31 = vld [vmem:[%s1 + $0x50] sm:$0xff]
  %v32 = vld [vmem:[%s1 + $0x58] sm:$0xff]
  %v33 = vld [vmem:[%s1 + $0x60] sm:$0xff]
  %v34 = vld [vmem:[%s1 + $0x68] sm:$0xff]
  %v35 = vld [vmem:[%s1 + $0x70] sm:$0xff]
  %v36 = vld [vmem:[%s1 + $0x78] sm:$0xff]
  %v37 = vld [vmem:[%s2] sm:$0x1]
  %v39 = vlaneseq
  %v40 = vshrl.u32 %v39, 7
  %v41 = vsub.s32 0, %v40
  %v42 = vrot.slane %v37, %v41
  %44 = vmatprep.subr.mxu0 0.0
  %45 = vmatpush1.msra.mxu0 %v21
  %46 = vmatprep.subr.mxu0 0.0
  %47 = vmatpush1.msra.mxu0 %v22
  %48 = vmatprep.subr.mxu0 0.0
  %49 = vmatpush1.msra.mxu0 %v23
  %50 = vmatprep.subr.mxu0 0.0
  %51 = vmatpush1.msra.mxu0 %v24
  %52 = vmatprep.subr.mxu0 0.0
  %53 = vmatpush1.msra.mxu0 %v25
  %54 = vmatprep.subr.mxu0 0.0
  %55 = vmatpush1.msra.mxu0 %v26
  %56 = vmatprep.subr.mxu0 0.0
  %57 = vmatpush1.msra.mxu0 %v27
  %58 = vmatprep.subr.mxu0 0.0
  %59 = vmatpush1.msra.mxu0 %v28
  %60 = vmatprep.subr.mxu0 0.0
  %61 = vmatpush1.msra.mxu0 %v29
  %62 = vmatprep.subr.mxu0 0.0
  %63 = vmatpush1.msra.mxu0 %v30
  %64 = vmatprep.subr.mxu0 0.0
  %65 = vmatpush1.msra.mxu0 %v31
  %66 = vmatprep.subr.mxu0 0.0
  %67 = vmatpush1.msra.mxu0 %v32
  %68 = vmatprep.subr.mxu0 0.0
  %69 = vmatpush1.msra.mxu0 %v33
  %70 = vmatprep.subr.mxu0 0.0
  %71 = vmatpush1.msra.mxu0 %v34
  %72 = vmatprep.subr.mxu0 0.0
  %73 = vmatpush1.msra.mxu0 %v35
  %74 = vmatprep.subr.mxu0 0.0
  %75 = vmatpush1.msra.mxu0 %v36
  %76 = vmatprep.subr.mxu0 0.0
  %77 = vmatpush1.msra.mxu0 0.0
  %78 = vmatprep.subr.mxu0 0.0
  %79 = vmatpush1.msra.mxu0 0.0
  %80 = vmatprep.subr.mxu0 0.0
  %81 = vmatpush1.msra.mxu0 0.0
  %82 = vmatprep.subr.mxu0 0.0
  %83 = vmatpush1.msra.mxu0 0.0
  %84 = vmatprep.subr.mxu0 0.0
  %85 = vmatpush1.msra.mxu0 0.0
  %86 = vmatprep.subr.mxu0 0.0
  %87 = vmatpush1.msra.mxu0 0.0
  %88 = vmatprep.subr.mxu0 0.0
  %89 = vmatpush1.msra.mxu0 0.0
  %90 = vmatprep.subr.mxu0 0.0
  %91 = vmatpush1.msra.mxu0 0.0
  %92 = vmatprep.subr.mxu0 0.0
  %93 = vmatpush1.msra.mxu0 0.0
  %94 = vmatprep.subr.mxu0 0.0
  %95 = vmatpush1.msra.mxu0 0.0
  %96 = vmatprep.subr.mxu0 0.0
  %97 = vmatpush1.msra.mxu0 0.0
  %98 = vmatprep.subr.mxu0 0.0
  %99 = vmatpush1.msra.mxu0 0.0
  %100 = vmatprep.subr.mxu0 0.0
  %101 = vmatpush1.msra.mxu0 0.0
  %102 = vmatprep.subr.mxu0 0.0
  %103 = vmatpush1.msra.mxu0 0.0
  %104 = vmatprep.subr.mxu0 0.0
  %105 = vmatpush1.msra.mxu0 0.0
  %106 = vmatprep.subr.mxu0 0.0
  %107 = vmatpush1.msra.mxu0 0.0
  %108 = vmatprep.mubr.f32.mxu0 0.0
  %109 = vmatmul.mubr.f32.gmra.mrb[0].mxu0 %v20
  %v110 = vpop.f32.mrb[0].mxu0
  %v111 = vadd.f32 %v42, %v110
  %v112 = vpop.f32.mrb[0].mxu0
  %113 = vdwg.mxu0
  %v114 = vxor.u32 %v111, 2147483648
  %v115 = vmul.f32 %v114, 1.442695
  %v116 = vpow.pop %v115
  %v117 = vadd.f32 %v116, 1.0
  %v118 = vrcp.pop %v117
  %v119 = vmul.f32 1.0, %v118
  %v120 = vmul.f32 %v111, %v119
  %v121 = vld [vmem:[%s3] sm:$0xff]
  %v122 = vld [vmem:[%s3 + $0x8] sm:$0xff]
  %v123 = vld [vmem:[%s3 + $0x10] sm:$0xff]
  %v124 = vld [vmem:[%s3 + $0x18] sm:$0xff]
  %v125 = vld [vmem:[%s3 + $0x20] sm:$0xff]
  %v126 = vld [vmem:[%s3 + $0x28] sm:$0xff]
  %v127 = vld [vmem:[%s3 + $0x30] sm:$0xff]
  %v128 = vld [vmem:[%s3 + $0x38] sm:$0xff]
  %v129 = vld [vmem:[%s3 + $0x40] sm:$0xff]
  %v130 = vld [vmem:[%s3 + $0x48] sm:$0xff]
  %v131 = vld [vmem:[%s3 + $0x50] sm:$0xff]
  %v132 = vld [vmem:[%s3 + $0x58] sm:$0xff]
  %v133 = vld [vmem:[%s3 + $0x60] sm:$0xff]
  %v134 = vld [vmem:[%s3 + $0x68] sm:$0xff]
  %v135 = vld [vmem:[%s3 + $0x70] sm:$0xff]
  %v136 = vld [vmem:[%s3 + $0x78] sm:$0xff]
  %v137 = vld [vmem:[%s4] sm:$0x1]
  %v139 = vlaneseq
  %v140 = vshrl.u32 %v139, 7
  %v141 = vsub.s32 0, %v140
  %v142 = vrot.slane %v137, %v141
  %144 = vmatprep.subr.mxu0 0.0
  %145 = vmatpush1.msra.mxu0 %v121
  %146 = vmatprep.subr.mxu0 0.0
  %147 = vmatpush1.msra.mxu0 %v122
  %148 = vmatprep.subr.mxu0 0.0
  %149 = vmatpush1.msra.mxu0 %v123
  %150 = vmatprep.subr.mxu0 0.0
  %151 = vmatpush1.msra.mxu0 %v124
  %152 = vmatprep.subr.mxu0 0.0
  %153 = vmatpush1.msra.mxu0 %v125
  %154 = vmatprep.subr.mxu0 0.0
  %155 = vmatpush1.msra.mxu0 %v126
  %156 = vmatprep.subr.mxu0 0.0
  %157 = vmatpush1.msra.mxu0 %v127
  %158 = vmatprep.subr.mxu0 0.0
  %159 = vmatpush1.msra.mxu0 %v128
  %160 = vmatprep.subr.mxu0 0.0
  %161 = vmatpush1.msra.mxu0 %v129
  %162 = vmatprep.subr.mxu0 0.0
  %163 = vmatpush1.msra.mxu0 %v130
  %164 = vmatprep.subr.mxu0 0.0
  %165 = vmatpush1.msra.mxu0 %v131
  %166 = vmatprep.subr.mxu0 0.0
  %167 = vmatpush1.msra.mxu0 %v132
  %168 = vmatprep.subr.mxu0 0.0
  %169 = vmatpush1.msra.mxu0 %v133
  %170 = vmatprep.subr.mxu0 0.0
  %171 = vmatpush1.msra.mxu0 %v134
  %172 = vmatprep.subr.mxu0 0.0
  %173 = vmatpush1.msra.mxu0 %v135
  %174 = vmatprep.subr.mxu0 0.0
  %175 = vmatpush1.msra.mxu0 %v136
  %176 = vmatprep.subr.mxu0 0.0
  %177 = vmatpush1.msra.mxu0 0.0
  %178 = vmatprep.subr.mxu0 0.0
  %179 = vmatpush1.msra.mxu0 0.0
  %180 = vmatprep.subr.mxu0 0.0
  %181 = vmatpush1.msra.mxu0 0.0
  %182 = vmatprep.subr.mxu0 0.0
  %183 = vmatpush1.msra.mxu0 0.0
  %184 = vmatprep.subr.mxu0 0.0
  %185 = vmatpush1.msra.mxu0 0.0
  %186 = vmatprep.subr.mxu0 0.0
  %187 = vmatpush1.msra.mxu0 0.0
  %188 = vmatprep.subr.mxu0 0.0
  %189 = vmatpush1.msra.mxu0 0.0
  %190 = vmatprep.subr.mxu0 0.0
  %191 = vmatpush1.msra.mxu0 0.0
  %192 = vmatprep.subr.mxu0 0.0
  %193 = vmatpush1.msra.mxu0 0.0
  %194 = vmatprep.subr.mxu0 0.0
  %195 = vmatpush1.msra.mxu0 0.0
  %196 = vmatprep.subr.mxu0 0.0
  %197 = vmatpush1.msra.mxu0 0.0
  %198 = vmatprep.subr.mxu0 0.0
  %199 = vmatpush1.msra.mxu0 0.0
  %200 = vmatprep.subr.mxu0 0.0
  %201 = vmatpush1.msra.mxu0 0.0
  %202 = vmatprep.subr.mxu0 0.0
  %203 = vmatpush1.msra.mxu0 0.0
  %204 = vmatprep.subr.mxu0 0.0
  %205 = vmatpush1.msra.mxu0 0.0
  %206 = vmatprep.subr.mxu0 0.0
  %207 = vmatpush1.msra.mxu0 0.0
  %208 = vmatprep.mubr.f32.mxu0 0.0
  %209 = vmatmul.mubr.f32.gmra.mrb[0].mxu0 %v120
  %v210 = vpop.f32.mrb[0].mxu0
  %v211 = vadd.f32 %v142, %v210
  %v212 = vpop.f32.mrb[0].mxu0
  %213 = vdwg.mxu0
  %v214 = vxor.u32 %v211, 2147483648
  %v215 = vmul.f32 %v214, 1.442695
  %v216 = vpow.pop %v215
  %v217 = vadd.f32 %v216, 1.0
  %v218 = vrcp.pop %v217
  %v219 = vmul.f32 1.0, %v218
  %220 = vst [vmem:[%s5] sm:$0x3] %v219
  // Predicated region
  $region22: #{_lambda_.16} parent=0 // pred_check
    _
  $region23: #{_lambda_.16} parent=0 // pred_check_branch
    %222 = sbr.rel (0) target = $region25
  $region24: #{_lambda_.16} parent=0 // pred_region
    _
  $region25: #{_lambda_.16} parent=0 // pred_fallthru
    _
  // Predicated region
  $region26: #{_lambda_.16} parent=0 // pred_check
    _
  $region27: #{_lambda_.16} parent=0 // pred_check_branch
    %224 = sbr.rel (0) target = $region29
  $region28: #{_lambda_.16} parent=0 // pred_region
    _
  $region29: #{_lambda_.16} parent=0 // pred_fallthru
    _

// kernel: _lambda_.14
$region0: #{_lambda_.14}
  #allocation0 [shape = 'u32[]', space=smem, size = 0x4, offset = 0x4, fixed_abs, tag = 'smem constant byte address 0x4 - core index']
  #allocation1 [shape = 'u32[144,128]{1,0:T(1,128)}', space=vmem, size = 0x12000, scoped, tag = 'internal scratch']
  %s0 = inlined_call_operand.vmem [shape: bf16[2,64,128], index: 0, kind: input, shape index: {}]
  %s1 = inlined_call_operand.vmem [shape: bf16[128,128], index: 1, kind: input, shape index: {}]
  %s2 = inlined_call_operand.vmem [shape: f32[1,128], index: 2, kind: input, shape index: {}]
  %s3 = inlined_call_operand.vmem [shape: f32[1,128], index: 3, kind: input, shape index: {}]
  %s4 = inlined_call_operand.vmem [shape: bf16[2,64,128], index: 4, kind: output, shape index: {}]
  %s5 = sld [smem:[#allocation0]]
  $region49: #{_lambda_.14} parent=0
    _
  %s7 = ssub.s32 1, %s5
  %s8 = scalar_select 0, %s7, %s5
  loop: start=0, step=1, limit=4
  $region2: #{_lambda_.14} parent=0 // loop_pre_header
    _
  $region3: #{_lambda_.14} parent=0 // loop_header
    %s10 = sphi 0, %s14
    %p11 = scmp.ge.s32.totalorder %s10, 4
    %s17 = sphi 0, %s29
    %s18 = sphi 0, %s25
    %s19 = sphi 0, %s17
    %s20 = sphi 0, %s18
    %s21 = sphi 0, %s19
    %s22 = sphi 0, %s20
    %s34 = sphi 0, %s36
    %s37 = sphi 0, %s34
    %s38 = sphi 0, %s37
    %s54 = sphi 0, %s38
    %s58 = sphi 0, %s58
    %s60 = sphi 0, %s58
    %s61 = sphi 0, %s60
    %s75 = sphi 0, %s61
    %s79 = sphi 0, %s79
    %s81 = sphi 0, %s79
    %s82 = sphi 0, %s81
    %s96 = sphi 0, %s82
    %s100 = sphi 0, %s100
    %s102 = sphi 0, %s100
    %s103 = sphi 0, %s102
    %s117 = sphi 0, %s103
    %s125 = sphi 0, %s127
    %s128 = sphi 0, %s125
    %s129 = sphi 0, %s128
    %s145 = sphi 0, %s129
  $region4: #{_lambda_.14} parent=0 // loop_header_branch
    %13 = sbr.rel (%p11) target = $region8
  $region5: #{_lambda_.14} parent=0 // loop_body
    %s15 = ssub.s32 %s10, 1
    %s16 = ssub.s32 %s10, 2
    %s23 = sadd.s32 1, %s18
    %p24 = scmp.ge.s32.totalorder %s23, 1
    %s25 = scalar_select %p24, 0, %s23
    %s26 = sadd.s32 1, %s17
    %s27 = scalar_select %p24, %s26, %s17
    %p28 = scmp.ge.s32.totalorder %s27, 2
    %s29 = scalar_select %p28, 0, %s27
    %s30 = ssub.s32 %s17, %s29
    %s31 = ssub.s32 %s18, %s25
    %s32 = sor.u32 %s30, %s31
    %p33 = scmp.eq.s32.totalorder %s32, 0
    %s35 = sadd.s32 %s34, 1
    %s36 = scalar_select %p33, %s34, %s35
    %p39 = pneg %p33
    %p40 = scmp.eq.s32.totalorder %s10, 1
    %p41 = por %p39, %p40
    %p42 = scmp.ne.s32.totalorder %s34, %s37
    %p43 = scmp.eq.s32.totalorder %s10, 0
    %p44 = por %p42, %p43
    %p45 = scmp.ne.s32.totalorder %s34, %s37
    %p46 = scmp.eq.s32.totalorder %s15, 1
    %p47 = por %p45, %p46
    %p48 = scmp.ne.s32.totalorder %s37, %s38
    %p49 = scmp.eq.s32.totalorder %s15, 0
    %p50 = por %p48, %p49
    %p51 = scmp.ne.s32.totalorder %s37, %s38
    %p52 = scmp.eq.s32.totalorder %s16, 1
    %p53 = por %p51, %p52
    %p55 = scmp.ne.s32.totalorder %s38, %s54
    %p56 = scmp.eq.s32.totalorder %s16, 0
    %p57 = por %p55, %p56
    %s59 = sadd.s32 %s58, 1
    %p62 = scmp.eq.s32.totalorder %s10, 1
    %p63 = scmp.ne.s32.totalorder %s58, %s60
    %p64 = scmp.eq.s32.totalorder %s10, 0
    %p65 = por %p63, %p64
    %p66 = scmp.ne.s32.totalorder %s58, %s60
    %p67 = scmp.eq.s32.totalorder %s15, 1
    %p68 = por %p66, %p67
    %p69 = scmp.ne.s32.totalorder %s60, %s61
    %p70 = scmp.eq.s32.totalorder %s15, 0
    %p71 = por %p69, %p70
    %p72 = scmp.ne.s32.totalorder %s60, %s61
    %p73 = scmp.eq.s32.totalorder %s16, 1
    %p74 = por %p72, %p73
    %p76 = scmp.ne.s32.totalorder %s61, %s75
    %p77 = scmp.eq.s32.totalorder %s16, 0
    %p78 = por %p76, %p77
    %s80 = sadd.s32 %s79, 1
    %p83 = scmp.eq.s32.totalorder %s10, 1
    %p84 = scmp.ne.s32.totalorder %s79, %s81
    %p85 = scmp.eq.s32.totalorder %s10, 0
    %p86 = por %p84, %p85
    %p87 = scmp.ne.s32.totalorder %s79, %s81
    %p88 = scmp.eq.s32.totalorder %s15, 1
    %p89 = por %p87, %p88
    %p90 = scmp.ne.s32.totalorder %s81, %s82
    %p91 = scmp.eq.s32.totalorder %s15, 0
    %p92 = por %p90, %p91
    %p93 = scmp.ne.s32.totalorder %s81, %s82
    %p94 = scmp.eq.s32.totalorder %s16, 1
    %p95 = por %p93, %p94
    %p97 = scmp.ne.s32.totalorder %s82, %s96
    %p98 = scmp.eq.s32.totalorder %s16, 0
    %p99 = por %p97, %p98
    %s101 = sadd.s32 %s100, 1
    %p104 = scmp.eq.s32.totalorder %s10, 1
    %p105 = scmp.ne.s32.totalorder %s100, %s102
    %p106 = scmp.eq.s32.totalorder %s10, 0
    %p107 = por %p105, %p106
    %p108 = scmp.ne.s32.totalorder %s100, %s102
    %p109 = scmp.eq.s32.totalorder %s15, 1
    %p110 = por %p108, %p109
    %p111 = scmp.ne.s32.totalorder %s102, %s103
    %p112 = scmp.eq.s32.totalorder %s15, 0
    %p113 = por %p111, %p112
    %p114 = scmp.ne.s32.totalorder %s102, %s103
    %p115 = scmp.eq.s32.totalorder %s16, 1
    %p116 = por %p114, %p115
    %p118 = scmp.ne.s32.totalorder %s103, %s117
    %p119 = scmp.eq.s32.totalorder %s16, 0
    %p120 = por %p118, %p119
    %s121 = ssub.s32 %s17, %s29
    %s122 = ssub.s32 %s18, %s25
    %s123 = sor.u32 %s121, %s122
    %p124 = scmp.eq.s32.totalorder %s123, 0
    %s126 = sadd.s32 %s125, 1
    %s127 = scalar_select %p124, %s125, %s126
    %p130 = pneg %p124
    %p131 = scmp.eq.s32.totalorder %s10, 1
    %p132 = por %p130, %p131
    %p133 = scmp.ne.s32.totalorder %s125, %s128
    %p134 = scmp.eq.s32.totalorder %s10, 0
    %p135 = por %p133, %p134
    %p136 = scmp.ne.s32.totalorder %s125, %s128
    %p137 = scmp.eq.s32.totalorder %s15, 1
    %p138 = por %p136, %p137
    %p139 = scmp.ne.s32.totalorder %s128, %s129
    %p140 = scmp.eq.s32.totalorder %s15, 0
    %p141 = por %p139, %p140
    %p142 = scmp.ne.s32.totalorder %s128, %s129
    %p143 = scmp.eq.s32.totalorder %s16, 1
    %p144 = por %p142, %p143
    %p146 = scmp.ne.s32.totalorder %s129, %s145
    %p147 = scmp.eq.s32.totalorder %s16, 0
    %p148 = por %p146, %p147
    %p149 = scmp.le.s32.totalorder 1, %s10
    %p150 = scmp.lt.s32.totalorder %s10, 3
    %p151 = pnand %p149, %p150
    %p152 = pneg %p151
    // Predicated region
    $region9: #{_lambda_.14} parent=5 // pred_check
      _
    $region10: #{_lambda_.14} parent=5 // pred_check_branch
      %154 = sbr.rel (%p151) target = $region12
    $region11: #{_lambda_.14} parent=5 // pred_region
      %s155 = ssub.s32 %s10, 1
      // Predicated region
      $region13: #{_lambda_.14} parent=11 // pred_check
        %p156 = pneg %p71
      $region14: #{_lambda_.14} parent=11 // pred_check_branch
        %158 = sbr.rel (%p156) target = $region16
      $region15: #{_lambda_.14} parent=11 // pred_region
        _
      $region16: #{_lambda_.14} parent=11 // pred_fallthru
        _
      // Predicated region
      $region17: #{_lambda_.14} parent=11 // pred_check
        %p159 = pneg %p92
      $region18: #{_lambda_.14} parent=11 // pred_check_branch
        %161 = sbr.rel (%p159) target = $region20
      $region19: #{_lambda_.14} parent=11 // pred_region
        _
      $region20: #{_lambda_.14} parent=11 // pred_fallthru
        _
      // Predicated region
      $region21: #{_lambda_.14} parent=11 // pred_check
        %p162 = pneg %p113
      $region22: #{_lambda_.14} parent=11 // pred_check_branch
        %164 = sbr.rel (%p162) target = $region24
      $region23: #{_lambda_.14} parent=11 // pred_region
        _
      $region24: #{_lambda_.14} parent=11 // pred_fallthru
        _
    $region12: #{_lambda_.14} parent=5 // pred_fallthru
      _
    %p165 = scmp.lt.s32.totalorder %s10, 2
    // Predicated region
    $region25: #{_lambda_.14} parent=5 // pred_check
      %p166 = pneg %p165
    $region26: #{_lambda_.14} parent=5 // pred_check_branch
      %168 = sbr.rel (%p166) target = $region28
    $region27: #{_lambda_.14} parent=5 // pred_region
      // Predicated region
      $region29: #{_lambda_.14} parent=27 // pred_check
        %p169 = pneg %p44
      $region30: #{_lambda_.14} parent=27 // pred_check_branch
        %171 = sbr.rel (%p169) target = $region32
      $region31: #{_lambda_.14} parent=27 // pred_region
        %s172 = smul.u32 8, %s18
        %p173 = scmp.lt.s32.totalorder %s17, 1
        %s174 = scalar_select %p173, %s17, 1
        %p175 = scmp.lt.s32.totalorder %s172, 7
        %s176 = scalar_select %p175, %s172, 7
        %s177 = smul.addr %s174, 8
        %s178 = sadd.s32 %s176, %s177
        %s179 = smul.addr %s178, 4
        %s180 = scalar_lea.vmem %s0, %s179
        %s181 = smul.u32 8, %s18
      $region32: #{_lambda_.14} parent=27 // pred_fallthru
        _
    $region28: #{_lambda_.14} parent=5 // pred_fallthru
      _
    %p182 = scmp.le.s32.totalorder 1, %s10
    %p183 = scmp.lt.s32.totalorder %s10, 3
    %p184 = pnand %p182, %p183
    %p185 = pneg %p184
    // Predicated region
    $region33: #{_lambda_.14} parent=5 // pred_check
      _
    $region34: #{_lambda_.14} parent=5 // pred_check_branch
      %187 = sbr.rel (%p184) target = $region36
    $region35: #{_lambda_.14} parent=5 // pred_region
      %s188 = ssub.s32 %s10, 1
      %s189 = smul.u32 8, %s20
      %p190 = scmp.lt.s32.totalorder %s19, 1
      %s191 = scalar_select %p190, %s19, 1
      %p192 = scmp.lt.s32.totalorder %s189, 7
      %s193 = scalar_select %p192, %s189, 7
      %s194 = smul.addr %s191, 8
      %s195 = sadd.s32 %s193, %s194
      %s196 = smul.addr %s195, 4
      %s197 = scalar_lea.vmem %s0, %s196
      %p198 = pneg %p50
      %p199 = pneg %p47
      %p200 = pneg %p71
      %p201 = pneg %p68
      %p202 = pneg %p92
      %p203 = pneg %p89
      %p204 = pneg %p113
      %p205 = pneg %p110
      %p206 = pneg %p141
      %p207 = pneg %p138
      %s208 = smul.u32 8, %s20
      %p209 = scmp.lt.s32.totalorder %s19, 1
      %s210 = scalar_select %p209, %s19, 1
      %p211 = scmp.lt.s32.totalorder %s208, 7
      %s212 = scalar_select %p211, %s208, 7
      %s213 = smul.addr %s210, 8
      %s214 = sadd.s32 %s212, %s213
      %s215 = smul.addr %s214, 4
      %s216 = scalar_lea.vmem %s4, %s215
      %s217 = smul.u32 8, %s20
      %p218 = scmp.lt.s32.totalorder %s19, 1
      %s219 = scalar_select %p218, %s19, 1
      %p220 = scmp.lt.s32.totalorder %s217, 7
      %s221 = scalar_select %p220, %s217, 7
      %s222 = smul.addr %s219, 8
      %s223 = sadd.s32 %s221, %s222
      %s224 = smul.addr %s223, 4
      %s225 = scalar_lea.vmem %s0, %s224
      %s226 = smul.u32 8, %s20
      %s227 = smul.u32 8, %s20
      %p228 = scmp.lt.s32.totalorder %s19, 1
      %s229 = scalar_select %p228, %s19, 1
      %p230 = scmp.lt.s32.totalorder %s227, 7
      %s231 = scalar_select %p230, %s227, 7
      %s232 = smul.addr %s229, 8
      %s233 = sadd.s32 %s231, %s232
      %s234 = smul.addr %s233, 4
      %s235 = scalar_lea.vmem %s4, %s234
      %s236 = smul.u32 8, %s20
      %v238 = vld [vmem:[%s225] sm:$0xf]
      %v239 = vld [vmem:[%s225 + $0x4] sm:$0xf]
      %v240 = vld [vmem:[%s225 + $0x8] sm:$0xf]
      %v241 = vld [vmem:[%s225 + $0xc] sm:$0xf]
      %v242 = vld [vmem:[%s225 + $0x10] sm:$0xf]
      %v243 = vld [vmem:[%s225 + $0x14] sm:$0xf]
      %v244 = vld [vmem:[%s225 + $0x18] sm:$0xf]
      %v245 = vld [vmem:[%s225 + $0x1c] sm:$0xf]
      %v246 = vld [vmem:[%s1] sm:$0xf]
      %v247 = vld [vmem:[%s1 + $0x4] sm:$0xf]
      %v248 = vld [vmem:[%s1 + $0x8] sm:$0xf]
      %v249 = vld [vmem:[%s1 + $0xc] sm:$0xf]
      %v250 = vld [vmem:[%s1 + $0x10] sm:$0xf]
      %v251 = vld [vmem:[%s1 + $0x14] sm:$0xf]
      %v252 = vld [vmem:[%s1 + $0x18] sm:$0xf]
      %v253 = vld [vmem:[%s1 + $0x1c] sm:$0xf]
      %v254 = vld [vmem:[%s1 + $0x20] sm:$0xf]
      %v255 = vld [vmem:[%s1 + $0x24] sm:$0xf]
      %v256 = vld [vmem:[%s1 + $0x28] sm:$0xf]
      %v257 = vld [vmem:[%s1 + $0x2c] sm:$0xf]
      %v258 = vld [vmem:[%s1 + $0x30] sm:$0xf]
      %v259 = vld [vmem:[%s1 + $0x34] sm:$0xf]
      %v260 = vld [vmem:[%s1 + $0x38] sm:$0xf]
      %v261 = vld [vmem:[%s1 + $0x3c] sm:$0xf]
      %v270 = vunpack.c.l.b16 %v238
      %v271 = vunpack.c.l.b16 %v239
      %v272 = vunpack.c.l.b16 %v240
      %v273 = vunpack.c.l.b16 %v241
      %v274 = vunpack.c.l.b16 %v242
      %v275 = vunpack.c.l.b16 %v243
      %v276 = vunpack.c.l.b16 %v244
      %v277 = vunpack.c.l.b16 %v245
      %v278 = vpack.c.b16 %v271, %v270
      %v279 = vpack.c.b16 %v273, %v272
      %v280 = vpack.c.b16 %v275, %v274
      %v281 = vpack.c.b16 %v277, %v276
      %v302 = vunpack.c.l.b16 %v246
      %v303 = vunpack.c.l.b16 %v247
      %v304 = vunpack.c.l.b16 %v248
      %v305 = vunpack.c.l.b16 %v249
      %v306 = vunpack.c.l.b16 %v250
      %v307 = vunpack.c.l.b16 %v251
      %v308 = vunpack.c.l.b16 %v252
      %v309 = vunpack.c.l.b16 %v253
      %v310 = vunpack.c.l.b16 %v254
      %v311 = vunpack.c.l.b16 %v255
      %v312 = vunpack.c.l.b16 %v256
      %v313 = vunpack.c.l.b16 %v257
      %v314 = vunpack.c.l.b16 %v258
      %v315 = vunpack.c.l.b16 %v259
      %v316 = vunpack.c.l.b16 %v260
      %v317 = vunpack.c.l.b16 %v261
      %v318 = vpack.c.b16 %v303, %v302
      %v319 = vpack.c.b16 %v305, %v304
      %v320 = vpack.c.b16 %v307, %v306
      %v321 = vpack.c.b16 %v309, %v308
      %v322 = vpack.c.b16 %v311, %v310
      %v323 = vpack.c.b16 %v313, %v312
      %v324 = vpack.c.b16 %v315, %v314
      %v325 = vpack.c.b16 %v317, %v316
      %334 = vmatprep.subr.bf16.mxu0 0
      %335 = vmatpush1.bf16.msra.mxu0 %v318
      %336 = vmatprep.subr.bf16.mxu0 0
      %337 = vmatpush1.bf16.msra.mxu0 %v319
      %338 = vmatprep.subr.bf16.mxu0 0
      %339 = vmatpush1.bf16.msra.mxu0 %v320
      %340 = vmatprep.subr.bf16.mxu0 0
      %341 = vmatpush1.bf16.msra.mxu0 %v321
      %342 = vmatprep.subr.bf16.mxu0 0
      %343 = vmatpush1.bf16.msra.mxu0 %v322
      %344 = vmatprep.subr.bf16.mxu0 0
      %345 = vmatpush1.bf16.msra.mxu0 %v323
      %346 = vmatprep.subr.bf16.mxu0 0
      %347 = vmatpush1.bf16.msra.mxu0 %v324
      %348 = vmatprep.subr.bf16.mxu0 0
      %349 = vmatpush1.bf16.msra.mxu0 %v325
      %350 = vmatprep.subr.bf16.mxu0 0
      %351 = vmatpush1.bf16.msra.mxu0 0
      %352 = vmatprep.subr.bf16.mxu0 0
      %353 = vmatpush1.bf16.msra.mxu0 0
      %354 = vmatprep.subr.bf16.mxu0 0
      %355 = vmatpush1.bf16.msra.mxu0 0
      %356 = vmatprep.subr.bf16.mxu0 0
      %357 = vmatpush1.bf16.msra.mxu0 0
      %358 = vmatprep.subr.bf16.mxu0 0
      %359 = vmatpush1.bf16.msra.mxu0 0
      %360 = vmatprep.subr.bf16.mxu0 0
      %361 = vmatpush1.bf16.msra.mxu0 0
      %362 = vmatprep.subr.bf16.mxu0 0
      %363 = vmatpush1.bf16.msra.mxu0 0
      %364 = vmatprep.subr.bf16.mxu0 0
      %365 = vmatpush1.bf16.msra.mxu0 0
      %366 = vmatprep.mubr.bf16.mxu0 0
      %367 = vmatmul.mubr.bf16.gmra.mrb[0].mxu0 %v278
      %v368 = vpop.f32.mrb[0].mxu0
      %v369 = vadd.f32 0.0, %v368
      %v370 = vpop.f32.mrb[0].mxu0
      %v371 = vpop.f32.mrb[0].mxu0
      %v372 = vadd.f32 0.0, %v371
      %v373 = vpop.f32.mrb[0].mxu0
      %374 = vmatprep.mubr.bf16.mxu0 0
      %375 = vmatmul.mubr.bf16.gmra.mrb[0].mxu0 %v279
      %v376 = vpop.f32.mrb[0].mxu0
      %v377 = vadd.f32 0.0, %v376
      %v378 = vpop.f32.mrb[0].mxu0
      %v379 = vpop.f32.mrb[0].mxu0
      %v380 = vadd.f32 0.0, %v379
      %v381 = vpop.f32.mrb[0].mxu0
      %382 = vmatprep.mubr.bf16.mxu0 0
      %383 = vmatmul.mubr.bf16.gmra.mrb[0].mxu0 %v280
      %v384 = vpop.f32.mrb[0].mxu0
      %v385 = vadd.f32 0.0, %v384
      %v386 = vpop.f32.mrb[0].mxu0
      %v387 = vpop.f32.mrb[0].mxu0
      %v388 = vadd.f32 0.0, %v387
      %v389 = vpop.f32.mrb[0].mxu0
      %390 = vmatprep.mubr.bf16.mxu0 0
      %391 = vmatmul.mubr.bf16.gmra.mrb[0].mxu0 %v281
      %v392 = vpop.f32.mrb[0].mxu0
      %v393 = vadd.f32 0.0, %v392
      %v394 = vpop.f32.mrb[0].mxu0
      %v395 = vpop.f32.mrb[0].mxu0
      %v396 = vadd.f32 0.0, %v395
      %v397 = vpop.f32.mrb[0].mxu0
      %398 = vdwg.mxu0
      %v399 = vld [vmem:[%s2] sm:$0x1]
      %v401 = vlaneseq
      %v402 = vshrl.u32 %v401, 7
      %v403 = vsub.s32 0, %v402
      %v404 = vrot.slane %v399, %v403
      %v406 = vmul.f32 %v369, %v404
      %v407 = vmul.f32 %v372, %v404
      %v408 = vmul.f32 %v377, %v404
      %v409 = vmul.f32 %v380, %v404
      %v410 = vmul.f32 %v385, %v404
      %v411 = vmul.f32 %v388, %v404
      %v412 = vmul.f32 %v393, %v404
      %v413 = vmul.f32 %v396, %v404
      %v414 = vld [vmem:[%s3] sm:$0x1]
      %v416 = vlaneseq
      %v417 = vshrl.u32 %v416, 7
      %v418 = vsub.s32 0, %v417
      %v419 = vrot.slane %v414, %v418
      %v421 = vadd.f32 %v406, %v419
      %v422 = vadd.f32 %v407, %v419
      %v423 = vadd.f32 %v408, %v419
      %v424 = vadd.f32 %v409, %v419
      %v425 = vadd.f32 %v410, %v419
      %v426 = vadd.f32 %v411, %v419
      %v427 = vadd.f32 %v412, %v419
      %v428 = vadd.f32 %v413, %v419
      %v429 = vxor.u32 %v421, 2147483648
      %v430 = vxor.u32 %v422, 2147483648
      %v431 = vxor.u32 %v423, 2147483648
      %v432 = vxor.u32 %v424, 2147483648
      %v433 = vxor.u32 %v425, 2147483648
      %v434 = vxor.u32 %v426, 2147483648
      %v435 = vxor.u32 %v427, 2147483648
      %v436 = vxor.u32 %v428, 2147483648
      %v437 = vmul.f32 %v429, 1.442695
      %v438 = vpow.pop %v437
      %v439 = vmul.f32 %v430, 1.442695
      %v440 = vpow.pop %v439
      %v441 = vmul.f32 %v431, 1.442695
      %v442 = vpow.pop %v441
      %v443 = vmul.f32 %v432, 1.442695
      %v444 = vpow.pop %v443
      %v445 = vmul.f32 %v433, 1.442695
      %v446 = vpow.pop %v445
      %v447 = vmul.f32 %v434, 1.442695
      %v448 = vpow.pop %v447
      %v449 = vmul.f32 %v435, 1.442695
      %v450 = vpow.pop %v449
      %v451 = vmul.f32 %v436, 1.442695
      %v452 = vpow.pop %v451
      %v453 = vadd.f32 %v438, 1.0
      %v454 = vadd.f32 %v440, 1.0
      %v455 = vadd.f32 %v442, 1.0
      %v456 = vadd.f32 %v444, 1.0
      %v457 = vadd.f32 %v446, 1.0
      %v458 = vadd.f32 %v448, 1.0
      %v459 = vadd.f32 %v450, 1.0
      %v460 = vadd.f32 %v452, 1.0
      %v461 = vrcp.pop %v453
      %v462 = vmul.f32 1.0, %v461
      %v463 = vrcp.pop %v454
      %v464 = vmul.f32 1.0, %v463
      %v465 = vrcp.pop %v455
      %v466 = vmul.f32 1.0, %v465
      %v467 = vrcp.pop %v456
      %v468 = vmul.f32 1.0, %v467
      %v469 = vrcp.pop %v457
      %v470 = vmul.f32 1.0, %v469
      %v471 = vrcp.pop %v458
      %v472 = vmul.f32 1.0, %v471
      %v473 = vrcp.pop %v459
      %v474 = vmul.f32 1.0, %v473
      %v475 = vrcp.pop %v460
      %v476 = vmul.f32 1.0, %v475
      %v477 = vmul.f32 %v421, %v462
      %v478 = vmul.f32 %v422, %v464
      %v479 = vmul.f32 %v423, %v466
      %v480 = vmul.f32 %v424, %v468
      %v481 = vmul.f32 %v425, %v470
      %v482 = vmul.f32 %v426, %v472
      %v483 = vmul.f32 %v427, %v474
      %v484 = vmul.f32 %v428, %v476
      %v485 = vpack.c.bf16 %v478, %v477
      %v486 = vpack.c.bf16 %v480, %v479
      %v487 = vpack.c.bf16 %v482, %v481
      %v488 = vpack.c.bf16 %v484, %v483
      %v493 = vunpack.c.l.b16 %v485
      %v494 = vunpack.c.h.b16 %v485
      %v495 = vunpack.c.l.b16 %v486
      %v496 = vunpack.c.h.b16 %v486
      %v497 = vunpack.c.l.b16 %v487
      %v498 = vunpack.c.h.b16 %v487
      %v499 = vunpack.c.l.b16 %v488
      %v500 = vunpack.c.h.b16 %v488
      %v501 = vpack.c.b16 %v493, %v493
      %v502 = vpack.c.b16 %v494, %v494
      %v503 = vpack.c.b16 %v495, %v495
      %v504 = vpack.c.b16 %v496, %v496
      %v505 = vpack.c.b16 %v497, %v497
      %v506 = vpack.c.b16 %v498, %v498
      %v507 = vpack.c.b16 %v499, %v499
      %v508 = vpack.c.b16 %v500, %v500
      %517 = vst [vmem:[%s235] sm:$0xf] %v501
      %518 = vst [vmem:[%s235 + $0x4] sm:$0xf] %v502
      %519 = vst [vmem:[%s235 + $0x8] sm:$0xf] %v503
      %520 = vst [vmem:[%s235 + $0xc] sm:$0xf] %v504
      %521 = vst [vmem:[%s235 + $0x10] sm:$0xf] %v505
      %522 = vst [vmem:[%s235 + $0x14] sm:$0xf] %v506
      %523 = vst [vmem:[%s235 + $0x18] sm:$0xf] %v507
      %524 = vst [vmem:[%s235 + $0x1c] sm:$0xf] %v508
      %s525 = smul.u32 8, %s20
      %p526 = scmp.lt.s32.totalorder %s19, 1
      %s527 = scalar_select %p526, %s19, 1
      %p528 = scmp.lt.s32.totalorder %s525, 7
      %s529 = scalar_select %p528, %s525, 7
      %s530 = smul.addr %s527, 8
      %s531 = sadd.s32 %s529, %s530
      %s532 = smul.addr %s531, 4
      %s533 = scalar_lea.vmem %s4, %s532
      // Predicated region
      $region37: #{_lambda_.14} parent=35 // pred_check
        %p534 = pneg %p138
      $region38: #{_lambda_.14} parent=35 // pred_check_branch
        %536 = sbr.rel (%p534) target = $region40
      $region39: #{_lambda_.14} parent=35 // pred_region
        %s537 = smul.u32 8, %s20
      $region40: #{_lambda_.14} parent=35 // pred_fallthru
        _
    $region36: #{_lambda_.14} parent=5 // pred_fallthru
      _
    %p538 = scmp.le.s32.totalorder 2, %s10
    // Predicated region
    $region41: #{_lambda_.14} parent=5 // pred_check
      %p539 = pneg %p538
    $region42: #{_lambda_.14} parent=5 // pred_check_branch
      %541 = sbr.rel (%p539) target = $region44
    $region43: #{_lambda_.14} parent=5 // pred_region
      %s542 = ssub.s32 %s10, 2
      // Predicated region
      $region45: #{_lambda_.14} parent=43 // pred_check
        %p543 = pneg %p144
      $region46: #{_lambda_.14} parent=43 // pred_check_branch
        %545 = sbr.rel (%p543) target = $region48
      $region47: #{_lambda_.14} parent=43 // pred_region
        %s546 = smul.u32 8, %s22
        %p547 = scmp.lt.s32.totalorder %s21, 1
        %s548 = scalar_select %p547, %s21, 1
        %p549 = scmp.lt.s32.totalorder %s546, 7
        %s550 = scalar_select %p549, %s546, 7
        %s551 = smul.addr %s548, 8
        %s552 = sadd.s32 %s550, %s551
        %s553 = smul.addr %s552, 4
        %s554 = scalar_lea.vmem %s4, %s553
      $region48: #{_lambda_.14} parent=43 // pred_fallthru
        _
    $region44: #{_lambda_.14} parent=5 // pred_fallthru
      _
  $region6: #{_lambda_.14} parent=0 // loop_footer
    %s14 = sadd.s32 1, %s10
  $region7: #{_lambda_.14} parent=0 // loop_footer_branch
    %9 = sbr.rel target = $region3
  $region8: #{_lambda_.14} parent=0 // loop_exit
    _

// kernel: _lambda_.17
$region0: #{_lambda_.17}
  #allocation0 [shape = 'u32[]', space=smem, size = 0x4, offset = 0x4, fixed_abs, tag = 'smem constant byte address 0x4 - core index']
  #allocation1 [shape = 'u32[144,128]{1,0:T(1,128)}', space=vmem, size = 0x12000, scoped, tag = 'internal scratch']
  %s0 = inlined_call_operand.vmem [shape: bf16[2,64,128], index: 0, kind: input, shape index: {}]
  %s1 = inlined_call_operand.vmem [shape: bf16[128,128], index: 1, kind: input, shape index: {}]
  %s2 = inlined_call_operand.vmem [shape: f32[1,128], index: 2, kind: input, shape index: {}]
  %s3 = inlined_call_operand.vmem [shape: f32[1,128], index: 3, kind: input, shape index: {}]
  %s4 = inlined_call_operand.vmem [shape: f32[2,1,128], index: 4, kind: input, shape index: {}]
  %s5 = inlined_call_operand.vmem [shape: bf16[2,64,128], index: 5, kind: input, shape index: {}]
  %s6 = inlined_call_operand.vmem [shape: bf16[2,64,128], index: 6, kind: output, shape index: {}]
  %s7 = sld [smem:[#allocation0]]
  $region57: #{_lambda_.17} parent=0
    _
  %s9 = ssub.s32 1, %s7
  %s10 = scalar_select 0, %s9, %s7
  loop: start=0, step=1, limit=4
  $region2: #{_lambda_.17} parent=0 // loop_pre_header
    _
  $region3: #{_lambda_.17} parent=0 // loop_header
    %s12 = sphi 0, %s16
    %p13 = scmp.ge.s32.totalorder %s12, 4
    %s19 = sphi 0, %s31
    %s20 = sphi 0, %s27
    %s21 = sphi 0, %s19
    %s22 = sphi 0, %s20
    %s23 = sphi 0, %s21
    %s24 = sphi 0, %s22
    %s36 = sphi 0, %s38
    %s39 = sphi 0, %s36
    %s40 = sphi 0, %s39
    %s56 = sphi 0, %s40
    %s60 = sphi 0, %s60
    %s62 = sphi 0, %s60
    %s63 = sphi 0, %s62
    %s77 = sphi 0, %s63
    %s81 = sphi 0, %s81
    %s83 = sphi 0, %s81
    %s84 = sphi 0, %s83
    %s98 = sphi 0, %s84
    %s102 = sphi 0, %s102
    %s104 = sphi 0, %s102
    %s105 = sphi 0, %s104
    %s119 = sphi 0, %s105
    %s125 = sphi 0, %s127
    %s128 = sphi 0, %s125
    %s129 = sphi 0, %s128
    %s145 = sphi 0, %s129
    %s153 = sphi 0, %s155
    %s156 = sphi 0, %s153
    %s157 = sphi 0, %s156
    %s173 = sphi 0, %s157
    %s181 = sphi 0, %s183
    %s184 = sphi 0, %s181
    %s185 = sphi 0, %s184
    %s201 = sphi 0, %s185
  $region4: #{_lambda_.17} parent=0 // loop_header_branch
    %15 = sbr.rel (%p13) target = $region8
  $region5: #{_lambda_.17} parent=0 // loop_body
    %s17 = ssub.s32 %s12, 1
    %s18 = ssub.s32 %s12, 2
    %s25 = sadd.s32 1, %s20
    %p26 = scmp.ge.s32.totalorder %s25, 1
    %s27 = scalar_select %p26, 0, %s25
    %s28 = sadd.s32 1, %s19
    %s29 = scalar_select %p26, %s28, %s19
    %p30 = scmp.ge.s32.totalorder %s29, 2
    %s31 = scalar_select %p30, 0, %s29
    %s32 = ssub.s32 %s19, %s31
    %s33 = ssub.s32 %s20, %s27
    %s34 = sor.u32 %s32, %s33
    %p35 = scmp.eq.s32.totalorder %s34, 0
    %s37 = sadd.s32 %s36, 1
    %s38 = scalar_select %p35, %s36, %s37
    %p41 = pneg %p35
    %p42 = scmp.eq.s32.totalorder %s12, 1
    %p43 = por %p41, %p42
    %p44 = scmp.ne.s32.totalorder %s36, %s39
    %p45 = scmp.eq.s32.totalorder %s12, 0
    %p46 = por %p44, %p45
    %p47 = scmp.ne.s32.totalorder %s36, %s39
    %p48 = scmp.eq.s32.totalorder %s17, 1
    %p49 = por %p47, %p48
    %p50 = scmp.ne.s32.totalorder %s39, %s40
    %p51 = scmp.eq.s32.totalorder %s17, 0
    %p52 = por %p50, %p51
    %p53 = scmp.ne.s32.totalorder %s39, %s40
    %p54 = scmp.eq.s32.totalorder %s18, 1
    %p55 = por %p53, %p54
    %p57 = scmp.ne.s32.totalorder %s40, %s56
    %p58 = scmp.eq.s32.totalorder %s18, 0
    %p59 = por %p57, %p58
    %s61 = sadd.s32 %s60, 1
    %p64 = scmp.eq.s32.totalorder %s12, 1
    %p65 = scmp.ne.s32.totalorder %s60, %s62
    %p66 = scmp.eq.s32.totalorder %s12, 0
    %p67 = por %p65, %p66
    %p68 = scmp.ne.s32.totalorder %s60, %s62
    %p69 = scmp.eq.s32.totalorder %s17, 1
    %p70 = por %p68, %p69
    %p71 = scmp.ne.s32.totalorder %s62, %s63
    %p72 = scmp.eq.s32.totalorder %s17, 0
    %p73 = por %p71, %p72
    %p74 = scmp.ne.s32.totalorder %s62, %s63
    %p75 = scmp.eq.s32.totalorder %s18, 1
    %p76 = por %p74, %p75
    %p78 = scmp.ne.s32.totalorder %s63, %s77
    %p79 = scmp.eq.s32.totalorder %s18, 0
    %p80 = por %p78, %p79
    %s82 = sadd.s32 %s81, 1
    %p85 = scmp.eq.s32.totalorder %s12, 1
    %p86 = scmp.ne.s32.totalorder %s81, %s83
    %p87 = scmp.eq.s32.totalorder %s12, 0
    %p88 = por %p86, %p87
    %p89 = scmp.ne.s32.totalorder %s81, %s83
    %p90 = scmp.eq.s32.totalorder %s17, 1
    %p91 = por %p89, %p90
    %p92 = scmp.ne.s32.totalorder %s83, %s84
    %p93 = scmp.eq.s32.totalorder %s17, 0
    %p94 = por %p92, %p93
    %p95 = scmp.ne.s32.totalorder %s83, %s84
    %p96 = scmp.eq.s32.totalorder %s18, 1
    %p97 = por %p95, %p96
    %p99 = scmp.ne.s32.totalorder %s84, %s98
    %p100 = scmp.eq.s32.totalorder %s18, 0
    %p101 = por %p99, %p100
    %s103 = sadd.s32 %s102, 1
    %p106 = scmp.eq.s32.totalorder %s12, 1
    %p107 = scmp.ne.s32.totalorder %s102, %s104
    %p108 = scmp.eq.s32.totalorder %s12, 0
    %p109 = por %p107, %p108
    %p110 = scmp.ne.s32.totalorder %s102, %s104
    %p111 = scmp.eq.s32.totalorder %s17, 1
    %p112 = por %p110, %p111
    %p113 = scmp.ne.s32.totalorder %s104, %s105
    %p114 = scmp.eq.s32.totalorder %s17, 0
    %p115 = por %p113, %p114
    %p116 = scmp.ne.s32.totalorder %s104, %s105
    %p117 = scmp.eq.s32.totalorder %s18, 1
    %p118 = por %p116, %p117
    %p120 = scmp.ne.s32.totalorder %s105, %s119
    %p121 = scmp.eq.s32.totalorder %s18, 0
    %p122 = por %p120, %p121
    %s123 = ssub.s32 %s19, %s31
    %p124 = scmp.eq.s32.totalorder %s123, 0
    %s126 = sadd.s32 %s125, 1
    %s127 = scalar_select %p124, %s125, %s126
    %p130 = pneg %p124
    %p131 = scmp.eq.s32.totalorder %s12, 1
    %p132 = por %p130, %p131
    %p133 = scmp.ne.s32.totalorder %s125, %s128
    %p134 = scmp.eq.s32.totalorder %s12, 0
    %p135 = por %p133, %p134
    %p136 = scmp.ne.s32.totalorder %s125, %s128
    %p137 = scmp.eq.s32.totalorder %s17, 1
    %p138 = por %p136, %p137
    %p139 = scmp.ne.s32.totalorder %s128, %s129
    %p140 = scmp.eq.s32.totalorder %s17, 0
    %p141 = por %p139, %p140
    %p142 = scmp.ne.s32.totalorder %s128, %s129
    %p143 = scmp.eq.s32.totalorder %s18, 1
    %p144 = por %p142, %p143
    %p146 = scmp.ne.s32.totalorder %s129, %s145
    %p147 = scmp.eq.s32.totalorder %s18, 0
    %p148 = por %p146, %p147
    %s149 = ssub.s32 %s19, %s31
    %s150 = ssub.s32 %s20, %s27
    %s151 = sor.u32 %s149, %s150
    %p152 = scmp.eq.s32.totalorder %s151, 0
    %s154 = sadd.s32 %s153, 1
    %s155 = scalar_select %p152, %s153, %s154
    %p158 = pneg %p152
    %p159 = scmp.eq.s32.totalorder %s12, 1
    %p160 = por %p158, %p159
    %p161 = scmp.ne.s32.totalorder %s153, %s156
    %p162 = scmp.eq.s32.totalorder %s12, 0
    %p163 = por %p161, %p162
    %p164 = scmp.ne.s32.totalorder %s153, %s156
    %p165 = scmp.eq.s32.totalorder %s17, 1
    %p166 = por %p164, %p165
    %p167 = scmp.ne.s32.totalorder %s156, %s157
    %p168 = scmp.eq.s32.totalorder %s17, 0
    %p169 = por %p167, %p168
    %p170 = scmp.ne.s32.totalorder %s156, %s157
    %p171 = scmp.eq.s32.totalorder %s18, 1
    %p172 = por %p170, %p171
    %p174 = scmp.ne.s32.totalorder %s157, %s173
    %p175 = scmp.eq.s32.totalorder %s18, 0
    %p176 = por %p174, %p175
    %s177 = ssub.s32 %s19, %s31
    %s178 = ssub.s32 %s20, %s27
    %s179 = sor.u32 %s177, %s178
    %p180 = scmp.eq.s32.totalorder %s179, 0
    %s182 = sadd.s32 %s181, 1
    %s183 = scalar_select %p180, %s181, %s182
    %p186 = pneg %p180
    %p187 = scmp.eq.s32.totalorder %s12, 1
    %p188 = por %p186, %p187
    %p189 = scmp.ne.s32.totalorder %s181, %s184
    %p190 = scmp.eq.s32.totalorder %s12, 0
    %p191 = por %p189, %p190
    %p192 = scmp.ne.s32.totalorder %s181, %s184
    %p193 = scmp.eq.s32.totalorder %s17, 1
    %p194 = por %p192, %p193
    %p195 = scmp.ne.s32.totalorder %s184, %s185
    %p196 = scmp.eq.s32.totalorder %s17, 0
    %p197 = por %p195, %p196
    %p198 = scmp.ne.s32.totalorder %s184, %s185
    %p199 = scmp.eq.s32.totalorder %s18, 1
    %p200 = por %p198, %p199
    %p202 = scmp.ne.s32.totalorder %s185, %s201
    %p203 = scmp.eq.s32.totalorder %s18, 0
    %p204 = por %p202, %p203
    %p205 = scmp.le.s32.totalorder 1, %s12
    %p206 = scmp.lt.s32.totalorder %s12, 3
    %p207 = pnand %p205, %p206
    %p208 = pneg %p207
    // Predicated region
    $region9: #{_lambda_.17} parent=5 // pred_check
      _
    $region10: #{_lambda_.17} parent=5 // pred_check_branch
      %210 = sbr.rel (%p207) target = $region12
    $region11: #{_lambda_.17} parent=5 // pred_region
      %s211 = ssub.s32 %s12, 1
      // Predicated region
      $region13: #{_lambda_.17} parent=11 // pred_check
        %p212 = pneg %p73
      $region14: #{_lambda_.17} parent=11 // pred_check_branch
        %214 = sbr.rel (%p212) target = $region16
      $region15: #{_lambda_.17} parent=11 // pred_region
        _
      $region16: #{_lambda_.17} parent=11 // pred_fallthru
        _
      // Predicated region
      $region17: #{_lambda_.17} parent=11 // pred_check
        %p215 = pneg %p94
      $region18: #{_lambda_.17} parent=11 // pred_check_branch
        %217 = sbr.rel (%p215) target = $region20
      $region19: #{_lambda_.17} parent=11 // pred_region
        _
      $region20: #{_lambda_.17} parent=11 // pred_fallthru
        _
      // Predicated region
      $region21: #{_lambda_.17} parent=11 // pred_check
        %p218 = pneg %p115
      $region22: #{_lambda_.17} parent=11 // pred_check_branch
        %220 = sbr.rel (%p218) target = $region24
      $region23: #{_lambda_.17} parent=11 // pred_region
        _
      $region24: #{_lambda_.17} parent=11 // pred_fallthru
        _
    $region12: #{_lambda_.17} parent=5 // pred_fallthru
      _
    %p221 = scmp.lt.s32.totalorder %s12, 2
    // Predicated region
    $region25: #{_lambda_.17} parent=5 // pred_check
      %p222 = pneg %p221
    $region26: #{_lambda_.17} parent=5 // pred_check_branch
      %224 = sbr.rel (%p222) target = $region28
    $region27: #{_lambda_.17} parent=5 // pred_region
      // Predicated region
      $region29: #{_lambda_.17} parent=27 // pred_check
        %p225 = pneg %p46
      $region30: #{_lambda_.17} parent=27 // pred_check_branch
        %227 = sbr.rel (%p225) target = $region32
      $region31: #{_lambda_.17} parent=27 // pred_region
        %s228 = smul.u32 8, %s20
        %p229 = scmp.lt.s32.totalorder %s19, 1
        %s230 = scalar_select %p229, %s19, 1
        %p231 = scmp.lt.s32.totalorder %s228, 7
        %s232 = scalar_select %p231, %s228, 7
        %s233 = smul.addr %s230, 8
        %s234 = sadd.s32 %s232, %s233
        %s235 = smul.addr %s234, 4
        %s236 = scalar_lea.vmem %s0, %s235
        %s237 = smul.u32 8, %s20
      $region32: #{_lambda_.17} parent=27 // pred_fallthru
        _
      // Predicated region
      $region33: #{_lambda_.17} parent=27 // pred_check
        %p238 = pneg %p135
      $region34: #{_lambda_.17} parent=27 // pred_check_branch
        %240 = sbr.rel (%p238) target = $region36
      $region35: #{_lambda_.17} parent=27 // pred_region
        %p241 = scmp.lt.s32.totalorder %s19, 1
        %s242 = scalar_select %p241, %s19, 1
        %s243 = scalar_lea.vmem %s4, %s242
      $region36: #{_lambda_.17} parent=27 // pred_fallthru
        _
      // Predicated region
      $region37: #{_lambda_.17} parent=27 // pred_check
        %p244 = pneg %p163
      $region38: #{_lambda_.17} parent=27 // pred_check_branch
        %246 = sbr.rel (%p244) target = $region40
      $region39: #{_lambda_.17} parent=27 // pred_region
        %s247 = smul.u32 8, %s20
        %p248 = scmp.lt.s32.totalorder %s19, 1
        %s249 = scalar_select %p248, %s19, 1
        %p250 = scmp.lt.s32.totalorder %s247, 7
        %s251 = scalar_select %p250, %s247, 7
        %s252 = smul.addr %s249, 8
        %s253 = sadd.s32 %s251, %s252
        %s254 = smul.addr %s253, 4
        %s255 = scalar_lea.vmem %s5, %s254
        %s256 = smul.u32 8, %s20
      $region40: #{_lambda_.17} parent=27 // pred_fallthru
        _
    $region28: #{_lambda_.17} parent=5 // pred_fallthru
      _
    %p257 = scmp.le.s32.totalorder 1, %s12
    %p258 = scmp.lt.s32.totalorder %s12, 3
    %p259 = pnand %p257, %p258
    %p260 = pneg %p259
    // Predicated region
    $region41: #{_lambda_.17} parent=5 // pred_check
      _
    $region42: #{_lambda_.17} parent=5 // pred_check_branch
      %262 = sbr.rel (%p259) target = $region44
    $region43: #{_lambda_.17} parent=5 // pred_region
      %s263 = ssub.s32 %s12, 1
      %s264 = smul.u32 8, %s22
      %p265 = scmp.lt.s32.totalorder %s21, 1
      %s266 = scalar_select %p265, %s21, 1
      %p267 = scmp.lt.s32.totalorder %s264, 7
      %s268 = scalar_select %p267, %s264, 7
      %s269 = smul.addr %s266, 8
      %s270 = sadd.s32 %s268, %s269
      %s271 = smul.addr %s270, 4
      %s272 = scalar_lea.vmem %s0, %s271
      %p273 = pneg %p52
      %p274 = pneg %p49
      %p275 = pneg %p73
      %p276 = pneg %p70
      %p277 = pneg %p94
      %p278 = pneg %p91
      %p279 = pneg %p115
      %p280 = pneg %p112
      %p281 = scmp.lt.s32.totalorder %s21, 1
      %s282 = scalar_select %p281, %s21, 1
      %s283 = scalar_lea.vmem %s4, %s282
      %p284 = pneg %p141
      %p285 = pneg %p138
      %s286 = smul.u32 8, %s22
      %p287 = scmp.lt.s32.totalorder %s21, 1
      %s288 = scalar_select %p287, %s21, 1
      %p289 = scmp.lt.s32.totalorder %s286, 7
      %s290 = scalar_select %p289, %s286, 7
      %s291 = smul.addr %s288, 8
      %s292 = sadd.s32 %s290, %s291
      %s293 = smul.addr %s292, 4
      %s294 = scalar_lea.vmem %s5, %s293
      %p295 = pneg %p169
      %p296 = pneg %p166
      %p297 = pneg %p197
      %p298 = pneg %p194
      %s299 = smul.u32 8, %s22
      %p300 = scmp.lt.s32.totalorder %s21, 1
      %s301 = scalar_select %p300, %s21, 1
      %p302 = scmp.lt.s32.totalorder %s299, 7
      %s303 = scalar_select %p302, %s299, 7
      %s304 = smul.addr %s301, 8
      %s305 = sadd.s32 %s303, %s304
      %s306 = smul.addr %s305, 4
      %s307 = scalar_lea.vmem %s6, %s306
      %s308 = smul.u32 8, %s22
      %p309 = scmp.lt.s32.totalorder %s21, 1
      %s310 = scalar_select %p309, %s21, 1
      %p311 = scmp.lt.s32.totalorder %s308, 7
      %s312 = scalar_select %p311, %s308, 7
      %s313 = smul.addr %s310, 8
      %s314 = sadd.s32 %s312, %s313
      %s315 = smul.addr %s314, 4
      %s316 = scalar_lea.vmem %s0, %s315
      %s317 = smul.u32 8, %s22
      %p318 = scmp.lt.s32.totalorder %s21, 1
      %s319 = scalar_select %p318, %s21, 1
      %s320 = scalar_lea.vmem %s4, %s319
      %s321 = smul.u32 8, %s22
      %p322 = scmp.lt.s32.totalorder %s21, 1
      %s323 = scalar_select %p322, %s21, 1
      %p324 = scmp.lt.s32.totalorder %s321, 7
      %s325 = scalar_select %p324, %s321, 7
      %s326 = smul.addr %s323, 8
      %s327 = sadd.s32 %s325, %s326
      %s328 = smul.addr %s327, 4
      %s329 = scalar_lea.vmem %s5, %s328
      %s330 = smul.u32 8, %s22
      %s331 = smul.u32 8, %s22
      %p332 = scmp.lt.s32.totalorder %s21, 1
      %s333 = scalar_select %p332, %s21, 1
      %p334 = scmp.lt.s32.totalorder %s331, 7
      %s335 = scalar_select %p334, %s331, 7
      %s336 = smul.addr %s333, 8
      %s337 = sadd.s32 %s335, %s336
      %s338 = smul.addr %s337, 4
      %s339 = scalar_lea.vmem %s6, %s338
      %s340 = smul.u32 8, %s22
      %v342 = vld [vmem:[%s316] sm:$0xf]
      %v343 = vld [vmem:[%s316 + $0x4] sm:$0xf]
      %v344 = vld [vmem:[%s316 + $0x8] sm:$0xf]
      %v345 = vld [vmem:[%s316 + $0xc] sm:$0xf]
      %v346 = vld [vmem:[%s316 + $0x10] sm:$0xf]
      %v347 = vld [vmem:[%s316 + $0x14] sm:$0xf]
      %v348 = vld [vmem:[%s316 + $0x18] sm:$0xf]
      %v349 = vld [vmem:[%s316 + $0x1c] sm:$0xf]
      %v350 = vunpack.c.l.bf16 %v342
      %v351 = vunpack.c.l.bf16 %v343
      %v352 = vunpack.c.l.bf16 %v344
      %v353 = vunpack.c.l.bf16 %v345
      %v354 = vunpack.c.l.bf16 %v346
      %v355 = vunpack.c.l.bf16 %v347
      %v356 = vunpack.c.l.bf16 %v348
      %v357 = vunpack.c.l.bf16 %v349
      %v358 = vld [vmem:[%s320] sm:$0x1]
      %v360 = vlaneseq
      %v361 = vshrl.u32 %v360, 7
      %v362 = vsub.s32 0, %v361
      %v363 = vrot.slane %v358, %v362
      %v365 = vmul.f32 %v350, %v363
      %v366 = vmul.f32 %v351, %v363
      %v367 = vmul.f32 %v352, %v363
      %v368 = vmul.f32 %v353, %v363
      %v369 = vmul.f32 %v354, %v363
      %v370 = vmul.f32 %v355, %v363
      %v371 = vmul.f32 %v356, %v363
      %v372 = vmul.f32 %v357, %v363
      %v373 = vpack.c.bf16 %v366, %v365
      %v374 = vpack.c.bf16 %v368, %v367
      %v375 = vpack.c.bf16 %v370, %v369
      %v376 = vpack.c.bf16 %v372, %v371
      %v377 = vld [vmem:[%s1] sm:$0xf]
      %v378 = vld [vmem:[%s1 + $0x4] sm:$0xf]
      %v379 = vld [vmem:[%s1 + $0x8] sm:$0xf]
      %v380 = vld [vmem:[%s1 + $0xc] sm:$0xf]
      %v381 = vld [vmem:[%s1 + $0x10] sm:$0xf]
      %v382 = vld [vmem:[%s1 + $0x14] sm:$0xf]
      %v383 = vld [vmem:[%s1 + $0x18] sm:$0xf]
      %v384 = vld [vmem:[%s1 + $0x1c] sm:$0xf]
      %v385 = vld [vmem:[%s1 + $0x20] sm:$0xf]
      %v386 = vld [vmem:[%s1 + $0x24] sm:$0xf]
      %v387 = vld [vmem:[%s1 + $0x28] sm:$0xf]
      %v388 = vld [vmem:[%s1 + $0x2c] sm:$0xf]
      %v389 = vld [vmem:[%s1 + $0x30] sm:$0xf]
      %v390 = vld [vmem:[%s1 + $0x34] sm:$0xf]
      %v391 = vld [vmem:[%s1 + $0x38] sm:$0xf]
      %v392 = vld [vmem:[%s1 + $0x3c] sm:$0xf]
      %v409 = vunpack.c.l.b16 %v377
      %v410 = vunpack.c.l.b16 %v378
      %v411 = vunpack.c.l.b16 %v379
      %v412 = vunpack.c.l.b16 %v380
      %v413 = vunpack.c.l.b16 %v381
      %v414 = vunpack.c.l.b16 %v382
      %v415 = vunpack.c.l.b16 %v383
      %v416 = vunpack.c.l.b16 %v384
      %v417 = vunpack.c.l.b16 %v385
      %v418 = vunpack.c.l.b16 %v386
      %v419 = vunpack.c.l.b16 %v387
      %v420 = vunpack.c.l.b16 %v388
      %v421 = vunpack.c.l.b16 %v389
      %v422 = vunpack.c.l.b16 %v390
      %v423 = vunpack.c.l.b16 %v391
      %v424 = vunpack.c.l.b16 %v392
      %v425 = vpack.c.b16 %v410, %v409
      %v426 = vpack.c.b16 %v412, %v411
      %v427 = vpack.c.b16 %v414, %v413
      %v428 = vpack.c.b16 %v416, %v415
      %v429 = vpack.c.b16 %v418, %v417
      %v430 = vpack.c.b16 %v420, %v419
      %v431 = vpack.c.b16 %v422, %v421
      %v432 = vpack.c.b16 %v424, %v423
      %441 = vmatprep.subr.bf16.mxu0 0
      %442 = vmatpush1.bf16.msra.mxu0 %v425
      %443 = vmatprep.subr.bf16.mxu0 0
      %444 = vmatpush1.bf16.msra.mxu0 %v426
      %445 = vmatprep.subr.bf16.mxu0 0
      %446 = vmatpush1.bf16.msra.mxu0 %v427
      %447 = vmatprep.subr.bf16.mxu0 0
      %448 = vmatpush1.bf16.msra.mxu0 %v428
      %449 = vmatprep.subr.bf16.mxu0 0
      %450 = vmatpush1.bf16.msra.mxu0 %v429
      %451 = vmatprep.subr.bf16.mxu0 0
      %452 = vmatpush1.bf16.msra.mxu0 %v430
      %453 = vmatprep.subr.bf16.mxu0 0
      %454 = vmatpush1.bf16.msra.mxu0 %v431
      %455 = vmatprep.subr.bf16.mxu0 0
      %456 = vmatpush1.bf16.msra.mxu0 %v432
      %457 = vmatprep.subr.bf16.mxu0 0
      %458 = vmatpush1.bf16.msra.mxu0 0
      %459 = vmatprep.subr.bf16.mxu0 0
      %460 = vmatpush1.bf16.msra.mxu0 0
      %461 = vmatprep.subr.bf16.mxu0 0
      %462 = vmatpush1.bf16.msra.mxu0 0
      %463 = vmatprep.subr.bf16.mxu0 0
      %464 = vmatpush1.bf16.msra.mxu0 0
      %465 = vmatprep.subr.bf16.mxu0 0
      %466 = vmatpush1.bf16.msra.mxu0 0
      %467 = vmatprep.subr.bf16.mxu0 0
      %468 = vmatpush1.bf16.msra.mxu0 0
      %469 = vmatprep.subr.bf16.mxu0 0
      %470 = vmatpush1.bf16.msra.mxu0 0
      %471 = vmatprep.subr.bf16.mxu0 0
      %472 = vmatpush1.bf16.msra.mxu0 0
      %473 = vmatprep.mubr.bf16.mxu0 0
      %474 = vmatmul.mubr.bf16.gmra.mrb[0].mxu0 %v373
      %v475 = vpop.f32.mrb[0].mxu0
      %v476 = vadd.f32 0.0, %v475
      %v477 = vpop.f32.mrb[0].mxu0
      %v478 = vpop.f32.mrb[0].mxu0
      %v479 = vadd.f32 0.0, %v478
      %v480 = vpop.f32.mrb[0].mxu0
      %481 = vmatprep.mubr.bf16.mxu0 0
      %482 = vmatmul.mubr.bf16.gmra.mrb[0].mxu0 %v374
      %v483 = vpop.f32.mrb[0].mxu0
      %v484 = vadd.f32 0.0, %v483
      %v485 = vpop.f32.mrb[0].mxu0
      %v486 = vpop.f32.mrb[0].mxu0
      %v487 = vadd.f32 0.0, %v486
      %v488 = vpop.f32.mrb[0].mxu0
      %489 = vmatprep.mubr.bf16.mxu0 0
      %490 = vmatmul.mubr.bf16.gmra.mrb[0].mxu0 %v375
      %v491 = vpop.f32.mrb[0].mxu0
      %v492 = vadd.f32 0.0, %v491
      %v493 = vpop.f32.mrb[0].mxu0
      %v494 = vpop.f32.mrb[0].mxu0
      %v495 = vadd.f32 0.0, %v494
      %v496 = vpop.f32.mrb[0].mxu0
      %497 = vmatprep.mubr.bf16.mxu0 0
      %498 = vmatmul.mubr.bf16.gmra.mrb[0].mxu0 %v376
      %v499 = vpop.f32.mrb[0].mxu0
      %v500 = vadd.f32 0.0, %v499
      %v501 = vpop.f32.mrb[0].mxu0
      %v502 = vpop.f32.mrb[0].mxu0
      %v503 = vadd.f32 0.0, %v502
      %v504 = vpop.f32.mrb[0].mxu0
      %505 = vdwg.mxu0
      %v506 = vld [vmem:[%s2] sm:$0x1]
      %v508 = vlaneseq
      %v509 = vshrl.u32 %v508, 7
      %v510 = vsub.s32 0, %v509
      %v511 = vrot.slane %v506, %v510
      %v513 = vmul.f32 %v476, %v511
      %v514 = vmul.f32 %v479, %v511
      %v515 = vmul.f32 %v484, %v511
      %v516 = vmul.f32 %v487, %v511
      %v517 = vmul.f32 %v492, %v511
      %v518 = vmul.f32 %v495, %v511
      %v519 = vmul.f32 %v500, %v511
      %v520 = vmul.f32 %v503, %v511
      %v521 = vld [vmem:[%s3] sm:$0x1]
      %v523 = vlaneseq
      %v524 = vshrl.u32 %v523, 7
      %v525 = vsub.s32 0, %v524
      %v526 = vrot.slane %v521, %v525
      %v528 = vadd.f32 %v513, %v526
      %v529 = vadd.f32 %v514, %v526
      %v530 = vadd.f32 %v515, %v526
      %v531 = vadd.f32 %v516, %v526
      %v532 = vadd.f32 %v517, %v526
      %v533 = vadd.f32 %v518, %v526
      %v534 = vadd.f32 %v519, %v526
      %v535 = vadd.f32 %v520, %v526
      %v536 = vld [vmem:[%s329] sm:$0xf]
      %v537 = vld [vmem:[%s329 + $0x4] sm:$0xf]
      %v538 = vld [vmem:[%s329 + $0x8] sm:$0xf]
      %v539 = vld [vmem:[%s329 + $0xc] sm:$0xf]
      %v540 = vld [vmem:[%s329 + $0x10] sm:$0xf]
      %v541 = vld [vmem:[%s329 + $0x14] sm:$0xf]
      %v542 = vld [vmem:[%s329 + $0x18] sm:$0xf]
      %v543 = vld [vmem:[%s329 + $0x1c] sm:$0xf]
      %v544 = vunpack.c.l.bf16 %v536
      %v545 = vunpack.c.l.bf16 %v537
      %v546 = vunpack.c.l.bf16 %v538
      %v547 = vunpack.c.l.bf16 %v539
      %v548 = vunpack.c.l.bf16 %v540
      %v549 = vunpack.c.l.bf16 %v541
      %v550 = vunpack.c.l.bf16 %v542
      %v551 = vunpack.c.l.bf16 %v543
      %v552 = vadd.f32 %v528, %v544
      %v553 = vadd.f32 %v529, %v545
      %v554 = vadd.f32 %v530, %v546
      %v555 = vadd.f32 %v531, %v547
      %v556 = vadd.f32 %v532, %v548
      %v557 = vadd.f32 %v533, %v549
      %v558 = vadd.f32 %v534, %v550
      %v559 = vadd.f32 %v535, %v551
      %v560 = vpack.c.bf16 %v553, %v552
      %v561 = vpack.c.bf16 %v555, %v554
      %v562 = vpack.c.bf16 %v557, %v556
      %v563 = vpack.c.bf16 %v559, %v558
      %v568 = vunpack.c.l.b16 %v560
      %v569 = vunpack.c.h.b16 %v560
      %v570 = vunpack.c.l.b16 %v561
      %v571 = vunpack.c.h.b16 %v561
      %v572 = vunpack.c.l.b16 %v562
      %v573 = vunpack.c.h.b16 %v562
      %v574 = vunpack.c.l.b16 %v563
      %v575 = vunpack.c.h.b16 %v563
      %v576 = vpack.c.b16 %v568, %v568
      %v577 = vpack.c.b16 %v569, %v569
      %v578 = vpack.c.b16 %v570, %v570
      %v579 = vpack.c.b16 %v571, %v571
      %v580 = vpack.c.b16 %v572, %v572
      %v581 = vpack.c.b16 %v573, %v573
      %v582 = vpack.c.b16 %v574, %v574
      %v583 = vpack.c.b16 %v575, %v575
      %592 = vst [vmem:[%s339] sm:$0xf] %v576
      %593 = vst [vmem:[%s339 + $0x4] sm:$0xf] %v577
      %594 = vst [vmem:[%s339 + $0x8] sm:$0xf] %v578
      %595 = vst [vmem:[%s339 + $0xc] sm:$0xf] %v579
      %596 = vst [vmem:[%s339 + $0x10] sm:$0xf] %v580
      %597 = vst [vmem:[%s339 + $0x14] sm:$0xf] %v581
      %598 = vst [vmem:[%s339 + $0x18] sm:$0xf] %v582
      %599 = vst [vmem:[%s339 + $0x1c] sm:$0xf] %v583
      %s600 = smul.u32 8, %s22
      %p601 = scmp.lt.s32.totalorder %s21, 1
      %s602 = scalar_select %p601, %s21, 1
      %p603 = scmp.lt.s32.totalorder %s600, 7
      %s604 = scalar_select %p603, %s600, 7
      %s605 = smul.addr %s602, 8
      %s606 = sadd.s32 %s604, %s605
      %s607 = smul.addr %s606, 4
      %s608 = scalar_lea.vmem %s6, %s607
      // Predicated region
      $region45: #{_lambda_.17} parent=43 // pred_check
        %p609 = pneg %p194
      $region46: #{_lambda_.17} parent=43 // pred_check_branch
        %611 = sbr.rel (%p609) target = $region48
      $region47: #{_lambda_.17} parent=43 // pred_region
        %s612 = smul.u32 8, %s22
      $region48: #{_lambda_.17} parent=43 // pred_fallthru
        _
    $region44: #{_lambda_.17} parent=5 // pred_fallthru
      _
    %p613 = scmp.le.s32.totalorder 2, %s12
    // Predicated region
    $region49: #{_lambda_.17} parent=5 // pred_check
      %p614 = pneg %p613
    $region50: #{_lambda_.17} parent=5 // pred_check_branch
      %616 = sbr.rel (%p614) target = $region52
    $region51: #{_lambda_.17} parent=5 // pred_region
      %s617 = ssub.s32 %s12, 2
      // Predicated region
      $region53: #{_lambda_.17} parent=51 // pred_check
        %p618 = pneg %p200
      $region54: #{_lambda_.17} parent=51 // pred_check_branch
        %620 = sbr.rel (%p618) target = $region56
      $region55: #{_lambda_.17} parent=51 // pred_region
        %s621 = smul.u32 8, %s24
        %p622 = scmp.lt.s32.totalorder %s23, 1
        %s623 = scalar_select %p622, %s23, 1
        %p624 = scmp.lt.s32.totalorder %s621, 7
        %s625 = scalar_select %p624, %s621, 7
        %s626 = smul.addr %s623, 8
        %s627 = sadd.s32 %s625, %s626
        %s628 = smul.addr %s627, 4
        %s629 = scalar_lea.vmem %s6, %s628
      $region56: #{_lambda_.17} parent=51 // pred_fallthru
        _
    $region52: #{_lambda_.17} parent=5 // pred_fallthru
      _
  $region6: #{_lambda_.17} parent=0 // loop_footer
    %s16 = sadd.s32 1, %s12
  $region7: #{_lambda_.17} parent=0 // loop_footer_branch
    %11 = sbr.rel target = $region3
  $region8: #{_lambda_.17} parent=0 // loop_exit
    _

// kernel: _lambda_.15
$region0: #{_lambda_.15}
  #allocation0 [shape = 'u32[]', space=smem, size = 0x4, offset = 0x4, fixed_abs, tag = 'smem constant byte address 0x4 - core index']
  #allocation1 [shape = 'u32[144,128]{1,0:T(1,128)}', space=vmem, size = 0x12000, scoped, tag = 'internal scratch']
  %s0 = inlined_call_operand.vmem [shape: bf16[2,10,10,128], index: 0, kind: input, shape index: {}]
  %s1 = inlined_call_operand.vmem [shape: f32[9,128], index: 1, kind: input, shape index: {}]
  %s2 = inlined_call_operand.vmem [shape: f32[1,128], index: 2, kind: input, shape index: {}]
  %s3 = inlined_call_operand.vmem [shape: f32[1,128], index: 3, kind: input, shape index: {}]
  %s4 = inlined_call_operand.vmem [shape: bf16[2,8,8,128], index: 4, kind: output, shape index: {0}]
  %s5 = inlined_call_operand.vmem [shape: f32[2,1,128], index: 5, kind: output, shape index: {1}]
  %6 = xla_tuple %s4, %s5
  %s7 = sld [smem:[#allocation0]]
  $region57: #{_lambda_.15} parent=0
    _
  %s9 = ssub.s32 1, %s7
  %s10 = scalar_select 0, %s9, %s7
  loop: start=0, step=1, limit=4
  $region2: #{_lambda_.15} parent=0 // loop_pre_header
    _
  $region3: #{_lambda_.15} parent=0 // loop_header
    %s12 = sphi 0, %s16
    %p13 = scmp.ge.s32.totalorder %s12, 4
    %s22 = sphi 0, %s24
    %s25 = sphi 0, %s22
    %s26 = sphi 0, %s25
    %s42 = sphi 0, %s26
    %s46 = sphi 0, %s46
    %s48 = sphi 0, %s46
    %s49 = sphi 0, %s48
    %s63 = sphi 0, %s49
    %s67 = sphi 0, %s67
    %s69 = sphi 0, %s67
    %s70 = sphi 0, %s69
    %s84 = sphi 0, %s70
    %s88 = sphi 0, %s88
    %s90 = sphi 0, %s88
    %s91 = sphi 0, %s90
    %s105 = sphi 0, %s91
    %s111 = sphi 0, %s113
    %s114 = sphi 0, %s111
    %s115 = sphi 0, %s114
    %s131 = sphi 0, %s115
    %s137 = sphi 0, %s139
    %s140 = sphi 0, %s137
    %s141 = sphi 0, %s140
    %s157 = sphi 0, %s141
  $region4: #{_lambda_.15} parent=0 // loop_header_branch
    %15 = sbr.rel (%p13) target = $region8
  $region5: #{_lambda_.15} parent=0 // loop_body
    %s17 = ssub.s32 %s12, 1
    %s18 = ssub.s32 %s12, 2
    %s19 = sadd.s32 %s12, 1
    %s20 = ssub.s32 %s12, %s19
    %p21 = scmp.eq.s32.totalorder %s20, 0
    %s23 = sadd.s32 %s22, 1
    %s24 = scalar_select %p21, %s22, %s23
    %p27 = pneg %p21
    %p28 = scmp.eq.s32.totalorder %s12, 1
    %p29 = por %p27, %p28
    %p30 = scmp.ne.s32.totalorder %s22, %s25
    %p31 = scmp.eq.s32.totalorder %s12, 0
    %p32 = por %p30, %p31
    %p33 = scmp.ne.s32.totalorder %s22, %s25
    %p34 = scmp.eq.s32.totalorder %s17, 1
    %p35 = por %p33, %p34
    %p36 = scmp.ne.s32.totalorder %s25, %s26
    %p37 = scmp.eq.s32.totalorder %s17, 0
    %p38 = por %p36, %p37
    %p39 = scmp.ne.s32.totalorder %s25, %s26
    %p40 = scmp.eq.s32.totalorder %s18, 1
    %p41 = por %p39, %p40
    %p43 = scmp.ne.s32.totalorder %s26, %s42
    %p44 = scmp.eq.s32.totalorder %s18, 0
    %p45 = por %p43, %p44
    %s47 = sadd.s32 %s46, 1
    %p50 = scmp.eq.s32.totalorder %s12, 1
    %p51 = scmp.ne.s32.totalorder %s46, %s48
    %p52 = scmp.eq.s32.totalorder %s12, 0
    %p53 = por %p51, %p52
    %p54 = scmp.ne.s32.totalorder %s46, %s48
    %p55 = scmp.eq.s32.totalorder %s17, 1
    %p56 = por %p54, %p55
    %p57 = scmp.ne.s32.totalorder %s48, %s49
    %p58 = scmp.eq.s32.totalorder %s17, 0
    %p59 = por %p57, %p58
    %p60 = scmp.ne.s32.totalorder %s48, %s49
    %p61 = scmp.eq.s32.totalorder %s18, 1
    %p62 = por %p60, %p61
    %p64 = scmp.ne.s32.totalorder %s49, %s63
    %p65 = scmp.eq.s32.totalorder %s18, 0
    %p66 = por %p64, %p65
    %s68 = sadd.s32 %s67, 1
    %p71 = scmp.eq.s32.totalorder %s12, 1
    %p72 = scmp.ne.s32.totalorder %s67, %s69
    %p73 = scmp.eq.s32.totalorder %s12, 0
    %p74 = por %p72, %p73
    %p75 = scmp.ne.s32.totalorder %s67, %s69
    %p76 = scmp.eq.s32.totalorder %s17, 1
    %p77 = por %p75, %p76
    %p78 = scmp.ne.s32.totalorder %s69, %s70
    %p79 = scmp.eq.s32.totalorder %s17, 0
    %p80 = por %p78, %p79
    %p81 = scmp.ne.s32.totalorder %s69, %s70
    %p82 = scmp.eq.s32.totalorder %s18, 1
    %p83 = por %p81, %p82
    %p85 = scmp.ne.s32.totalorder %s70, %s84
    %p86 = scmp.eq.s32.totalorder %s18, 0
    %p87 = por %p85, %p86
    %s89 = sadd.s32 %s88, 1
    %p92 = scmp.eq.s32.totalorder %s12, 1
    %p93 = scmp.ne.s32.totalorder %s88, %s90
    %p94 = scmp.eq.s32.totalorder %s12, 0
    %p95 = por %p93, %p94
    %p96 = scmp.ne.s32.totalorder %s88, %s90
    %p97 = scmp.eq.s32.totalorder %s17, 1
    %p98 = por %p96, %p97
    %p99 = scmp.ne.s32.totalorder %s90, %s91
    %p100 = scmp.eq.s32.totalorder %s17, 0
    %p101 = por %p99, %p100
    %p102 = scmp.ne.s32.totalorder %s90, %s91
    %p103 = scmp.eq.s32.totalorder %s18, 1
    %p104 = por %p102, %p103
    %p106 = scmp.ne.s32.totalorder %s91, %s105
    %p107 = scmp.eq.s32.totalorder %s18, 0
    %p108 = por %p106, %p107
    %s109 = ssub.s32 %s12, %s19
    %p110 = scmp.eq.s32.totalorder %s109, 0
    %s112 = sadd.s32 %s111, 1
    %s113 = scalar_select %p110, %s111, %s112
    %p116 = pneg %p110
    %p117 = scmp.eq.s32.totalorder %s12, 1
    %p118 = por %p116, %p117
    %p119 = scmp.ne.s32.totalorder %s111, %s114
    %p120 = scmp.eq.s32.totalorder %s12, 0
    %p121 = por %p119, %p120
    %p122 = scmp.ne.s32.totalorder %s111, %s114
    %p123 = scmp.eq.s32.totalorder %s17, 1
    %p124 = por %p122, %p123
    %p125 = scmp.ne.s32.totalorder %s114, %s115
    %p126 = scmp.eq.s32.totalorder %s17, 0
    %p127 = por %p125, %p126
    %p128 = scmp.ne.s32.totalorder %s114, %s115
    %p129 = scmp.eq.s32.totalorder %s18, 1
    %p130 = por %p128, %p129
    %p132 = scmp.ne.s32.totalorder %s115, %s131
    %p133 = scmp.eq.s32.totalorder %s18, 0
    %p134 = por %p132, %p133
    %s135 = ssub.s32 %s12, %s19
    %p136 = scmp.eq.s32.totalorder %s135, 0
    %s138 = sadd.s32 %s137, 1
    %s139 = scalar_select %p136, %s137, %s138
    %p142 = pneg %p136
    %p143 = scmp.eq.s32.totalorder %s12, 1
    %p144 = por %p142, %p143
    %p145 = scmp.ne.s32.totalorder %s137, %s140
    %p146 = scmp.eq.s32.totalorder %s12, 0
    %p147 = por %p145, %p146
    %p148 = scmp.ne.s32.totalorder %s137, %s140
    %p149 = scmp.eq.s32.totalorder %s17, 1
    %p150 = por %p148, %p149
    %p151 = scmp.ne.s32.totalorder %s140, %s141
    %p152 = scmp.eq.s32.totalorder %s17, 0
    %p153 = por %p151, %p152
    %p154 = scmp.ne.s32.totalorder %s140, %s141
    %p155 = scmp.eq.s32.totalorder %s18, 1
    %p156 = por %p154, %p155
    %p158 = scmp.ne.s32.totalorder %s141, %s157
    %p159 = scmp.eq.s32.totalorder %s18, 0
    %p160 = por %p158, %p159
    %p161 = scmp.le.s32.totalorder 1, %s12
    %p162 = scmp.lt.s32.totalorder %s12, 3
    %p163 = pnand %p161, %p162
    %p164 = pneg %p163
    // Predicated region
    $region9: #{_lambda_.15} parent=5 // pred_check
      _
    $region10: #{_lambda_.15} parent=5 // pred_check_branch
      %166 = sbr.rel (%p163) target = $region12
    $region11: #{_lambda_.15} parent=5 // pred_region
      %s167 = ssub.s32 %s12, 1
      // Predicated region
      $region13: #{_lambda_.15} parent=11 // pred_check
        %p168 = pneg %p59
      $region14: #{_lambda_.15} parent=11 // pred_check_branch
        %170 = sbr.rel (%p168) target = $region16
      $region15: #{_lambda_.15} parent=11 // pred_region
        _
      $region16: #{_lambda_.15} parent=11 // pred_fallthru
        _
      // Predicated region
      $region17: #{_lambda_.15} parent=11 // pred_check
        %p171 = pneg %p80
      $region18: #{_lambda_.15} parent=11 // pred_check_branch
        %173 = sbr.rel (%p171) target = $region20
      $region19: #{_lambda_.15} parent=11 // pred_region
        _
      $region20: #{_lambda_.15} parent=11 // pred_fallthru
        _
      // Predicated region
      $region21: #{_lambda_.15} parent=11 // pred_check
        %p174 = pneg %p101
      $region22: #{_lambda_.15} parent=11 // pred_check_branch
        %176 = sbr.rel (%p174) target = $region24
      $region23: #{_lambda_.15} parent=11 // pred_region
        _
      $region24: #{_lambda_.15} parent=11 // pred_fallthru
        _
    $region12: #{_lambda_.15} parent=5 // pred_fallthru
      _
    %p177 = scmp.lt.s32.totalorder %s12, 2
    // Predicated region
    $region25: #{_lambda_.15} parent=5 // pred_check
      %p178 = pneg %p177
    $region26: #{_lambda_.15} parent=5 // pred_check_branch
      %180 = sbr.rel (%p178) target = $region28
    $region27: #{_lambda_.15} parent=5 // pred_region
      // Predicated region
      $region29: #{_lambda_.15} parent=27 // pred_check
        %p181 = pneg %p32
      $region30: #{_lambda_.15} parent=27 // pred_check_branch
        %183 = sbr.rel (%p181) target = $region32
      $region31: #{_lambda_.15} parent=27 // pred_region
        %p184 = scmp.lt.s32.totalorder %s12, 1
        %s185 = scalar_select %p184, %s12, 1
        %s186 = smul.addr %s185, 20
        %s187 = smul.addr %s186, 4
        %s188 = scalar_lea.vmem %s0, %s187
      $region32: #{_lambda_.15} parent=27 // pred_fallthru
        _
    $region28: #{_lambda_.15} parent=5 // pred_fallthru
      _
    %p189 = scmp.le.s32.totalorder 1, %s12
    %p190 = scmp.lt.s32.totalorder %s12, 3
    %p191 = pnand %p189, %p190
    %p192 = pneg %p191
    // Predicated region
    $region33: #{_lambda_.15} parent=5 // pred_check
      _
    $region34: #{_lambda_.15} parent=5 // pred_check_branch
      %194 = sbr.rel (%p191) target = $region36
    $region35: #{_lambda_.15} parent=5 // pred_region
      %s195 = ssub.s32 %s12, 1
      %p196 = scmp.lt.s32.totalorder %s17, 1
      %s197 = scalar_select %p196, %s17, 1
      %s198 = smul.addr %s197, 20
      %s199 = smul.addr %s198, 4
      %s200 = scalar_lea.vmem %s0, %s199
      %p201 = pneg %p38
      %p202 = pneg %p35
      %p203 = pneg %p59
      %p204 = pneg %p56
      %p205 = pneg %p80
      %p206 = pneg %p77
      %p207 = pneg %p101
      %p208 = pneg %p98
      %p209 = pneg %p127
      %p210 = pneg %p124
      %p211 = scmp.lt.s32.totalorder %s17, 1
      %s212 = scalar_select %p211, %s17, 1
      %s213 = smul.addr %s212, 8
      %s214 = smul.addr %s213, 4
      %s215 = scalar_lea.vmem %s4, %s214
      %p216 = pneg %p153
      %p217 = pneg %p150
      %p218 = scmp.lt.s32.totalorder %s17, 1
      %s219 = scalar_select %p218, %s17, 1
      %s220 = scalar_lea.vmem %s5, %s219
      %p221 = scmp.lt.s32.totalorder %s17, 1
      %s222 = scalar_select %p221, %s17, 1
      %s223 = smul.addr %s222, 20
      %s224 = smul.addr %s223, 4
      %s225 = scalar_lea.vmem %s0, %s224
      %p226 = scmp.lt.s32.totalorder %s17, 1
      %s227 = scalar_select %p226, %s17, 1
      %s228 = smul.addr %s227, 8
      %s229 = smul.addr %s228, 4
      %s230 = scalar_lea.vmem %s4, %s229
      %p231 = scmp.lt.s32.totalorder %s17, 1
      %s232 = scalar_select %p231, %s17, 1
      %s233 = scalar_lea.vmem %s5, %s232
      %v234 = vld [vmem:[%s225] sm:$0xf]
      %v235 = vld [vmem:[%s225 + $0x8] sm:$0xf]
      %v236 = vld [vmem:[%s225 + $0x10] sm:$0xf]
      %v237 = vld [vmem:[%s225 + $0x18] sm:$0xf]
      %v238 = vld [vmem:[%s225 + $0x20] sm:$0xf]
      %v239 = vld [vmem:[%s225 + $0x28] sm:$0xf]
      %v240 = vld [vmem:[%s225 + $0x30] sm:$0xf]
      %v241 = vld [vmem:[%s225 + $0x38] sm:$0xf]
      %v242 = vunpack.c.l.bf16 %v234
      %v243 = vunpack.c.l.bf16 %v235
      %v244 = vunpack.c.l.bf16 %v236
      %v245 = vunpack.c.l.bf16 %v237
      %v246 = vunpack.c.l.bf16 %v238
      %v247 = vunpack.c.l.bf16 %v239
      %v248 = vunpack.c.l.bf16 %v240
      %v249 = vunpack.c.l.bf16 %v241
      %v250 = vld [vmem:[%s1] sm:$0x1]
      %v251 = vlaneseq
      %v252 = vshrl.u32 %v251, 7
      %v253 = vsub.s32 0, %v252
      %v254 = vrot.slane %v250, %v253
      %v255 = vmul.f32 %v242, %v254
      %v256 = vmul.f32 %v243, %v254
      %v257 = vmul.f32 %v244, %v254
      %v258 = vmul.f32 %v245, %v254
      %v259 = vmul.f32 %v246, %v254
      %v260 = vmul.f32 %v247, %v254
      %v261 = vmul.f32 %v248, %v254
      %v262 = vmul.f32 %v249, %v254
      %v263 = vadd.f32 %v255, 0.0
      %v264 = vadd.f32 %v256, 0.0
      %v265 = vadd.f32 %v257, 0.0
      %v266 = vadd.f32 %v258, 0.0
      %v267 = vadd.f32 %v259, 0.0
      %v268 = vadd.f32 %v260, 0.0
      %v269 = vadd.f32 %v261, 0.0
      %v270 = vadd.f32 %v262, 0.0
      %v271 = vld [vmem:[%s225 + $0x4] sm:$0x1]
      %v272 = vld [vmem:[%s225 + $0xc] sm:$0x1]
      %v273 = vld [vmem:[%s225 + $0x14] sm:$0x1]
      %v274 = vld [vmem:[%s225 + $0x1c] sm:$0x1]
      %v275 = vld [vmem:[%s225 + $0x24] sm:$0x1]
      %v276 = vld [vmem:[%s225 + $0x2c] sm:$0x1]
      %v277 = vld [vmem:[%s225 + $0x34] sm:$0x1]
      %v278 = vld [vmem:[%s225 + $0x3c] sm:$0x1]
      %v279 = vunpack.c.l.bf16 %v271
      %v280 = vunpack.c.l.bf16 %v272
      %v281 = vunpack.c.l.bf16 %v273
      %v282 = vunpack.c.l.bf16 %v274
      %v283 = vunpack.c.l.bf16 %v275
      %v284 = vunpack.c.l.bf16 %v276
      %v285 = vunpack.c.l.bf16 %v277
      %v286 = vunpack.c.l.bf16 %v278
      %v287 = vld [vmem:[%s1 + $0x1] sm:$0x1]
      %v288 = vlaneseq
      %v289 = vshrl.u32 %v288, 7
      %v290 = vsub.s32 0, %v289
      %v291 = vrot.slane %v287, %v290
      %v292 = vmul.f32 %v242, %v291
      %v293 = vmul.f32 %v279, %v291
      %v294 = vmul.f32 %v243, %v291
      %v295 = vmul.f32 %v280, %v291
      %v296 = vmul.f32 %v244, %v291
      %v297 = vmul.f32 %v281, %v291
      %v298 = vmul.f32 %v245, %v291
      %v299 = vmul.f32 %v282, %v291
      %v300 = vmul.f32 %v246, %v291
      %v301 = vmul.f32 %v283, %v291
      %v302 = vmul.f32 %v247, %v291
      %v303 = vmul.f32 %v284, %v291
      %v304 = vmul.f32 %v248, %v291
      %v305 = vmul.f32 %v285, %v291
      %v306 = vmul.f32 %v249, %v291
      %v307 = vmul.f32 %v286, %v291
      %vm324 = vcmask 1046528
      %v325 = vrot.slane %v292, 1
      %v326 = vrot.slane %v293, 1
      %v327 = vsel %vm324, %v325, %v326
      %v328 = vrot.slane %v294, 1
      %v329 = vrot.slane %v295, 1
      %v330 = vsel %vm324, %v328, %v329
      %v331 = vrot.slane %v296, 1
      %v332 = vrot.slane %v297, 1
      %v333 = vsel %vm324, %v331, %v332
      %v334 = vrot.slane %v298, 1
      %v335 = vrot.slane %v299, 1
      %v336 = vsel %vm324, %v334, %v335
      %v337 = vrot.slane %v300, 1
      %v338 = vrot.slane %v301, 1
      %v339 = vsel %vm324, %v337, %v338
      %v340 = vrot.slane %v302, 1
      %v341 = vrot.slane %v303, 1
      %v342 = vsel %vm324, %v340, %v341
      %v343 = vrot.slane %v304, 1
      %v344 = vrot.slane %v305, 1
      %v345 = vsel %vm324, %v343, %v344
      %v346 = vrot.slane %v306, 1
      %v347 = vrot.slane %v307, 1
      %v348 = vsel %vm324, %v346, %v347
      %v357 = vadd.f32 %v263, %v327
      %v358 = vadd.f32 %v264, %v330
      %v359 = vadd.f32 %v265, %v333
      %v360 = vadd.f32 %v266, %v336
      %v361 = vadd.f32 %v267, %v339
      %v362 = vadd.f32 %v268, %v342
      %v363 = vadd.f32 %v269, %v345
      %v364 = vadd.f32 %v270, %v348
      %v365 = vld [vmem:[%s225] sm:$0xe]
      %v366 = vld [vmem:[%s225 + $0x8] sm:$0xe]
      %v367 = vld [vmem:[%s225 + $0x10] sm:$0xe]
      %v368 = vld [vmem:[%s225 + $0x18] sm:$0xe]
      %v369 = vld [vmem:[%s225 + $0x20] sm:$0xe]
      %v370 = vld [vmem:[%s225 + $0x28] sm:$0xe]
      %v371 = vld [vmem:[%s225 + $0x30] sm:$0xe]
      %v372 = vld [vmem:[%s225 + $0x38] sm:$0xe]
      %v373 = vunpack.c.l.bf16 %v365
      %v374 = vunpack.c.l.bf16 %v366
      %v375 = vunpack.c.l.bf16 %v367
      %v376 = vunpack.c.l.bf16 %v368
      %v377 = vunpack.c.l.bf16 %v369
      %v378 = vunpack.c.l.bf16 %v370
      %v379 = vunpack.c.l.bf16 %v371
      %v380 = vunpack.c.l.bf16 %v372
      %v381 = vld [vmem:[%s1 + $0x2] sm:$0x1]
      %v382 = vlaneseq
      %v383 = vshrl.u32 %v382, 7
      %v384 = vsub.s32 0, %v383
      %v385 = vrot.slane %v381, %v384
      %v386 = vmul.f32 %v373, %v385
      %v387 = vmul.f32 %v279, %v385
      %v388 = vmul.f32 %v374, %v385
      %v389 = vmul.f32 %v280, %v385
      %v390 = vmul.f32 %v375, %v385
      %v391 = vmul.f32 %v281, %v385
      %v392 = vmul.f32 %v376, %v385
      %v393 = vmul.f32 %v282, %v385
      %v394 = vmul.f32 %v377, %v385
      %v395 = vmul.f32 %v283, %v385
      %v396 = vmul.f32 %v378, %v385
      %v397 = vmul.f32 %v284, %v385
      %v398 = vmul.f32 %v379, %v385
      %v399 = vmul.f32 %v285, %v385
      %v400 = vmul.f32 %v380, %v385
      %v401 = vmul.f32 %v286, %v385
      %vm418 = vcmask 1045504
      %v419 = vrot.slane %v386, 2
      %v420 = vrot.slane %v387, 2
      %v421 = vsel %vm418, %v419, %v420
      %v422 = vrot.slane %v388, 2
      %v423 = vrot.slane %v389, 2
      %v424 = vsel %vm418, %v422, %v423
      %v425 = vrot.slane %v390, 2
      %v426 = vrot.slane %v391, 2
      %v427 = vsel %vm418, %v425, %v426
      %v428 = vrot.slane %v392, 2
      %v429 = vrot.slane %v393, 2
      %v430 = vsel %vm418, %v428, %v429
      %v431 = vrot.slane %v394, 2
      %v432 = vrot.slane %v395, 2
      %v433 = vsel %vm418, %v431, %v432
      %v434 = vrot.slane %v396, 2
      %v435 = vrot.slane %v397, 2
      %v436 = vsel %vm418, %v434, %v435
      %v437 = vrot.slane %v398, 2
      %v438 = vrot.slane %v399, 2
      %v439 = vsel %vm418, %v437, %v438
      %v440 = vrot.slane %v400, 2
      %v441 = vrot.slane %v401, 2
      %v442 = vsel %vm418, %v440, %v441
      %v451 = vadd.f32 %v357, %v421
      %v452 = vadd.f32 %v358, %v424
      %v453 = vadd.f32 %v359, %v427
      %v454 = vadd.f32 %v360, %v430
      %v455 = vadd.f32 %v361, %v433
      %v456 = vadd.f32 %v362, %v436
      %v457 = vadd.f32 %v363, %v439
      %v458 = vadd.f32 %v364, %v442
      %s459 = scalar_lea.vmem %s225, 8
      %v460 = vld [vmem:[%s459] sm:$0xf]
      %v461 = vld [vmem:[%s459 + $0x8] sm:$0xf]
      %v462 = vld [vmem:[%s459 + $0x10] sm:$0xf]
      %v463 = vld [vmem:[%s459 + $0x18] sm:$0xf]
      %v464 = vld [vmem:[%s459 + $0x20] sm:$0xf]
      %v465 = vld [vmem:[%s459 + $0x28] sm:$0xf]
      %v466 = vld [vmem:[%s459 + $0x30] sm:$0xf]
      %v467 = vld [vmem:[%s459 + $0x38] sm:$0xf]
      %v468 = vunpack.c.l.bf16 %v460
      %v469 = vunpack.c.l.bf16 %v461
      %v470 = vunpack.c.l.bf16 %v462
      %v471 = vunpack.c.l.bf16 %v463
      %v472 = vunpack.c.l.bf16 %v464
      %v473 = vunpack.c.l.bf16 %v465
      %v474 = vunpack.c.l.bf16 %v466
      %v475 = vunpack.c.l.bf16 %v467
      %v476 = vld [vmem:[%s1 + $0x3] sm:$0x1]
      %v477 = vlaneseq
      %v478 = vshrl.u32 %v477, 7
      %v479 = vsub.s32 0, %v478
      %v480 = vrot.slane %v476, %v479
      %v481 = vmul.f32 %v468, %v480
      %v482 = vmul.f32 %v469, %v480
      %v483 = vmul.f32 %v470, %v480
      %v484 = vmul.f32 %v471, %v480
      %v485 = vmul.f32 %v472, %v480
      %v486 = vmul.f32 %v473, %v480
      %v487 = vmul.f32 %v474, %v480
      %v488 = vmul.f32 %v475, %v480
      %v489 = vadd.f32 %v451, %v481
      %v490 = vadd.f32 %v452, %v482
      %v491 = vadd.f32 %v453, %v483
      %v492 = vadd.f32 %v454, %v484
      %v493 = vadd.f32 %v455, %v485
      %v494 = vadd.f32 %v456, %v486
      %v495 = vadd.f32 %v457, %v487
      %v496 = vadd.f32 %v458, %v488
      %v497 = vld [vmem:[%s459 + $0x4] sm:$0x1]
      %v498 = vld [vmem:[%s459 + $0xc] sm:$0x1]
      %v499 = vld [vmem:[%s459 + $0x14] sm:$0x1]
      %v500 = vld [vmem:[%s459 + $0x1c] sm:$0x1]
      %v501 = vld [vmem:[%s459 + $0x24] sm:$0x1]
      %v502 = vld [vmem:[%s459 + $0x2c] sm:$0x1]
      %v503 = vld [vmem:[%s459 + $0x34] sm:$0x1]
      %v504 = vld [vmem:[%s459 + $0x3c] sm:$0x1]
      %v505 = vunpack.c.l.bf16 %v497
      %v506 = vunpack.c.l.bf16 %v498
      %v507 = vunpack.c.l.bf16 %v499
      %v508 = vunpack.c.l.bf16 %v500
      %v509 = vunpack.c.l.bf16 %v501
      %v510 = vunpack.c.l.bf16 %v502
      %v511 = vunpack.c.l.bf16 %v503
      %v512 = vunpack.c.l.bf16 %v504
      %v513 = vld [vmem:[%s1 + $0x4] sm:$0x1]
      %v514 = vlaneseq
      %v515 = vshrl.u32 %v514, 7
      %v516 = vsub.s32 0, %v515
      %v517 = vrot.slane %v513, %v516
      %v518 = vmul.f32 %v468, %v517
      %v519 = vmul.f32 %v505, %v517
      %v520 = vmul.f32 %v469, %v517
      %v521 = vmul.f32 %v506, %v517
      %v522 = vmul.f32 %v470, %v517
      %v523 = vmul.f32 %v507, %v517
      %v524 = vmul.f32 %v471, %v517
      %v525 = vmul.f32 %v508, %v517
      %v526 = vmul.f32 %v472, %v517
      %v527 = vmul.f32 %v509, %v517
      %v528 = vmul.f32 %v473, %v517
      %v529 = vmul.f32 %v510, %v517
      %v530 = vmul.f32 %v474, %v517
      %v531 = vmul.f32 %v511, %v517
      %v532 = vmul.f32 %v475, %v517
      %v533 = vmul.f32 %v512, %v517
      %v550 = vrot.slane %v518, 1
      %v551 = vrot.slane %v519, 1
      %v552 = vsel %vm324, %v550, %v551
      %v553 = vrot.slane %v520, 1
      %v554 = vrot.slane %v521, 1
      %v555 = vsel %vm324, %v553, %v554
      %v556 = vrot.slane %v522, 1
      %v557 = vrot.slane %v523, 1
      %v558 = vsel %vm324, %v556, %v557
      %v559 = vrot.slane %v524, 1
      %v560 = vrot.slane %v525, 1
      %v561 = vsel %vm324, %v559, %v560
      %v562 = vrot.slane %v526, 1
      %v563 = vrot.slane %v527, 1
      %v564 = vsel %vm324, %v562, %v563
      %v565 = vrot.slane %v528, 1
      %v566 = vrot.slane %v529, 1
      %v567 = vsel %vm324, %v565, %v566
      %v568 = vrot.slane %v530, 1
      %v569 = vrot.slane %v531, 1
      %v570 = vsel %vm324, %v568, %v569
      %v571 = vrot.slane %v532, 1
      %v572 = vrot.slane %v533, 1
      %v573 = vsel %vm324, %v571, %v572
      %v582 = vadd.f32 %v489, %v552
      %v583 = vadd.f32 %v490, %v555
      %v584 = vadd.f32 %v491, %v558
      %v585 = vadd.f32 %v492, %v561
      %v586 = vadd.f32 %v493, %v564
      %v587 = vadd.f32 %v494, %v567
      %v588 = vadd.f32 %v495, %v570
      %v589 = vadd.f32 %v496, %v573
      %v590 = vld [vmem:[%s459] sm:$0xe]
      %v591 = vld [vmem:[%s459 + $0x8] sm:$0xe]
      %v592 = vld [vmem:[%s459 + $0x10] sm:$0xe]
      %v593 = vld [vmem:[%s459 + $0x18] sm:$0xe]
      %v594 = vld [vmem:[%s459 + $0x20] sm:$0xe]
      %v595 = vld [vmem:[%s459 + $0x28] sm:$0xe]
      %v596 = vld [vmem:[%s459 + $0x30] sm:$0xe]
      %v597 = vld [vmem:[%s459 + $0x38] sm:$0xe]
      %v598 = vunpack.c.l.bf16 %v590
      %v599 = vunpack.c.l.bf16 %v591
      %v600 = vunpack.c.l.bf16 %v592
      %v601 = vunpack.c.l.bf16 %v593
      %v602 = vunpack.c.l.bf16 %v594
      %v603 = vunpack.c.l.bf16 %v595
      %v604 = vunpack.c.l.bf16 %v596
      %v605 = vunpack.c.l.bf16 %v597
      %v606 = vld [vmem:[%s1 + $0x5] sm:$0x1]
      %v607 = vlaneseq
      %v608 = vshrl.u32 %v607, 7
      %v609 = vsub.s32 0, %v608
      %v610 = vrot.slane %v606, %v609
      %v611 = vmul.f32 %v598, %v610
      %v612 = vmul.f32 %v505, %v610
      %v613 = vmul.f32 %v599, %v610
      %v614 = vmul.f32 %v506, %v610
      %v615 = vmul.f32 %v600, %v610
      %v616 = vmul.f32 %v507, %v610
      %v617 = vmul.f32 %v601, %v610
      %v618 = vmul.f32 %v508, %v610
      %v619 = vmul.f32 %v602, %v610
      %v620 = vmul.f32 %v509, %v610
      %v621 = vmul.f32 %v603, %v610
      %v622 = vmul.f32 %v510, %v610
      %v623 = vmul.f32 %v604, %v610
      %v624 = vmul.f32 %v511, %v610
      %v625 = vmul.f32 %v605, %v610
      %v626 = vmul.f32 %v512, %v610
      %v643 = vrot.slane %v611, 2
      %v644 = vrot.slane %v612, 2
      %v645 = vsel %vm418, %v643, %v644
      %v646 = vrot.slane %v613, 2
      %v647 = vrot.slane %v614, 2
      %v648 = vsel %vm418, %v646, %v647
      %v649 = vrot.slane %v615, 2
      %v650 = vrot.slane %v616, 2
      %v651 = vsel %vm418, %v649, %v650
      %v652 = vrot.slane %v617, 2
      %v653 = vrot.slane %v618, 2
      %v654 = vsel %vm418, %v652, %v653
      %v655 = vrot.slane %v619, 2
      %v656 = vrot.slane %v620, 2
      %v657 = vsel %vm418, %v655, %v656
      %v658 = vrot.slane %v621, 2
      %v659 = vrot.slane %v622, 2
      %v660 = vsel %vm418, %v658, %v659
      %v661 = vrot.slane %v623, 2
      %v662 = vrot.slane %v624, 2
      %v663 = vsel %vm418, %v661, %v662
      %v664 = vrot.slane %v625, 2
      %v665 = vrot.slane %v626, 2
      %v666 = vsel %vm418, %v664, %v665
      %v675 = vadd.f32 %v582, %v645
      %v676 = vadd.f32 %v583, %v648
      %v677 = vadd.f32 %v584, %v651
      %v678 = vadd.f32 %v585, %v654
      %v679 = vadd.f32 %v586, %v657
      %v680 = vadd.f32 %v587, %v660
      %v681 = vadd.f32 %v588, %v663
      %v682 = vadd.f32 %v589, %v666
      %s683 = scalar_lea.vmem %s225, 16
      %v684 = vld [vmem:[%s683] sm:$0xf]
      %v685 = vld [vmem:[%s683 + $0x8] sm:$0xf]
      %v686 = vld [vmem:[%s683 + $0x10] sm:$0xf]
      %v687 = vld [vmem:[%s683 + $0x18] sm:$0xf]
      %v688 = vld [vmem:[%s683 + $0x20] sm:$0xf]
      %v689 = vld [vmem:[%s683 + $0x28] sm:$0xf]
      %v690 = vld [vmem:[%s683 + $0x30] sm:$0xf]
      %v691 = vld [vmem:[%s683 + $0x38] sm:$0xf]
      %v692 = vunpack.c.l.bf16 %v684
      %v693 = vunpack.c.l.bf16 %v685
      %v694 = vunpack.c.l.bf16 %v686
      %v695 = vunpack.c.l.bf16 %v687
      %v696 = vunpack.c.l.bf16 %v688
      %v697 = vunpack.c.l.bf16 %v689
      %v698 = vunpack.c.l.bf16 %v690
      %v699 = vunpack.c.l.bf16 %v691
      %v700 = vld [vmem:[%s1 + $0x6] sm:$0x1]
      %v701 = vlaneseq
      %v702 = vshrl.u32 %v701, 7
      %v703 = vsub.s32 0, %v702
      %v704 = vrot.slane %v700, %v703
      %v705 = vmul.f32 %v692, %v704
      %v706 = vmul.f32 %v693, %v704
      %v707 = vmul.f32 %v694, %v704
      %v708 = vmul.f32 %v695, %v704
      %v709 = vmul.f32 %v696, %v704
      %v710 = vmul.f32 %v697, %v704
      %v711 = vmul.f32 %v698, %v704
      %v712 = vmul.f32 %v699, %v704
      %v713 = vadd.f32 %v675, %v705
      %v714 = vadd.f32 %v676, %v706
      %v715 = vadd.f32 %v677, %v707
      %v716 = vadd.f32 %v678, %v708
      %v717 = vadd.f32 %v679, %v709
      %v718 = vadd.f32 %v680, %v710
      %v719 = vadd.f32 %v681, %v711
      %v720 = vadd.f32 %v682, %v712
      %v721 = vld [vmem:[%s683 + $0x4] sm:$0x1]
      %v722 = vld [vmem:[%s683 + $0xc] sm:$0x1]
      %v723 = vld [vmem:[%s683 + $0x14] sm:$0x1]
      %v724 = vld [vmem:[%s683 + $0x1c] sm:$0x1]
      %v725 = vld [vmem:[%s683 + $0x24] sm:$0x1]
      %v726 = vld [vmem:[%s683 + $0x2c] sm:$0x1]
      %v727 = vld [vmem:[%s683 + $0x34] sm:$0x1]
      %v728 = vld [vmem:[%s683 + $0x3c] sm:$0x1]
      %v729 = vunpack.c.l.bf16 %v721
      %v730 = vunpack.c.l.bf16 %v722
      %v731 = vunpack.c.l.bf16 %v723
      %v732 = vunpack.c.l.bf16 %v724
      %v733 = vunpack.c.l.bf16 %v725
      %v734 = vunpack.c.l.bf16 %v726
      %v735 = vunpack.c.l.bf16 %v727
      %v736 = vunpack.c.l.bf16 %v728
      %v737 = vld [vmem:[%s1 + $0x7] sm:$0x1]
      %v738 = vlaneseq
      %v739 = vshrl.u32 %v738, 7
      %v740 = vsub.s32 0, %v739
      %v741 = vrot.slane %v737, %v740
      %v742 = vmul.f32 %v692, %v741
      %v743 = vmul.f32 %v729, %v741
      %v744 = vmul.f32 %v693, %v741
      %v745 = vmul.f32 %v730, %v741
      %v746 = vmul.f32 %v694, %v741
      %v747 = vmul.f32 %v731, %v741
      %v748 = vmul.f32 %v695, %v741
      %v749 = vmul.f32 %v732, %v741
      %v750 = vmul.f32 %v696, %v741
      %v751 = vmul.f32 %v733, %v741
      %v752 = vmul.f32 %v697, %v741
      %v753 = vmul.f32 %v734, %v741
      %v754 = vmul.f32 %v698, %v741
      %v755 = vmul.f32 %v735, %v741
      %v756 = vmul.f32 %v699, %v741
      %v757 = vmul.f32 %v736, %v741
      %v774 = vrot.slane %v742, 1
      %v775 = vrot.slane %v743, 1
      %v776 = vsel %vm324, %v774, %v775
      %v777 = vrot.slane %v744, 1
      %v778 = vrot.slane %v745, 1
      %v779 = vsel %vm324, %v777, %v778
      %v780 = vrot.slane %v746, 1
      %v781 = vrot.slane %v747, 1
      %v782 = vsel %vm324, %v780, %v781
      %v783 = vrot.slane %v748, 1
      %v784 = vrot.slane %v749, 1
      %v785 = vsel %vm324, %v783, %v784
      %v786 = vrot.slane %v750, 1
      %v787 = vrot.slane %v751, 1
      %v788 = vsel %vm324, %v786, %v787
      %v789 = vrot.slane %v752, 1
      %v790 = vrot.slane %v753, 1
      %v791 = vsel %vm324, %v789, %v790
      %v792 = vrot.slane %v754, 1
      %v793 = vrot.slane %v755, 1
      %v794 = vsel %vm324, %v792, %v793
      %v795 = vrot.slane %v756, 1
      %v796 = vrot.slane %v757, 1
      %v797 = vsel %vm324, %v795, %v796
      %v806 = vadd.f32 %v713, %v776
      %v807 = vadd.f32 %v714, %v779
      %v808 = vadd.f32 %v715, %v782
      %v809 = vadd.f32 %v716, %v785
      %v810 = vadd.f32 %v717, %v788
      %v811 = vadd.f32 %v718, %v791
      %v812 = vadd.f32 %v719, %v794
      %v813 = vadd.f32 %v720, %v797
      %v814 = vld [vmem:[%s683] sm:$0xe]
      %v815 = vld [vmem:[%s683 + $0x8] sm:$0xe]
      %v816 = vld [vmem:[%s683 + $0x10] sm:$0xe]
      %v817 = vld [vmem:[%s683 + $0x18] sm:$0xe]
      %v818 = vld [vmem:[%s683 + $0x20] sm:$0xe]
      %v819 = vld [vmem:[%s683 + $0x28] sm:$0xe]
      %v820 = vld [vmem:[%s683 + $0x30] sm:$0xe]
      %v821 = vld [vmem:[%s683 + $0x38] sm:$0xe]
      %v822 = vunpack.c.l.bf16 %v814
      %v823 = vunpack.c.l.bf16 %v815
      %v824 = vunpack.c.l.bf16 %v816
      %v825 = vunpack.c.l.bf16 %v817
      %v826 = vunpack.c.l.bf16 %v818
      %v827 = vunpack.c.l.bf16 %v819
      %v828 = vunpack.c.l.bf16 %v820
      %v829 = vunpack.c.l.bf16 %v821
      %v830 = vld [vmem:[%s1 + $0x8] sm:$0x1]
      %v831 = vlaneseq
      %v832 = vshrl.u32 %v831, 7
      %v833 = vsub.s32 0, %v832
      %v834 = vrot.slane %v830, %v833
      %v835 = vmul.f32 %v822, %v834
      %v836 = vmul.f32 %v729, %v834
      %v837 = vmul.f32 %v823, %v834
      %v838 = vmul.f32 %v730, %v834
      %v839 = vmul.f32 %v824, %v834
      %v840 = vmul.f32 %v731, %v834
      %v841 = vmul.f32 %v825, %v834
      %v842 = vmul.f32 %v732, %v834
      %v843 = vmul.f32 %v826, %v834
      %v844 = vmul.f32 %v733, %v834
      %v845 = vmul.f32 %v827, %v834
      %v846 = vmul.f32 %v734, %v834
      %v847 = vmul.f32 %v828, %v834
      %v848 = vmul.f32 %v735, %v834
      %v849 = vmul.f32 %v829, %v834
      %v850 = vmul.f32 %v736, %v834
      %v867 = vrot.slane %v835, 2
      %v868 = vrot.slane %v836, 2
      %v869 = vsel %vm418, %v867, %v868
      %v870 = vrot.slane %v837, 2
      %v871 = vrot.slane %v838, 2
      %v872 = vsel %vm418, %v870, %v871
      %v873 = vrot.slane %v839, 2
      %v874 = vrot.slane %v840, 2
      %v875 = vsel %vm418, %v873, %v874
      %v876 = vrot.slane %v841, 2
      %v877 = vrot.slane %v842, 2
      %v878 = vsel %vm418, %v876, %v877
      %v879 = vrot.slane %v843, 2
      %v880 = vrot.slane %v844, 2
      %v881 = vsel %vm418, %v879, %v880
      %v882 = vrot.slane %v845, 2
      %v883 = vrot.slane %v846, 2
      %v884 = vsel %vm418, %v882, %v883
      %v885 = vrot.slane %v847, 2
      %v886 = vrot.slane %v848, 2
      %v887 = vsel %vm418, %v885, %v886
      %v888 = vrot.slane %v849, 2
      %v889 = vrot.slane %v850, 2
      %v890 = vsel %vm418, %v888, %v889
      %v899 = vadd.f32 %v806, %v869
      %v900 = vadd.f32 %v807, %v872
      %v901 = vadd.f32 %v808, %v875
      %v902 = vadd.f32 %v809, %v878
      %v903 = vadd.f32 %v810, %v881
      %v904 = vadd.f32 %v811, %v884
      %v905 = vadd.f32 %v812, %v887
      %v906 = vadd.f32 %v813, %v890
      %v907 = vld [vmem:[%s2] sm:$0x1]
      %v909 = vlaneseq
      %v910 = vshrl.u32 %v909, 7
      %v911 = vsub.s32 0, %v910
      %v912 = vrot.slane %v907, %v911
      %v914 = vmul.f32 %v899, %v912
      %v915 = vmul.f32 %v900, %v912
      %v916 = vmul.f32 %v901, %v912
      %v917 = vmul.f32 %v902, %v912
      %v918 = vmul.f32 %v903, %v912
      %v919 = vmul.f32 %v904, %v912
      %v920 = vmul.f32 %v905, %v912
      %v921 = vmul.f32 %v906, %v912
      %v922 = vld [vmem:[%s3] sm:$0x1]
      %v924 = vlaneseq
      %v925 = vshrl.u32 %v924, 7
      %v926 = vsub.s32 0, %v925
      %v927 = vrot.slane %v922, %v926
      %v929 = vadd.f32 %v914, %v927
      %v930 = vadd.f32 %v915, %v927
      %v931 = vadd.f32 %v916, %v927
      %v932 = vadd.f32 %v917, %v927
      %v933 = vadd.f32 %v918, %v927
      %v934 = vadd.f32 %v919, %v927
      %v935 = vadd.f32 %v920, %v927
      %v936 = vadd.f32 %v921, %v927
      %v937 = vxor.u32 %v929, 2147483648
      %v938 = vxor.u32 %v930, 2147483648
      %v939 = vxor.u32 %v931, 2147483648
      %v940 = vxor.u32 %v932, 2147483648
      %v941 = vxor.u32 %v933, 2147483648
      %v942 = vxor.u32 %v934, 2147483648
      %v943 = vxor.u32 %v935, 2147483648
      %v944 = vxor.u32 %v936, 2147483648
      %v945 = vmul.f32 %v937, 1.442695
      %v946 = vpow.pop %v945
      %v947 = vmul.f32 %v938, 1.442695
      %v948 = vpow.pop %v947
      %v949 = vmul.f32 %v939, 1.442695
      %v950 = vpow.pop %v949
      %v951 = vmul.f32 %v940, 1.442695
      %v952 = vpow.pop %v951
      %v953 = vmul.f32 %v941, 1.442695
      %v954 = vpow.pop %v953
      %v955 = vmul.f32 %v942, 1.442695
      %v956 = vpow.pop %v955
      %v957 = vmul.f32 %v943, 1.442695
      %v958 = vpow.pop %v957
      %v959 = vmul.f32 %v944, 1.442695
      %v960 = vpow.pop %v959
      %v961 = vadd.f32 %v946, 1.0
      %v962 = vadd.f32 %v948, 1.0
      %v963 = vadd.f32 %v950, 1.0
      %v964 = vadd.f32 %v952, 1.0
      %v965 = vadd.f32 %v954, 1.0
      %v966 = vadd.f32 %v956, 1.0
      %v967 = vadd.f32 %v958, 1.0
      %v968 = vadd.f32 %v960, 1.0
      %v969 = vrcp.pop %v961
      %v970 = vmul.f32 1.0, %v969
      %v971 = vrcp.pop %v962
      %v972 = vmul.f32 1.0, %v971
      %v973 = vrcp.pop %v963
      %v974 = vmul.f32 1.0, %v973
      %v975 = vrcp.pop %v964
      %v976 = vmul.f32 1.0, %v975
      %v977 = vrcp.pop %v965
      %v978 = vmul.f32 1.0, %v977
      %v979 = vrcp.pop %v966
      %v980 = vmul.f32 1.0, %v979
      %v981 = vrcp.pop %v967
      %v982 = vmul.f32 1.0, %v981
      %v983 = vrcp.pop %v968
      %v984 = vmul.f32 1.0, %v983
      %v985 = vmul.f32 %v929, %v970
      %v986 = vmul.f32 %v930, %v972
      %v987 = vmul.f32 %v931, %v974
      %v988 = vmul.f32 %v932, %v976
      %v989 = vmul.f32 %v933, %v978
      %v990 = vmul.f32 %v934, %v980
      %v991 = vmul.f32 %v935, %v982
      %v992 = vmul.f32 %v936, %v984
      %v993 = vpack.c.bf16 %v985, %v985
      %v994 = vpack.c.bf16 %v986, %v986
      %v995 = vpack.c.bf16 %v987, %v987
      %v996 = vpack.c.bf16 %v988, %v988
      %v997 = vpack.c.bf16 %v989, %v989
      %v998 = vpack.c.bf16 %v990, %v990
      %v999 = vpack.c.bf16 %v991, %v991
      %v1000 = vpack.c.bf16 %v992, %v992
      %1001 = vst [vmem:[%s230] sm:$0xf] %v993
      %1002 = vst [vmem:[%s230 + $0x4] sm:$0xf] %v994
      %1003 = vst [vmem:[%s230 + $0x8] sm:$0xf] %v995
      %1004 = vst [vmem:[%s230 + $0xc] sm:$0xf] %v996
      %1005 = vst [vmem:[%s230 + $0x10] sm:$0xf] %v997
      %1006 = vst [vmem:[%s230 + $0x14] sm:$0xf] %v998
      %1007 = vst [vmem:[%s230 + $0x18] sm:$0xf] %v999
      %1008 = vst [vmem:[%s230 + $0x1c] sm:$0xf] %v1000
      %v1009 = vadd.f32 %v985, %v986
      %v1010 = vadd.f32 %v1009, %v987
      %v1011 = vadd.f32 %v1010, %v988
      %v1012 = vadd.f32 %v1011, %v989
      %v1013 = vadd.f32 %v1012, %v990
      %v1014 = vadd.f32 %v1013, %v991
      %v1015 = vadd.f32 %v1014, %v992
      %v1016 = vrot.slane %v1015, 4
      %v1017 = vadd.f32 %v1015, %v1016
      %v1018 = vrot.slane %v1017, 2
      %v1019 = vadd.f32 %v1017, %v1018
      %v1020 = vrot.slane %v1019, 1
      %v1021 = vadd.f32 %v1019, %v1020
      %v1022 = vmul.f32 %v1021, 0.015625
      %1023 = vst [vmem:[%s233] sm:$0x1] %v1022
      %p1024 = scmp.lt.s32.totalorder %s17, 1
      %s1025 = scalar_select %p1024, %s17, 1
      %s1026 = smul.addr %s1025, 8
      %s1027 = smul.addr %s1026, 4
      %s1028 = scalar_lea.vmem %s4, %s1027
      %p1029 = scmp.lt.s32.totalorder %s17, 1
      %s1030 = scalar_select %p1029, %s17, 1
      %s1031 = scalar_lea.vmem %s5, %s1030
      // Predicated region
      $region37: #{_lambda_.15} parent=35 // pred_check
        %p1032 = pneg %p124
      $region38: #{_lambda_.15} parent=35 // pred_check_branch
        %1034 = sbr.rel (%p1032) target = $region40
      $region39: #{_lambda_.15} parent=35 // pred_region
        _
      $region40: #{_lambda_.15} parent=35 // pred_fallthru
        _
      // Predicated region
      $region41: #{_lambda_.15} parent=35 // pred_check
        %p1035 = pneg %p150
      $region42: #{_lambda_.15} parent=35 // pred_check_branch
        %1037 = sbr.rel (%p1035) target = $region44
      $region43: #{_lambda_.15} parent=35 // pred_region
        _
      $region44: #{_lambda_.15} parent=35 // pred_fallthru
        _
    $region36: #{_lambda_.15} parent=5 // pred_fallthru
      _
    %p1038 = scmp.le.s32.totalorder 2, %s12
    // Predicated region
    $region45: #{_lambda_.15} parent=5 // pred_check
      %p1039 = pneg %p1038
    $region46: #{_lambda_.15} parent=5 // pred_check_branch
      %1041 = sbr.rel (%p1039) target = $region48
    $region47: #{_lambda_.15} parent=5 // pred_region
      %s1042 = ssub.s32 %s12, 2
      // Predicated region
      $region49: #{_lambda_.15} parent=47 // pred_check
        %p1043 = pneg %p130
      $region50: #{_lambda_.15} parent=47 // pred_check_branch
        %1045 = sbr.rel (%p1043) target = $region52
      $region51: #{_lambda_.15} parent=47 // pred_region
        %p1046 = scmp.lt.s32.totalorder %s18, 1
        %s1047 = scalar_select %p1046, %s18, 1
        %s1048 = smul.addr %s1047, 8
        %s1049 = smul.addr %s1048, 4
        %s1050 = scalar_lea.vmem %s4, %s1049
      $region52: #{_lambda_.15} parent=47 // pred_fallthru
        _
      // Predicated region
      $region53: #{_lambda_.15} parent=47 // pred_check
        %p1051 = pneg %p156
      $region54: #{_lambda_.15} parent=47 // pred_check_branch
        %1053 = sbr.rel (%p1051) target = $region56
      $region55: #{_lambda_.15} parent=47 // pred_region
        %p1054 = scmp.lt.s32.totalorder %s18, 1
        %s1055 = scalar_select %p1054, %s18, 1
        %s1056 = scalar_lea.vmem %s5, %s1055
      $region56: #{_lambda_.15} parent=47 // pred_fallthru
        _
    $region48: #{_lambda_.15} parent=5 // pred_fallthru
      _
  $region6: #{_lambda_.15} parent=0 // loop_footer
    %s16 = sadd.s32 1, %s12
  $region7: #{_lambda_.15} parent=0 // loop_footer_branch
    %11 = sbr.rel target = $region3
  $region8: #{_lambda_.15} parent=0 // loop_exit
    _

// kernel: _lambda_.21
$region0: #{_lambda_.21}
  #allocation0 [shape = 'u32[]', space=smem, size = 0x4, offset = 0x4, fixed_abs, tag = 'smem constant byte address 0x4 - core index']
  #allocation1 [shape = 'u32[144,128]{1,0:T(1,128)}', space=vmem, size = 0x12000, scoped, tag = 'internal scratch']
  %s0 = inlined_call_operand.vmem [shape: bf16[2,16,128], index: 0, kind: input, shape index: {}]
  %s1 = inlined_call_operand.vmem [shape: bf16[128,128], index: 1, kind: input, shape index: {}]
  %s2 = inlined_call_operand.vmem [shape: f32[1,128], index: 2, kind: input, shape index: {}]
  %s3 = inlined_call_operand.vmem [shape: f32[1,128], index: 3, kind: input, shape index: {}]
  %s4 = inlined_call_operand.vmem [shape: f32[2,1,128], index: 4, kind: input, shape index: {}]
  %s5 = inlined_call_operand.vmem [shape: bf16[2,16,128], index: 5, kind: output, shape index: {}]
  %s6 = sld [smem:[#allocation0]]
  $region53: #{_lambda_.21} parent=0
    _
  %s8 = ssub.s32 1, %s6
  %s9 = scalar_select 0, %s8, %s6
  loop: start=0, step=1, limit=4
  $region2: #{_lambda_.21} parent=0 // loop_pre_header
    _
  $region3: #{_lambda_.21} parent=0 // loop_header
    %s11 = sphi 0, %s15
    %p12 = scmp.ge.s32.totalorder %s11, 4
    %s18 = sphi 0, %s30
    %s19 = sphi 0, %s26
    %s20 = sphi 0, %s18
    %s21 = sphi 0, %s19
    %s22 = sphi 0, %s20
    %s23 = sphi 0, %s21
    %s35 = sphi 0, %s37
    %s38 = sphi 0, %s35
    %s39 = sphi 0, %s38
    %s55 = sphi 0, %s39
    %s59 = sphi 0, %s59
    %s61 = sphi 0, %s59
    %s62 = sphi 0, %s61
    %s76 = sphi 0, %s62
    %s80 = sphi 0, %s80
    %s82 = sphi 0, %s80
    %s83 = sphi 0, %s82
    %s97 = sphi 0, %s83
    %s101 = sphi 0, %s101
    %s103 = sphi 0, %s101
    %s104 = sphi 0, %s103
    %s118 = sphi 0, %s104
    %s124 = sphi 0, %s126
    %s127 = sphi 0, %s124
    %s128 = sphi 0, %s127
    %s144 = sphi 0, %s128
    %s152 = sphi 0, %s154
    %s155 = sphi 0, %s152
    %s156 = sphi 0, %s155
    %s172 = sphi 0, %s156
  $region4: #{_lambda_.21} parent=0 // loop_header_branch
    %14 = sbr.rel (%p12) target = $region8
  $region5: #{_lambda_.21} parent=0 // loop_body
    %s16 = ssub.s32 %s11, 1
    %s17 = ssub.s32 %s11, 2
    %s24 = sadd.s32 1, %s19
    %p25 = scmp.ge.s32.totalorder %s24, 1
    %s26 = scalar_select %p25, 0, %s24
    %s27 = sadd.s32 1, %s18
    %s28 = scalar_select %p25, %s27, %s18
    %p29 = scmp.ge.s32.totalorder %s28, 2
    %s30 = scalar_select %p29, 0, %s28
    %s31 = ssub.s32 %s18, %s30
    %s32 = ssub.s32 %s19, %s26
    %s33 = sor.u32 %s31, %s32
    %p34 = scmp.eq.s32.totalorder %s33, 0
    %s36 = sadd.s32 %s35, 1
    %s37 = scalar_select %p34, %s35, %s36
    %p40 = pneg %p34
    %p41 = scmp.eq.s32.totalorder %s11, 1
    %p42 = por %p40, %p41
    %p43 = scmp.ne.s32.totalorder %s35, %s38
    %p44 = scmp.eq.s32.totalorder %s11, 0
    %p45 = por %p43, %p44
    %p46 = scmp.ne.s32.totalorder %s35, %s38
    %p47 = scmp.eq.s32.totalorder %s16, 1
    %p48 = por %p46, %p47
    %p49 = scmp.ne.s32.totalorder %s38, %s39
    %p50 = scmp.eq.s32.totalorder %s16, 0
    %p51 = por %p49, %p50
    %p52 = scmp.ne.s32.totalorder %s38, %s39
    %p53 = scmp.eq.s32.totalorder %s17, 1
    %p54 = por %p52, %p53
    %p56 = scmp.ne.s32.totalorder %s39, %s55
    %p57 = scmp.eq.s32.totalorder %s17, 0
    %p58 = por %p56, %p57
    %s60 = sadd.s32 %s59, 1
    %p63 = scmp.eq.s32.totalorder %s11, 1
    %p64 = scmp.ne.s32.totalorder %s59, %s61
    %p65 = scmp.eq.s32.totalorder %s11, 0
    %p66 = por %p64, %p65
    %p67 = scmp.ne.s32.totalorder %s59, %s61
    %p68 = scmp.eq.s32.totalorder %s16, 1
    %p69 = por %p67, %p68
    %p70 = scmp.ne.s32.totalorder %s61, %s62
    %p71 = scmp.eq.s32.totalorder %s16, 0
    %p72 = por %p70, %p71
    %p73 = scmp.ne.s32.totalorder %s61, %s62
    %p74 = scmp.eq.s32.totalorder %s17, 1
    %p75 = por %p73, %p74
    %p77 = scmp.ne.s32.totalorder %s62, %s76
    %p78 = scmp.eq.s32.totalorder %s17, 0
    %p79 = por %p77, %p78
    %s81 = sadd.s32 %s80, 1
    %p84 = scmp.eq.s32.totalorder %s11, 1
    %p85 = scmp.ne.s32.totalorder %s80, %s82
    %p86 = scmp.eq.s32.totalorder %s11, 0
    %p87 = por %p85, %p86
    %p88 = scmp.ne.s32.totalorder %s80, %s82
    %p89 = scmp.eq.s32.totalorder %s16, 1
    %p90 = por %p88, %p89
    %p91 = scmp.ne.s32.totalorder %s82, %s83
    %p92 = scmp.eq.s32.totalorder %s16, 0
    %p93 = por %p91, %p92
    %p94 = scmp.ne.s32.totalorder %s82, %s83
    %p95 = scmp.eq.s32.totalorder %s17, 1
    %p96 = por %p94, %p95
    %p98 = scmp.ne.s32.totalorder %s83, %s97
    %p99 = scmp.eq.s32.totalorder %s17, 0
    %p100 = por %p98, %p99
    %s102 = sadd.s32 %s101, 1
    %p105 = scmp.eq.s32.totalorder %s11, 1
    %p106 = scmp.ne.s32.totalorder %s101, %s103
    %p107 = scmp.eq.s32.totalorder %s11, 0
    %p108 = por %p106, %p107
    %p109 = scmp.ne.s32.totalorder %s101, %s103
    %p110 = scmp.eq.s32.totalorder %s16, 1
    %p111 = por %p109, %p110
    %p112 = scmp.ne.s32.totalorder %s103, %s104
    %p113 = scmp.eq.s32.totalorder %s16, 0
    %p114 = por %p112, %p113
    %p115 = scmp.ne.s32.totalorder %s103, %s104
    %p116 = scmp.eq.s32.totalorder %s17, 1
    %p117 = por %p115, %p116
    %p119 = scmp.ne.s32.totalorder %s104, %s118
    %p120 = scmp.eq.s32.totalorder %s17, 0
    %p121 = por %p119, %p120
    %s122 = ssub.s32 %s18, %s30
    %p123 = scmp.eq.s32.totalorder %s122, 0
    %s125 = sadd.s32 %s124, 1
    %s126 = scalar_select %p123, %s124, %s125
    %p129 = pneg %p123
    %p130 = scmp.eq.s32.totalorder %s11, 1
    %p131 = por %p129, %p130
    %p132 = scmp.ne.s32.totalorder %s124, %s127
    %p133 = scmp.eq.s32.totalorder %s11, 0
    %p134 = por %p132, %p133
    %p135 = scmp.ne.s32.totalorder %s124, %s127
    %p136 = scmp.eq.s32.totalorder %s16, 1
    %p137 = por %p135, %p136
    %p138 = scmp.ne.s32.totalorder %s127, %s128
    %p139 = scmp.eq.s32.totalorder %s16, 0
    %p140 = por %p138, %p139
    %p141 = scmp.ne.s32.totalorder %s127, %s128
    %p142 = scmp.eq.s32.totalorder %s17, 1
    %p143 = por %p141, %p142
    %p145 = scmp.ne.s32.totalorder %s128, %s144
    %p146 = scmp.eq.s32.totalorder %s17, 0
    %p147 = por %p145, %p146
    %s148 = ssub.s32 %s18, %s30
    %s149 = ssub.s32 %s19, %s26
    %s150 = sor.u32 %s148, %s149
    %p151 = scmp.eq.s32.totalorder %s150, 0
    %s153 = sadd.s32 %s152, 1
    %s154 = scalar_select %p151, %s152, %s153
    %p157 = pneg %p151
    %p158 = scmp.eq.s32.totalorder %s11, 1
    %p159 = por %p157, %p158
    %p160 = scmp.ne.s32.totalorder %s152, %s155
    %p161 = scmp.eq.s32.totalorder %s11, 0
    %p162 = por %p160, %p161
    %p163 = scmp.ne.s32.totalorder %s152, %s155
    %p164 = scmp.eq.s32.totalorder %s16, 1
    %p165 = por %p163, %p164
    %p166 = scmp.ne.s32.totalorder %s155, %s156
    %p167 = scmp.eq.s32.totalorder %s16, 0
    %p168 = por %p166, %p167
    %p169 = scmp.ne.s32.totalorder %s155, %s156
    %p170 = scmp.eq.s32.totalorder %s17, 1
    %p171 = por %p169, %p170
    %p173 = scmp.ne.s32.totalorder %s156, %s172
    %p174 = scmp.eq.s32.totalorder %s17, 0
    %p175 = por %p173, %p174
    %p176 = scmp.le.s32.totalorder 1, %s11
    %p177 = scmp.lt.s32.totalorder %s11, 3
    %p178 = pnand %p176, %p177
    %p179 = pneg %p178
    // Predicated region
    $region9: #{_lambda_.21} parent=5 // pred_check
      _
    $region10: #{_lambda_.21} parent=5 // pred_check_branch
      %181 = sbr.rel (%p178) target = $region12
    $region11: #{_lambda_.21} parent=5 // pred_region
      %s182 = ssub.s32 %s11, 1
      // Predicated region
      $region13: #{_lambda_.21} parent=11 // pred_check
        %p183 = pneg %p72
      $region14: #{_lambda_.21} parent=11 // pred_check_branch
        %185 = sbr.rel (%p183) target = $region16
      $region15: #{_lambda_.21} parent=11 // pred_region
        _
      $region16: #{_lambda_.21} parent=11 // pred_fallthru
        _
      // Predicated region
      $region17: #{_lambda_.21} parent=11 // pred_check
        %p186 = pneg %p93
      $region18: #{_lambda_.21} parent=11 // pred_check_branch
        %188 = sbr.rel (%p186) target = $region20
      $region19: #{_lambda_.21} parent=11 // pred_region
        _
      $region20: #{_lambda_.21} parent=11 // pred_fallthru
        _
      // Predicated region
      $region21: #{_lambda_.21} parent=11 // pred_check
        %p189 = pneg %p114
      $region22: #{_lambda_.21} parent=11 // pred_check_branch
        %191 = sbr.rel (%p189) target = $region24
      $region23: #{_lambda_.21} parent=11 // pred_region
        _
      $region24: #{_lambda_.21} parent=11 // pred_fallthru
        _
    $region12: #{_lambda_.21} parent=5 // pred_fallthru
      _
    %p192 = scmp.lt.s32.totalorder %s11, 2
    // Predicated region
    $region25: #{_lambda_.21} parent=5 // pred_check
      %p193 = pneg %p192
    $region26: #{_lambda_.21} parent=5 // pred_check_branch
      %195 = sbr.rel (%p193) target = $region28
    $region27: #{_lambda_.21} parent=5 // pred_region
      // Predicated region
      $region29: #{_lambda_.21} parent=27 // pred_check
        %p196 = pneg %p45
      $region30: #{_lambda_.21} parent=27 // pred_check_branch
        %198 = sbr.rel (%p196) target = $region32
      $region31: #{_lambda_.21} parent=27 // pred_region
        %s199 = smul.u32 2, %s19
        %p200 = scmp.lt.s32.totalorder %s18, 1
        %s201 = scalar_select %p200, %s18, 1
        %p202 = scmp.lt.s32.totalorder %s199, 1
        %s203 = scalar_select %p202, %s199, 1
        %s204 = smul.addr %s201, 2
        %s205 = sadd.s32 %s203, %s204
        %s206 = smul.addr %s205, 4
        %s207 = scalar_lea.vmem %s0, %s206
        %s208 = smul.u32 2, %s19
      $region32: #{_lambda_.21} parent=27 // pred_fallthru
        _
      // Predicated region
      $region33: #{_lambda_.21} parent=27 // pred_check
        %p209 = pneg %p134
      $region34: #{_lambda_.21} parent=27 // pred_check_branch
        %211 = sbr.rel (%p209) target = $region36
      $region35: #{_lambda_.21} parent=27 // pred_region
        %p212 = scmp.lt.s32.totalorder %s18, 1
        %s213 = scalar_select %p212, %s18, 1
        %s214 = scalar_lea.vmem %s4, %s213
      $region36: #{_lambda_.21} parent=27 // pred_fallthru
        _
    $region28: #{_lambda_.21} parent=5 // pred_fallthru
      _
    %p215 = scmp.le.s32.totalorder 1, %s11
    %p216 = scmp.lt.s32.totalorder %s11, 3
    %p217 = pnand %p215, %p216
    %p218 = pneg %p217
    // Predicated region
    $region37: #{_lambda_.21} parent=5 // pred_check
      _
    $region38: #{_lambda_.21} parent=5 // pred_check_branch
      %220 = sbr.rel (%p217) target = $region40
    $region39: #{_lambda_.21} parent=5 // pred_region
      %s221 = ssub.s32 %s11, 1
      %s222 = smul.u32 2, %s21
      %p223 = scmp.lt.s32.totalorder %s20, 1
      %s224 = scalar_select %p223, %s20, 1
      %p225 = scmp.lt.s32.totalorder %s222, 1
      %s226 = scalar_select %p225, %s222, 1
      %s227 = smul.addr %s224, 2
      %s228 = sadd.s32 %s226, %s227
      %s229 = smul.addr %s228, 4
      %s230 = scalar_lea.vmem %s0, %s229
      %p231 = pneg %p51
      %p232 = pneg %p48
      %p233 = pneg %p72
      %p234 = pneg %p69
      %p235 = pneg %p93
      %p236 = pneg %p90
      %p237 = pneg %p114
      %p238 = pneg %p111
      %p239 = scmp.lt.s32.totalorder %s20, 1
      %s240 = scalar_select %p239, %s20, 1
      %s241 = scalar_lea.vmem %s4, %s240
      %p242 = pneg %p140
      %p243 = pneg %p137
      %p244 = pneg %p168
      %p245 = pneg %p165
      %s246 = smul.u32 2, %s21
      %p247 = scmp.lt.s32.totalorder %s20, 1
      %s248 = scalar_select %p247, %s20, 1
      %p249 = scmp.lt.s32.totalorder %s246, 1
      %s250 = scalar_select %p249, %s246, 1
      %s251 = smul.addr %s248, 2
      %s252 = sadd.s32 %s250, %s251
      %s253 = smul.addr %s252, 4
      %s254 = scalar_lea.vmem %s5, %s253
      %s255 = smul.u32 2, %s21
      %p256 = scmp.lt.s32.totalorder %s20, 1
      %s257 = scalar_select %p256, %s20, 1
      %p258 = scmp.lt.s32.totalorder %s255, 1
      %s259 = scalar_select %p258, %s255, 1
      %s260 = smul.addr %s257, 2
      %s261 = sadd.s32 %s259, %s260
      %s262 = smul.addr %s261, 4
      %s263 = scalar_lea.vmem %s0, %s262
      %s264 = smul.u32 2, %s21
      %p265 = scmp.lt.s32.totalorder %s20, 1
      %s266 = scalar_select %p265, %s20, 1
      %s267 = scalar_lea.vmem %s4, %s266
      %s268 = smul.u32 2, %s21
      %p269 = scmp.lt.s32.totalorder %s20, 1
      %s270 = scalar_select %p269, %s20, 1
      %p271 = scmp.lt.s32.totalorder %s268, 1
      %s272 = scalar_select %p271, %s268, 1
      %s273 = smul.addr %s270, 2
      %s274 = sadd.s32 %s272, %s273
      %s275 = smul.addr %s274, 4
      %s276 = scalar_lea.vmem %s5, %s275
      %s277 = smul.u32 2, %s21
      %v279 = vld [vmem:[%s263] sm:$0xf]
      %v280 = vld [vmem:[%s263 + $0x4] sm:$0xf]
      %v281 = vunpack.c.l.bf16 %v279
      %v282 = vunpack.c.l.bf16 %v280
      %v283 = vld [vmem:[%s267] sm:$0x1]
      %v285 = vlaneseq
      %v286 = vshrl.u32 %v285, 7
      %v287 = vsub.s32 0, %v286
      %v288 = vrot.slane %v283, %v287
      %v290 = vmul.f32 %v281, %v288
      %v291 = vmul.f32 %v282, %v288
      %v292 = vpack.c.bf16 %v291, %v290
      %v293 = vld [vmem:[%s1] sm:$0xf]
      %v294 = vld [vmem:[%s1 + $0x4] sm:$0xf]
      %v295 = vld [vmem:[%s1 + $0x8] sm:$0xf]
      %v296 = vld [vmem:[%s1 + $0xc] sm:$0xf]
      %v297 = vld [vmem:[%s1 + $0x10] sm:$0xf]
      %v298 = vld [vmem:[%s1 + $0x14] sm:$0xf]
      %v299 = vld [vmem:[%s1 + $0x18] sm:$0xf]
      %v300 = vld [vmem:[%s1 + $0x1c] sm:$0xf]
      %v301 = vld [vmem:[%s1 + $0x20] sm:$0xf]
      %v302 = vld [vmem:[%s1 + $0x24] sm:$0xf]
      %v303 = vld [vmem:[%s1 + $0x28] sm:$0xf]
      %v304 = vld [vmem:[%s1 + $0x2c] sm:$0xf]
      %v305 = vld [vmem:[%s1 + $0x30] sm:$0xf]
      %v306 = vld [vmem:[%s1 + $0x34] sm:$0xf]
      %v307 = vld [vmem:[%s1 + $0x38] sm:$0xf]
      %v308 = vld [vmem:[%s1 + $0x3c] sm:$0xf]
      %v325 = vunpack.c.l.b16 %v293
      %v326 = vunpack.c.l.b16 %v294
      %v327 = vunpack.c.l.b16 %v295
      %v328 = vunpack.c.l.b16 %v296
      %v329 = vunpack.c.l.b16 %v297
      %v330 = vunpack.c.l.b16 %v298
      %v331 = vunpack.c.l.b16 %v299
      %v332 = vunpack.c.l.b16 %v300
      %v333 = vunpack.c.l.b16 %v301
      %v334 = vunpack.c.l.b16 %v302
      %v335 = vunpack.c.l.b16 %v303
      %v336 = vunpack.c.l.b16 %v304
      %v337 = vunpack.c.l.b16 %v305
      %v338 = vunpack.c.l.b16 %v306
      %v339 = vunpack.c.l.b16 %v307
      %v340 = vunpack.c.l.b16 %v308
      %v341 = vpack.c.b16 %v326, %v325
      %v342 = vpack.c.b16 %v328, %v327
      %v343 = vpack.c.b16 %v330, %v329
      %v344 = vpack.c.b16 %v332, %v331
      %v345 = vpack.c.b16 %v334, %v333
      %v346 = vpack.c.b16 %v336, %v335
      %v347 = vpack.c.b16 %v338, %v337
      %v348 = vpack.c.b16 %v340, %v339
      %357 = vmatprep.subr.bf16.mxu0 0
      %358 = vmatpush1.bf16.msra.mxu0 %v341
      %359 = vmatprep.subr.bf16.mxu0 0
      %360 = vmatpush1.bf16.msra.mxu0 %v342
      %361 = vmatprep.subr.bf16.mxu0 0
      %362 = vmatpush1.bf16.msra.mxu0 %v343
      %363 = vmatprep.subr.bf16.mxu0 0
      %364 = vmatpush1.bf16.msra.mxu0 %v344
      %365 = vmatprep.subr.bf16.mxu0 0
      %366 = vmatpush1.bf16.msra.mxu0 %v345
      %367 = vmatprep.subr.bf16.mxu0 0
      %368 = vmatpush1.bf16.msra.mxu0 %v346
      %369 = vmatprep.subr.bf16.mxu0 0
      %370 = vmatpush1.bf16.msra.mxu0 %v347
      %371 = vmatprep.subr.bf16.mxu0 0
      %372 = vmatpush1.bf16.msra.mxu0 %v348
      %373 = vmatprep.subr.bf16.mxu0 0
      %374 = vmatpush1.bf16.msra.mxu0 0
      %375 = vmatprep.subr.bf16.mxu0 0
      %376 = vmatpush1.bf16.msra.mxu0 0
      %377 = vmatprep.subr.bf16.mxu0 0
      %378 = vmatpush1.bf16.msra.mxu0 0
      %379 = vmatprep.subr.bf16.mxu0 0
      %380 = vmatpush1.bf16.msra.mxu0 0
      %381 = vmatprep.subr.bf16.mxu0 0
      %382 = vmatpush1.bf16.msra.mxu0 0
      %383 = vmatprep.subr.bf16.mxu0 0
      %384 = vmatpush1.bf16.msra.mxu0 0
      %385 = vmatprep.subr.bf16.mxu0 0
      %386 = vmatpush1.bf16.msra.mxu0 0
      %387 = vmatprep.subr.bf16.mxu0 0
      %388 = vmatpush1.bf16.msra.mxu0 0
      %389 = vmatprep.mubr.bf16.mxu0 0
      %390 = vmatmul.mubr.bf16.gmra.mrb[0].mxu0 %v292
      %v391 = vpop.f32.mrb[0].mxu0
      %v392 = vadd.f32 0.0, %v391
      %v393 = vpop.f32.mrb[0].mxu0
      %v394 = vpop.f32.mrb[0].mxu0
      %v395 = vadd.f32 0.0, %v394
      %v396 = vpop.f32.mrb[0].mxu0
      %397 = vdwg.mxu0
      %v398 = vld [vmem:[%s2] sm:$0x1]
      %v400 = vlaneseq
      %v401 = vshrl.u32 %v400, 7
      %v402 = vsub.s32 0, %v401
      %v403 = vrot.slane %v398, %v402
      %v405 = vmul.f32 %v392, %v403
      %v406 = vmul.f32 %v395, %v403
      %v407 = vld [vmem:[%s3] sm:$0x1]
      %v409 = vlaneseq
      %v410 = vshrl.u32 %v409, 7
      %v411 = vsub.s32 0, %v410
      %v412 = vrot.slane %v407, %v411
      %v414 = vadd.f32 %v405, %v412
      %v415 = vadd.f32 %v406, %v412
      %v416 = vpack.c.bf16 %v415, %v414
      %v418 = vunpack.c.l.b16 %v416
      %v419 = vunpack.c.h.b16 %v416
      %v420 = vpack.c.b16 %v418, %v418
      %v421 = vpack.c.b16 %v419, %v419
      %424 = vst [vmem:[%s276] sm:$0xf] %v420
      %425 = vst [vmem:[%s276 + $0x4] sm:$0xf] %v421
      %s426 = smul.u32 2, %s21
      %p427 = scmp.lt.s32.totalorder %s20, 1
      %s428 = scalar_select %p427, %s20, 1
      %p429 = scmp.lt.s32.totalorder %s426, 1
      %s430 = scalar_select %p429, %s426, 1
      %s431 = smul.addr %s428, 2
      %s432 = sadd.s32 %s430, %s431
      %s433 = smul.addr %s432, 4
      %s434 = scalar_lea.vmem %s5, %s433
      // Predicated region
      $region41: #{_lambda_.21} parent=39 // pred_check
        %p435 = pneg %p165
      $region42: #{_lambda_.21} parent=39 // pred_check_branch
        %437 = sbr.rel (%p435) target = $region44
      $region43: #{_lambda_.21} parent=39 // pred_region
        %s438 = smul.u32 2, %s21
      $region44: #{_lambda_.21} parent=39 // pred_fallthru
        _
    $region40: #{_lambda_.21} parent=5 // pred_fallthru
      _
    %p439 = scmp.le.s32.totalorder 2, %s11
    // Predicated region
    $region45: #{_lambda_.21} parent=5 // pred_check
      %p440 = pneg %p439
    $region46: #{_lambda_.21} parent=5 // pred_check_branch
      %442 = sbr.rel (%p440) target = $region48
    $region47: #{_lambda_.21} parent=5 // pred_region
      %s443 = ssub.s32 %s11, 2
      // Predicated region
      $region49: #{_lambda_.21} parent=47 // pred_check
        %p444 = pneg %p171
      $region50: #{_lambda_.21} parent=47 // pred_check_branch
        %446 = sbr.rel (%p444) target = $region52
      $region51: #{_lambda_.21} parent=47 // pred_region
        %s447 = smul.u32 2, %s23
        %p448 = scmp.lt.s32.totalorder %s22, 1
        %s449 = scalar_select %p448, %s22, 1
        %p450 = scmp.lt.s32.totalorder %s447, 1
        %s451 = scalar_select %p450, %s447, 1
        %s452 = smul.addr %s449, 2
        %s453 = sadd.s32 %s451, %s452
        %s454 = smul.addr %s453, 4
        %s455 = scalar_lea.vmem %s5, %s454
      $region52: #{_lambda_.21} parent=47 // pred_fallthru
        _
    $region48: #{_lambda_.21} parent=5 // pred_fallthru
      _
  $region6: #{_lambda_.21} parent=0 // loop_footer
    %s15 = sadd.s32 1, %s11
  $region7: #{_lambda_.21} parent=0 // loop_footer_branch
    %10 = sbr.rel target = $region3
  $region8: #{_lambda_.21} parent=0 // loop_exit
    _

// kernel: _lambda_.19
$region0: #{_lambda_.19}
  #allocation0 [shape = 'u32[]', space=smem, size = 0x4, offset = 0x4, fixed_abs, tag = 'smem constant byte address 0x4 - core index']
  #allocation1 [shape = 'u32[144,128]{1,0:T(1,128)}', space=vmem, size = 0x12000, scoped, tag = 'internal scratch']
  %s0 = inlined_call_operand.vmem [shape: bf16[2,20,5,128], index: 0, kind: input, shape index: {}]
  %s1 = inlined_call_operand.vmem [shape: f32[9,128], index: 1, kind: input, shape index: {}]
  %s2 = inlined_call_operand.vmem [shape: f32[1,128], index: 2, kind: input, shape index: {}]
  %s3 = inlined_call_operand.vmem [shape: f32[1,128], index: 3, kind: input, shape index: {}]
  %s4 = inlined_call_operand.vmem [shape: bf16[2,4,4,128], index: 4, kind: output, shape index: {0}]
  %s5 = inlined_call_operand.vmem [shape: f32[2,1,128], index: 5, kind: output, shape index: {1}]
  %6 = xla_tuple %s4, %s5
  %s7 = sld [smem:[#allocation0]]
  $region57: #{_lambda_.19} parent=0
    _
  %s9 = ssub.s32 1, %s7
  %s10 = scalar_select 0, %s9, %s7
  loop: start=0, step=1, limit=4
  $region2: #{_lambda_.19} parent=0 // loop_pre_header
    _
  $region3: #{_lambda_.19} parent=0 // loop_header
    %s12 = sphi 0, %s16
    %p13 = scmp.ge.s32.totalorder %s12, 4
    %s22 = sphi 0, %s24
    %s25 = sphi 0, %s22
    %s26 = sphi 0, %s25
    %s42 = sphi 0, %s26
    %s46 = sphi 0, %s46
    %s48 = sphi 0, %s46
    %s49 = sphi 0, %s48
    %s63 = sphi 0, %s49
    %s67 = sphi 0, %s67
    %s69 = sphi 0, %s67
    %s70 = sphi 0, %s69
    %s84 = sphi 0, %s70
    %s88 = sphi 0, %s88
    %s90 = sphi 0, %s88
    %s91 = sphi 0, %s90
    %s105 = sphi 0, %s91
    %s111 = sphi 0, %s113
    %s114 = sphi 0, %s111
    %s115 = sphi 0, %s114
    %s131 = sphi 0, %s115
    %s137 = sphi 0, %s139
    %s140 = sphi 0, %s137
    %s141 = sphi 0, %s140
    %s157 = sphi 0, %s141
  $region4: #{_lambda_.19} parent=0 // loop_header_branch
    %15 = sbr.rel (%p13) target = $region8
  $region5: #{_lambda_.19} parent=0 // loop_body
    %s17 = ssub.s32 %s12, 1
    %s18 = ssub.s32 %s12, 2
    %s19 = sadd.s32 %s12, 1
    %s20 = ssub.s32 %s12, %s19
    %p21 = scmp.eq.s32.totalorder %s20, 0
    %s23 = sadd.s32 %s22, 1
    %s24 = scalar_select %p21, %s22, %s23
    %p27 = pneg %p21
    %p28 = scmp.eq.s32.totalorder %s12, 1
    %p29 = por %p27, %p28
    %p30 = scmp.ne.s32.totalorder %s22, %s25
    %p31 = scmp.eq.s32.totalorder %s12, 0
    %p32 = por %p30, %p31
    %p33 = scmp.ne.s32.totalorder %s22, %s25
    %p34 = scmp.eq.s32.totalorder %s17, 1
    %p35 = por %p33, %p34
    %p36 = scmp.ne.s32.totalorder %s25, %s26
    %p37 = scmp.eq.s32.totalorder %s17, 0
    %p38 = por %p36, %p37
    %p39 = scmp.ne.s32.totalorder %s25, %s26
    %p40 = scmp.eq.s32.totalorder %s18, 1
    %p41 = por %p39, %p40
    %p43 = scmp.ne.s32.totalorder %s26, %s42
    %p44 = scmp.eq.s32.totalorder %s18, 0
    %p45 = por %p43, %p44
    %s47 = sadd.s32 %s46, 1
    %p50 = scmp.eq.s32.totalorder %s12, 1
    %p51 = scmp.ne.s32.totalorder %s46, %s48
    %p52 = scmp.eq.s32.totalorder %s12, 0
    %p53 = por %p51, %p52
    %p54 = scmp.ne.s32.totalorder %s46, %s48
    %p55 = scmp.eq.s32.totalorder %s17, 1
    %p56 = por %p54, %p55
    %p57 = scmp.ne.s32.totalorder %s48, %s49
    %p58 = scmp.eq.s32.totalorder %s17, 0
    %p59 = por %p57, %p58
    %p60 = scmp.ne.s32.totalorder %s48, %s49
    %p61 = scmp.eq.s32.totalorder %s18, 1
    %p62 = por %p60, %p61
    %p64 = scmp.ne.s32.totalorder %s49, %s63
    %p65 = scmp.eq.s32.totalorder %s18, 0
    %p66 = por %p64, %p65
    %s68 = sadd.s32 %s67, 1
    %p71 = scmp.eq.s32.totalorder %s12, 1
    %p72 = scmp.ne.s32.totalorder %s67, %s69
    %p73 = scmp.eq.s32.totalorder %s12, 0
    %p74 = por %p72, %p73
    %p75 = scmp.ne.s32.totalorder %s67, %s69
    %p76 = scmp.eq.s32.totalorder %s17, 1
    %p77 = por %p75, %p76
    %p78 = scmp.ne.s32.totalorder %s69, %s70
    %p79 = scmp.eq.s32.totalorder %s17, 0
    %p80 = por %p78, %p79
    %p81 = scmp.ne.s32.totalorder %s69, %s70
    %p82 = scmp.eq.s32.totalorder %s18, 1
    %p83 = por %p81, %p82
    %p85 = scmp.ne.s32.totalorder %s70, %s84
    %p86 = scmp.eq.s32.totalorder %s18, 0
    %p87 = por %p85, %p86
    %s89 = sadd.s32 %s88, 1
    %p92 = scmp.eq.s32.totalorder %s12, 1
    %p93 = scmp.ne.s32.totalorder %s88, %s90
    %p94 = scmp.eq.s32.totalorder %s12, 0
    %p95 = por %p93, %p94
    %p96 = scmp.ne.s32.totalorder %s88, %s90
    %p97 = scmp.eq.s32.totalorder %s17, 1
    %p98 = por %p96, %p97
    %p99 = scmp.ne.s32.totalorder %s90, %s91
    %p100 = scmp.eq.s32.totalorder %s17, 0
    %p101 = por %p99, %p100
    %p102 = scmp.ne.s32.totalorder %s90, %s91
    %p103 = scmp.eq.s32.totalorder %s18, 1
    %p104 = por %p102, %p103
    %p106 = scmp.ne.s32.totalorder %s91, %s105
    %p107 = scmp.eq.s32.totalorder %s18, 0
    %p108 = por %p106, %p107
    %s109 = ssub.s32 %s12, %s19
    %p110 = scmp.eq.s32.totalorder %s109, 0
    %s112 = sadd.s32 %s111, 1
    %s113 = scalar_select %p110, %s111, %s112
    %p116 = pneg %p110
    %p117 = scmp.eq.s32.totalorder %s12, 1
    %p118 = por %p116, %p117
    %p119 = scmp.ne.s32.totalorder %s111, %s114
    %p120 = scmp.eq.s32.totalorder %s12, 0
    %p121 = por %p119, %p120
    %p122 = scmp.ne.s32.totalorder %s111, %s114
    %p123 = scmp.eq.s32.totalorder %s17, 1
    %p124 = por %p122, %p123
    %p125 = scmp.ne.s32.totalorder %s114, %s115
    %p126 = scmp.eq.s32.totalorder %s17, 0
    %p127 = por %p125, %p126
    %p128 = scmp.ne.s32.totalorder %s114, %s115
    %p129 = scmp.eq.s32.totalorder %s18, 1
    %p130 = por %p128, %p129
    %p132 = scmp.ne.s32.totalorder %s115, %s131
    %p133 = scmp.eq.s32.totalorder %s18, 0
    %p134 = por %p132, %p133
    %s135 = ssub.s32 %s12, %s19
    %p136 = scmp.eq.s32.totalorder %s135, 0
    %s138 = sadd.s32 %s137, 1
    %s139 = scalar_select %p136, %s137, %s138
    %p142 = pneg %p136
    %p143 = scmp.eq.s32.totalorder %s12, 1
    %p144 = por %p142, %p143
    %p145 = scmp.ne.s32.totalorder %s137, %s140
    %p146 = scmp.eq.s32.totalorder %s12, 0
    %p147 = por %p145, %p146
    %p148 = scmp.ne.s32.totalorder %s137, %s140
    %p149 = scmp.eq.s32.totalorder %s17, 1
    %p150 = por %p148, %p149
    %p151 = scmp.ne.s32.totalorder %s140, %s141
    %p152 = scmp.eq.s32.totalorder %s17, 0
    %p153 = por %p151, %p152
    %p154 = scmp.ne.s32.totalorder %s140, %s141
    %p155 = scmp.eq.s32.totalorder %s18, 1
    %p156 = por %p154, %p155
    %p158 = scmp.ne.s32.totalorder %s141, %s157
    %p159 = scmp.eq.s32.totalorder %s18, 0
    %p160 = por %p158, %p159
    %p161 = scmp.le.s32.totalorder 1, %s12
    %p162 = scmp.lt.s32.totalorder %s12, 3
    %p163 = pnand %p161, %p162
    %p164 = pneg %p163
    // Predicated region
    $region9: #{_lambda_.19} parent=5 // pred_check
      _
    $region10: #{_lambda_.19} parent=5 // pred_check_branch
      %166 = sbr.rel (%p163) target = $region12
    $region11: #{_lambda_.19} parent=5 // pred_region
      %s167 = ssub.s32 %s12, 1
      // Predicated region
      $region13: #{_lambda_.19} parent=11 // pred_check
        %p168 = pneg %p59
      $region14: #{_lambda_.19} parent=11 // pred_check_branch
        %170 = sbr.rel (%p168) target = $region16
      $region15: #{_lambda_.19} parent=11 // pred_region
        _
      $region16: #{_lambda_.19} parent=11 // pred_fallthru
        _
      // Predicated region
      $region17: #{_lambda_.19} parent=11 // pred_check
        %p171 = pneg %p80
      $region18: #{_lambda_.19} parent=11 // pred_check_branch
        %173 = sbr.rel (%p171) target = $region20
      $region19: #{_lambda_.19} parent=11 // pred_region
        _
      $region20: #{_lambda_.19} parent=11 // pred_fallthru
        _
      // Predicated region
      $region21: #{_lambda_.19} parent=11 // pred_check
        %p174 = pneg %p101
      $region22: #{_lambda_.19} parent=11 // pred_check_branch
        %176 = sbr.rel (%p174) target = $region24
      $region23: #{_lambda_.19} parent=11 // pred_region
        _
      $region24: #{_lambda_.19} parent=11 // pred_fallthru
        _
    $region12: #{_lambda_.19} parent=5 // pred_fallthru
      _
    %p177 = scmp.lt.s32.totalorder %s12, 2
    // Predicated region
    $region25: #{_lambda_.19} parent=5 // pred_check
      %p178 = pneg %p177
    $region26: #{_lambda_.19} parent=5 // pred_check_branch
      %180 = sbr.rel (%p178) target = $region28
    $region27: #{_lambda_.19} parent=5 // pred_region
      // Predicated region
      $region29: #{_lambda_.19} parent=27 // pred_check
        %p181 = pneg %p32
      $region30: #{_lambda_.19} parent=27 // pred_check_branch
        %183 = sbr.rel (%p181) target = $region32
      $region31: #{_lambda_.19} parent=27 // pred_region
        %p184 = scmp.lt.s32.totalorder %s12, 1
        %s185 = scalar_select %p184, %s12, 1
        %s186 = smul.addr %s185, 20
        %s187 = smul.addr %s186, 4
        %s188 = scalar_lea.vmem %s0, %s187
      $region32: #{_lambda_.19} parent=27 // pred_fallthru
        _
    $region28: #{_lambda_.19} parent=5 // pred_fallthru
      _
    %p189 = scmp.le.s32.totalorder 1, %s12
    %p190 = scmp.lt.s32.totalorder %s12, 3
    %p191 = pnand %p189, %p190
    %p192 = pneg %p191
    // Predicated region
    $region33: #{_lambda_.19} parent=5 // pred_check
      _
    $region34: #{_lambda_.19} parent=5 // pred_check_branch
      %194 = sbr.rel (%p191) target = $region36
    $region35: #{_lambda_.19} parent=5 // pred_region
      %s195 = ssub.s32 %s12, 1
      %p196 = scmp.lt.s32.totalorder %s17, 1
      %s197 = scalar_select %p196, %s17, 1
      %s198 = smul.addr %s197, 20
      %s199 = smul.addr %s198, 4
      %s200 = scalar_lea.vmem %s0, %s199
      %p201 = pneg %p38
      %p202 = pneg %p35
      %p203 = pneg %p59
      %p204 = pneg %p56
      %p205 = pneg %p80
      %p206 = pneg %p77
      %p207 = pneg %p101
      %p208 = pneg %p98
      %p209 = pneg %p127
      %p210 = pneg %p124
      %p211 = scmp.lt.s32.totalorder %s17, 1
      %s212 = scalar_select %p211, %s17, 1
      %s213 = smul.addr %s212, 4
      %s214 = smul.addr %s213, 2
      %s215 = scalar_lea.vmem %s4, %s214
      %p216 = pneg %p153
      %p217 = pneg %p150
      %p218 = scmp.lt.s32.totalorder %s17, 1
      %s219 = scalar_select %p218, %s17, 1
      %s220 = scalar_lea.vmem %s5, %s219
      %p221 = scmp.lt.s32.totalorder %s17, 1
      %s222 = scalar_select %p221, %s17, 1
      %s223 = smul.addr %s222, 20
      %s224 = smul.addr %s223, 4
      %s225 = scalar_lea.vmem %s0, %s224
      %p226 = scmp.lt.s32.totalorder %s17, 1
      %s227 = scalar_select %p226, %s17, 1
      %s228 = smul.addr %s227, 4
      %s229 = smul.addr %s228, 2
      %s230 = scalar_lea.vmem %s4, %s229
      %p231 = scmp.lt.s32.totalorder %s17, 1
      %s232 = scalar_select %p231, %s17, 1
      %s233 = scalar_lea.vmem %s5, %s232
      %v234 = vld [vmem:[%s225] sm:$0x3]
      %v235 = vld [vmem:[%s225 + $0x4] sm:$0x3]
      %v236 = vld [vmem:[%s225 + $0x8] sm:$0x3]
      %v237 = vld [vmem:[%s225 + $0xc] sm:$0x3]
      %v238 = vunpack.c.l.bf16 %v234
      %v239 = vunpack.c.l.bf16 %v235
      %v240 = vunpack.c.l.bf16 %v236
      %v241 = vunpack.c.l.bf16 %v237
      %v242 = vld [vmem:[%s1] sm:$0x1]
      %v243 = vlaneseq
      %v244 = vshrl.u32 %v243, 7
      %v245 = vsub.s32 0, %v244
      %v246 = vrot.slane %v242, %v245
      %v247 = vmul.f32 %v238, %v246
      %v248 = vmul.f32 %v239, %v246
      %v249 = vmul.f32 %v240, %v246
      %v250 = vmul.f32 %v241, %v246
      %v251 = vadd.f32 %v247, 0.0
      %v252 = vadd.f32 %v248, 0.0
      %v253 = vadd.f32 %v249, 0.0
      %v254 = vadd.f32 %v250, 0.0
      %s255 = scalar_lea.vmem %s225, 20
      %v256 = vld [vmem:[%s255] sm:$0x3]
      %v257 = vld [vmem:[%s255 + $0x4] sm:$0x3]
      %v258 = vld [vmem:[%s255 + $0x8] sm:$0x3]
      %v259 = vld [vmem:[%s255 + $0xc] sm:$0x3]
      %v260 = vunpack.c.l.bf16 %v256
      %v261 = vunpack.c.l.bf16 %v257
      %v262 = vunpack.c.l.bf16 %v258
      %v263 = vunpack.c.l.bf16 %v259
      %v264 = vld [vmem:[%s1 + $0x1] sm:$0x1]
      %v265 = vlaneseq
      %v266 = vshrl.u32 %v265, 7
      %v267 = vsub.s32 0, %v266
      %v268 = vrot.slane %v264, %v267
      %v269 = vmul.f32 %v260, %v268
      %v270 = vmul.f32 %v261, %v268
      %v271 = vmul.f32 %v262, %v268
      %v272 = vmul.f32 %v263, %v268
      %v273 = vadd.f32 %v251, %v269
      %v274 = vadd.f32 %v252, %v270
      %v275 = vadd.f32 %v253, %v271
      %v276 = vadd.f32 %v254, %v272
      %v277 = vld [vmem:[%s225] sm:$0x7]
      %v278 = vld [vmem:[%s225 + $0x4] sm:$0x7]
      %v279 = vld [vmem:[%s225 + $0x8] sm:$0x7]
      %v280 = vld [vmem:[%s225 + $0xc] sm:$0x7]
      %v281 = vunpack.c.l.bf16 %v277
      %v282 = vunpack.c.l.bf16 %v278
      %v283 = vunpack.c.l.bf16 %v279
      %v284 = vunpack.c.l.bf16 %v280
      %v285 = vld [vmem:[%s1 + $0x2] sm:$0x1]
      %v286 = vlaneseq
      %v287 = vshrl.u32 %v286, 7
      %v288 = vsub.s32 0, %v287
      %v289 = vrot.slane %v285, %v288
      %v290 = vmul.f32 %v281, %v289
      %v291 = vmul.f32 %v282, %v289
      %v292 = vmul.f32 %v283, %v289
      %v293 = vmul.f32 %v284, %v289
      %v298 = vrot.slane %v290, 1
      %v299 = vrot.slane %v291, 1
      %v300 = vrot.slane %v292, 1
      %v301 = vrot.slane %v293, 1
      %v306 = vadd.f32 %v273, %v298
      %v307 = vadd.f32 %v274, %v299
      %v308 = vadd.f32 %v275, %v300
      %v309 = vadd.f32 %v276, %v301
      %s310 = scalar_lea.vmem %s225, 40
      %v311 = vld [vmem:[%s310] sm:$0x3]
      %v312 = vld [vmem:[%s310 + $0x4] sm:$0x3]
      %v313 = vld [vmem:[%s310 + $0x8] sm:$0x3]
      %v314 = vld [vmem:[%s310 + $0xc] sm:$0x3]
      %v315 = vunpack.c.l.bf16 %v311
      %v316 = vunpack.c.l.bf16 %v312
      %v317 = vunpack.c.l.bf16 %v313
      %v318 = vunpack.c.l.bf16 %v314
      %v319 = vld [vmem:[%s1 + $0x3] sm:$0x1]
      %v320 = vlaneseq
      %v321 = vshrl.u32 %v320, 7
      %v322 = vsub.s32 0, %v321
      %v323 = vrot.slane %v319, %v322
      %v324 = vmul.f32 %v315, %v323
      %v325 = vmul.f32 %v316, %v323
      %v326 = vmul.f32 %v317, %v323
      %v327 = vmul.f32 %v318, %v323
      %v328 = vadd.f32 %v306, %v324
      %v329 = vadd.f32 %v307, %v325
      %v330 = vadd.f32 %v308, %v326
      %v331 = vadd.f32 %v309, %v327
      %s332 = scalar_lea.vmem %s225, 60
      %v333 = vld [vmem:[%s332] sm:$0x3]
      %v334 = vld [vmem:[%s332 + $0x4] sm:$0x3]
      %v335 = vld [vmem:[%s332 + $0x8] sm:$0x3]
      %v336 = vld [vmem:[%s332 + $0xc] sm:$0x3]
      %v337 = vunpack.c.l.bf16 %v333
      %v338 = vunpack.c.l.bf16 %v334
      %v339 = vunpack.c.l.bf16 %v335
      %v340 = vunpack.c.l.bf16 %v336
      %v341 = vld [vmem:[%s1 + $0x4] sm:$0x1]
      %v342 = vlaneseq
      %v343 = vshrl.u32 %v342, 7
      %v344 = vsub.s32 0, %v343
      %v345 = vrot.slane %v341, %v344
      %v346 = vmul.f32 %v337, %v345
      %v347 = vmul.f32 %v338, %v345
      %v348 = vmul.f32 %v339, %v345
      %v349 = vmul.f32 %v340, %v345
      %v350 = vadd.f32 %v328, %v346
      %v351 = vadd.f32 %v329, %v347
      %v352 = vadd.f32 %v330, %v348
      %v353 = vadd.f32 %v331, %v349
      %v354 = vld [vmem:[%s310] sm:$0x7]
      %v355 = vld [vmem:[%s310 + $0x4] sm:$0x7]
      %v356 = vld [vmem:[%s310 + $0x8] sm:$0x7]
      %v357 = vld [vmem:[%s310 + $0xc] sm:$0x7]
      %v358 = vunpack.c.l.bf16 %v354
      %v359 = vunpack.c.l.bf16 %v355
      %v360 = vunpack.c.l.bf16 %v356
      %v361 = vunpack.c.l.bf16 %v357
      %v362 = vld [vmem:[%s1 + $0x5] sm:$0x1]
      %v363 = vlaneseq
      %v364 = vshrl.u32 %v363, 7
      %v365 = vsub.s32 0, %v364
      %v366 = vrot.slane %v362, %v365
      %v367 = vmul.f32 %v358, %v366
      %v368 = vmul.f32 %v359, %v366
      %v369 = vmul.f32 %v360, %v366
      %v370 = vmul.f32 %v361, %v366
      %v375 = vrot.slane %v367, 1
      %v376 = vrot.slane %v368, 1
      %v377 = vrot.slane %v369, 1
      %v378 = vrot.slane %v370, 1
      %v383 = vadd.f32 %v350, %v375
      %v384 = vadd.f32 %v351, %v376
      %v385 = vadd.f32 %v352, %v377
      %v386 = vadd.f32 %v353, %v378
      %s387 = scalar_lea.vmem %s225, 4
      %v388 = vld [vmem:[%s387] sm:$0x3]
      %v389 = vld [vmem:[%s387 + $0x4] sm:$0x3]
      %v390 = vld [vmem:[%s387 + $0x8] sm:$0x3]
      %v391 = vld [vmem:[%s387 + $0xc] sm:$0x3]
      %v392 = vunpack.c.l.bf16 %v388
      %v393 = vunpack.c.l.bf16 %v389
      %v394 = vunpack.c.l.bf16 %v390
      %v395 = vunpack.c.l.bf16 %v391
      %v396 = vld [vmem:[%s1 + $0x6] sm:$0x1]
      %v397 = vlaneseq
      %v398 = vshrl.u32 %v397, 7
      %v399 = vsub.s32 0, %v398
      %v400 = vrot.slane %v396, %v399
      %v401 = vmul.f32 %v392, %v400
      %v402 = vmul.f32 %v393, %v400
      %v403 = vmul.f32 %v394, %v400
      %v404 = vmul.f32 %v395, %v400
      %v405 = vadd.f32 %v383, %v401
      %v406 = vadd.f32 %v384, %v402
      %v407 = vadd.f32 %v385, %v403
      %v408 = vadd.f32 %v386, %v404
      %s409 = scalar_lea.vmem %s225, 24
      %v410 = vld [vmem:[%s409] sm:$0x3]
      %v411 = vld [vmem:[%s409 + $0x4] sm:$0x3]
      %v412 = vld [vmem:[%s409 + $0x8] sm:$0x3]
      %v413 = vld [vmem:[%s409 + $0xc] sm:$0x3]
      %v414 = vunpack.c.l.bf16 %v410
      %v415 = vunpack.c.l.bf16 %v411
      %v416 = vunpack.c.l.bf16 %v412
      %v417 = vunpack.c.l.bf16 %v413
      %v418 = vld [vmem:[%s1 + $0x7] sm:$0x1]
      %v419 = vlaneseq
      %v420 = vshrl.u32 %v419, 7
      %v421 = vsub.s32 0, %v420
      %v422 = vrot.slane %v418, %v421
      %v423 = vmul.f32 %v414, %v422
      %v424 = vmul.f32 %v415, %v422
      %v425 = vmul.f32 %v416, %v422
      %v426 = vmul.f32 %v417, %v422
      %v427 = vadd.f32 %v405, %v423
      %v428 = vadd.f32 %v406, %v424
      %v429 = vadd.f32 %v407, %v425
      %v430 = vadd.f32 %v408, %v426
      %v431 = vld [vmem:[%s387] sm:$0x7]
      %v432 = vld [vmem:[%s387 + $0x4] sm:$0x7]
      %v433 = vld [vmem:[%s387 + $0x8] sm:$0x7]
      %v434 = vld [vmem:[%s387 + $0xc] sm:$0x7]
      %v435 = vunpack.c.l.bf16 %v431
      %v436 = vunpack.c.l.bf16 %v432
      %v437 = vunpack.c.l.bf16 %v433
      %v438 = vunpack.c.l.bf16 %v434
      %v439 = vld [vmem:[%s1 + $0x8] sm:$0x1]
      %v440 = vlaneseq
      %v441 = vshrl.u32 %v440, 7
      %v442 = vsub.s32 0, %v441
      %v443 = vrot.slane %v439, %v442
      %v444 = vmul.f32 %v435, %v443
      %v445 = vmul.f32 %v436, %v443
      %v446 = vmul.f32 %v437, %v443
      %v447 = vmul.f32 %v438, %v443
      %v452 = vrot.slane %v444, 1
      %v453 = vrot.slane %v445, 1
      %v454 = vrot.slane %v446, 1
      %v455 = vrot.slane %v447, 1
      %v460 = vadd.f32 %v427, %v452
      %v461 = vadd.f32 %v428, %v453
      %v462 = vadd.f32 %v429, %v454
      %v463 = vadd.f32 %v430, %v455
      %v464 = vld [vmem:[%s2] sm:$0x1]
      %v466 = vlaneseq
      %v467 = vshrl.u32 %v466, 7
      %v468 = vsub.s32 0, %v467
      %v469 = vrot.slane %v464, %v468
      %v471 = vmul.f32 %v460, %v469
      %v472 = vmul.f32 %v461, %v469
      %v473 = vmul.f32 %v462, %v469
      %v474 = vmul.f32 %v463, %v469
      %v475 = vld [vmem:[%s3] sm:$0x1]
      %v477 = vlaneseq
      %v478 = vshrl.u32 %v477, 7
      %v479 = vsub.s32 0, %v478
      %v480 = vrot.slane %v475, %v479
      %v482 = vadd.f32 %v471, %v480
      %v483 = vadd.f32 %v472, %v480
      %v484 = vadd.f32 %v473, %v480
      %v485 = vadd.f32 %v474, %v480
      %v486 = vxor.u32 %v482, 2147483648
      %v487 = vxor.u32 %v483, 2147483648
      %v488 = vxor.u32 %v484, 2147483648
      %v489 = vxor.u32 %v485, 2147483648
      %v490 = vmul.f32 %v486, 1.442695
      %v491 = vpow.pop %v490
      %v492 = vmul.f32 %v487, 1.442695
      %v493 = vpow.pop %v492
      %v494 = vmul.f32 %v488, 1.442695
      %v495 = vpow.pop %v494
      %v496 = vmul.f32 %v489, 1.442695
      %v497 = vpow.pop %v496
      %v498 = vadd.f32 %v491, 1.0
      %v499 = vadd.f32 %v493, 1.0
      %v500 = vadd.f32 %v495, 1.0
      %v501 = vadd.f32 %v497, 1.0
      %v502 = vrcp.pop %v498
      %v503 = vmul.f32 1.0, %v502
      %v504 = vrcp.pop %v499
      %v505 = vmul.f32 1.0, %v504
      %v506 = vrcp.pop %v500
      %v507 = vmul.f32 1.0, %v506
      %v508 = vrcp.pop %v501
      %v509 = vmul.f32 1.0, %v508
      %v510 = vmul.f32 %v482, %v503
      %v511 = vmul.f32 %v483, %v505
      %v512 = vmul.f32 %v484, %v507
      %v513 = vmul.f32 %v485, %v509
      %v514 = vpack.c.bf16 %v510, %v510
      %v515 = vpack.c.bf16 %v511, %v511
      %v516 = vpack.c.bf16 %v512, %v512
      %v517 = vpack.c.bf16 %v513, %v513
      %518 = vst [vmem:[%s230] sm:$0x3] %v514
      %519 = vst [vmem:[%s230 + $0x2] sm:$0x3] %v515
      %520 = vst [vmem:[%s230 + $0x4] sm:$0x3] %v516
      %521 = vst [vmem:[%s230 + $0x6] sm:$0x3] %v517
      %vm522 = vcmask 1043456
      %v523 = vsel %vm522, %v510, 0.0
      %v524 = vsel %vm522, %v511, 0.0
      %v525 = vadd.f32 %v523, %v524
      %v526 = vsel %vm522, %v512, 0.0
      %v527 = vadd.f32 %v525, %v526
      %v528 = vsel %vm522, %v513, 0.0
      %v529 = vadd.f32 %v527, %v528
      %v530 = vrot.slane %v529, 4
      %v531 = vadd.f32 %v529, %v530
      %v532 = vrot.slane %v531, 2
      %v533 = vadd.f32 %v531, %v532
      %v534 = vrot.slane %v533, 1
      %v535 = vadd.f32 %v533, %v534
      %v536 = vmul.f32 %v535, 0.0625
      %537 = vst [vmem:[%s233] sm:$0x1] %v536
      %p538 = scmp.lt.s32.totalorder %s17, 1
      %s539 = scalar_select %p538, %s17, 1
      %s540 = smul.addr %s539, 4
      %s541 = smul.addr %s540, 2
      %s542 = scalar_lea.vmem %s4, %s541
      %p543 = scmp.lt.s32.totalorder %s17, 1
      %s544 = scalar_select %p543, %s17, 1
      %s545 = scalar_lea.vmem %s5, %s544
      // Predicated region
      $region37: #{_lambda_.19} parent=35 // pred_check
        %p546 = pneg %p124
      $region38: #{_lambda_.19} parent=35 // pred_check_branch
        %548 = sbr.rel (%p546) target = $region40
      $region39: #{_lambda_.19} parent=35 // pred_region
        _
      $region40: #{_lambda_.19} parent=35 // pred_fallthru
        _
      // Predicated region
      $region41: #{_lambda_.19} parent=35 // pred_check
        %p549 = pneg %p150
      $region42: #{_lambda_.19} parent=35 // pred_check_branch
        %551 = sbr.rel (%p549) target = $region44
      $region43: #{_lambda_.19} parent=35 // pred_region
        _
      $region44: #{_lambda_.19} parent=35 // pred_fallthru
        _
    $region36: #{_lambda_.19} parent=5 // pred_fallthru
      _
    %p552 = scmp.le.s32.totalorder 2, %s12
    // Predicated region
    $region45: #{_lambda_.19} parent=5 // pred_check
      %p553 = pneg %p552
    $region46: #{_lambda_.19} parent=5 // pred_check_branch
      %555 = sbr.rel (%p553) target = $region48
    $region47: #{_lambda_.19} parent=5 // pred_region
      %s556 = ssub.s32 %s12, 2
      // Predicated region
      $region49: #{_lambda_.19} parent=47 // pred_check
        %p557 = pneg %p130
      $region50: #{_lambda_.19} parent=47 // pred_check_branch
        %559 = sbr.rel (%p557) target = $region52
      $region51: #{_lambda_.19} parent=47 // pred_region
        %p560 = scmp.lt.s32.totalorder %s18, 1
        %s561 = scalar_select %p560, %s18, 1
        %s562 = smul.addr %s561, 4
        %s563 = smul.addr %s562, 2
        %s564 = scalar_lea.vmem %s4, %s563
      $region52: #{_lambda_.19} parent=47 // pred_fallthru
        _
      // Predicated region
      $region53: #{_lambda_.19} parent=47 // pred_check
        %p565 = pneg %p156
      $region54: #{_lambda_.19} parent=47 // pred_check_branch
        %567 = sbr.rel (%p565) target = $region56
      $region55: #{_lambda_.19} parent=47 // pred_region
        %p568 = scmp.lt.s32.totalorder %s18, 1
        %s569 = scalar_select %p568, %s18, 1
        %s570 = scalar_lea.vmem %s5, %s569
      $region56: #{_lambda_.19} parent=47 // pred_fallthru
        _
    $region48: #{_lambda_.19} parent=5 // pred_fallthru
      _
  $region6: #{_lambda_.19} parent=0 // loop_footer
    %s16 = sadd.s32 1, %s12
  $region7: #{_lambda_.19} parent=0 // loop_footer_branch
    %11 = sbr.rel target = $region3
  $region8: #{_lambda_.19} parent=0 // loop_exit
    _

// kernel: _lambda_.22
$region0: #{_lambda_.22}
  #allocation0 [shape = 'u32[]', space=smem, size = 0x4, offset = 0x4, fixed_abs, tag = 'smem constant byte address 0x4 - core index']
  #allocation1 [shape = 'u32[144,128]{1,0:T(1,128)}', space=vmem, size = 0x12000, scoped, tag = 'internal scratch']
  %s0 = inlined_call_operand.vmem [shape: bf16[2,16,128], index: 0, kind: input, shape index: {}]
  %s1 = inlined_call_operand.vmem [shape: bf16[128,128], index: 1, kind: input, shape index: {}]
  %s2 = inlined_call_operand.vmem [shape: f32[1,128], index: 2, kind: input, shape index: {}]
  %s3 = inlined_call_operand.vmem [shape: f32[1,128], index: 3, kind: input, shape index: {}]
  %s4 = inlined_call_operand.vmem [shape: bf16[2,16,128], index: 4, kind: output, shape index: {}]
  %s5 = sld [smem:[#allocation0]]
  $region49: #{_lambda_.22} parent=0
    _
  %s7 = ssub.s32 1, %s5
  %s8 = scalar_select 0, %s7, %s5
  loop: start=0, step=1, limit=4
  $region2: #{_lambda_.22} parent=0 // loop_pre_header
    _
  $region3: #{_lambda_.22} parent=0 // loop_header
    %s10 = sphi 0, %s14
    %p11 = scmp.ge.s32.totalorder %s10, 4
    %s17 = sphi 0, %s29
    %s18 = sphi 0, %s25
    %s19 = sphi 0, %s17
    %s20 = sphi 0, %s18
    %s21 = sphi 0, %s19
    %s22 = sphi 0, %s20
    %s34 = sphi 0, %s36
    %s37 = sphi 0, %s34
    %s38 = sphi 0, %s37
    %s54 = sphi 0, %s38
    %s58 = sphi 0, %s58
    %s60 = sphi 0, %s58
    %s61 = sphi 0, %s60
    %s75 = sphi 0, %s61
    %s79 = sphi 0, %s79
    %s81 = sphi 0, %s79
    %s82 = sphi 0, %s81
    %s96 = sphi 0, %s82
    %s100 = sphi 0, %s100
    %s102 = sphi 0, %s100
    %s103 = sphi 0, %s102
    %s117 = sphi 0, %s103
    %s125 = sphi 0, %s127
    %s128 = sphi 0, %s125
    %s129 = sphi 0, %s128
    %s145 = sphi 0, %s129
  $region4: #{_lambda_.22} parent=0 // loop_header_branch
    %13 = sbr.rel (%p11) target = $region8
  $region5: #{_lambda_.22} parent=0 // loop_body
    %s15 = ssub.s32 %s10, 1
    %s16 = ssub.s32 %s10, 2
    %s23 = sadd.s32 1, %s18
    %p24 = scmp.ge.s32.totalorder %s23, 1
    %s25 = scalar_select %p24, 0, %s23
    %s26 = sadd.s32 1, %s17
    %s27 = scalar_select %p24, %s26, %s17
    %p28 = scmp.ge.s32.totalorder %s27, 2
    %s29 = scalar_select %p28, 0, %s27
    %s30 = ssub.s32 %s17, %s29
    %s31 = ssub.s32 %s18, %s25
    %s32 = sor.u32 %s30, %s31
    %p33 = scmp.eq.s32.totalorder %s32, 0
    %s35 = sadd.s32 %s34, 1
    %s36 = scalar_select %p33, %s34, %s35
    %p39 = pneg %p33
    %p40 = scmp.eq.s32.totalorder %s10, 1
    %p41 = por %p39, %p40
    %p42 = scmp.ne.s32.totalorder %s34, %s37
    %p43 = scmp.eq.s32.totalorder %s10, 0
    %p44 = por %p42, %p43
    %p45 = scmp.ne.s32.totalorder %s34, %s37
    %p46 = scmp.eq.s32.totalorder %s15, 1
    %p47 = por %p45, %p46
    %p48 = scmp.ne.s32.totalorder %s37, %s38
    %p49 = scmp.eq.s32.totalorder %s15, 0
    %p50 = por %p48, %p49
    %p51 = scmp.ne.s32.totalorder %s37, %s38
    %p52 = scmp.eq.s32.totalorder %s16, 1
    %p53 = por %p51, %p52
    %p55 = scmp.ne.s32.totalorder %s38, %s54
    %p56 = scmp.eq.s32.totalorder %s16, 0
    %p57 = por %p55, %p56
    %s59 = sadd.s32 %s58, 1
    %p62 = scmp.eq.s32.totalorder %s10, 1
    %p63 = scmp.ne.s32.totalorder %s58, %s60
    %p64 = scmp.eq.s32.totalorder %s10, 0
    %p65 = por %p63, %p64
    %p66 = scmp.ne.s32.totalorder %s58, %s60
    %p67 = scmp.eq.s32.totalorder %s15, 1
    %p68 = por %p66, %p67
    %p69 = scmp.ne.s32.totalorder %s60, %s61
    %p70 = scmp.eq.s32.totalorder %s15, 0
    %p71 = por %p69, %p70
    %p72 = scmp.ne.s32.totalorder %s60, %s61
    %p73 = scmp.eq.s32.totalorder %s16, 1
    %p74 = por %p72, %p73
    %p76 = scmp.ne.s32.totalorder %s61, %s75
    %p77 = scmp.eq.s32.totalorder %s16, 0
    %p78 = por %p76, %p77
    %s80 = sadd.s32 %s79, 1
    %p83 = scmp.eq.s32.totalorder %s10, 1
    %p84 = scmp.ne.s32.totalorder %s79, %s81
    %p85 = scmp.eq.s32.totalorder %s10, 0
    %p86 = por %p84, %p85
    %p87 = scmp.ne.s32.totalorder %s79, %s81
    %p88 = scmp.eq.s32.totalorder %s15, 1
    %p89 = por %p87, %p88
    %p90 = scmp.ne.s32.totalorder %s81, %s82
    %p91 = scmp.eq.s32.totalorder %s15, 0
    %p92 = por %p90, %p91
    %p93 = scmp.ne.s32.totalorder %s81, %s82
    %p94 = scmp.eq.s32.totalorder %s16, 1
    %p95 = por %p93, %p94
    %p97 = scmp.ne.s32.totalorder %s82, %s96
    %p98 = scmp.eq.s32.totalorder %s16, 0
    %p99 = por %p97, %p98
    %s101 = sadd.s32 %s100, 1
    %p104 = scmp.eq.s32.totalorder %s10, 1
    %p105 = scmp.ne.s32.totalorder %s100, %s102
    %p106 = scmp.eq.s32.totalorder %s10, 0
    %p107 = por %p105, %p106
    %p108 = scmp.ne.s32.totalorder %s100, %s102
    %p109 = scmp.eq.s32.totalorder %s15, 1
    %p110 = por %p108, %p109
    %p111 = scmp.ne.s32.totalorder %s102, %s103
    %p112 = scmp.eq.s32.totalorder %s15, 0
    %p113 = por %p111, %p112
    %p114 = scmp.ne.s32.totalorder %s102, %s103
    %p115 = scmp.eq.s32.totalorder %s16, 1
    %p116 = por %p114, %p115
    %p118 = scmp.ne.s32.totalorder %s103, %s117
    %p119 = scmp.eq.s32.totalorder %s16, 0
    %p120 = por %p118, %p119
    %s121 = ssub.s32 %s17, %s29
    %s122 = ssub.s32 %s18, %s25
    %s123 = sor.u32 %s121, %s122
    %p124 = scmp.eq.s32.totalorder %s123, 0
    %s126 = sadd.s32 %s125, 1
    %s127 = scalar_select %p124, %s125, %s126
    %p130 = pneg %p124
    %p131 = scmp.eq.s32.totalorder %s10, 1
    %p132 = por %p130, %p131
    %p133 = scmp.ne.s32.totalorder %s125, %s128
    %p134 = scmp.eq.s32.totalorder %s10, 0
    %p135 = por %p133, %p134
    %p136 = scmp.ne.s32.totalorder %s125, %s128
    %p137 = scmp.eq.s32.totalorder %s15, 1
    %p138 = por %p136, %p137
    %p139 = scmp.ne.s32.totalorder %s128, %s129
    %p140 = scmp.eq.s32.totalorder %s15, 0
    %p141 = por %p139, %p140
    %p142 = scmp.ne.s32.totalorder %s128, %s129
    %p143 = scmp.eq.s32.totalorder %s16, 1
    %p144 = por %p142, %p143
    %p146 = scmp.ne.s32.totalorder %s129, %s145
    %p147 = scmp.eq.s32.totalorder %s16, 0
    %p148 = por %p146, %p147
    %p149 = scmp.le.s32.totalorder 1, %s10
    %p150 = scmp.lt.s32.totalorder %s10, 3
    %p151 = pnand %p149, %p150
    %p152 = pneg %p151
    // Predicated region
    $region9: #{_lambda_.22} parent=5 // pred_check
      _
    $region10: #{_lambda_.22} parent=5 // pred_check_branch
      %154 = sbr.rel (%p151) target = $region12
    $region11: #{_lambda_.22} parent=5 // pred_region
      %s155 = ssub.s32 %s10, 1
      // Predicated region
      $region13: #{_lambda_.22} parent=11 // pred_check
        %p156 = pneg %p71
      $region14: #{_lambda_.22} parent=11 // pred_check_branch
        %158 = sbr.rel (%p156) target = $region16
      $region15: #{_lambda_.22} parent=11 // pred_region
        _
      $region16: #{_lambda_.22} parent=11 // pred_fallthru
        _
      // Predicated region
      $region17: #{_lambda_.22} parent=11 // pred_check
        %p159 = pneg %p92
      $region18: #{_lambda_.22} parent=11 // pred_check_branch
        %161 = sbr.rel (%p159) target = $region20
      $region19: #{_lambda_.22} parent=11 // pred_region
        _
      $region20: #{_lambda_.22} parent=11 // pred_fallthru
        _
      // Predicated region
      $region21: #{_lambda_.22} parent=11 // pred_check
        %p162 = pneg %p113
      $region22: #{_lambda_.22} parent=11 // pred_check_branch
        %164 = sbr.rel (%p162) target = $region24
      $region23: #{_lambda_.22} parent=11 // pred_region
        _
      $region24: #{_lambda_.22} parent=11 // pred_fallthru
        _
    $region12: #{_lambda_.22} parent=5 // pred_fallthru
      _
    %p165 = scmp.lt.s32.totalorder %s10, 2
    // Predicated region
    $region25: #{_lambda_.22} parent=5 // pred_check
      %p166 = pneg %p165
    $region26: #{_lambda_.22} parent=5 // pred_check_branch
      %168 = sbr.rel (%p166) target = $region28
    $region27: #{_lambda_.22} parent=5 // pred_region
      // Predicated region
      $region29: #{_lambda_.22} parent=27 // pred_check
        %p169 = pneg %p44
      $region30: #{_lambda_.22} parent=27 // pred_check_branch
        %171 = sbr.rel (%p169) target = $region32
      $region31: #{_lambda_.22} parent=27 // pred_region
        %s172 = smul.u32 2, %s18
        %p173 = scmp.lt.s32.totalorder %s17, 1
        %s174 = scalar_select %p173, %s17, 1
        %p175 = scmp.lt.s32.totalorder %s172, 1
        %s176 = scalar_select %p175, %s172, 1
        %s177 = smul.addr %s174, 2
        %s178 = sadd.s32 %s176, %s177
        %s179 = smul.addr %s178, 4
        %s180 = scalar_lea.vmem %s0, %s179
        %s181 = smul.u32 2, %s18
      $region32: #{_lambda_.22} parent=27 // pred_fallthru
        _
    $region28: #{_lambda_.22} parent=5 // pred_fallthru
      _
    %p182 = scmp.le.s32.totalorder 1, %s10
    %p183 = scmp.lt.s32.totalorder %s10, 3
    %p184 = pnand %p182, %p183
    %p185 = pneg %p184
    // Predicated region
    $region33: #{_lambda_.22} parent=5 // pred_check
      _
    $region34: #{_lambda_.22} parent=5 // pred_check_branch
      %187 = sbr.rel (%p184) target = $region36
    $region35: #{_lambda_.22} parent=5 // pred_region
      %s188 = ssub.s32 %s10, 1
      %s189 = smul.u32 2, %s20
      %p190 = scmp.lt.s32.totalorder %s19, 1
      %s191 = scalar_select %p190, %s19, 1
      %p192 = scmp.lt.s32.totalorder %s189, 1
      %s193 = scalar_select %p192, %s189, 1
      %s194 = smul.addr %s191, 2
      %s195 = sadd.s32 %s193, %s194
      %s196 = smul.addr %s195, 4
      %s197 = scalar_lea.vmem %s0, %s196
      %p198 = pneg %p50
      %p199 = pneg %p47
      %p200 = pneg %p71
      %p201 = pneg %p68
      %p202 = pneg %p92
      %p203 = pneg %p89
      %p204 = pneg %p113
      %p205 = pneg %p110
      %p206 = pneg %p141
      %p207 = pneg %p138
      %s208 = smul.u32 2, %s20
      %p209 = scmp.lt.s32.totalorder %s19, 1
      %s210 = scalar_select %p209, %s19, 1
      %p211 = scmp.lt.s32.totalorder %s208, 1
      %s212 = scalar_select %p211, %s208, 1
      %s213 = smul.addr %s210, 2
      %s214 = sadd.s32 %s212, %s213
      %s215 = smul.addr %s214, 4
      %s216 = scalar_lea.vmem %s4, %s215
      %s217 = smul.u32 2, %s20
      %p218 = scmp.lt.s32.totalorder %s19, 1
      %s219 = scalar_select %p218, %s19, 1
      %p220 = scmp.lt.s32.totalorder %s217, 1
      %s221 = scalar_select %p220, %s217, 1
      %s222 = smul.addr %s219, 2
      %s223 = sadd.s32 %s221, %s222
      %s224 = smul.addr %s223, 4
      %s225 = scalar_lea.vmem %s0, %s224
      %s226 = smul.u32 2, %s20
      %s227 = smul.u32 2, %s20
      %p228 = scmp.lt.s32.totalorder %s19, 1
      %s229 = scalar_select %p228, %s19, 1
      %p230 = scmp.lt.s32.totalorder %s227, 1
      %s231 = scalar_select %p230, %s227, 1
      %s232 = smul.addr %s229, 2
      %s233 = sadd.s32 %s231, %s232
      %s234 = smul.addr %s233, 4
      %s235 = scalar_lea.vmem %s4, %s234
      %s236 = smul.u32 2, %s20
      %v238 = vld [vmem:[%s225] sm:$0xf]
      %v239 = vld [vmem:[%s225 + $0x4] sm:$0xf]
      %v240 = vld [vmem:[%s1] sm:$0xf]
      %v241 = vld [vmem:[%s1 + $0x4] sm:$0xf]
      %v242 = vld [vmem:[%s1 + $0x8] sm:$0xf]
      %v243 = vld [vmem:[%s1 + $0xc] sm:$0xf]
      %v244 = vld [vmem:[%s1 + $0x10] sm:$0xf]
      %v245 = vld [vmem:[%s1 + $0x14] sm:$0xf]
      %v246 = vld [vmem:[%s1 + $0x18] sm:$0xf]
      %v247 = vld [vmem:[%s1 + $0x1c] sm:$0xf]
      %v248 = vld [vmem:[%s1 + $0x20] sm:$0xf]
      %v249 = vld [vmem:[%s1 + $0x24] sm:$0xf]
      %v250 = vld [vmem:[%s1 + $0x28] sm:$0xf]
      %v251 = vld [vmem:[%s1 + $0x2c] sm:$0xf]
      %v252 = vld [vmem:[%s1 + $0x30] sm:$0xf]
      %v253 = vld [vmem:[%s1 + $0x34] sm:$0xf]
      %v254 = vld [vmem:[%s1 + $0x38] sm:$0xf]
      %v255 = vld [vmem:[%s1 + $0x3c] sm:$0xf]
      %v258 = vunpack.c.l.b16 %v238
      %v259 = vunpack.c.l.b16 %v239
      %v260 = vpack.c.b16 %v259, %v258
      %v278 = vunpack.c.l.b16 %v240
      %v279 = vunpack.c.l.b16 %v241
      %v280 = vunpack.c.l.b16 %v242
      %v281 = vunpack.c.l.b16 %v243
      %v282 = vunpack.c.l.b16 %v244
      %v283 = vunpack.c.l.b16 %v245
      %v284 = vunpack.c.l.b16 %v246
      %v285 = vunpack.c.l.b16 %v247
      %v286 = vunpack.c.l.b16 %v248
      %v287 = vunpack.c.l.b16 %v249
      %v288 = vunpack.c.l.b16 %v250
      %v289 = vunpack.c.l.b16 %v251
      %v290 = vunpack.c.l.b16 %v252
      %v291 = vunpack.c.l.b16 %v253
      %v292 = vunpack.c.l.b16 %v254
      %v293 = vunpack.c.l.b16 %v255
      %v294 = vpack.c.b16 %v279, %v278
      %v295 = vpack.c.b16 %v281, %v280
      %v296 = vpack.c.b16 %v283, %v282
      %v297 = vpack.c.b16 %v285, %v284
      %v298 = vpack.c.b16 %v287, %v286
      %v299 = vpack.c.b16 %v289, %v288
      %v300 = vpack.c.b16 %v291, %v290
      %v301 = vpack.c.b16 %v293, %v292
      %310 = vmatprep.subr.bf16.mxu0 0
      %311 = vmatpush1.bf16.msra.mxu0 %v294
      %312 = vmatprep.subr.bf16.mxu0 0
      %313 = vmatpush1.bf16.msra.mxu0 %v295
      %314 = vmatprep.subr.bf16.mxu0 0
      %315 = vmatpush1.bf16.msra.mxu0 %v296
      %316 = vmatprep.subr.bf16.mxu0 0
      %317 = vmatpush1.bf16.msra.mxu0 %v297
      %318 = vmatprep.subr.bf16.mxu0 0
      %319 = vmatpush1.bf16.msra.mxu0 %v298
      %320 = vmatprep.subr.bf16.mxu0 0
      %321 = vmatpush1.bf16.msra.mxu0 %v299
      %322 = vmatprep.subr.bf16.mxu0 0
      %323 = vmatpush1.bf16.msra.mxu0 %v300
      %324 = vmatprep.subr.bf16.mxu0 0
      %325 = vmatpush1.bf16.msra.mxu0 %v301
      %326 = vmatprep.subr.bf16.mxu0 0
      %327 = vmatpush1.bf16.msra.mxu0 0
      %328 = vmatprep.subr.bf16.mxu0 0
      %329 = vmatpush1.bf16.msra.mxu0 0
      %330 = vmatprep.subr.bf16.mxu0 0
      %331 = vmatpush1.bf16.msra.mxu0 0
      %332 = vmatprep.subr.bf16.mxu0 0
      %333 = vmatpush1.bf16.msra.mxu0 0
      %334 = vmatprep.subr.bf16.mxu0 0
      %335 = vmatpush1.bf16.msra.mxu0 0
      %336 = vmatprep.subr.bf16.mxu0 0
      %337 = vmatpush1.bf16.msra.mxu0 0
      %338 = vmatprep.subr.bf16.mxu0 0
      %339 = vmatpush1.bf16.msra.mxu0 0
      %340 = vmatprep.subr.bf16.mxu0 0
      %341 = vmatpush1.bf16.msra.mxu0 0
      %342 = vmatprep.mubr.bf16.mxu0 0
      %343 = vmatmul.mubr.bf16.gmra.mrb[0].mxu0 %v260
      %v344 = vpop.f32.mrb[0].mxu0
      %v345 = vadd.f32 0.0, %v344
      %v346 = vpop.f32.mrb[0].mxu0
      %v347 = vpop.f32.mrb[0].mxu0
      %v348 = vadd.f32 0.0, %v347
      %v349 = vpop.f32.mrb[0].mxu0
      %350 = vdwg.mxu0
      %v351 = vld [vmem:[%s2] sm:$0x1]
      %v353 = vlaneseq
      %v354 = vshrl.u32 %v353, 7
      %v355 = vsub.s32 0, %v354
      %v356 = vrot.slane %v351, %v355
      %v358 = vmul.f32 %v345, %v356
      %v359 = vmul.f32 %v348, %v356
      %v360 = vld [vmem:[%s3] sm:$0x1]
      %v362 = vlaneseq
      %v363 = vshrl.u32 %v362, 7
      %v364 = vsub.s32 0, %v363
      %v365 = vrot.slane %v360, %v364
      %v367 = vadd.f32 %v358, %v365
      %v368 = vadd.f32 %v359, %v365
      %v369 = vxor.u32 %v367, 2147483648
      %v370 = vxor.u32 %v368, 2147483648
      %v371 = vmul.f32 %v369, 1.442695
      %v372 = vpow.pop %v371
      %v373 = vmul.f32 %v370, 1.442695
      %v374 = vpow.pop %v373
      %v375 = vadd.f32 %v372, 1.0
      %v376 = vadd.f32 %v374, 1.0
      %v377 = vrcp.pop %v375
      %v378 = vmul.f32 1.0, %v377
      %v379 = vrcp.pop %v376
      %v380 = vmul.f32 1.0, %v379
      %v381 = vmul.f32 %v367, %v378
      %v382 = vmul.f32 %v368, %v380
      %v383 = vpack.c.bf16 %v382, %v381
      %v385 = vunpack.c.l.b16 %v383
      %v386 = vunpack.c.h.b16 %v383
      %v387 = vpack.c.b16 %v385, %v385
      %v388 = vpack.c.b16 %v386, %v386
      %391 = vst [vmem:[%s235] sm:$0xf] %v387
      %392 = vst [vmem:[%s235 + $0x4] sm:$0xf] %v388
      %s393 = smul.u32 2, %s20
      %p394 = scmp.lt.s32.totalorder %s19, 1
      %s395 = scalar_select %p394, %s19, 1
      %p396 = scmp.lt.s32.totalorder %s393, 1
      %s397 = scalar_select %p396, %s393, 1
      %s398 = smul.addr %s395, 2
      %s399 = sadd.s32 %s397, %s398
      %s400 = smul.addr %s399, 4
      %s401 = scalar_lea.vmem %s4, %s400
      // Predicated region
      $region37: #{_lambda_.22} parent=35 // pred_check
        %p402 = pneg %p138
      $region38: #{_lambda_.22} parent=35 // pred_check_branch
        %404 = sbr.rel (%p402) target = $region40
      $region39: #{_lambda_.22} parent=35 // pred_region
        %s405 = smul.u32 2, %s20
      $region40: #{_lambda_.22} parent=35 // pred_fallthru
        _
    $region36: #{_lambda_.22} parent=5 // pred_fallthru
      _
    %p406 = scmp.le.s32.totalorder 2, %s10
    // Predicated region
    $region41: #{_lambda_.22} parent=5 // pred_check
      %p407 = pneg %p406
    $region42: #{_lambda_.22} parent=5 // pred_check_branch
      %409 = sbr.rel (%p407) target = $region44
    $region43: #{_lambda_.22} parent=5 // pred_region
      %s410 = ssub.s32 %s10, 2
      // Predicated region
      $region45: #{_lambda_.22} parent=43 // pred_check
        %p411 = pneg %p144
      $region46: #{_lambda_.22} parent=43 // pred_check_branch
        %413 = sbr.rel (%p411) target = $region48
      $region47: #{_lambda_.22} parent=43 // pred_region
        %s414 = smul.u32 2, %s22
        %p415 = scmp.lt.s32.totalorder %s21, 1
        %s416 = scalar_select %p415, %s21, 1
        %p417 = scmp.lt.s32.totalorder %s414, 1
        %s418 = scalar_select %p417, %s414, 1
        %s419 = smul.addr %s416, 2
        %s420 = sadd.s32 %s418, %s419
        %s421 = smul.addr %s420, 4
        %s422 = scalar_lea.vmem %s4, %s421
      $region48: #{_lambda_.22} parent=43 // pred_fallthru
        _
    $region44: #{_lambda_.22} parent=5 // pred_fallthru
      _
  $region6: #{_lambda_.22} parent=0 // loop_footer
    %s14 = sadd.s32 1, %s10
  $region7: #{_lambda_.22} parent=0 // loop_footer_branch
    %9 = sbr.rel target = $region3
  $region8: #{_lambda_.22} parent=0 // loop_exit
    _

// kernel: _lambda_.23
$region0: #{_lambda_.23}
  #allocation0 [shape = 'u32[]', space=smem, size = 0x4, offset = 0x4, fixed_abs, tag = 'smem constant byte address 0x4 - core index']
  #allocation1 [shape = 'u32[144,128]{1,0:T(1,128)}', space=vmem, size = 0x12000, scoped, tag = 'internal scratch']
  %s0 = inlined_call_operand.vmem [shape: bf16[2,6,6,128], index: 0, kind: input, shape index: {}]
  %s1 = inlined_call_operand.vmem [shape: f32[9,128], index: 1, kind: input, shape index: {}]
  %s2 = inlined_call_operand.vmem [shape: f32[1,128], index: 2, kind: input, shape index: {}]
  %s3 = inlined_call_operand.vmem [shape: f32[1,128], index: 3, kind: input, shape index: {}]
  %s4 = inlined_call_operand.vmem [shape: bf16[2,4,4,128], index: 4, kind: output, shape index: {0}]
  %s5 = inlined_call_operand.vmem [shape: f32[2,1,128], index: 5, kind: output, shape index: {1}]
  %6 = xla_tuple %s4, %s5
  %s7 = sld [smem:[#allocation0]]
  $region57: #{_lambda_.23} parent=0
    _
  %s9 = ssub.s32 1, %s7
  %s10 = scalar_select 0, %s9, %s7
  loop: start=0, step=1, limit=4
  $region2: #{_lambda_.23} parent=0 // loop_pre_header
    _
  $region3: #{_lambda_.23} parent=0 // loop_header
    %s12 = sphi 0, %s16
    %p13 = scmp.ge.s32.totalorder %s12, 4
    %s22 = sphi 0, %s24
    %s25 = sphi 0, %s22
    %s26 = sphi 0, %s25
    %s42 = sphi 0, %s26
    %s46 = sphi 0, %s46
    %s48 = sphi 0, %s46
    %s49 = sphi 0, %s48
    %s63 = sphi 0, %s49
    %s67 = sphi 0, %s67
    %s69 = sphi 0, %s67
    %s70 = sphi 0, %s69
    %s84 = sphi 0, %s70
    %s88 = sphi 0, %s88
    %s90 = sphi 0, %s88
    %s91 = sphi 0, %s90
    %s105 = sphi 0, %s91
    %s111 = sphi 0, %s113
    %s114 = sphi 0, %s111
    %s115 = sphi 0, %s114
    %s131 = sphi 0, %s115
    %s137 = sphi 0, %s139
    %s140 = sphi 0, %s137
    %s141 = sphi 0, %s140
    %s157 = sphi 0, %s141
  $region4: #{_lambda_.23} parent=0 // loop_header_branch
    %15 = sbr.rel (%p13) target = $region8
  $region5: #{_lambda_.23} parent=0 // loop_body
    %s17 = ssub.s32 %s12, 1
    %s18 = ssub.s32 %s12, 2
    %s19 = sadd.s32 %s12, 1
    %s20 = ssub.s32 %s12, %s19
    %p21 = scmp.eq.s32.totalorder %s20, 0
    %s23 = sadd.s32 %s22, 1
    %s24 = scalar_select %p21, %s22, %s23
    %p27 = pneg %p21
    %p28 = scmp.eq.s32.totalorder %s12, 1
    %p29 = por %p27, %p28
    %p30 = scmp.ne.s32.totalorder %s22, %s25
    %p31 = scmp.eq.s32.totalorder %s12, 0
    %p32 = por %p30, %p31
    %p33 = scmp.ne.s32.totalorder %s22, %s25
    %p34 = scmp.eq.s32.totalorder %s17, 1
    %p35 = por %p33, %p34
    %p36 = scmp.ne.s32.totalorder %s25, %s26
    %p37 = scmp.eq.s32.totalorder %s17, 0
    %p38 = por %p36, %p37
    %p39 = scmp.ne.s32.totalorder %s25, %s26
    %p40 = scmp.eq.s32.totalorder %s18, 1
    %p41 = por %p39, %p40
    %p43 = scmp.ne.s32.totalorder %s26, %s42
    %p44 = scmp.eq.s32.totalorder %s18, 0
    %p45 = por %p43, %p44
    %s47 = sadd.s32 %s46, 1
    %p50 = scmp.eq.s32.totalorder %s12, 1
    %p51 = scmp.ne.s32.totalorder %s46, %s48
    %p52 = scmp.eq.s32.totalorder %s12, 0
    %p53 = por %p51, %p52
    %p54 = scmp.ne.s32.totalorder %s46, %s48
    %p55 = scmp.eq.s32.totalorder %s17, 1
    %p56 = por %p54, %p55
    %p57 = scmp.ne.s32.totalorder %s48, %s49
    %p58 = scmp.eq.s32.totalorder %s17, 0
    %p59 = por %p57, %p58
    %p60 = scmp.ne.s32.totalorder %s48, %s49
    %p61 = scmp.eq.s32.totalorder %s18, 1
    %p62 = por %p60, %p61
    %p64 = scmp.ne.s32.totalorder %s49, %s63
    %p65 = scmp.eq.s32.totalorder %s18, 0
    %p66 = por %p64, %p65
    %s68 = sadd.s32 %s67, 1
    %p71 = scmp.eq.s32.totalorder %s12, 1
    %p72 = scmp.ne.s32.totalorder %s67, %s69
    %p73 = scmp.eq.s32.totalorder %s12, 0
    %p74 = por %p72, %p73
    %p75 = scmp.ne.s32.totalorder %s67, %s69
    %p76 = scmp.eq.s32.totalorder %s17, 1
    %p77 = por %p75, %p76
    %p78 = scmp.ne.s32.totalorder %s69, %s70
    %p79 = scmp.eq.s32.totalorder %s17, 0
    %p80 = por %p78, %p79
    %p81 = scmp.ne.s32.totalorder %s69, %s70
    %p82 = scmp.eq.s32.totalorder %s18, 1
    %p83 = por %p81, %p82
    %p85 = scmp.ne.s32.totalorder %s70, %s84
    %p86 = scmp.eq.s32.totalorder %s18, 0
    %p87 = por %p85, %p86
    %s89 = sadd.s32 %s88, 1
    %p92 = scmp.eq.s32.totalorder %s12, 1
    %p93 = scmp.ne.s32.totalorder %s88, %s90
    %p94 = scmp.eq.s32.totalorder %s12, 0
    %p95 = por %p93, %p94
    %p96 = scmp.ne.s32.totalorder %s88, %s90
    %p97 = scmp.eq.s32.totalorder %s17, 1
    %p98 = por %p96, %p97
    %p99 = scmp.ne.s32.totalorder %s90, %s91
    %p100 = scmp.eq.s32.totalorder %s17, 0
    %p101 = por %p99, %p100
    %p102 = scmp.ne.s32.totalorder %s90, %s91
    %p103 = scmp.eq.s32.totalorder %s18, 1
    %p104 = por %p102, %p103
    %p106 = scmp.ne.s32.totalorder %s91, %s105
    %p107 = scmp.eq.s32.totalorder %s18, 0
    %p108 = por %p106, %p107
    %s109 = ssub.s32 %s12, %s19
    %p110 = scmp.eq.s32.totalorder %s109, 0
    %s112 = sadd.s32 %s111, 1
    %s113 = scalar_select %p110, %s111, %s112
    %p116 = pneg %p110
    %p117 = scmp.eq.s32.totalorder %s12, 1
    %p118 = por %p116, %p117
    %p119 = scmp.ne.s32.totalorder %s111, %s114
    %p120 = scmp.eq.s32.totalorder %s12, 0
    %p121 = por %p119, %p120
    %p122 = scmp.ne.s32.totalorder %s111, %s114
    %p123 = scmp.eq.s32.totalorder %s17, 1
    %p124 = por %p122, %p123
    %p125 = scmp.ne.s32.totalorder %s114, %s115
    %p126 = scmp.eq.s32.totalorder %s17, 0
    %p127 = por %p125, %p126
    %p128 = scmp.ne.s32.totalorder %s114, %s115
    %p129 = scmp.eq.s32.totalorder %s18, 1
    %p130 = por %p128, %p129
    %p132 = scmp.ne.s32.totalorder %s115, %s131
    %p133 = scmp.eq.s32.totalorder %s18, 0
    %p134 = por %p132, %p133
    %s135 = ssub.s32 %s12, %s19
    %p136 = scmp.eq.s32.totalorder %s135, 0
    %s138 = sadd.s32 %s137, 1
    %s139 = scalar_select %p136, %s137, %s138
    %p142 = pneg %p136
    %p143 = scmp.eq.s32.totalorder %s12, 1
    %p144 = por %p142, %p143
    %p145 = scmp.ne.s32.totalorder %s137, %s140
    %p146 = scmp.eq.s32.totalorder %s12, 0
    %p147 = por %p145, %p146
    %p148 = scmp.ne.s32.totalorder %s137, %s140
    %p149 = scmp.eq.s32.totalorder %s17, 1
    %p150 = por %p148, %p149
    %p151 = scmp.ne.s32.totalorder %s140, %s141
    %p152 = scmp.eq.s32.totalorder %s17, 0
    %p153 = por %p151, %p152
    %p154 = scmp.ne.s32.totalorder %s140, %s141
    %p155 = scmp.eq.s32.totalorder %s18, 1
    %p156 = por %p154, %p155
    %p158 = scmp.ne.s32.totalorder %s141, %s157
    %p159 = scmp.eq.s32.totalorder %s18, 0
    %p160 = por %p158, %p159
    %p161 = scmp.le.s32.totalorder 1, %s12
    %p162 = scmp.lt.s32.totalorder %s12, 3
    %p163 = pnand %p161, %p162
    %p164 = pneg %p163
    // Predicated region
    $region9: #{_lambda_.23} parent=5 // pred_check
      _
    $region10: #{_lambda_.23} parent=5 // pred_check_branch
      %166 = sbr.rel (%p163) target = $region12
    $region11: #{_lambda_.23} parent=5 // pred_region
      %s167 = ssub.s32 %s12, 1
      // Predicated region
      $region13: #{_lambda_.23} parent=11 // pred_check
        %p168 = pneg %p59
      $region14: #{_lambda_.23} parent=11 // pred_check_branch
        %170 = sbr.rel (%p168) target = $region16
      $region15: #{_lambda_.23} parent=11 // pred_region
        _
      $region16: #{_lambda_.23} parent=11 // pred_fallthru
        _
      // Predicated region
      $region17: #{_lambda_.23} parent=11 // pred_check
        %p171 = pneg %p80
      $region18: #{_lambda_.23} parent=11 // pred_check_branch
        %173 = sbr.rel (%p171) target = $region20
      $region19: #{_lambda_.23} parent=11 // pred_region
        _
      $region20: #{_lambda_.23} parent=11 // pred_fallthru
        _
      // Predicated region
      $region21: #{_lambda_.23} parent=11 // pred_check
        %p174 = pneg %p101
      $region22: #{_lambda_.23} parent=11 // pred_check_branch
        %176 = sbr.rel (%p174) target = $region24
      $region23: #{_lambda_.23} parent=11 // pred_region
        _
      $region24: #{_lambda_.23} parent=11 // pred_fallthru
        _
    $region12: #{_lambda_.23} parent=5 // pred_fallthru
      _
    %p177 = scmp.lt.s32.totalorder %s12, 2
    // Predicated region
    $region25: #{_lambda_.23} parent=5 // pred_check
      %p178 = pneg %p177
    $region26: #{_lambda_.23} parent=5 // pred_check_branch
      %180 = sbr.rel (%p178) target = $region28
    $region27: #{_lambda_.23} parent=5 // pred_region
      // Predicated region
      $region29: #{_lambda_.23} parent=27 // pred_check
        %p181 = pneg %p32
      $region30: #{_lambda_.23} parent=27 // pred_check_branch
        %183 = sbr.rel (%p181) target = $region32
      $region31: #{_lambda_.23} parent=27 // pred_region
        %p184 = scmp.lt.s32.totalorder %s12, 1
        %s185 = scalar_select %p184, %s12, 1
        %s186 = smul.addr %s185, 6
        %s187 = smul.addr %s186, 4
        %s188 = scalar_lea.vmem %s0, %s187
      $region32: #{_lambda_.23} parent=27 // pred_fallthru
        _
    $region28: #{_lambda_.23} parent=5 // pred_fallthru
      _
    %p189 = scmp.le.s32.totalorder 1, %s12
    %p190 = scmp.lt.s32.totalorder %s12, 3
    %p191 = pnand %p189, %p190
    %p192 = pneg %p191
    // Predicated region
    $region33: #{_lambda_.23} parent=5 // pred_check
      _
    $region34: #{_lambda_.23} parent=5 // pred_check_branch
      %194 = sbr.rel (%p191) target = $region36
    $region35: #{_lambda_.23} parent=5 // pred_region
      %s195 = ssub.s32 %s12, 1
      %p196 = scmp.lt.s32.totalorder %s17, 1
      %s197 = scalar_select %p196, %s17, 1
      %s198 = smul.addr %s197, 6
      %s199 = smul.addr %s198, 4
      %s200 = scalar_lea.vmem %s0, %s199
      %p201 = pneg %p38
      %p202 = pneg %p35
      %p203 = pneg %p59
      %p204 = pneg %p56
      %p205 = pneg %p80
      %p206 = pneg %p77
      %p207 = pneg %p101
      %p208 = pneg %p98
      %p209 = pneg %p127
      %p210 = pneg %p124
      %p211 = scmp.lt.s32.totalorder %s17, 1
      %s212 = scalar_select %p211, %s17, 1
      %s213 = smul.addr %s212, 4
      %s214 = smul.addr %s213, 2
      %s215 = scalar_lea.vmem %s4, %s214
      %p216 = pneg %p153
      %p217 = pneg %p150
      %p218 = scmp.lt.s32.totalorder %s17, 1
      %s219 = scalar_select %p218, %s17, 1
      %s220 = scalar_lea.vmem %s5, %s219
      %p221 = scmp.lt.s32.totalorder %s17, 1
      %s222 = scalar_select %p221, %s17, 1
      %s223 = smul.addr %s222, 6
      %s224 = smul.addr %s223, 4
      %s225 = scalar_lea.vmem %s0, %s224
      %p226 = scmp.lt.s32.totalorder %s17, 1
      %s227 = scalar_select %p226, %s17, 1
      %s228 = smul.addr %s227, 4
      %s229 = smul.addr %s228, 2
      %s230 = scalar_lea.vmem %s4, %s229
      %p231 = scmp.lt.s32.totalorder %s17, 1
      %s232 = scalar_select %p231, %s17, 1
      %s233 = scalar_lea.vmem %s5, %s232
      %v234 = vld [vmem:[%s225] sm:$0x3]
      %v235 = vld [vmem:[%s225 + $0x4] sm:$0x3]
      %v236 = vld [vmem:[%s225 + $0x8] sm:$0x3]
      %v237 = vld [vmem:[%s225 + $0xc] sm:$0x3]
      %v238 = vunpack.c.l.bf16 %v234
      %v239 = vunpack.c.l.bf16 %v235
      %v240 = vunpack.c.l.bf16 %v236
      %v241 = vunpack.c.l.bf16 %v237
      %v242 = vld [vmem:[%s1] sm:$0x1]
      %v243 = vlaneseq
      %v244 = vshrl.u32 %v243, 7
      %v245 = vsub.s32 0, %v244
      %v246 = vrot.slane %v242, %v245
      %v247 = vmul.f32 %v238, %v246
      %v248 = vmul.f32 %v239, %v246
      %v249 = vmul.f32 %v240, %v246
      %v250 = vmul.f32 %v241, %v246
      %v251 = vadd.f32 %v247, 0.0
      %v252 = vadd.f32 %v248, 0.0
      %v253 = vadd.f32 %v249, 0.0
      %v254 = vadd.f32 %v250, 0.0
      %v255 = vld [vmem:[%s225] sm:$0x7]
      %v256 = vld [vmem:[%s225 + $0x4] sm:$0x7]
      %v257 = vld [vmem:[%s225 + $0x8] sm:$0x7]
      %v258 = vld [vmem:[%s225 + $0xc] sm:$0x7]
      %v259 = vunpack.c.l.bf16 %v255
      %v260 = vunpack.c.l.bf16 %v256
      %v261 = vunpack.c.l.bf16 %v257
      %v262 = vunpack.c.l.bf16 %v258
      %v263 = vld [vmem:[%s1 + $0x1] sm:$0x1]
      %v264 = vlaneseq
      %v265 = vshrl.u32 %v264, 7
      %v266 = vsub.s32 0, %v265
      %v267 = vrot.slane %v263, %v266
      %v268 = vmul.f32 %v259, %v267
      %v269 = vmul.f32 %v260, %v267
      %v270 = vmul.f32 %v261, %v267
      %v271 = vmul.f32 %v262, %v267
      %v276 = vrot.slane %v268, 1
      %v277 = vrot.slane %v269, 1
      %v278 = vrot.slane %v270, 1
      %v279 = vrot.slane %v271, 1
      %v284 = vadd.f32 %v251, %v276
      %v285 = vadd.f32 %v252, %v277
      %v286 = vadd.f32 %v253, %v278
      %v287 = vadd.f32 %v254, %v279
      %v288 = vld [vmem:[%s225] sm:$0x6]
      %v289 = vld [vmem:[%s225 + $0x4] sm:$0x6]
      %v290 = vld [vmem:[%s225 + $0x8] sm:$0x6]
      %v291 = vld [vmem:[%s225 + $0xc] sm:$0x6]
      %v292 = vunpack.c.l.bf16 %v288
      %v293 = vunpack.c.l.bf16 %v289
      %v294 = vunpack.c.l.bf16 %v290
      %v295 = vunpack.c.l.bf16 %v291
      %v296 = vld [vmem:[%s1 + $0x2] sm:$0x1]
      %v297 = vlaneseq
      %v298 = vshrl.u32 %v297, 7
      %v299 = vsub.s32 0, %v298
      %v300 = vrot.slane %v296, %v299
      %v301 = vmul.f32 %v292, %v300
      %v302 = vmul.f32 %v293, %v300
      %v303 = vmul.f32 %v294, %v300
      %v304 = vmul.f32 %v295, %v300
      %v309 = vrot.slane %v301, 2
      %v310 = vrot.slane %v302, 2
      %v311 = vrot.slane %v303, 2
      %v312 = vrot.slane %v304, 2
      %v317 = vadd.f32 %v284, %v309
      %v318 = vadd.f32 %v285, %v310
      %v319 = vadd.f32 %v286, %v311
      %v320 = vadd.f32 %v287, %v312
      %s321 = scalar_lea.vmem %s225, 4
      %v322 = vld [vmem:[%s321] sm:$0x3]
      %v323 = vld [vmem:[%s321 + $0x4] sm:$0x3]
      %v324 = vld [vmem:[%s321 + $0x8] sm:$0x3]
      %v325 = vld [vmem:[%s321 + $0xc] sm:$0x3]
      %v326 = vunpack.c.l.bf16 %v322
      %v327 = vunpack.c.l.bf16 %v323
      %v328 = vunpack.c.l.bf16 %v324
      %v329 = vunpack.c.l.bf16 %v325
      %v330 = vld [vmem:[%s1 + $0x3] sm:$0x1]
      %v331 = vlaneseq
      %v332 = vshrl.u32 %v331, 7
      %v333 = vsub.s32 0, %v332
      %v334 = vrot.slane %v330, %v333
      %v335 = vmul.f32 %v326, %v334
      %v336 = vmul.f32 %v327, %v334
      %v337 = vmul.f32 %v328, %v334
      %v338 = vmul.f32 %v329, %v334
      %v339 = vadd.f32 %v317, %v335
      %v340 = vadd.f32 %v318, %v336
      %v341 = vadd.f32 %v319, %v337
      %v342 = vadd.f32 %v320, %v338
      %v343 = vld [vmem:[%s321] sm:$0x7]
      %v344 = vld [vmem:[%s321 + $0x4] sm:$0x7]
      %v345 = vld [vmem:[%s321 + $0x8] sm:$0x7]
      %v346 = vld [vmem:[%s321 + $0xc] sm:$0x7]
      %v347 = vunpack.c.l.bf16 %v343
      %v348 = vunpack.c.l.bf16 %v344
      %v349 = vunpack.c.l.bf16 %v345
      %v350 = vunpack.c.l.bf16 %v346
      %v351 = vld [vmem:[%s1 + $0x4] sm:$0x1]
      %v352 = vlaneseq
      %v353 = vshrl.u32 %v352, 7
      %v354 = vsub.s32 0, %v353
      %v355 = vrot.slane %v351, %v354
      %v356 = vmul.f32 %v347, %v355
      %v357 = vmul.f32 %v348, %v355
      %v358 = vmul.f32 %v349, %v355
      %v359 = vmul.f32 %v350, %v355
      %v364 = vrot.slane %v356, 1
      %v365 = vrot.slane %v357, 1
      %v366 = vrot.slane %v358, 1
      %v367 = vrot.slane %v359, 1
      %v372 = vadd.f32 %v339, %v364
      %v373 = vadd.f32 %v340, %v365
      %v374 = vadd.f32 %v341, %v366
      %v375 = vadd.f32 %v342, %v367
      %v376 = vld [vmem:[%s321] sm:$0x6]
      %v377 = vld [vmem:[%s321 + $0x4] sm:$0x6]
      %v378 = vld [vmem:[%s321 + $0x8] sm:$0x6]
      %v379 = vld [vmem:[%s321 + $0xc] sm:$0x6]
      %v380 = vunpack.c.l.bf16 %v376
      %v381 = vunpack.c.l.bf16 %v377
      %v382 = vunpack.c.l.bf16 %v378
      %v383 = vunpack.c.l.bf16 %v379
      %v384 = vld [vmem:[%s1 + $0x5] sm:$0x1]
      %v385 = vlaneseq
      %v386 = vshrl.u32 %v385, 7
      %v387 = vsub.s32 0, %v386
      %v388 = vrot.slane %v384, %v387
      %v389 = vmul.f32 %v380, %v388
      %v390 = vmul.f32 %v381, %v388
      %v391 = vmul.f32 %v382, %v388
      %v392 = vmul.f32 %v383, %v388
      %v397 = vrot.slane %v389, 2
      %v398 = vrot.slane %v390, 2
      %v399 = vrot.slane %v391, 2
      %v400 = vrot.slane %v392, 2
      %v405 = vadd.f32 %v372, %v397
      %v406 = vadd.f32 %v373, %v398
      %v407 = vadd.f32 %v374, %v399
      %v408 = vadd.f32 %v375, %v400
      %s409 = scalar_lea.vmem %s225, 8
      %v410 = vld [vmem:[%s409] sm:$0x3]
      %v411 = vld [vmem:[%s409 + $0x4] sm:$0x3]
      %v412 = vld [vmem:[%s409 + $0x8] sm:$0x3]
      %v413 = vld [vmem:[%s409 + $0xc] sm:$0x3]
      %v414 = vunpack.c.l.bf16 %v410
      %v415 = vunpack.c.l.bf16 %v411
      %v416 = vunpack.c.l.bf16 %v412
      %v417 = vunpack.c.l.bf16 %v413
      %v418 = vld [vmem:[%s1 + $0x6] sm:$0x1]
      %v419 = vlaneseq
      %v420 = vshrl.u32 %v419, 7
      %v421 = vsub.s32 0, %v420
      %v422 = vrot.slane %v418, %v421
      %v423 = vmul.f32 %v414, %v422
      %v424 = vmul.f32 %v415, %v422
      %v425 = vmul.f32 %v416, %v422
      %v426 = vmul.f32 %v417, %v422
      %v427 = vadd.f32 %v405, %v423
      %v428 = vadd.f32 %v406, %v424
      %v429 = vadd.f32 %v407, %v425
      %v430 = vadd.f32 %v408, %v426
      %v431 = vld [vmem:[%s409] sm:$0x7]
      %v432 = vld [vmem:[%s409 + $0x4] sm:$0x7]
      %v433 = vld [vmem:[%s409 + $0x8] sm:$0x7]
      %v434 = vld [vmem:[%s409 + $0xc] sm:$0x7]
      %v435 = vunpack.c.l.bf16 %v431
      %v436 = vunpack.c.l.bf16 %v432
      %v437 = vunpack.c.l.bf16 %v433
      %v438 = vunpack.c.l.bf16 %v434
      %v439 = vld [vmem:[%s1 + $0x7] sm:$0x1]
      %v440 = vlaneseq
      %v441 = vshrl.u32 %v440, 7
      %v442 = vsub.s32 0, %v441
      %v443 = vrot.slane %v439, %v442
      %v444 = vmul.f32 %v435, %v443
      %v445 = vmul.f32 %v436, %v443
      %v446 = vmul.f32 %v437, %v443
      %v447 = vmul.f32 %v438, %v443
      %v452 = vrot.slane %v444, 1
      %v453 = vrot.slane %v445, 1
      %v454 = vrot.slane %v446, 1
      %v455 = vrot.slane %v447, 1
      %v460 = vadd.f32 %v427, %v452
      %v461 = vadd.f32 %v428, %v453
      %v462 = vadd.f32 %v429, %v454
      %v463 = vadd.f32 %v430, %v455
      %v464 = vld [vmem:[%s409] sm:$0x6]
      %v465 = vld [vmem:[%s409 + $0x4] sm:$0x6]
      %v466 = vld [vmem:[%s409 + $0x8] sm:$0x6]
      %v467 = vld [vmem:[%s409 + $0xc] sm:$0x6]
      %v468 = vunpack.c.l.bf16 %v464
      %v469 = vunpack.c.l.bf16 %v465
      %v470 = vunpack.c.l.bf16 %v466
      %v471 = vunpack.c.l.bf16 %v467
      %v472 = vld [vmem:[%s1 + $0x8] sm:$0x1]
      %v473 = vlaneseq
      %v474 = vshrl.u32 %v473, 7
      %v475 = vsub.s32 0, %v474
      %v476 = vrot.slane %v472, %v475
      %v477 = vmul.f32 %v468, %v476
      %v478 = vmul.f32 %v469, %v476
      %v479 = vmul.f32 %v470, %v476
      %v480 = vmul.f32 %v471, %v476
      %v485 = vrot.slane %v477, 2
      %v486 = vrot.slane %v478, 2
      %v487 = vrot.slane %v479, 2
      %v488 = vrot.slane %v480, 2
      %v493 = vadd.f32 %v460, %v485
      %v494 = vadd.f32 %v461, %v486
      %v495 = vadd.f32 %v462, %v487
      %v496 = vadd.f32 %v463, %v488
      %v497 = vld [vmem:[%s2] sm:$0x1]
      %v499 = vlaneseq
      %v500 = vshrl.u32 %v499, 7
      %v501 = vsub.s32 0, %v500
      %v502 = vrot.slane %v497, %v501
      %v504 = vmul.f32 %v493, %v502
      %v505 = vmul.f32 %v494, %v502
      %v506 = vmul.f32 %v495, %v502
      %v507 = vmul.f32 %v496, %v502
      %v508 = vld [vmem:[%s3] sm:$0x1]
      %v510 = vlaneseq
      %v511 = vshrl.u32 %v510, 7
      %v512 = vsub.s32 0, %v511
      %v513 = vrot.slane %v508, %v512
      %v515 = vadd.f32 %v504, %v513
      %v516 = vadd.f32 %v505, %v513
      %v517 = vadd.f32 %v506, %v513
      %v518 = vadd.f32 %v507, %v513
      %v519 = vxor.u32 %v515, 2147483648
      %v520 = vxor.u32 %v516, 2147483648
      %v521 = vxor.u32 %v517, 2147483648
      %v522 = vxor.u32 %v518, 2147483648
      %v523 = vmul.f32 %v519, 1.442695
      %v524 = vpow.pop %v523
      %v525 = vmul.f32 %v520, 1.442695
      %v526 = vpow.pop %v525
      %v527 = vmul.f32 %v521, 1.442695
      %v528 = vpow.pop %v527
      %v529 = vmul.f32 %v522, 1.442695
      %v530 = vpow.pop %v529
      %v531 = vadd.f32 %v524, 1.0
      %v532 = vadd.f32 %v526, 1.0
      %v533 = vadd.f32 %v528, 1.0
      %v534 = vadd.f32 %v530, 1.0
      %v535 = vrcp.pop %v531
      %v536 = vmul.f32 1.0, %v535
      %v537 = vrcp.pop %v532
      %v538 = vmul.f32 1.0, %v537
      %v539 = vrcp.pop %v533
      %v540 = vmul.f32 1.0, %v539
      %v541 = vrcp.pop %v534
      %v542 = vmul.f32 1.0, %v541
      %v543 = vmul.f32 %v515, %v536
      %v544 = vmul.f32 %v516, %v538
      %v545 = vmul.f32 %v517, %v540
      %v546 = vmul.f32 %v518, %v542
      %v547 = vpack.c.bf16 %v543, %v543
      %v548 = vpack.c.bf16 %v544, %v544
      %v549 = vpack.c.bf16 %v545, %v545
      %v550 = vpack.c.bf16 %v546, %v546
      %551 = vst [vmem:[%s230] sm:$0x3] %v547
      %552 = vst [vmem:[%s230 + $0x2] sm:$0x3] %v548
      %553 = vst [vmem:[%s230 + $0x4] sm:$0x3] %v549
      %554 = vst [vmem:[%s230 + $0x6] sm:$0x3] %v550
      %vm555 = vcmask 1043456
      %v556 = vsel %vm555, %v543, 0.0
      %v557 = vsel %vm555, %v544, 0.0
      %v558 = vadd.f32 %v556, %v557
      %v559 = vsel %vm555, %v545, 0.0
      %v560 = vadd.f32 %v558, %v559
      %v561 = vsel %vm555, %v546, 0.0
      %v562 = vadd.f32 %v560, %v561
      %v563 = vrot.slane %v562, 4
      %v564 = vadd.f32 %v562, %v563
      %v565 = vrot.slane %v564, 2
      %v566 = vadd.f32 %v564, %v565
      %v567 = vrot.slane %v566, 1
      %v568 = vadd.f32 %v566, %v567
      %v569 = vmul.f32 %v568, 0.0625
      %570 = vst [vmem:[%s233] sm:$0x1] %v569
      %p571 = scmp.lt.s32.totalorder %s17, 1
      %s572 = scalar_select %p571, %s17, 1
      %s573 = smul.addr %s572, 4
      %s574 = smul.addr %s573, 2
      %s575 = scalar_lea.vmem %s4, %s574
      %p576 = scmp.lt.s32.totalorder %s17, 1
      %s577 = scalar_select %p576, %s17, 1
      %s578 = scalar_lea.vmem %s5, %s577
      // Predicated region
      $region37: #{_lambda_.23} parent=35 // pred_check
        %p579 = pneg %p124
      $region38: #{_lambda_.23} parent=35 // pred_check_branch
        %581 = sbr.rel (%p579) target = $region40
      $region39: #{_lambda_.23} parent=35 // pred_region
        _
      $region40: #{_lambda_.23} parent=35 // pred_fallthru
        _
      // Predicated region
      $region41: #{_lambda_.23} parent=35 // pred_check
        %p582 = pneg %p150
      $region42: #{_lambda_.23} parent=35 // pred_check_branch
        %584 = sbr.rel (%p582) target = $region44
      $region43: #{_lambda_.23} parent=35 // pred_region
        _
      $region44: #{_lambda_.23} parent=35 // pred_fallthru
        _
    $region36: #{_lambda_.23} parent=5 // pred_fallthru
      _
    %p585 = scmp.le.s32.totalorder 2, %s12
    // Predicated region
    $region45: #{_lambda_.23} parent=5 // pred_check
      %p586 = pneg %p585
    $region46: #{_lambda_.23} parent=5 // pred_check_branch
      %588 = sbr.rel (%p586) target = $region48
    $region47: #{_lambda_.23} parent=5 // pred_region
      %s589 = ssub.s32 %s12, 2
      // Predicated region
      $region49: #{_lambda_.23} parent=47 // pred_check
        %p590 = pneg %p130
      $region50: #{_lambda_.23} parent=47 // pred_check_branch
        %592 = sbr.rel (%p590) target = $region52
      $region51: #{_lambda_.23} parent=47 // pred_region
        %p593 = scmp.lt.s32.totalorder %s18, 1
        %s594 = scalar_select %p593, %s18, 1
        %s595 = smul.addr %s594, 4
        %s596 = smul.addr %s595, 2
        %s597 = scalar_lea.vmem %s4, %s596
      $region52: #{_lambda_.23} parent=47 // pred_fallthru
        _
      // Predicated region
      $region53: #{_lambda_.23} parent=47 // pred_check
        %p598 = pneg %p156
      $region54: #{_lambda_.23} parent=47 // pred_check_branch
        %600 = sbr.rel (%p598) target = $region56
      $region55: #{_lambda_.23} parent=47 // pred_region
        %p601 = scmp.lt.s32.totalorder %s18, 1
        %s602 = scalar_select %p601, %s18, 1
        %s603 = scalar_lea.vmem %s5, %s602
      $region56: #{_lambda_.23} parent=47 // pred_fallthru
        _
    $region48: #{_lambda_.23} parent=5 // pred_fallthru
      _
  $region6: #{_lambda_.23} parent=0 // loop_footer
    %s16 = sadd.s32 1, %s12
  $region7: #{_lambda_.23} parent=0 // loop_footer_branch
    %11 = sbr.rel target = $region3
  $region8: #{_lambda_.23} parent=0 // loop_exit
    _

// kernel: _lambda_.25
$region0: #{_lambda_.25}
  #allocation0 [shape = 'u32[]', space=smem, size = 0x4, offset = 0x4, fixed_abs, tag = 'smem constant byte address 0x4 - core index']
  #allocation1 [shape = 'u32[144,128]{1,0:T(1,128)}', space=vmem, size = 0x12000, scoped, tag = 'internal scratch']
  %s0 = inlined_call_operand.vmem [shape: bf16[2,16,128], index: 0, kind: input, shape index: {}]
  %s1 = inlined_call_operand.vmem [shape: bf16[128,128], index: 1, kind: input, shape index: {}]
  %s2 = inlined_call_operand.vmem [shape: f32[1,128], index: 2, kind: input, shape index: {}]
  %s3 = inlined_call_operand.vmem [shape: f32[1,128], index: 3, kind: input, shape index: {}]
  %s4 = inlined_call_operand.vmem [shape: f32[2,1,128], index: 4, kind: input, shape index: {}]
  %s5 = inlined_call_operand.vmem [shape: bf16[2,16,128], index: 5, kind: input, shape index: {}]
  %s6 = inlined_call_operand.vmem [shape: bf16[2,16,128], index: 6, kind: output, shape index: {}]
  %s7 = sld [smem:[#allocation0]]
  $region57: #{_lambda_.25} parent=0
    _
  %s9 = ssub.s32 1, %s7
  %s10 = scalar_select 0, %s9, %s7
  loop: start=0, step=1, limit=4
  $region2: #{_lambda_.25} parent=0 // loop_pre_header
    _
  $region3: #{_lambda_.25} parent=0 // loop_header
    %s12 = sphi 0, %s16
    %p13 = scmp.ge.s32.totalorder %s12, 4
    %s19 = sphi 0, %s31
    %s20 = sphi 0, %s27
    %s21 = sphi 0, %s19
    %s22 = sphi 0, %s20
    %s23 = sphi 0, %s21
    %s24 = sphi 0, %s22
    %s36 = sphi 0, %s38
    %s39 = sphi 0, %s36
    %s40 = sphi 0, %s39
    %s56 = sphi 0, %s40
    %s60 = sphi 0, %s60
    %s62 = sphi 0, %s60
    %s63 = sphi 0, %s62
    %s77 = sphi 0, %s63
    %s81 = sphi 0, %s81
    %s83 = sphi 0, %s81
    %s84 = sphi 0, %s83
    %s98 = sphi 0, %s84
    %s102 = sphi 0, %s102
    %s104 = sphi 0, %s102
    %s105 = sphi 0, %s104
    %s119 = sphi 0, %s105
    %s125 = sphi 0, %s127
    %s128 = sphi 0, %s125
    %s129 = sphi 0, %s128
    %s145 = sphi 0, %s129
    %s153 = sphi 0, %s155
    %s156 = sphi 0, %s153
    %s157 = sphi 0, %s156
    %s173 = sphi 0, %s157
    %s181 = sphi 0, %s183
    %s184 = sphi 0, %s181
    %s185 = sphi 0, %s184
    %s201 = sphi 0, %s185
  $region4: #{_lambda_.25} parent=0 // loop_header_branch
    %15 = sbr.rel (%p13) target = $region8
  $region5: #{_lambda_.25} parent=0 // loop_body
    %s17 = ssub.s32 %s12, 1
    %s18 = ssub.s32 %s12, 2
    %s25 = sadd.s32 1, %s20
    %p26 = scmp.ge.s32.totalorder %s25, 1
    %s27 = scalar_select %p26, 0, %s25
    %s28 = sadd.s32 1, %s19
    %s29 = scalar_select %p26, %s28, %s19
    %p30 = scmp.ge.s32.totalorder %s29, 2
    %s31 = scalar_select %p30, 0, %s29
    %s32 = ssub.s32 %s19, %s31
    %s33 = ssub.s32 %s20, %s27
    %s34 = sor.u32 %s32, %s33
    %p35 = scmp.eq.s32.totalorder %s34, 0
    %s37 = sadd.s32 %s36, 1
    %s38 = scalar_select %p35, %s36, %s37
    %p41 = pneg %p35
    %p42 = scmp.eq.s32.totalorder %s12, 1
    %p43 = por %p41, %p42
    %p44 = scmp.ne.s32.totalorder %s36, %s39
    %p45 = scmp.eq.s32.totalorder %s12, 0
    %p46 = por %p44, %p45
    %p47 = scmp.ne.s32.totalorder %s36, %s39
    %p48 = scmp.eq.s32.totalorder %s17, 1
    %p49 = por %p47, %p48
    %p50 = scmp.ne.s32.totalorder %s39, %s40
    %p51 = scmp.eq.s32.totalorder %s17, 0
    %p52 = por %p50, %p51
    %p53 = scmp.ne.s32.totalorder %s39, %s40
    %p54 = scmp.eq.s32.totalorder %s18, 1
    %p55 = por %p53, %p54
    %p57 = scmp.ne.s32.totalorder %s40, %s56
    %p58 = scmp.eq.s32.totalorder %s18, 0
    %p59 = por %p57, %p58
    %s61 = sadd.s32 %s60, 1
    %p64 = scmp.eq.s32.totalorder %s12, 1
    %p65 = scmp.ne.s32.totalorder %s60, %s62
    %p66 = scmp.eq.s32.totalorder %s12, 0
    %p67 = por %p65, %p66
    %p68 = scmp.ne.s32.totalorder %s60, %s62
    %p69 = scmp.eq.s32.totalorder %s17, 1
    %p70 = por %p68, %p69
    %p71 = scmp.ne.s32.totalorder %s62, %s63
    %p72 = scmp.eq.s32.totalorder %s17, 0
    %p73 = por %p71, %p72
    %p74 = scmp.ne.s32.totalorder %s62, %s63
    %p75 = scmp.eq.s32.totalorder %s18, 1
    %p76 = por %p74, %p75
    %p78 = scmp.ne.s32.totalorder %s63, %s77
    %p79 = scmp.eq.s32.totalorder %s18, 0
    %p80 = por %p78, %p79
    %s82 = sadd.s32 %s81, 1
    %p85 = scmp.eq.s32.totalorder %s12, 1
    %p86 = scmp.ne.s32.totalorder %s81, %s83
    %p87 = scmp.eq.s32.totalorder %s12, 0
    %p88 = por %p86, %p87
    %p89 = scmp.ne.s32.totalorder %s81, %s83
    %p90 = scmp.eq.s32.totalorder %s17, 1
    %p91 = por %p89, %p90
    %p92 = scmp.ne.s32.totalorder %s83, %s84
    %p93 = scmp.eq.s32.totalorder %s17, 0
    %p94 = por %p92, %p93
    %p95 = scmp.ne.s32.totalorder %s83, %s84
    %p96 = scmp.eq.s32.totalorder %s18, 1
    %p97 = por %p95, %p96
    %p99 = scmp.ne.s32.totalorder %s84, %s98
    %p100 = scmp.eq.s32.totalorder %s18, 0
    %p101 = por %p99, %p100
    %s103 = sadd.s32 %s102, 1
    %p106 = scmp.eq.s32.totalorder %s12, 1
    %p107 = scmp.ne.s32.totalorder %s102, %s104
    %p108 = scmp.eq.s32.totalorder %s12, 0
    %p109 = por %p107, %p108
    %p110 = scmp.ne.s32.totalorder %s102, %s104
    %p111 = scmp.eq.s32.totalorder %s17, 1
    %p112 = por %p110, %p111
    %p113 = scmp.ne.s32.totalorder %s104, %s105
    %p114 = scmp.eq.s32.totalorder %s17, 0
    %p115 = por %p113, %p114
    %p116 = scmp.ne.s32.totalorder %s104, %s105
    %p117 = scmp.eq.s32.totalorder %s18, 1
    %p118 = por %p116, %p117
    %p120 = scmp.ne.s32.totalorder %s105, %s119
    %p121 = scmp.eq.s32.totalorder %s18, 0
    %p122 = por %p120, %p121
    %s123 = ssub.s32 %s19, %s31
    %p124 = scmp.eq.s32.totalorder %s123, 0
    %s126 = sadd.s32 %s125, 1
    %s127 = scalar_select %p124, %s125, %s126
    %p130 = pneg %p124
    %p131 = scmp.eq.s32.totalorder %s12, 1
    %p132 = por %p130, %p131
    %p133 = scmp.ne.s32.totalorder %s125, %s128
    %p134 = scmp.eq.s32.totalorder %s12, 0
    %p135 = por %p133, %p134
    %p136 = scmp.ne.s32.totalorder %s125, %s128
    %p137 = scmp.eq.s32.totalorder %s17, 1
    %p138 = por %p136, %p137
    %p139 = scmp.ne.s32.totalorder %s128, %s129
    %p140 = scmp.eq.s32.totalorder %s17, 0
    %p141 = por %p139, %p140
    %p142 = scmp.ne.s32.totalorder %s128, %s129
    %p143 = scmp.eq.s32.totalorder %s18, 1
    %p144 = por %p142, %p143
    %p146 = scmp.ne.s32.totalorder %s129, %s145
    %p147 = scmp.eq.s32.totalorder %s18, 0
    %p148 = por %p146, %p147
    %s149 = ssub.s32 %s19, %s31
    %s150 = ssub.s32 %s20, %s27
    %s151 = sor.u32 %s149, %s150
    %p152 = scmp.eq.s32.totalorder %s151, 0
    %s154 = sadd.s32 %s153, 1
    %s155 = scalar_select %p152, %s153, %s154
    %p158 = pneg %p152
    %p159 = scmp.eq.s32.totalorder %s12, 1
    %p160 = por %p158, %p159
    %p161 = scmp.ne.s32.totalorder %s153, %s156
    %p162 = scmp.eq.s32.totalorder %s12, 0
    %p163 = por %p161, %p162
    %p164 = scmp.ne.s32.totalorder %s153, %s156
    %p165 = scmp.eq.s32.totalorder %s17, 1
    %p166 = por %p164, %p165
    %p167 = scmp.ne.s32.totalorder %s156, %s157
    %p168 = scmp.eq.s32.totalorder %s17, 0
    %p169 = por %p167, %p168
    %p170 = scmp.ne.s32.totalorder %s156, %s157
    %p171 = scmp.eq.s32.totalorder %s18, 1
    %p172 = por %p170, %p171
    %p174 = scmp.ne.s32.totalorder %s157, %s173
    %p175 = scmp.eq.s32.totalorder %s18, 0
    %p176 = por %p174, %p175
    %s177 = ssub.s32 %s19, %s31
    %s178 = ssub.s32 %s20, %s27
    %s179 = sor.u32 %s177, %s178
    %p180 = scmp.eq.s32.totalorder %s179, 0
    %s182 = sadd.s32 %s181, 1
    %s183 = scalar_select %p180, %s181, %s182
    %p186 = pneg %p180
    %p187 = scmp.eq.s32.totalorder %s12, 1
    %p188 = por %p186, %p187
    %p189 = scmp.ne.s32.totalorder %s181, %s184
    %p190 = scmp.eq.s32.totalorder %s12, 0
    %p191 = por %p189, %p190
    %p192 = scmp.ne.s32.totalorder %s181, %s184
    %p193 = scmp.eq.s32.totalorder %s17, 1
    %p194 = por %p192, %p193
    %p195 = scmp.ne.s32.totalorder %s184, %s185
    %p196 = scmp.eq.s32.totalorder %s17, 0
    %p197 = por %p195, %p196
    %p198 = scmp.ne.s32.totalorder %s184, %s185
    %p199 = scmp.eq.s32.totalorder %s18, 1
    %p200 = por %p198, %p199
    %p202 = scmp.ne.s32.totalorder %s185, %s201
    %p203 = scmp.eq.s32.totalorder %s18, 0
    %p204 = por %p202, %p203
    %p205 = scmp.le.s32.totalorder 1, %s12
    %p206 = scmp.lt.s32.totalorder %s12, 3
    %p207 = pnand %p205, %p206
    %p208 = pneg %p207
    // Predicated region
    $region9: #{_lambda_.25} parent=5 // pred_check
      _
    $region10: #{_lambda_.25} parent=5 // pred_check_branch
      %210 = sbr.rel (%p207) target = $region12
    $region11: #{_lambda_.25} parent=5 // pred_region
      %s211 = ssub.s32 %s12, 1
      // Predicated region
      $region13: #{_lambda_.25} parent=11 // pred_check
        %p212 = pneg %p73
      $region14: #{_lambda_.25} parent=11 // pred_check_branch
        %214 = sbr.rel (%p212) target = $region16
      $region15: #{_lambda_.25} parent=11 // pred_region
        _
      $region16: #{_lambda_.25} parent=11 // pred_fallthru
        _
      // Predicated region
      $region17: #{_lambda_.25} parent=11 // pred_check
        %p215 = pneg %p94
      $region18: #{_lambda_.25} parent=11 // pred_check_branch
        %217 = sbr.rel (%p215) target = $region20
      $region19: #{_lambda_.25} parent=11 // pred_region
        _
      $region20: #{_lambda_.25} parent=11 // pred_fallthru
        _
      // Predicated region
      $region21: #{_lambda_.25} parent=11 // pred_check
        %p218 = pneg %p115
      $region22: #{_lambda_.25} parent=11 // pred_check_branch
        %220 = sbr.rel (%p218) target = $region24
      $region23: #{_lambda_.25} parent=11 // pred_region
        _
      $region24: #{_lambda_.25} parent=11 // pred_fallthru
        _
    $region12: #{_lambda_.25} parent=5 // pred_fallthru
      _
    %p221 = scmp.lt.s32.totalorder %s12, 2
    // Predicated region
    $region25: #{_lambda_.25} parent=5 // pred_check
      %p222 = pneg %p221
    $region26: #{_lambda_.25} parent=5 // pred_check_branch
      %224 = sbr.rel (%p222) target = $region28
    $region27: #{_lambda_.25} parent=5 // pred_region
      // Predicated region
      $region29: #{_lambda_.25} parent=27 // pred_check
        %p225 = pneg %p46
      $region30: #{_lambda_.25} parent=27 // pred_check_branch
        %227 = sbr.rel (%p225) target = $region32
      $region31: #{_lambda_.25} parent=27 // pred_region
        %s228 = smul.u32 2, %s20
        %p229 = scmp.lt.s32.totalorder %s19, 1
        %s230 = scalar_select %p229, %s19, 1
        %p231 = scmp.lt.s32.totalorder %s228, 1
        %s232 = scalar_select %p231, %s228, 1
        %s233 = smul.addr %s230, 2
        %s234 = sadd.s32 %s232, %s233
        %s235 = smul.addr %s234, 4
        %s236 = scalar_lea.vmem %s0, %s235
        %s237 = smul.u32 2, %s20
      $region32: #{_lambda_.25} parent=27 // pred_fallthru
        _
      // Predicated region
      $region33: #{_lambda_.25} parent=27 // pred_check
        %p238 = pneg %p135
      $region34: #{_lambda_.25} parent=27 // pred_check_branch
        %240 = sbr.rel (%p238) target = $region36
      $region35: #{_lambda_.25} parent=27 // pred_region
        %p241 = scmp.lt.s32.totalorder %s19, 1
        %s242 = scalar_select %p241, %s19, 1
        %s243 = scalar_lea.vmem %s4, %s242
      $region36: #{_lambda_.25} parent=27 // pred_fallthru
        _
      // Predicated region
      $region37: #{_lambda_.25} parent=27 // pred_check
        %p244 = pneg %p163
      $region38: #{_lambda_.25} parent=27 // pred_check_branch
        %246 = sbr.rel (%p244) target = $region40
      $region39: #{_lambda_.25} parent=27 // pred_region
        %s247 = smul.u32 2, %s20
        %p248 = scmp.lt.s32.totalorder %s19, 1
        %s249 = scalar_select %p248, %s19, 1
        %p250 = scmp.lt.s32.totalorder %s247, 1
        %s251 = scalar_select %p250, %s247, 1
        %s252 = smul.addr %s249, 2
        %s253 = sadd.s32 %s251, %s252
        %s254 = smul.addr %s253, 4
        %s255 = scalar_lea.vmem %s5, %s254
        %s256 = smul.u32 2, %s20
      $region40: #{_lambda_.25} parent=27 // pred_fallthru
        _
    $region28: #{_lambda_.25} parent=5 // pred_fallthru
      _
    %p257 = scmp.le.s32.totalorder 1, %s12
    %p258 = scmp.lt.s32.totalorder %s12, 3
    %p259 = pnand %p257, %p258
    %p260 = pneg %p259
    // Predicated region
    $region41: #{_lambda_.25} parent=5 // pred_check
      _
    $region42: #{_lambda_.25} parent=5 // pred_check_branch
      %262 = sbr.rel (%p259) target = $region44
    $region43: #{_lambda_.25} parent=5 // pred_region
      %s263 = ssub.s32 %s12, 1
      %s264 = smul.u32 2, %s22
      %p265 = scmp.lt.s32.totalorder %s21, 1
      %s266 = scalar_select %p265, %s21, 1
      %p267 = scmp.lt.s32.totalorder %s264, 1
      %s268 = scalar_select %p267, %s264, 1
      %s269 = smul.addr %s266, 2
      %s270 = sadd.s32 %s268, %s269
      %s271 = smul.addr %s270, 4
      %s272 = scalar_lea.vmem %s0, %s271
      %p273 = pneg %p52
      %p274 = pneg %p49
      %p275 = pneg %p73
      %p276 = pneg %p70
      %p277 = pneg %p94
      %p278 = pneg %p91
      %p279 = pneg %p115
      %p280 = pneg %p112
      %p281 = scmp.lt.s32.totalorder %s21, 1
      %s282 = scalar_select %p281, %s21, 1
      %s283 = scalar_lea.vmem %s4, %s282
      %p284 = pneg %p141
      %p285 = pneg %p138
      %s286 = smul.u32 2, %s22
      %p287 = scmp.lt.s32.totalorder %s21, 1
      %s288 = scalar_select %p287, %s21, 1
      %p289 = scmp.lt.s32.totalorder %s286, 1
      %s290 = scalar_select %p289, %s286, 1
      %s291 = smul.addr %s288, 2
      %s292 = sadd.s32 %s290, %s291
      %s293 = smul.addr %s292, 4
      %s294 = scalar_lea.vmem %s5, %s293
      %p295 = pneg %p169
      %p296 = pneg %p166
      %p297 = pneg %p197
      %p298 = pneg %p194
      %s299 = smul.u32 2, %s22
      %p300 = scmp.lt.s32.totalorder %s21, 1
      %s301 = scalar_select %p300, %s21, 1
      %p302 = scmp.lt.s32.totalorder %s299, 1
      %s303 = scalar_select %p302, %s299, 1
      %s304 = smul.addr %s301, 2
      %s305 = sadd.s32 %s303, %s304
      %s306 = smul.addr %s305, 4
      %s307 = scalar_lea.vmem %s6, %s306
      %s308 = smul.u32 2, %s22
      %p309 = scmp.lt.s32.totalorder %s21, 1
      %s310 = scalar_select %p309, %s21, 1
      %p311 = scmp.lt.s32.totalorder %s308, 1
      %s312 = scalar_select %p311, %s308, 1
      %s313 = smul.addr %s310, 2
      %s314 = sadd.s32 %s312, %s313
      %s315 = smul.addr %s314, 4
      %s316 = scalar_lea.vmem %s0, %s315
      %s317 = smul.u32 2, %s22
      %p318 = scmp.lt.s32.totalorder %s21, 1
      %s319 = scalar_select %p318, %s21, 1
      %s320 = scalar_lea.vmem %s4, %s319
      %s321 = smul.u32 2, %s22
      %p322 = scmp.lt.s32.totalorder %s21, 1
      %s323 = scalar_select %p322, %s21, 1
      %p324 = scmp.lt.s32.totalorder %s321, 1
      %s325 = scalar_select %p324, %s321, 1
      %s326 = smul.addr %s323, 2
      %s327 = sadd.s32 %s325, %s326
      %s328 = smul.addr %s327, 4
      %s329 = scalar_lea.vmem %s5, %s328
      %s330 = smul.u32 2, %s22
      %s331 = smul.u32 2, %s22
      %p332 = scmp.lt.s32.totalorder %s21, 1
      %s333 = scalar_select %p332, %s21, 1
      %p334 = scmp.lt.s32.totalorder %s331, 1
      %s335 = scalar_select %p334, %s331, 1
      %s336 = smul.addr %s333, 2
      %s337 = sadd.s32 %s335, %s336
      %s338 = smul.addr %s337, 4
      %s339 = scalar_lea.vmem %s6, %s338
      %s340 = smul.u32 2, %s22
      %v342 = vld [vmem:[%s316] sm:$0xf]
      %v343 = vld [vmem:[%s316 + $0x4] sm:$0xf]
      %v344 = vunpack.c.l.bf16 %v342
      %v345 = vunpack.c.l.bf16 %v343
      %v346 = vld [vmem:[%s320] sm:$0x1]
      %v348 = vlaneseq
      %v349 = vshrl.u32 %v348, 7
      %v350 = vsub.s32 0, %v349
      %v351 = vrot.slane %v346, %v350
      %v353 = vmul.f32 %v344, %v351
      %v354 = vmul.f32 %v345, %v351
      %v355 = vpack.c.bf16 %v354, %v353
      %v356 = vld [vmem:[%s1] sm:$0xf]
      %v357 = vld [vmem:[%s1 + $0x4] sm:$0xf]
      %v358 = vld [vmem:[%s1 + $0x8] sm:$0xf]
      %v359 = vld [vmem:[%s1 + $0xc] sm:$0xf]
      %v360 = vld [vmem:[%s1 + $0x10] sm:$0xf]
      %v361 = vld [vmem:[%s1 + $0x14] sm:$0xf]
      %v362 = vld [vmem:[%s1 + $0x18] sm:$0xf]
      %v363 = vld [vmem:[%s1 + $0x1c] sm:$0xf]
      %v364 = vld [vmem:[%s1 + $0x20] sm:$0xf]
      %v365 = vld [vmem:[%s1 + $0x24] sm:$0xf]
      %v366 = vld [vmem:[%s1 + $0x28] sm:$0xf]
      %v367 = vld [vmem:[%s1 + $0x2c] sm:$0xf]
      %v368 = vld [vmem:[%s1 + $0x30] sm:$0xf]
      %v369 = vld [vmem:[%s1 + $0x34] sm:$0xf]
      %v370 = vld [vmem:[%s1 + $0x38] sm:$0xf]
      %v371 = vld [vmem:[%s1 + $0x3c] sm:$0xf]
      %v388 = vunpack.c.l.b16 %v356
      %v389 = vunpack.c.l.b16 %v357
      %v390 = vunpack.c.l.b16 %v358
      %v391 = vunpack.c.l.b16 %v359
      %v392 = vunpack.c.l.b16 %v360
      %v393 = vunpack.c.l.b16 %v361
      %v394 = vunpack.c.l.b16 %v362
      %v395 = vunpack.c.l.b16 %v363
      %v396 = vunpack.c.l.b16 %v364
      %v397 = vunpack.c.l.b16 %v365
      %v398 = vunpack.c.l.b16 %v366
      %v399 = vunpack.c.l.b16 %v367
      %v400 = vunpack.c.l.b16 %v368
      %v401 = vunpack.c.l.b16 %v369
      %v402 = vunpack.c.l.b16 %v370
      %v403 = vunpack.c.l.b16 %v371
      %v404 = vpack.c.b16 %v389, %v388
      %v405 = vpack.c.b16 %v391, %v390
      %v406 = vpack.c.b16 %v393, %v392
      %v407 = vpack.c.b16 %v395, %v394
      %v408 = vpack.c.b16 %v397, %v396
      %v409 = vpack.c.b16 %v399, %v398
      %v410 = vpack.c.b16 %v401, %v400
      %v411 = vpack.c.b16 %v403, %v402
      %420 = vmatprep.subr.bf16.mxu0 0
      %421 = vmatpush1.bf16.msra.mxu0 %v404
      %422 = vmatprep.subr.bf16.mxu0 0
      %423 = vmatpush1.bf16.msra.mxu0 %v405
      %424 = vmatprep.subr.bf16.mxu0 0
      %425 = vmatpush1.bf16.msra.mxu0 %v406
      %426 = vmatprep.subr.bf16.mxu0 0
      %427 = vmatpush1.bf16.msra.mxu0 %v407
      %428 = vmatprep.subr.bf16.mxu0 0
      %429 = vmatpush1.bf16.msra.mxu0 %v408
      %430 = vmatprep.subr.bf16.mxu0 0
      %431 = vmatpush1.bf16.msra.mxu0 %v409
      %432 = vmatprep.subr.bf16.mxu0 0
      %433 = vmatpush1.bf16.msra.mxu0 %v410
      %434 = vmatprep.subr.bf16.mxu0 0
      %435 = vmatpush1.bf16.msra.mxu0 %v411
      %436 = vmatprep.subr.bf16.mxu0 0
      %437 = vmatpush1.bf16.msra.mxu0 0
      %438 = vmatprep.subr.bf16.mxu0 0
      %439 = vmatpush1.bf16.msra.mxu0 0
      %440 = vmatprep.subr.bf16.mxu0 0
      %441 = vmatpush1.bf16.msra.mxu0 0
      %442 = vmatprep.subr.bf16.mxu0 0
      %443 = vmatpush1.bf16.msra.mxu0 0
      %444 = vmatprep.subr.bf16.mxu0 0
      %445 = vmatpush1.bf16.msra.mxu0 0
      %446 = vmatprep.subr.bf16.mxu0 0
      %447 = vmatpush1.bf16.msra.mxu0 0
      %448 = vmatprep.subr.bf16.mxu0 0
      %449 = vmatpush1.bf16.msra.mxu0 0
      %450 = vmatprep.subr.bf16.mxu0 0
      %451 = vmatpush1.bf16.msra.mxu0 0
      %452 = vmatprep.mubr.bf16.mxu0 0
      %453 = vmatmul.mubr.bf16.gmra.mrb[0].mxu0 %v355
      %v454 = vpop.f32.mrb[0].mxu0
      %v455 = vadd.f32 0.0, %v454
      %v456 = vpop.f32.mrb[0].mxu0
      %v457 = vpop.f32.mrb[0].mxu0
      %v458 = vadd.f32 0.0, %v457
      %v459 = vpop.f32.mrb[0].mxu0
      %460 = vdwg.mxu0
      %v461 = vld [vmem:[%s2] sm:$0x1]
      %v463 = vlaneseq
      %v464 = vshrl.u32 %v463, 7
      %v465 = vsub.s32 0, %v464
      %v466 = vrot.slane %v461, %v465
      %v468 = vmul.f32 %v455, %v466
      %v469 = vmul.f32 %v458, %v466
      %v470 = vld [vmem:[%s3] sm:$0x1]
      %v472 = vlaneseq
      %v473 = vshrl.u32 %v472, 7
      %v474 = vsub.s32 0, %v473
      %v475 = vrot.slane %v470, %v474
      %v477 = vadd.f32 %v468, %v475
      %v478 = vadd.f32 %v469, %v475
      %v479 = vld [vmem:[%s329] sm:$0xf]
      %v480 = vld [vmem:[%s329 + $0x4] sm:$0xf]
      %v481 = vunpack.c.l.bf16 %v479
      %v482 = vunpack.c.l.bf16 %v480
      %v483 = vadd.f32 %v477, %v481
      %v484 = vadd.f32 %v478, %v482
      %v485 = vpack.c.bf16 %v484, %v483
      %v487 = vunpack.c.l.b16 %v485
      %v488 = vunpack.c.h.b16 %v485
      %v489 = vpack.c.b16 %v487, %v487
      %v490 = vpack.c.b16 %v488, %v488
      %493 = vst [vmem:[%s339] sm:$0xf] %v489
      %494 = vst [vmem:[%s339 + $0x4] sm:$0xf] %v490
      %s495 = smul.u32 2, %s22
      %p496 = scmp.lt.s32.totalorder %s21, 1
      %s497 = scalar_select %p496, %s21, 1
      %p498 = scmp.lt.s32.totalorder %s495, 1
      %s499 = scalar_select %p498, %s495, 1
      %s500 = smul.addr %s497, 2
      %s501 = sadd.s32 %s499, %s500
      %s502 = smul.addr %s501, 4
      %s503 = scalar_lea.vmem %s6, %s502
      // Predicated region
      $region45: #{_lambda_.25} parent=43 // pred_check
        %p504 = pneg %p194
      $region46: #{_lambda_.25} parent=43 // pred_check_branch
        %506 = sbr.rel (%p504) target = $region48
      $region47: #{_lambda_.25} parent=43 // pred_region
        %s507 = smul.u32 2, %s22
      $region48: #{_lambda_.25} parent=43 // pred_fallthru
        _
    $region44: #{_lambda_.25} parent=5 // pred_fallthru
      _
    %p508 = scmp.le.s32.totalorder 2, %s12
    // Predicated region
    $region49: #{_lambda_.25} parent=5 // pred_check
      %p509 = pneg %p508
    $region50: #{_lambda_.25} parent=5 // pred_check_branch
      %511 = sbr.rel (%p509) target = $region52
    $region51: #{_lambda_.25} parent=5 // pred_region
      %s512 = ssub.s32 %s12, 2
      // Predicated region
      $region53: #{_lambda_.25} parent=51 // pred_check
        %p513 = pneg %p200
      $region54: #{_lambda_.25} parent=51 // pred_check_branch
        %515 = sbr.rel (%p513) target = $region56
      $region55: #{_lambda_.25} parent=51 // pred_region
        %s516 = smul.u32 2, %s24
        %p517 = scmp.lt.s32.totalorder %s23, 1
        %s518 = scalar_select %p517, %s23, 1
        %p519 = scmp.lt.s32.totalorder %s516, 1
        %s520 = scalar_select %p519, %s516, 1
        %s521 = smul.addr %s518, 2
        %s522 = sadd.s32 %s520, %s521
        %s523 = smul.addr %s522, 4
        %s524 = scalar_lea.vmem %s6, %s523
      $region56: #{_lambda_.25} parent=51 // pred_fallthru
        _
    $region52: #{_lambda_.25} parent=5 // pred_fallthru
      _
  $region6: #{_lambda_.25} parent=0 // loop_footer
    %s16 = sadd.s32 1, %s12
  $region7: #{_lambda_.25} parent=0 // loop_footer_branch
    %11 = sbr.rel target = $region3
  $region8: #{_lambda_.25} parent=0 // loop_exit
    _

// kernel: _lambda_.27
$region0: #{_lambda_.27}
  #allocation0 [shape = 'u32[]', space=smem, size = 0x4, offset = 0x4, fixed_abs, tag = 'smem constant byte address 0x4 - core index']
  #allocation1 [shape = 'u32[144,128]{1,0:T(1,128)}', space=vmem, size = 0x12000, scoped, tag = 'internal scratch']
  %s0 = inlined_call_operand.vmem [shape: bf16[2,16,384], index: 0, kind: input, shape index: {}]
  %s1 = inlined_call_operand.vmem [shape: f32[384,128], index: 1, kind: input, shape index: {}]
  %s2 = inlined_call_operand.vmem [shape: f32[1,128], index: 2, kind: input, shape index: {}]
  %s3 = inlined_call_operand.hbm [shape: f32[2,128], index: 3, kind: output, shape index: {}]
  %s4 = sld [smem:[#allocation0]]
  $region22: #{_lambda_.27} parent=0
    _
  %s6 = ssub.s32 1, %s4
  %s7 = scalar_select 0, %s6, %s4
  $region1: #{_lambda_.27} parent=0
    #allocation2 [shape = 'u8[1024]{0}', space=vmem, size = 0x400, scoped, tag = 'output window, operand 0, single buffered']
    #allocation3 [shape = 's32[1]{0}', space=sflag, size = 0x4, scoped, tag = 'scoped memory for _lambda_.27']
    %8 = vsyncpa [#allocation3], 0
    // Predicated region
    $region2: #{_lambda_.27} parent=1 // pred_check
      _
    $region3: #{_lambda_.27} parent=1 // pred_check_branch
      %10 = sbr.rel (0) target = $region5
    $region4: #{_lambda_.27} parent=1 // pred_region
      _
    $region5: #{_lambda_.27} parent=1 // pred_fallthru
      _
    // Predicated region
    $region6: #{_lambda_.27} parent=1 // pred_check
      _
    $region7: #{_lambda_.27} parent=1 // pred_check_branch
      %12 = sbr.rel (0) target = $region9
    $region8: #{_lambda_.27} parent=1 // pred_region
      _
    $region9: #{_lambda_.27} parent=1 // pred_fallthru
      _
    // Predicated region
    $region10: #{_lambda_.27} parent=1 // pred_check
      _
    $region11: #{_lambda_.27} parent=1 // pred_check_branch
      %14 = sbr.rel (0) target = $region13
    $region12: #{_lambda_.27} parent=1 // pred_region
      _
    $region13: #{_lambda_.27} parent=1 // pred_fallthru
      _
    %v15 = vld [vmem:[%s0] sm:$0xff]
    %v16 = vld [vmem:[%s0 + $0x8] sm:$0xf]
    %v17 = vld [vmem:[%s0 + $0xc] sm:$0xff]
    %v18 = vld [vmem:[%s0 + $0x14] sm:$0xf]
    %v19 = vld [vmem:[%s0 + $0x18] sm:$0xff]
    %v20 = vld [vmem:[%s0 + $0x20] sm:$0xf]
    %v21 = vld [vmem:[%s0 + $0x24] sm:$0xff]
    %v22 = vld [vmem:[%s0 + $0x2c] sm:$0xf]
    %v23 = vunpack.c.l.bf16 %v15
    %v24 = vunpack.c.h.bf16 %v15
    %v25 = vunpack.c.l.bf16 %v16
    %v26 = vunpack.c.l.bf16 %v17
    %v27 = vunpack.c.h.bf16 %v17
    %v28 = vunpack.c.l.bf16 %v18
    %v29 = vunpack.c.l.bf16 %v19
    %v30 = vunpack.c.h.bf16 %v19
    %v31 = vunpack.c.l.bf16 %v20
    %v32 = vunpack.c.l.bf16 %v21
    %v33 = vunpack.c.h.bf16 %v21
    %v34 = vunpack.c.l.bf16 %v22
    %v35 = vadd.f32 %v23, %v26
    %v36 = vrot.slane %v35, 4
    %v37 = vadd.f32 %v35, %v36
    %v38 = vrot.slane %v37, 2
    %v39 = vadd.f32 %v37, %v38
    %v40 = vrot.slane %v39, 1
    %v41 = vadd.f32 %v39, %v40
    %v42 = vadd.f32 %v24, %v27
    %v43 = vrot.slane %v42, 4
    %v44 = vadd.f32 %v42, %v43
    %v45 = vrot.slane %v44, 2
    %v46 = vadd.f32 %v44, %v45
    %v47 = vrot.slane %v46, 1
    %v48 = vadd.f32 %v46, %v47
    %v49 = vadd.f32 %v25, %v28
    %v50 = vrot.slane %v49, 4
    %v51 = vadd.f32 %v49, %v50
    %v52 = vrot.slane %v51, 2
    %v53 = vadd.f32 %v51, %v52
    %v54 = vrot.slane %v53, 1
    %v55 = vadd.f32 %v53, %v54
    %v56 = vadd.f32 %v29, %v32
    %v57 = vrot.slane %v56, 4
    %v58 = vadd.f32 %v56, %v57
    %v59 = vrot.slane %v58, 2
    %v60 = vadd.f32 %v58, %v59
    %v61 = vrot.slane %v60, 1
    %v62 = vadd.f32 %v60, %v61
    %v63 = vadd.f32 %v30, %v33
    %v64 = vrot.slane %v63, 4
    %v65 = vadd.f32 %v63, %v64
    %v66 = vrot.slane %v65, 2
    %v67 = vadd.f32 %v65, %v66
    %v68 = vrot.slane %v67, 1
    %v69 = vadd.f32 %v67, %v68
    %v70 = vadd.f32 %v31, %v34
    %v71 = vrot.slane %v70, 4
    %v72 = vadd.f32 %v70, %v71
    %v73 = vrot.slane %v72, 2
    %v74 = vadd.f32 %v72, %v73
    %v75 = vrot.slane %v74, 1
    %v76 = vadd.f32 %v74, %v75
    %v77 = vmul.f32 %v41, 0.0625
    %v78 = vmul.f32 %v48, 0.0625
    %v79 = vmul.f32 %v55, 0.0625
    %v80 = vmul.f32 %v62, 0.0625
    %v81 = vmul.f32 %v69, 0.0625
    %v82 = vmul.f32 %v76, 0.0625
    %v83 = vld [vmem:[%s1] sm:$0xff]
    %v84 = vld [vmem:[%s1 + $0x8] sm:$0xff]
    %v85 = vld [vmem:[%s1 + $0x10] sm:$0xff]
    %v86 = vld [vmem:[%s1 + $0x18] sm:$0xff]
    %v87 = vld [vmem:[%s1 + $0x20] sm:$0xff]
    %v88 = vld [vmem:[%s1 + $0x28] sm:$0xff]
    %v89 = vld [vmem:[%s1 + $0x30] sm:$0xff]
    %v90 = vld [vmem:[%s1 + $0x38] sm:$0xff]
    %v91 = vld [vmem:[%s1 + $0x40] sm:$0xff]
    %v92 = vld [vmem:[%s1 + $0x48] sm:$0xff]
    %v93 = vld [vmem:[%s1 + $0x50] sm:$0xff]
    %v94 = vld [vmem:[%s1 + $0x58] sm:$0xff]
    %v95 = vld [vmem:[%s1 + $0x60] sm:$0xff]
    %v96 = vld [vmem:[%s1 + $0x68] sm:$0xff]
    %v97 = vld [vmem:[%s1 + $0x70] sm:$0xff]
    %v98 = vld [vmem:[%s1 + $0x78] sm:$0xff]
    %v99 = vld [vmem:[%s1 + $0x80] sm:$0xff]
    %v100 = vld [vmem:[%s1 + $0x88] sm:$0xff]
    %v101 = vld [vmem:[%s1 + $0x90] sm:$0xff]
    %v102 = vld [vmem:[%s1 + $0x98] sm:$0xff]
    %v103 = vld [vmem:[%s1 + $0xa0] sm:$0xff]
    %v104 = vld [vmem:[%s1 + $0xa8] sm:$0xff]
    %v105 = vld [vmem:[%s1 + $0xb0] sm:$0xff]
    %v106 = vld [vmem:[%s1 + $0xb8] sm:$0xff]
    %v107 = vld [vmem:[%s1 + $0xc0] sm:$0xff]
    %v108 = vld [vmem:[%s1 + $0xc8] sm:$0xff]
    %v109 = vld [vmem:[%s1 + $0xd0] sm:$0xff]
    %v110 = vld [vmem:[%s1 + $0xd8] sm:$0xff]
    %v111 = vld [vmem:[%s1 + $0xe0] sm:$0xff]
    %v112 = vld [vmem:[%s1 + $0xe8] sm:$0xff]
    %v113 = vld [vmem:[%s1 + $0xf0] sm:$0xff]
    %v114 = vld [vmem:[%s1 + $0xf8] sm:$0xff]
    %v115 = vld [vmem:[%s1 + $0x100] sm:$0xff]
    %v116 = vld [vmem:[%s1 + $0x108] sm:$0xff]
    %v117 = vld [vmem:[%s1 + $0x110] sm:$0xff]
    %v118 = vld [vmem:[%s1 + $0x118] sm:$0xff]
    %v119 = vld [vmem:[%s1 + $0x120] sm:$0xff]
    %v120 = vld [vmem:[%s1 + $0x128] sm:$0xff]
    %v121 = vld [vmem:[%s1 + $0x130] sm:$0xff]
    %v122 = vld [vmem:[%s1 + $0x138] sm:$0xff]
    %v123 = vld [vmem:[%s1 + $0x140] sm:$0xff]
    %v124 = vld [vmem:[%s1 + $0x148] sm:$0xff]
    %v125 = vld [vmem:[%s1 + $0x150] sm:$0xff]
    %v126 = vld [vmem:[%s1 + $0x158] sm:$0xff]
    %v127 = vld [vmem:[%s1 + $0x160] sm:$0xff]
    %v128 = vld [vmem:[%s1 + $0x168] sm:$0xff]
    %v129 = vld [vmem:[%s1 + $0x170] sm:$0xff]
    %v130 = vld [vmem:[%s1 + $0x178] sm:$0xff]
    %v131 = vld [vmem:[%s2] sm:$0x1]
    %v133 = vlaneseq
    %v134 = vshrl.u32 %v133, 7
    %v135 = vsub.s32 0, %v134
    %v136 = vrot.slane %v131, %v135
    %vm144 = vcmask 1041409
    %v145 = vsel %vm144, %v80, %v77
    %v146 = vsel %vm144, %v81, %v78
    %v147 = vsel %vm144, %v82, %v79
    %151 = vmatprep.subr.mxu0 0.0
    %152 = vmatpush1.msra.mxu0 %v83
    %153 = vmatprep.subr.mxu0 0.0
    %154 = vmatpush1.msra.mxu0 %v84
    %155 = vmatprep.subr.mxu0 0.0
    %156 = vmatpush1.msra.mxu0 %v85
    %157 = vmatprep.subr.mxu0 0.0
    %158 = vmatpush1.msra.mxu0 %v86
    %159 = vmatprep.subr.mxu0 0.0
    %160 = vmatpush1.msra.mxu0 %v87
    %161 = vmatprep.subr.mxu0 0.0
    %162 = vmatpush1.msra.mxu0 %v88
    %163 = vmatprep.subr.mxu0 0.0
    %164 = vmatpush1.msra.mxu0 %v89
    %165 = vmatprep.subr.mxu0 0.0
    %166 = vmatpush1.msra.mxu0 %v90
    %167 = vmatprep.subr.mxu0 0.0
    %168 = vmatpush1.msra.mxu0 %v91
    %169 = vmatprep.subr.mxu0 0.0
    %170 = vmatpush1.msra.mxu0 %v92
    %171 = vmatprep.subr.mxu0 0.0
    %172 = vmatpush1.msra.mxu0 %v93
    %173 = vmatprep.subr.mxu0 0.0
    %174 = vmatpush1.msra.mxu0 %v94
    %175 = vmatprep.subr.mxu0 0.0
    %176 = vmatpush1.msra.mxu0 %v95
    %177 = vmatprep.subr.mxu0 0.0
    %178 = vmatpush1.msra.mxu0 %v96
    %179 = vmatprep.subr.mxu0 0.0
    %180 = vmatpush1.msra.mxu0 %v97
    %181 = vmatprep.subr.mxu0 0.0
    %182 = vmatpush1.msra.mxu0 %v98
    %183 = vmatprep.subr.mxu0 0.0
    %184 = vmatpush1.msra.mxu0 %v99
    %185 = vmatprep.subr.mxu0 0.0
    %186 = vmatpush1.msra.mxu0 %v100
    %187 = vmatprep.subr.mxu0 0.0
    %188 = vmatpush1.msra.mxu0 %v101
    %189 = vmatprep.subr.mxu0 0.0
    %190 = vmatpush1.msra.mxu0 %v102
    %191 = vmatprep.subr.mxu0 0.0
    %192 = vmatpush1.msra.mxu0 %v103
    %193 = vmatprep.subr.mxu0 0.0
    %194 = vmatpush1.msra.mxu0 %v104
    %195 = vmatprep.subr.mxu0 0.0
    %196 = vmatpush1.msra.mxu0 %v105
    %197 = vmatprep.subr.mxu0 0.0
    %198 = vmatpush1.msra.mxu0 %v106
    %199 = vmatprep.subr.mxu0 0.0
    %200 = vmatpush1.msra.mxu0 %v107
    %201 = vmatprep.subr.mxu0 0.0
    %202 = vmatpush1.msra.mxu0 %v108
    %203 = vmatprep.subr.mxu0 0.0
    %204 = vmatpush1.msra.mxu0 %v109
    %205 = vmatprep.subr.mxu0 0.0
    %206 = vmatpush1.msra.mxu0 %v110
    %207 = vmatprep.subr.mxu0 0.0
    %208 = vmatpush1.msra.mxu0 %v111
    %209 = vmatprep.subr.mxu0 0.0
    %210 = vmatpush1.msra.mxu0 %v112
    %211 = vmatprep.subr.mxu0 0.0
    %212 = vmatpush1.msra.mxu0 %v113
    %213 = vmatprep.subr.mxu0 0.0
    %214 = vmatpush1.msra.mxu0 %v114
    %215 = vmatprep.mubr.f32.mxu0 %v146
    %216 = vmatmul.mubr.f32.gmra.mrb[0].mxu0 %v145
    %v217 = vpop.f32.mrb[0].mxu0
    %v218 = vadd.f32 %v136, %v217
    %v219 = vpop.f32.mrb[0].mxu0
    %220 = vdwg.mxu0
    %221 = vmatprep.subr.mxu0 0.0
    %222 = vmatpush1.msra.mxu0 %v115
    %223 = vmatprep.subr.mxu0 0.0
    %224 = vmatpush1.msra.mxu0 %v116
    %225 = vmatprep.subr.mxu0 0.0
    %226 = vmatpush1.msra.mxu0 %v117
    %227 = vmatprep.subr.mxu0 0.0
    %228 = vmatpush1.msra.mxu0 %v118
    %229 = vmatprep.subr.mxu0 0.0
    %230 = vmatpush1.msra.mxu0 %v119
    %231 = vmatprep.subr.mxu0 0.0
    %232 = vmatpush1.msra.mxu0 %v120
    %233 = vmatprep.subr.mxu0 0.0
    %234 = vmatpush1.msra.mxu0 %v121
    %235 = vmatprep.subr.mxu0 0.0
    %236 = vmatpush1.msra.mxu0 %v122
    %237 = vmatprep.subr.mxu0 0.0
    %238 = vmatpush1.msra.mxu0 %v123
    %239 = vmatprep.subr.mxu0 0.0
    %240 = vmatpush1.msra.mxu0 %v124
    %241 = vmatprep.subr.mxu0 0.0
    %242 = vmatpush1.msra.mxu0 %v125
    %243 = vmatprep.subr.mxu0 0.0
    %244 = vmatpush1.msra.mxu0 %v126
    %245 = vmatprep.subr.mxu0 0.0
    %246 = vmatpush1.msra.mxu0 %v127
    %247 = vmatprep.subr.mxu0 0.0
    %248 = vmatpush1.msra.mxu0 %v128
    %249 = vmatprep.subr.mxu0 0.0
    %250 = vmatpush1.msra.mxu0 %v129
    %251 = vmatprep.subr.mxu0 0.0
    %252 = vmatpush1.msra.mxu0 %v130
    %253 = vmatprep.subr.mxu0 0.0
    %254 = vmatpush1.msra.mxu0 0.0
    %255 = vmatprep.subr.mxu0 0.0
    %256 = vmatpush1.msra.mxu0 0.0
    %257 = vmatprep.subr.mxu0 0.0
    %258 = vmatpush1.msra.mxu0 0.0
    %259 = vmatprep.subr.mxu0 0.0
    %260 = vmatpush1.msra.mxu0 0.0
    %261 = vmatprep.subr.mxu0 0.0
    %262 = vmatpush1.msra.mxu0 0.0
    %263 = vmatprep.subr.mxu0 0.0
    %264 = vmatpush1.msra.mxu0 0.0
    %265 = vmatprep.subr.mxu0 0.0
    %266 = vmatpush1.msra.mxu0 0.0
    %267 = vmatprep.subr.mxu0 0.0
    %268 = vmatpush1.msra.mxu0 0.0
    %269 = vmatprep.subr.mxu0 0.0
    %270 = vmatpush1.msra.mxu0 0.0
    %271 = vmatprep.subr.mxu0 0.0
    %272 = vmatpush1.msra.mxu0 0.0
    %273 = vmatprep.subr.mxu0 0.0
    %274 = vmatpush1.msra.mxu0 0.0
    %275 = vmatprep.subr.mxu0 0.0
    %276 = vmatpush1.msra.mxu0 0.0
    %277 = vmatprep.subr.mxu0 0.0
    %278 = vmatpush1.msra.mxu0 0.0
    %279 = vmatprep.subr.mxu0 0.0
    %280 = vmatpush1.msra.mxu0 0.0
    %281 = vmatprep.subr.mxu0 0.0
    %282 = vmatpush1.msra.mxu0 0.0
    %283 = vmatprep.subr.mxu0 0.0
    %284 = vmatpush1.msra.mxu0 0.0
    %285 = vmatprep.mubr.f32.mxu0 0.0
    %286 = vmatmul.mubr.f32.gmra.mrb[0].mxu0 %v147
    %v287 = vpop.f32.mrb[0].mxu0
    %v288 = vadd.f32 %v218, %v287
    %v289 = vpop.f32.mrb[0].mxu0
    %290 = vdwg.mxu0
    %291 = vst [vmem:[#allocation2] sm:$0x3] %v288
    // Predicated region
    $region14: #{_lambda_.27} parent=1 // pred_check
      _
    $region15: #{_lambda_.27} parent=1 // pred_check_branch
      %293 = sbr.rel (0) target = $region17
    $region16: #{_lambda_.27} parent=1 // pred_region
      %s295 = ssub.s32 32, 32
      %296 = vsyncadd [#allocation3], %s295
      %s298 = sshll.u32 [#allocation2], 4
      %s299 = int_to_ptr.vmem [resolvable:$true] %s298
      %301 = dma.vmem_to_hbm [thread:$0]  %s299, 32, %s3, [#allocation3]
    $region17: #{_lambda_.27} parent=1 // pred_fallthru
      _
    // Predicated region
    $region18: #{_lambda_.27} parent=1 // pred_check
      _
    $region19: #{_lambda_.27} parent=1 // pred_check_branch
      %303 = sbr.rel (0) target = $region21
    $region20: #{_lambda_.27} parent=1 // pred_region
      %304 = dma.done [#allocation3], 32
    $region21: #{_lambda_.27} parent=1 // pred_fallthru
      _
    %305 = vsyncpa [#allocation3], 1

// kernel: _lambda_.26
$region0: #{_lambda_.26}
  #allocation0 [shape = 'u32[]', space=smem, size = 0x4, offset = 0x4, fixed_abs, tag = 'smem constant byte address 0x4 - core index']
  #allocation1 [shape = 'u32[144,128]{1,0:T(1,128)}', space=vmem, size = 0x12000, scoped, tag = 'internal scratch']
  %s0 = inlined_call_operand.vmem [shape: bf16[2,16,128], index: 0, kind: input, shape index: {}]
  %s1 = inlined_call_operand.vmem [shape: bf16[128,384], index: 1, kind: input, shape index: {}]
  %s2 = inlined_call_operand.vmem [shape: f32[1,384], index: 2, kind: input, shape index: {}]
  %s3 = inlined_call_operand.vmem [shape: f32[1,384], index: 3, kind: input, shape index: {}]
  %s4 = inlined_call_operand.vmem [shape: bf16[2,16,384], index: 4, kind: output, shape index: {}]
  %s5 = sld [smem:[#allocation0]]
  $region49: #{_lambda_.26} parent=0
    _
  %s7 = ssub.s32 1, %s5
  %s8 = scalar_select 0, %s7, %s5
  loop: start=0, step=1, limit=4
  $region2: #{_lambda_.26} parent=0 // loop_pre_header
    _
  $region3: #{_lambda_.26} parent=0 // loop_header
    %s10 = sphi 0, %s14
    %p11 = scmp.ge.s32.totalorder %s10, 4
    %s17 = sphi 0, %s29
    %s18 = sphi 0, %s25
    %s19 = sphi 0, %s17
    %s20 = sphi 0, %s18
    %s21 = sphi 0, %s19
    %s22 = sphi 0, %s20
    %s34 = sphi 0, %s36
    %s37 = sphi 0, %s34
    %s38 = sphi 0, %s37
    %s54 = sphi 0, %s38
    %s58 = sphi 0, %s58
    %s60 = sphi 0, %s58
    %s61 = sphi 0, %s60
    %s75 = sphi 0, %s61
    %s79 = sphi 0, %s79
    %s81 = sphi 0, %s79
    %s82 = sphi 0, %s81
    %s96 = sphi 0, %s82
    %s100 = sphi 0, %s100
    %s102 = sphi 0, %s100
    %s103 = sphi 0, %s102
    %s117 = sphi 0, %s103
    %s125 = sphi 0, %s127
    %s128 = sphi 0, %s125
    %s129 = sphi 0, %s128
    %s145 = sphi 0, %s129
  $region4: #{_lambda_.26} parent=0 // loop_header_branch
    %13 = sbr.rel (%p11) target = $region8
  $region5: #{_lambda_.26} parent=0 // loop_body
    %s15 = ssub.s32 %s10, 1
    %s16 = ssub.s32 %s10, 2
    %s23 = sadd.s32 1, %s18
    %p24 = scmp.ge.s32.totalorder %s23, 1
    %s25 = scalar_select %p24, 0, %s23
    %s26 = sadd.s32 1, %s17
    %s27 = scalar_select %p24, %s26, %s17
    %p28 = scmp.ge.s32.totalorder %s27, 2
    %s29 = scalar_select %p28, 0, %s27
    %s30 = ssub.s32 %s17, %s29
    %s31 = ssub.s32 %s18, %s25
    %s32 = sor.u32 %s30, %s31
    %p33 = scmp.eq.s32.totalorder %s32, 0
    %s35 = sadd.s32 %s34, 1
    %s36 = scalar_select %p33, %s34, %s35
    %p39 = pneg %p33
    %p40 = scmp.eq.s32.totalorder %s10, 1
    %p41 = por %p39, %p40
    %p42 = scmp.ne.s32.totalorder %s34, %s37
    %p43 = scmp.eq.s32.totalorder %s10, 0
    %p44 = por %p42, %p43
    %p45 = scmp.ne.s32.totalorder %s34, %s37
    %p46 = scmp.eq.s32.totalorder %s15, 1
    %p47 = por %p45, %p46
    %p48 = scmp.ne.s32.totalorder %s37, %s38
    %p49 = scmp.eq.s32.totalorder %s15, 0
    %p50 = por %p48, %p49
    %p51 = scmp.ne.s32.totalorder %s37, %s38
    %p52 = scmp.eq.s32.totalorder %s16, 1
    %p53 = por %p51, %p52
    %p55 = scmp.ne.s32.totalorder %s38, %s54
    %p56 = scmp.eq.s32.totalorder %s16, 0
    %p57 = por %p55, %p56
    %s59 = sadd.s32 %s58, 1
    %p62 = scmp.eq.s32.totalorder %s10, 1
    %p63 = scmp.ne.s32.totalorder %s58, %s60
    %p64 = scmp.eq.s32.totalorder %s10, 0
    %p65 = por %p63, %p64
    %p66 = scmp.ne.s32.totalorder %s58, %s60
    %p67 = scmp.eq.s32.totalorder %s15, 1
    %p68 = por %p66, %p67
    %p69 = scmp.ne.s32.totalorder %s60, %s61
    %p70 = scmp.eq.s32.totalorder %s15, 0
    %p71 = por %p69, %p70
    %p72 = scmp.ne.s32.totalorder %s60, %s61
    %p73 = scmp.eq.s32.totalorder %s16, 1
    %p74 = por %p72, %p73
    %p76 = scmp.ne.s32.totalorder %s61, %s75
    %p77 = scmp.eq.s32.totalorder %s16, 0
    %p78 = por %p76, %p77
    %s80 = sadd.s32 %s79, 1
    %p83 = scmp.eq.s32.totalorder %s10, 1
    %p84 = scmp.ne.s32.totalorder %s79, %s81
    %p85 = scmp.eq.s32.totalorder %s10, 0
    %p86 = por %p84, %p85
    %p87 = scmp.ne.s32.totalorder %s79, %s81
    %p88 = scmp.eq.s32.totalorder %s15, 1
    %p89 = por %p87, %p88
    %p90 = scmp.ne.s32.totalorder %s81, %s82
    %p91 = scmp.eq.s32.totalorder %s15, 0
    %p92 = por %p90, %p91
    %p93 = scmp.ne.s32.totalorder %s81, %s82
    %p94 = scmp.eq.s32.totalorder %s16, 1
    %p95 = por %p93, %p94
    %p97 = scmp.ne.s32.totalorder %s82, %s96
    %p98 = scmp.eq.s32.totalorder %s16, 0
    %p99 = por %p97, %p98
    %s101 = sadd.s32 %s100, 1
    %p104 = scmp.eq.s32.totalorder %s10, 1
    %p105 = scmp.ne.s32.totalorder %s100, %s102
    %p106 = scmp.eq.s32.totalorder %s10, 0
    %p107 = por %p105, %p106
    %p108 = scmp.ne.s32.totalorder %s100, %s102
    %p109 = scmp.eq.s32.totalorder %s15, 1
    %p110 = por %p108, %p109
    %p111 = scmp.ne.s32.totalorder %s102, %s103
    %p112 = scmp.eq.s32.totalorder %s15, 0
    %p113 = por %p111, %p112
    %p114 = scmp.ne.s32.totalorder %s102, %s103
    %p115 = scmp.eq.s32.totalorder %s16, 1
    %p116 = por %p114, %p115
    %p118 = scmp.ne.s32.totalorder %s103, %s117
    %p119 = scmp.eq.s32.totalorder %s16, 0
    %p120 = por %p118, %p119
    %s121 = ssub.s32 %s17, %s29
    %s122 = ssub.s32 %s18, %s25
    %s123 = sor.u32 %s121, %s122
    %p124 = scmp.eq.s32.totalorder %s123, 0
    %s126 = sadd.s32 %s125, 1
    %s127 = scalar_select %p124, %s125, %s126
    %p130 = pneg %p124
    %p131 = scmp.eq.s32.totalorder %s10, 1
    %p132 = por %p130, %p131
    %p133 = scmp.ne.s32.totalorder %s125, %s128
    %p134 = scmp.eq.s32.totalorder %s10, 0
    %p135 = por %p133, %p134
    %p136 = scmp.ne.s32.totalorder %s125, %s128
    %p137 = scmp.eq.s32.totalorder %s15, 1
    %p138 = por %p136, %p137
    %p139 = scmp.ne.s32.totalorder %s128, %s129
    %p140 = scmp.eq.s32.totalorder %s15, 0
    %p141 = por %p139, %p140
    %p142 = scmp.ne.s32.totalorder %s128, %s129
    %p143 = scmp.eq.s32.totalorder %s16, 1
    %p144 = por %p142, %p143
    %p146 = scmp.ne.s32.totalorder %s129, %s145
    %p147 = scmp.eq.s32.totalorder %s16, 0
    %p148 = por %p146, %p147
    %p149 = scmp.le.s32.totalorder 1, %s10
    %p150 = scmp.lt.s32.totalorder %s10, 3
    %p151 = pnand %p149, %p150
    %p152 = pneg %p151
    // Predicated region
    $region9: #{_lambda_.26} parent=5 // pred_check
      _
    $region10: #{_lambda_.26} parent=5 // pred_check_branch
      %154 = sbr.rel (%p151) target = $region12
    $region11: #{_lambda_.26} parent=5 // pred_region
      %s155 = ssub.s32 %s10, 1
      // Predicated region
      $region13: #{_lambda_.26} parent=11 // pred_check
        %p156 = pneg %p71
      $region14: #{_lambda_.26} parent=11 // pred_check_branch
        %158 = sbr.rel (%p156) target = $region16
      $region15: #{_lambda_.26} parent=11 // pred_region
        _
      $region16: #{_lambda_.26} parent=11 // pred_fallthru
        _
      // Predicated region
      $region17: #{_lambda_.26} parent=11 // pred_check
        %p159 = pneg %p92
      $region18: #{_lambda_.26} parent=11 // pred_check_branch
        %161 = sbr.rel (%p159) target = $region20
      $region19: #{_lambda_.26} parent=11 // pred_region
        _
      $region20: #{_lambda_.26} parent=11 // pred_fallthru
        _
      // Predicated region
      $region21: #{_lambda_.26} parent=11 // pred_check
        %p162 = pneg %p113
      $region22: #{_lambda_.26} parent=11 // pred_check_branch
        %164 = sbr.rel (%p162) target = $region24
      $region23: #{_lambda_.26} parent=11 // pred_region
        _
      $region24: #{_lambda_.26} parent=11 // pred_fallthru
        _
    $region12: #{_lambda_.26} parent=5 // pred_fallthru
      _
    %p165 = scmp.lt.s32.totalorder %s10, 2
    // Predicated region
    $region25: #{_lambda_.26} parent=5 // pred_check
      %p166 = pneg %p165
    $region26: #{_lambda_.26} parent=5 // pred_check_branch
      %168 = sbr.rel (%p166) target = $region28
    $region27: #{_lambda_.26} parent=5 // pred_region
      // Predicated region
      $region29: #{_lambda_.26} parent=27 // pred_check
        %p169 = pneg %p44
      $region30: #{_lambda_.26} parent=27 // pred_check_branch
        %171 = sbr.rel (%p169) target = $region32
      $region31: #{_lambda_.26} parent=27 // pred_region
        %s172 = smul.u32 2, %s18
        %p173 = scmp.lt.s32.totalorder %s17, 1
        %s174 = scalar_select %p173, %s17, 1
        %p175 = scmp.lt.s32.totalorder %s172, 1
        %s176 = scalar_select %p175, %s172, 1
        %s177 = smul.addr %s174, 2
        %s178 = sadd.s32 %s176, %s177
        %s179 = smul.addr %s178, 4
        %s180 = scalar_lea.vmem %s0, %s179
        %s181 = smul.u32 2, %s18
      $region32: #{_lambda_.26} parent=27 // pred_fallthru
        _
    $region28: #{_lambda_.26} parent=5 // pred_fallthru
      _
    %p182 = scmp.le.s32.totalorder 1, %s10
    %p183 = scmp.lt.s32.totalorder %s10, 3
    %p184 = pnand %p182, %p183
    %p185 = pneg %p184
    // Predicated region
    $region33: #{_lambda_.26} parent=5 // pred_check
      _
    $region34: #{_lambda_.26} parent=5 // pred_check_branch
      %187 = sbr.rel (%p184) target = $region36
    $region35: #{_lambda_.26} parent=5 // pred_region
      %s188 = ssub.s32 %s10, 1
      %s189 = smul.u32 2, %s20
      %p190 = scmp.lt.s32.totalorder %s19, 1
      %s191 = scalar_select %p190, %s19, 1
      %p192 = scmp.lt.s32.totalorder %s189, 1
      %s193 = scalar_select %p192, %s189, 1
      %s194 = smul.addr %s191, 2
      %s195 = sadd.s32 %s193, %s194
      %s196 = smul.addr %s195, 4
      %s197 = scalar_lea.vmem %s0, %s196
      %p198 = pneg %p50
      %p199 = pneg %p47
      %p200 = pneg %p71
      %p201 = pneg %p68
      %p202 = pneg %p92
      %p203 = pneg %p89
      %p204 = pneg %p113
      %p205 = pneg %p110
      %p206 = pneg %p141
      %p207 = pneg %p138
      %s208 = smul.u32 2, %s20
      %p209 = scmp.lt.s32.totalorder %s19, 1
      %s210 = scalar_select %p209, %s19, 1
      %p211 = scmp.lt.s32.totalorder %s208, 1
      %s212 = scalar_select %p211, %s208, 1
      %s213 = smul.addr %s212, 3
      %s214 = smul.addr %s210, 6
      %s215 = sadd.s32 %s213, %s214
      %s216 = smul.addr %s215, 4
      %s217 = scalar_lea.vmem %s4, %s216
      %s218 = smul.u32 2, %s20
      %p219 = scmp.lt.s32.totalorder %s19, 1
      %s220 = scalar_select %p219, %s19, 1
      %p221 = scmp.lt.s32.totalorder %s218, 1
      %s222 = scalar_select %p221, %s218, 1
      %s223 = smul.addr %s220, 2
      %s224 = sadd.s32 %s222, %s223
      %s225 = smul.addr %s224, 4
      %s226 = scalar_lea.vmem %s0, %s225
      %s227 = smul.u32 2, %s20
      %s228 = smul.u32 2, %s20
      %p229 = scmp.lt.s32.totalorder %s19, 1
      %s230 = scalar_select %p229, %s19, 1
      %p231 = scmp.lt.s32.totalorder %s228, 1
      %s232 = scalar_select %p231, %s228, 1
      %s233 = smul.addr %s232, 3
      %s234 = smul.addr %s230, 6
      %s235 = sadd.s32 %s233, %s234
      %s236 = smul.addr %s235, 4
      %s237 = scalar_lea.vmem %s4, %s236
      %s238 = smul.u32 2, %s20
      %v240 = vld [vmem:[%s226] sm:$0xf]
      %v241 = vld [vmem:[%s226 + $0x4] sm:$0xf]
      %v242 = vld [vmem:[%s1] sm:$0xff]
      %v243 = vld [vmem:[%s1 + $0x8] sm:$0xf]
      %v244 = vld [vmem:[%s1 + $0xc] sm:$0xff]
      %v245 = vld [vmem:[%s1 + $0x14] sm:$0xf]
      %v246 = vld [vmem:[%s1 + $0x18] sm:$0xff]
      %v247 = vld [vmem:[%s1 + $0x20] sm:$0xf]
      %v248 = vld [vmem:[%s1 + $0x24] sm:$0xff]
      %v249 = vld [vmem:[%s1 + $0x2c] sm:$0xf]
      %v250 = vld [vmem:[%s1 + $0x30] sm:$0xff]
      %v251 = vld [vmem:[%s1 + $0x38] sm:$0xf]
      %v252 = vld [vmem:[%s1 + $0x3c] sm:$0xff]
      %v253 = vld [vmem:[%s1 + $0x44] sm:$0xf]
      %v254 = vld [vmem:[%s1 + $0x48] sm:$0xff]
      %v255 = vld [vmem:[%s1 + $0x50] sm:$0xf]
      %v256 = vld [vmem:[%s1 + $0x54] sm:$0xff]
      %v257 = vld [vmem:[%s1 + $0x5c] sm:$0xf]
      %v258 = vld [vmem:[%s1 + $0x60] sm:$0xff]
      %v259 = vld [vmem:[%s1 + $0x68] sm:$0xf]
      %v260 = vld [vmem:[%s1 + $0x6c] sm:$0xff]
      %v261 = vld [vmem:[%s1 + $0x74] sm:$0xf]
      %v262 = vld [vmem:[%s1 + $0x78] sm:$0xff]
      %v263 = vld [vmem:[%s1 + $0x80] sm:$0xf]
      %v264 = vld [vmem:[%s1 + $0x84] sm:$0xff]
      %v265 = vld [vmem:[%s1 + $0x8c] sm:$0xf]
      %v266 = vld [vmem:[%s1 + $0x90] sm:$0xff]
      %v267 = vld [vmem:[%s1 + $0x98] sm:$0xf]
      %v268 = vld [vmem:[%s1 + $0x9c] sm:$0xff]
      %v269 = vld [vmem:[%s1 + $0xa4] sm:$0xf]
      %v270 = vld [vmem:[%s1 + $0xa8] sm:$0xff]
      %v271 = vld [vmem:[%s1 + $0xb0] sm:$0xf]
      %v272 = vld [vmem:[%s1 + $0xb4] sm:$0xff]
      %v273 = vld [vmem:[%s1 + $0xbc] sm:$0xf]
      %v276 = vunpack.c.l.b16 %v240
      %v277 = vunpack.c.l.b16 %v241
      %v278 = vpack.c.b16 %v277, %v276
      %v312 = vunpack.c.l.b16 %v242
      %v313 = vunpack.c.h.b16 %v242
      %v314 = vunpack.c.l.b16 %v243
      %v315 = vunpack.c.l.b16 %v244
      %v316 = vunpack.c.h.b16 %v244
      %v317 = vunpack.c.l.b16 %v245
      %v318 = vunpack.c.l.b16 %v246
      %v319 = vunpack.c.h.b16 %v246
      %v320 = vunpack.c.l.b16 %v247
      %v321 = vunpack.c.l.b16 %v248
      %v322 = vunpack.c.h.b16 %v248
      %v323 = vunpack.c.l.b16 %v249
      %v324 = vunpack.c.l.b16 %v250
      %v325 = vunpack.c.h.b16 %v250
      %v326 = vunpack.c.l.b16 %v251
      %v327 = vunpack.c.l.b16 %v252
      %v328 = vunpack.c.h.b16 %v252
      %v329 = vunpack.c.l.b16 %v253
      %v330 = vunpack.c.l.b16 %v254
      %v331 = vunpack.c.h.b16 %v254
      %v332 = vunpack.c.l.b16 %v255
      %v333 = vunpack.c.l.b16 %v256
      %v334 = vunpack.c.h.b16 %v256
      %v335 = vunpack.c.l.b16 %v257
      %v336 = vunpack.c.l.b16 %v258
      %v337 = vunpack.c.h.b16 %v258
      %v338 = vunpack.c.l.b16 %v259
      %v339 = vunpack.c.l.b16 %v260
      %v340 = vunpack.c.h.b16 %v260
      %v341 = vunpack.c.l.b16 %v261
      %v342 = vunpack.c.l.b16 %v262
      %v343 = vunpack.c.h.b16 %v262
      %v344 = vunpack.c.l.b16 %v263
      %v345 = vunpack.c.l.b16 %v264
      %v346 = vunpack.c.h.b16 %v264
      %v347 = vunpack.c.l.b16 %v265
      %v348 = vunpack.c.l.b16 %v266
      %v349 = vunpack.c.h.b16 %v266
      %v350 = vunpack.c.l.b16 %v267
      %v351 = vunpack.c.l.b16 %v268
      %v352 = vunpack.c.h.b16 %v268
      %v353 = vunpack.c.l.b16 %v269
      %v354 = vunpack.c.l.b16 %v270
      %v355 = vunpack.c.h.b16 %v270
      %v356 = vunpack.c.l.b16 %v271
      %v357 = vunpack.c.l.b16 %v272
      %v358 = vunpack.c.h.b16 %v272
      %v359 = vunpack.c.l.b16 %v273
      %v360 = vpack.c.b16 %v315, %v312
      %v361 = vpack.c.b16 %v316, %v313
      %v362 = vpack.c.b16 %v317, %v314
      %v363 = vpack.c.b16 %v321, %v318
      %v364 = vpack.c.b16 %v322, %v319
      %v365 = vpack.c.b16 %v323, %v320
      %v366 = vpack.c.b16 %v327, %v324
      %v367 = vpack.c.b16 %v328, %v325
      %v368 = vpack.c.b16 %v329, %v326
      %v369 = vpack.c.b16 %v333, %v330
      %v370 = vpack.c.b16 %v334, %v331
      %v371 = vpack.c.b16 %v335, %v332
      %v372 = vpack.c.b16 %v339, %v336
      %v373 = vpack.c.b16 %v340, %v337
      %v374 = vpack.c.b16 %v341, %v338
      %v375 = vpack.c.b16 %v345, %v342
      %v376 = vpack.c.b16 %v346, %v343
      %v377 = vpack.c.b16 %v347, %v344
      %v378 = vpack.c.b16 %v351, %v348
      %v379 = vpack.c.b16 %v352, %v349
      %v380 = vpack.c.b16 %v353, %v350
      %v381 = vpack.c.b16 %v357, %v354
      %v382 = vpack.c.b16 %v358, %v355
      %v383 = vpack.c.b16 %v359, %v356
      %408 = vmatprep.subr.bf16.mxu0 %v361
      %409 = vmatpush1.bf16.msra.mxu0 %v360
      %410 = vmatprep.subr.bf16.mxu0 %v364
      %411 = vmatpush1.bf16.msra.mxu0 %v363
      %412 = vmatprep.subr.bf16.mxu0 %v367
      %413 = vmatpush1.bf16.msra.mxu0 %v366
      %414 = vmatprep.subr.bf16.mxu0 %v370
      %415 = vmatpush1.bf16.msra.mxu0 %v369
      %416 = vmatprep.subr.bf16.mxu0 %v373
      %417 = vmatpush1.bf16.msra.mxu0 %v372
      %418 = vmatprep.subr.bf16.mxu0 %v376
      %419 = vmatpush1.bf16.msra.mxu0 %v375
      %420 = vmatprep.subr.bf16.mxu0 %v379
      %421 = vmatpush1.bf16.msra.mxu0 %v378
      %422 = vmatprep.subr.bf16.mxu0 %v382
      %423 = vmatpush1.bf16.msra.mxu0 %v381
      %424 = vmatprep.subr.bf16.mxu0 0
      %425 = vmatpush1.bf16.msra.mxu0 0
      %426 = vmatprep.subr.bf16.mxu0 0
      %427 = vmatpush1.bf16.msra.mxu0 0
      %428 = vmatprep.subr.bf16.mxu0 0
      %429 = vmatpush1.bf16.msra.mxu0 0
      %430 = vmatprep.subr.bf16.mxu0 0
      %431 = vmatpush1.bf16.msra.mxu0 0
      %432 = vmatprep.subr.bf16.mxu0 0
      %433 = vmatpush1.bf16.msra.mxu0 0
      %434 = vmatprep.subr.bf16.mxu0 0
      %435 = vmatpush1.bf16.msra.mxu0 0
      %436 = vmatprep.subr.bf16.mxu0 0
      %437 = vmatpush1.bf16.msra.mxu0 0
      %438 = vmatprep.subr.bf16.mxu0 0
      %439 = vmatpush1.bf16.msra.mxu0 0
      %440 = vmatprep.mubr.bf16.mxu0 0
      %441 = vmatmul.mubr.bf16.gmra.mrb[0].mxu0 %v278
      %v442 = vpop.f32.mrb[0].mxu0
      %v443 = vadd.f32 0.0, %v442
      %v444 = vpop.f32.mrb[0].mxu0
      %v445 = vadd.f32 0.0, %v444
      %v446 = vpop.f32.mrb[0].mxu0
      %v447 = vadd.f32 0.0, %v446
      %v448 = vpop.f32.mrb[0].mxu0
      %v449 = vadd.f32 0.0, %v448
      %450 = vdwg.mxu0
      %451 = vmatprep.subr.bf16.mxu0 0
      %452 = vmatpush1.bf16.msra.mxu0 %v362
      %453 = vmatprep.subr.bf16.mxu0 0
      %454 = vmatpush1.bf16.msra.mxu0 %v365
      %455 = vmatprep.subr.bf16.mxu0 0
      %456 = vmatpush1.bf16.msra.mxu0 %v368
      %457 = vmatprep.subr.bf16.mxu0 0
      %458 = vmatpush1.bf16.msra.mxu0 %v371
      %459 = vmatprep.subr.bf16.mxu0 0
      %460 = vmatpush1.bf16.msra.mxu0 %v374
      %461 = vmatprep.subr.bf16.mxu0 0
      %462 = vmatpush1.bf16.msra.mxu0 %v377
      %463 = vmatprep.subr.bf16.mxu0 0
      %464 = vmatpush1.bf16.msra.mxu0 %v380
      %465 = vmatprep.subr.bf16.mxu0 0
      %466 = vmatpush1.bf16.msra.mxu0 %v383
      %467 = vmatprep.subr.bf16.mxu0 0
      %468 = vmatpush1.bf16.msra.mxu0 0
      %469 = vmatprep.subr.bf16.mxu0 0
      %470 = vmatpush1.bf16.msra.mxu0 0
      %471 = vmatprep.subr.bf16.mxu0 0
      %472 = vmatpush1.bf16.msra.mxu0 0
      %473 = vmatprep.subr.bf16.mxu0 0
      %474 = vmatpush1.bf16.msra.mxu0 0
      %475 = vmatprep.subr.bf16.mxu0 0
      %476 = vmatpush1.bf16.msra.mxu0 0
      %477 = vmatprep.subr.bf16.mxu0 0
      %478 = vmatpush1.bf16.msra.mxu0 0
      %479 = vmatprep.subr.bf16.mxu0 0
      %480 = vmatpush1.bf16.msra.mxu0 0
      %481 = vmatprep.subr.bf16.mxu0 0
      %482 = vmatpush1.bf16.msra.mxu0 0
      %483 = vmatprep.mubr.bf16.mxu0 0
      %484 = vmatmul.mubr.bf16.gmra.mrb[0].mxu0 %v278
      %v485 = vpop.f32.mrb[0].mxu0
      %v486 = vadd.f32 0.0, %v485
      %v487 = vpop.f32.mrb[0].mxu0
      %v488 = vpop.f32.mrb[0].mxu0
      %v489 = vadd.f32 0.0, %v488
      %v490 = vpop.f32.mrb[0].mxu0
      %491 = vdwg.mxu0
      %v492 = vld [vmem:[%s2] sm:$0x7]
      %v494 = vlaneseq
      %v495 = vshrl.u32 %v494, 7
      %v496 = vsub.s32 0, %v495
      %v497 = vrot.slane %v492, %v496
      %v498 = vlaneseq
      %v499 = vshrl.u32 %v498, 7
      %v500 = vsub.s32 1, %v499
      %v501 = vrot.slane %v492, %v500
      %v502 = vlaneseq
      %v503 = vshrl.u32 %v502, 7
      %v504 = vsub.s32 2, %v503
      %v505 = vrot.slane %v492, %v504
      %v509 = vmul.f32 %v443, %v497
      %v510 = vmul.f32 %v445, %v501
      %v511 = vmul.f32 %v486, %v505
      %v512 = vmul.f32 %v447, %v497
      %v513 = vmul.f32 %v449, %v501
      %v514 = vmul.f32 %v489, %v505
      %v515 = vld [vmem:[%s3] sm:$0x7]
      %v517 = vlaneseq
      %v518 = vshrl.u32 %v517, 7
      %v519 = vsub.s32 0, %v518
      %v520 = vrot.slane %v515, %v519
      %v521 = vlaneseq
      %v522 = vshrl.u32 %v521, 7
      %v523 = vsub.s32 1, %v522
      %v524 = vrot.slane %v515, %v523
      %v525 = vlaneseq
      %v526 = vshrl.u32 %v525, 7
      %v527 = vsub.s32 2, %v526
      %v528 = vrot.slane %v515, %v527
      %v532 = vadd.f32 %v509, %v520
      %v533 = vadd.f32 %v510, %v524
      %v534 = vadd.f32 %v511, %v528
      %v535 = vadd.f32 %v512, %v520
      %v536 = vadd.f32 %v513, %v524
      %v537 = vadd.f32 %v514, %v528
      %v538 = vxor.u32 %v532, 2147483648
      %v539 = vxor.u32 %v533, 2147483648
      %v540 = vxor.u32 %v534, 2147483648
      %v541 = vxor.u32 %v535, 2147483648
      %v542 = vxor.u32 %v536, 2147483648
      %v543 = vxor.u32 %v537, 2147483648
      %v544 = vmul.f32 %v538, 1.442695
      %v545 = vpow.pop %v544
      %v546 = vmul.f32 %v539, 1.442695
      %v547 = vpow.pop %v546
      %v548 = vmul.f32 %v540, 1.442695
      %v549 = vpow.pop %v548
      %v550 = vmul.f32 %v541, 1.442695
      %v551 = vpow.pop %v550
      %v552 = vmul.f32 %v542, 1.442695
      %v553 = vpow.pop %v552
      %v554 = vmul.f32 %v543, 1.442695
      %v555 = vpow.pop %v554
      %v556 = vadd.f32 %v545, 1.0
      %v557 = vadd.f32 %v547, 1.0
      %v558 = vadd.f32 %v549, 1.0
      %v559 = vadd.f32 %v551, 1.0
      %v560 = vadd.f32 %v553, 1.0
      %v561 = vadd.f32 %v555, 1.0
      %v562 = vrcp.pop %v556
      %v563 = vmul.f32 1.0, %v562
      %v564 = vrcp.pop %v557
      %v565 = vmul.f32 1.0, %v564
      %v566 = vrcp.pop %v558
      %v567 = vmul.f32 1.0, %v566
      %v568 = vrcp.pop %v559
      %v569 = vmul.f32 1.0, %v568
      %v570 = vrcp.pop %v560
      %v571 = vmul.f32 1.0, %v570
      %v572 = vrcp.pop %v561
      %v573 = vmul.f32 1.0, %v572
      %v574 = vmul.f32 %v532, %v563
      %v575 = vmul.f32 %v533, %v565
      %v576 = vmul.f32 %v534, %v567
      %v577 = vmul.f32 %v535, %v569
      %v578 = vmul.f32 %v536, %v571
      %v579 = vmul.f32 %v537, %v573
      %v580 = vpack.c.bf16 %v577, %v574
      %v581 = vpack.c.bf16 %v578, %v575
      %v582 = vpack.c.bf16 %v579, %v576
      %v586 = vunpack.c.l.b16 %v580
      %v587 = vunpack.c.l.b16 %v581
      %v588 = vunpack.c.l.b16 %v582
      %v589 = vunpack.c.h.b16 %v580
      %v590 = vunpack.c.h.b16 %v581
      %v591 = vunpack.c.h.b16 %v582
      %v592 = vpack.c.b16 %v587, %v586
      %v593 = vpack.c.b16 %v588, %v588
      %v594 = vpack.c.b16 %v590, %v589
      %v595 = vpack.c.b16 %v591, %v591
      %600 = vst [vmem:[%s237] sm:$0xff] %v592
      %601 = vst [vmem:[%s237 + $0x8] sm:$0xf] %v593
      %602 = vst [vmem:[%s237 + $0xc] sm:$0xff] %v594
      %603 = vst [vmem:[%s237 + $0x14] sm:$0xf] %v595
      %s604 = smul.u32 2, %s20
      %p605 = scmp.lt.s32.totalorder %s19, 1
      %s606 = scalar_select %p605, %s19, 1
      %p607 = scmp.lt.s32.totalorder %s604, 1
      %s608 = scalar_select %p607, %s604, 1
      %s609 = smul.addr %s608, 3
      %s610 = smul.addr %s606, 6
      %s611 = sadd.s32 %s609, %s610
      %s612 = smul.addr %s611, 4
      %s613 = scalar_lea.vmem %s4, %s612
      // Predicated region
      $region37: #{_lambda_.26} parent=35 // pred_check
        %p614 = pneg %p138
      $region38: #{_lambda_.26} parent=35 // pred_check_branch
        %616 = sbr.rel (%p614) target = $region40
      $region39: #{_lambda_.26} parent=35 // pred_region
        %s617 = smul.u32 2, %s20
      $region40: #{_lambda_.26} parent=35 // pred_fallthru
        _
    $region36: #{_lambda_.26} parent=5 // pred_fallthru
      _
    %p618 = scmp.le.s32.totalorder 2, %s10
    // Predicated region
    $region41: #{_lambda_.26} parent=5 // pred_check
      %p619 = pneg %p618
    $region42: #{_lambda_.26} parent=5 // pred_check_branch
      %621 = sbr.rel (%p619) target = $region44
    $region43: #{_lambda_.26} parent=5 // pred_region
      %s622 = ssub.s32 %s10, 2
      // Predicated region
      $region45: #{_lambda_.26} parent=43 // pred_check
        %p623 = pneg %p144
      $region46: #{_lambda_.26} parent=43 // pred_check_branch
        %625 = sbr.rel (%p623) target = $region48
      $region47: #{_lambda_.26} parent=43 // pred_region
        %s626 = smul.u32 2, %s22
        %p627 = scmp.lt.s32.totalorder %s21, 1
        %s628 = scalar_select %p627, %s21, 1
        %p629 = scmp.lt.s32.totalorder %s626, 1
        %s630 = scalar_select %p629, %s626, 1
        %s631 = smul.addr %s630, 3
        %s632 = smul.addr %s628, 6
        %s633 = sadd.s32 %s631, %s632
        %s634 = smul.addr %s633, 4
        %s635 = scalar_lea.vmem %s4, %s634
      $region48: #{_lambda_.26} parent=43 // pred_fallthru
        _
    $region44: #{_lambda_.26} parent=5 // pred_fallthru
      _
  $region6: #{_lambda_.26} parent=0 // loop_footer
    %s14 = sadd.s32 1, %s10
  $region7: #{_lambda_.26} parent=0 // loop_footer_branch
    %9 = sbr.rel target = $region3
  $region8: #{_lambda_.26} parent=0 // loop_exit
    _

</llo_original>
